<compile_context>
chip_gen: v7x
topology: tpu7x:2x2x1
jax: 0.10.0
libtpu: 0.0.40
codegen_flags: <defaults>
</compile_context>

<pallas_src>
import numpy as np
import jax
import jax.numpy as jnp
from jax.experimental import pallas as pl
from jax.experimental.pallas import tpu as pltpu

ND = 128          # node embedding dim (hardcoded reshape (1,128) in the reference)
ED = 47           # edge embedding dim (zeros((0,47)) in the reference)
GD = 50           # graph dim
PROP_STEPS = 2
NT = 115          # f_addnode classes (incl. stop)
ET = 20           # f_nodes edge-type classes

V_MAX = 8         # padded node capacity of the growing seed graph
E_MAX = 8         # padded edge capacity of the growing seed graph
E_STEP_MAX = 8    # max edges attached to a single new node

NEG = -1e30

# ----------------------- packed weight-slab row layout -----------------------
WA_MPN_STRIDE = 4 * ND                               # per (rep, prop step): xi, xj, ea, w2
WA_GM_BASE = 2 * PROP_STEPS * WA_MPN_STRIDE          # 2048
WA_HEAD_BASE = WA_GM_BASE + 2 * 2 * ND               # 2560
WA_ROWS = WA_HEAD_BASE + 7 * ND                      # 3456
WB_STRIDE = 2 * ND                                   # per (rep, prop step): wih, whh
WB_ROWS = 2 * PROP_STEPS * WB_STRIDE                 # 1024
B_K_STRIDE = 6                                       # per (rep, prop step): b1, b2, lstm i/f/g/o
B_GM_BASE = 2 * PROP_STEPS * B_K_STRIDE              # 24
B_HEAD_BASE = B_GM_BASE + 4                          # 28
NB_ROWS = 32


def _log_softmax(logits, n_valid):
    col = jax.lax.broadcasted_iota(jnp.int32, logits.shape, 1)
    z = jnp.where(col < n_valid, logits, NEG)
    m = jnp.max(z, axis=-1, keepdims=True)
    zs = z - m
    lse = jnp.log(jnp.sum(jnp.exp(zs), axis=-1, keepdims=True))
    return zs - lse


# ----------------------------- fused generation kernel -----------------------

def _gen_kernel(nn_tab, ne_tab, nt_tab, nid_tab, nse_tab, u_tab, t_tab,
                xinit_ref, bx_ref, ea_ref, gsrc_ref, gdst_ref, gdstT_ref,
                wa_ref, wb_ref, bs_ref,
                logp_ref, x_sc, lp_sc):
    f32, bf16 = jnp.float32, jnp.bfloat16
    s = pl.program_id(0)
    last = pl.num_programs(0) - 1

    @pl.when(s == 0)
    def _():
        x_sc[...] = xinit_ref[...]
        lp_sc[...] = jnp.zeros_like(lp_sc)

    n_nodes = nn_tab[s]
    n_edges = ne_tab[s]
    nt_idx = nt_tab[s]
    new_id = nid_tab[s]
    n_se = nse_tab[s]

    def wA(r):                 # [128, 128] bf16 slice of slab A
        return wa_ref[r:r + ND, :]

    def wB(r):                 # [128, 512] bf16 slice of slab B
        return wb_ref[r:r + ND, :]

    def bias(r):               # [1, 128] f32 bias row
        return bs_ref[r:r + 1, :]

    def mm(a, w):              # bf16 x bf16 MXU matmul, f32 accumulation
        return jnp.dot(a.astype(bf16), w.astype(bf16), preferred_element_type=f32)

    # per-step validity masks built in-kernel from SMEM scalars
    e_valid = (jax.lax.broadcasted_iota(jnp.int32, (E_MAX, 1), 0) < n_edges).astype(f32)
    nmask = (jax.lax.broadcasted_iota(jnp.int32, (V_MAX, 1), 0) < n_nodes).astype(f32)

    g_src = gsrc_ref[...] * e_valid        # [E_MAX, V_MAX] one-hot of edge sources
    g_dst = gdst_ref[...] * e_valid        # [E_MAX, V_MAX] one-hot of edge targets
    g_dst_t = gdstT_ref[...]               # [V_MAX, E_MAX]
    ea = ea_ref[...]                       # [E_MAX, ND] edge attrs (47 -> 128 lanes)
    x0 = x_sc[...]                         # carried node states

    def graph_rep(rep, x):
        """One Graph_Representation.forward: (propagated node states, h_G)."""
        c = jnp.zeros((V_MAX, ND), f32)
        for st in range(PROP_STEPS):
            k = rep * PROP_STEPS + st
            wr = k * WA_MPN_STRIDE
            br = k * B_K_STRIDE
            # gather endpoints as tiny one-hot matmuls (no data-dep indexing)
            x_i = mm(g_dst, x)                                    # [E, ND] targets
            x_j = mm(g_src, x)                                    # [E, ND] sources
            # message net: split matmuls instead of lane-dim concat
            h = jnp.maximum(mm(x_i, wA(wr)) + mm(x_j, wA(wr + ND))
                            + mm(ea, wA(wr + 2 * ND)) + bias(br), 0.0)
            msg = (mm(h, wA(wr + 3 * ND)) + bias(br + 1)) * e_valid
            a = mm(g_dst_t, msg)                                  # aggr='add' at targets
            # LSTMCell(input=x, hx=(a, c)): split ih / hh matmuls
            gates = mm(x, wB(k * WB_STRIDE)) + mm(a, wB(k * WB_STRIDE + ND))
            i_g = jax.nn.sigmoid(gates[:, 0:ND] + bias(br + 2))
            f_g = jax.nn.sigmoid(gates[:, ND:2 * ND] + bias(br + 3))
            g_g = jnp.tanh(gates[:, 2 * ND:3 * ND] + bias(br + 4))
            o_g = jax.nn.sigmoid(gates[:, 3 * ND:4 * ND] + bias(br + 5))
            c = f_g * c + i_g * g_g
            x = o_g * jnp.tanh(c)
        gr = WA_GM_BASE + rep * 2 * ND
        bb = B_GM_BASE + rep * 2
        g = jax.nn.sigmoid(mm(x, wA(gr)) + bias(bb))
        hv = mm(x, wA(gr + ND)) + bias(bb + 1)
        h_G = jnp.sum(g * hv * nmask, axis=0, keepdims=True)      # [1, ND]
        return x, h_G

    x_R, h_G = graph_rep(0, x0)        # params["R"]  (seed.x mutated -> x_R)
    x_RI, h_GI = graph_rep(1, x_R)     # R_init runs on the already-mutated states

    hb = WA_HEAD_BASE
    # f_addnode: log_softmax over 115 classes (padded to 128 lanes)
    nt_logp = _log_softmax(mm(h_G, wA(hb)) + bias(B_HEAD_BASE), NT)
    probs = jnp.exp(nt_logp)                                      # padded cols -> 0
    # new_node.f_init([h_G_init, node_type[:-1]]); class 114 row is zero-padded
    new_emb = (mm(h_GI, wA(hb + ND)) + mm(probs, wA(hb + 2 * ND))
               + bias(B_HEAD_BASE + 1))
    # f_addedge([h_G, new_node_embedding]): log_softmax over 2 classes
    ae_logp = _log_softmax(mm(h_G, wA(hb + 3 * ND)) + mm(new_emb, wA(hb + 4 * ND))
                           + bias(B_HEAD_BASE + 2), 2)
    # f_nodes(temp = x_RI, new_node_embedding): per-row log_softmax over 20
    sc_logp = _log_softmax(mm(x_RI, wA(hb + 5 * ND)) + mm(new_emb, wA(hb + 6 * ND))
                           + bias(B_HEAD_BASE + 3), ET)

    # ---------------- per-step log-prob delta (all in-kernel) ----------------
    lane = jax.lax.broadcasted_iota(jnp.int32, (1, ND), 1)
    nt_term = jnp.sum(jnp.where(lane == nt_idx, nt_logp, 0.0))
    ae0 = jnp.sum(jnp.where(lane == 0, ae_logp, 0.0))
    ae1 = jnp.sum(jnp.where(lane == 1, ae_logp, 0.0))

    rows = jax.lax.broadcasted_iota(jnp.int32, (V_MAX, ND), 0)
    cols = jax.lax.broadcasted_iota(jnp.int32, (V_MAX, ND), 1)
    edge_sum = jnp.zeros((), f32)
    for j in range(E_STEP_MAX):
        uj = u_tab[s, j]
        tj = t_tab[s, j]
        hit = jnp.sum(jnp.where((rows == uj) & (cols == tj), sc_logp, 0.0))
        edge_sum = edge_sum + jnp.where(j < n_se, ae0 + hit, 0.0)

    stop_term = jnp.where(s == last, 0.0, ae1)        # final STOP step: nt term only
    lp = lp_sc[...] + (nt_term + stop_term + edge_sum)
    lp_sc[...] = lp
    logp_ref[...] = lp                                 # lane-replicated running sum

    # carry node states; append raw embedding of the newly added node at row n_nodes
    vb_rows = jax.lax.broadcasted_iota(jnp.int32, (bx_ref.shape[0], 1), 0)
    new_row = jnp.sum(jnp.where(vb_rows == new_id, bx_ref[...], 0.0),
                      axis=0, keepdims=True)           # exact gather of batch.x row
    v_rows = jax.lax.broadcasted_iota(jnp.int32, (V_MAX, 1), 0)
    x_sc[...] = jnp.where(v_rows == n_nodes, new_row, x_RI)


def _run_generation(kp, tables, x_init, bx_pad, ea_full, g_src, g_dst, g_dst_t):
    s_total = int(tables["nn"].shape[0])
    vb = int(bx_pad.shape[0])
    cmap = lambda s, *_: (0, 0)      # constant block index -> weights resident in VMEM

    grid_spec = pltpu.PrefetchScalarGridSpec(
        num_scalar_prefetch=7,
        grid=(s_total,),
        in_specs=[
            pl.BlockSpec((V_MAX, ND), cmap),           # x_init
            pl.BlockSpec((vb, ND), cmap),              # batch_x (padded rows)
            pl.BlockSpec((E_MAX, ND), cmap),           # edge attrs (47 -> 128 lanes)
            pl.BlockSpec((E_MAX, V_MAX), cmap),        # source one-hots
            pl.BlockSpec((E_MAX, V_MAX), cmap),        # target one-hots
            pl.BlockSpec((V_MAX, E_MAX), cmap),        # target one-hots, transposed
            pl.BlockSpec((WA_ROWS, ND), cmap),         # bf16 weight slab A (128-wide)
            pl.BlockSpec((WB_ROWS, 4 * ND), cmap),     # bf16 weight slab B (LSTM, 512-wide)
            pl.BlockSpec((NB_ROWS, ND), cmap),         # f32 bias slab
        ],
        out_specs=pl.BlockSpec((1, ND), cmap),
        scratch_shapes=[pltpu.VMEM((V_MAX, ND), jnp.float32),   # carried node states
                        pltpu.VMEM((1, ND), jnp.float32)],      # log_p accumulator
    )
    cost = pl.CostEstimate(flops=16_000_000 * s_total,
                           transcendentals=20_000 * s_total,
                           bytes_accessed=2_300_000 + 8_192 * s_total)
    out = pl.pallas_call(
        _gen_kernel,
        out_shape=jax.ShapeDtypeStruct((1, ND), jnp.float32),
        grid_spec=grid_spec,
        compiler_params=pltpu.CompilerParams(
            dimension_semantics=("arbitrary",),
            vmem_limit_bytes=32 * 1024 * 1024),
        cost_estimate=cost,
    )(tables["nn"], tables["ne"], tables["nt"], tables["nid"], tables["nse"],
      tables["u"], tables["t"],
      x_init, bx_pad, ea_full, g_src, g_dst, g_dst_t,
      kp["wa"], kp["wb"], kp["bs"])
    return out


# ----------------------------- parameter init -------------------------------

def _uniform(key, shape, bound):
    return jax.random.uniform(key, shape, jnp.float32, -bound, bound)


def init_linear(key, in_dim, out_dim):
    k1, k2 = jax.random.split(key)
    bound = 1.0 / float(np.sqrt(in_dim))
    return {"w": _uniform(k1, (in_dim, out_dim), bound),    # stored pre-transposed
            "b": _uniform(k2, (1, out_dim), bound)}


def init_lstm(key, in_dim, hid):
    ks = jax.random.split(key, 4)
    bound = 1.0 / float(np.sqrt(hid))
    return {"wih": _uniform(ks[0], (in_dim, 4 * hid), bound),
            "whh": _uniform(ks[1], (hid, 4 * hid), bound),
            "bih": _uniform(ks[2], (1, 4 * hid), bound),
            "bhh": _uniform(ks[3], (1, 4 * hid), bound)}


def init_graph_rep(key, nd, ed, gd, prop_steps):
    keys = jax.random.split(key, prop_steps * 3 + 2)
    mpn, lstm = [], []
    for s in range(prop_steps):
        mpn.append({"l1": init_linear(keys[3 * s + 0], 2 * nd + ed, nd),
                    "l2": init_linear(keys[3 * s + 1], nd, nd)})
        lstm.append(init_lstm(keys[3 * s + 2], nd, nd))
    return {"mpn": mpn, "lstm": lstm,
            "gm": init_linear(keys[-2], nd, gd),
            "fm": init_linear(keys[-1], nd, gd)}


def init_model(key, nd=ND, ed=ED, gd=GD, prop_steps=PROP_STEPS):
    ks = jax.random.split(key, 6)
    return {
        "R": init_graph_rep(ks[0], nd, ed, gd, prop_steps),
        "fan": init_linear(ks[1], gd, NT),
        "fae": init_linear(ks[2], gd + nd, 2),
        "fs": init_linear(ks[3], 2 * nd, ET),
        "new_node": {"R_init": init_graph_rep(ks[4], nd, ed, gd, prop_steps),
                     "f_init": init_linear(ks[5], gd + (NT - 1), nd)},
    }


def pack_params(p):
    """Repack params into two bf16 weight slabs + one f32 bias slab."""
    wa = np.zeros((WA_ROWS, ND), np.float32)
    wb = np.zeros((WB_ROWS, 4 * ND), np.float32)
    bs = np.zeros((NB_ROWS, ND), np.float32)

    def put(dst, r, a):
        a = np.asarray(a, np.float32)
        dst[r:r + a.shape[0], :a.shape[1]] = a

    for rep, gr in enumerate((p["R"], p["new_node"]["R_init"])):
        for st in range(PROP_STEPS):
            k = rep * PROP_STEPS + st
            w1 = np.asarray(gr["mpn"][st]["l1"]["w"])           # [2*ND+ED, ND]
            base = k * WA_MPN_STRIDE
            put(wa, base + 0, w1[0:ND])                         # x_i rows
            put(wa, base + ND, w1[ND:2 * ND])                   # x_j rows
            put(wa, base + 2 * ND, w1[2 * ND:2 * ND + ED])      # edge_attr rows
            put(wa, base + 3 * ND, gr["mpn"][st]["l2"]["w"])
            put(bs, k * B_K_STRIDE + 0, gr["mpn"][st]["l1"]["b"])
            put(bs, k * B_K_STRIDE + 1, gr["mpn"][st]["l2"]["b"])
            put(wb, k * WB_STRIDE + 0, gr["lstm"][st]["wih"])
            put(wb, k * WB_STRIDE + ND, gr["lstm"][st]["whh"])
            lb = (np.asarray(gr["lstm"][st]["bih"]) + np.asarray(gr["lstm"][st]["bhh"]))[0]
            for gi in range(4):                                 # i, f, g, o gate biases
                bs[k * B_K_STRIDE + 2 + gi, :] = lb[gi * ND:(gi + 1) * ND]
        put(wa, WA_GM_BASE + rep * 2 * ND + 0, gr["gm"]["w"])
        put(wa, WA_GM_BASE + rep * 2 * ND + ND, gr["fm"]["w"])
        put(bs, B_GM_BASE + rep * 2 + 0, gr["gm"]["b"])
        put(bs, B_GM_BASE + rep * 2 + 1, gr["fm"]["b"])

    fiw = np.asarray(p["new_node"]["f_init"]["w"])              # [GD+114, ND]
    faw = np.asarray(p["fae"]["w"])                             # [GD+ND, 2]
    fsw = np.asarray(p["fs"]["w"])                              # [2*ND, ET]
    put(wa, WA_HEAD_BASE + 0 * ND, p["fan"]["w"])               # [GD, NT]
    put(wa, WA_HEAD_BASE + 1 * ND, fiw[0:GD])
    put(wa, WA_HEAD_BASE + 2 * ND, fiw[GD:GD + (NT - 1)])       # row 114 stays zero
    put(wa, WA_HEAD_BASE + 3 * ND, faw[0:GD])
    put(wa, WA_HEAD_BASE + 4 * ND, faw[GD:GD + ND])
    put(wa, WA_HEAD_BASE + 5 * ND, fsw[0:ND])
    put(wa, WA_HEAD_BASE + 6 * ND, fsw[ND:2 * ND])
    put(bs, B_HEAD_BASE + 0, p["fan"]["b"])
    put(bs, B_HEAD_BASE + 1, p["new_node"]["f_init"]["b"])
    put(bs, B_HEAD_BASE + 2, p["fae"]["b"])
    put(bs, B_HEAD_BASE + 3, p["fs"]["b"])

    return dict(wa=jnp.asarray(wa, jnp.bfloat16),
                wb=jnp.asarray(wb, jnp.bfloat16),
                bs=jnp.asarray(bs, jnp.float32))


# ----------------------------- model forward --------------------------------

def model_forward(kparams, batch_x, batch_edge_attr, batch_edge_index,
                  node_ordering, edge_ordering):
    """Sequential graph-generation NLL: one fused pallas_call for all steps."""
    bx = np.asarray(batch_x, dtype=np.float32)
    bei = np.asarray(batch_edge_index)
    bea = np.asarray(batch_edge_attr, dtype=np.float32)
    assert bx.shape[1] == ND

    s_total = len(node_ordering)                 # (len-1) add-node steps + 1 STOP step
    nn_tab = np.zeros((s_total,), np.int32)
    ne_tab = np.zeros((s_total,), np.int32)
    nt_tab = np.zeros((s_total,), np.int32)
    nid_tab = np.zeros((s_total,), np.int32)
    nse_tab = np.zeros((s_total,), np.int32)
    u_tab = np.zeros((s_total, E_STEP_MAX), np.int32)
    t_tab = np.zeros((s_total, E_STEP_MAX), np.int32)
    src_full = np.zeros((E_MAX,), np.int32)
    dst_full = np.zeros((E_MAX,), np.int32)
    ea_full = np.zeros((E_MAX, ND), np.float32)

    canonical = {node_ordering[0][0]: 0}
    nxt, n_nodes, n_edges, step = 1, 1, 0, 0
    for edges, node in zip(edge_ordering[1:], node_ordering[1:]):
        canonical[node[0]] = nxt
        nxt += 1
        v = canonical[node[0]]
        assert n_nodes < V_MAX and len(edges) <= E_STEP_MAX
        nn_tab[step], ne_tab[step] = n_nodes, n_edges
        nt_tab[step], nid_tab[step] = node[1] - 1, node[0]
        nse_tab[step] = len(edges)
        for j, edge in enumerate(edges):
            u = canonical[edge[1]] if edge[0] == node[0] else canonical[edge[0]]
            u_tab[step, j], t_tab[step, j] = u, edge[2]
            edge_idx = 0                          # faithful to reference default
            for i_, e_ in enumerate(bei.T):
                if (e_[0] == u and e_[1] == v) or (e_[0] == v and e_[1] == u):
                    edge_idx = i_
                    break
            assert n_edges < E_MAX
            src_full[n_edges] = bei[0, edge_idx]
            dst_full[n_edges] = bei[1, edge_idx]
            ea_full[n_edges, :ED] = bea[edge_idx]
            n_edges += 1
        n_nodes += 1
        step += 1
    # final STOP step: only the f_addnode "don't add node" term contributes
    nn_tab[step], ne_tab[step] = n_nodes, n_edges
    nt_tab[step], nid_tab[step], nse_tab[step] = NT - 1, 0, 0

    assert int(src_full.max(initial=0)) < V_MAX and int(dst_full.max(initial=0)) < V_MAX
    g_src = np.zeros((E_MAX, V_MAX), np.float32)
    g_dst = np.zeros((E_MAX, V_MAX), np.float32)
    g_src[np.arange(E_MAX), src_full] = 1.0
    g_dst[np.arange(E_MAX), dst_full] = 1.0
    g_dst_t = np.ascontiguousarray(g_dst.T)

    vb = max(8, -(-bx.shape[0] // 8) * 8)
    bx_pad = np.zeros((vb, ND), np.float32)
    bx_pad[:bx.shape[0], :] = bx
    x_init = np.zeros((V_MAX, ND), np.float32)
    x_init[0, :] = bx[node_ordering[0][0]]

    tables = dict(nn=jnp.asarray(nn_tab), ne=jnp.asarray(ne_tab),
                  nt=jnp.asarray(nt_tab), nid=jnp.asarray(nid_tab),
                  nse=jnp.asarray(nse_tab), u=jnp.asarray(u_tab),
                  t=jnp.asarray(t_tab))

    out = _run_generation(kparams, tables,
                          jnp.asarray(x_init), jnp.asarray(bx_pad),
                          jnp.asarray(ea_full), jnp.asarray(g_src),
                          jnp.asarray(g_dst), jnp.asarray(g_dst_t))
    return -out[0, 0]


# --------------------------------- main --------------------------------------

if __name__ == "__main__":
    key = jax.random.PRNGKey(0)
    k_param, k_x, k_e = jax.random.split(key, 3)

    params = init_model(k_param)
    kparams = pack_params(params)

    # Synthetic graph batch: 3 nodes, 4 directed edges.
    V, E = 3, 4
    batch_x = jax.random.normal(k_x, (V, ND), jnp.float32)
    batch_edge_attr = np.asarray(jax.random.normal(k_e, (E, ED), jnp.float32))
    batch_edge_index = np.array([[0, 1, 1, 2],
                                 [1, 0, 2, 1]], dtype=np.int64)

    # Generation sequence: (node_id, node_type) and per-node edge lists (u, v, edge_type).
    node_ordering = [(0, 5), (1, 3), (2, 7)]
    edge_ordering = [[], [(1, 0, 2)], [(2, 1, 5)]]

    nll = model_forward(kparams, np.asarray(batch_x), batch_edge_attr,
                        batch_edge_index, node_ordering, edge_ordering)
    nll = jax.block_until_ready(nll)
    assert np.isfinite(float(nll))
    print("KERNEL_OK")
</pallas_src>

<mosaic_0001>
module attributes {stable_mosaic.version = 11 : i64} {
  func.func @_gen_kernel(%arg0: i32, %arg1: memref<3xi32, #tpu.memory_space<smem>>, %arg2: memref<3xi32, #tpu.memory_space<smem>>, %arg3: memref<3xi32, #tpu.memory_space<smem>>, %arg4: memref<3xi32, #tpu.memory_space<smem>>, %arg5: memref<3xi32, #tpu.memory_space<smem>>, %arg6: memref<3x8xi32, #tpu.memory_space<smem>>, %arg7: memref<3x8xi32, #tpu.memory_space<smem>>, %arg8: memref<8x128xf32, #tpu.memory_space<vmem>>, %arg9: memref<8x128xf32, #tpu.memory_space<vmem>>, %arg10: memref<8x128xf32, #tpu.memory_space<vmem>>, %arg11: memref<8x8xf32, #tpu.memory_space<vmem>>, %arg12: memref<8x8xf32, #tpu.memory_space<vmem>>, %arg13: memref<8x8xf32, #tpu.memory_space<vmem>>, %arg14: memref<3456x128xbf16, #tpu.memory_space<vmem>>, %arg15: memref<1024x512xbf16, #tpu.memory_space<vmem>>, %arg16: memref<32x128xf32, #tpu.memory_space<vmem>>, %arg17: memref<1x128xf32, #tpu.memory_space<vmem>>, %arg18: memref<8x128xf32, #tpu.memory_space<vmem>>, %arg19: memref<1x128xf32, #tpu.memory_space<vmem>>) attributes {dimension_semantics = [#tpu.dimension_semantics<arbitrary>], iteration_bounds = array<i64: 3>, scalar_prefetch = 7 : i64, scratch_operands = 2 : i64, tpu.core_type = #tpu.core_type<tc>, window_params = [{pipeline_mode = #tpu.pipeline_mode<synchronous>, transform_indices = @transform_0, window_bounds = array<i64: 8, 128>}, {pipeline_mode = #tpu.pipeline_mode<synchronous>, transform_indices = @transform_1, window_bounds = array<i64: 8, 128>}, {pipeline_mode = #tpu.pipeline_mode<synchronous>, transform_indices = @transform_2, window_bounds = array<i64: 8, 128>}, {pipeline_mode = #tpu.pipeline_mode<synchronous>, transform_indices = @transform_3, window_bounds = array<i64: 8, 8>}, {pipeline_mode = #tpu.pipeline_mode<synchronous>, transform_indices = @transform_4, window_bounds = array<i64: 8, 8>}, {pipeline_mode = #tpu.pipeline_mode<synchronous>, transform_indices = @transform_5, window_bounds = array<i64: 8, 8>}, {pipeline_mode = #tpu.pipeline_mode<synchronous>, transform_indices = @transform_6, window_bounds = array<i64: 3456, 128>}, {pipeline_mode = #tpu.pipeline_mode<synchronous>, transform_indices = @transform_7, window_bounds = array<i64: 1024, 512>}, {pipeline_mode = #tpu.pipeline_mode<synchronous>, transform_indices = @transform_8, window_bounds = array<i64: 32, 128>}, {pipeline_mode = #tpu.pipeline_mode<synchronous>, transform_indices = @transform_9, window_bounds = array<i64: 1, 128>}]} {
    %c0_i32 = arith.constant 0 : i32
    %0 = arith.cmpi eq, %arg0, %c0_i32 : i32
    %1 = arith.extui %0 : i1 to i32
    %c0_i32_0 = arith.constant 0 : i32
    %2 = arith.cmpi ne, %1, %c0_i32_0 : i32
    scf.if %2 {
      %c0_229 = arith.constant 0 : index
      %c0_230 = arith.constant 0 : index
      %673 = vector.load %arg8[%c0_229, %c0_230] : memref<8x128xf32, #tpu.memory_space<vmem>>, vector<8x128xf32>
      %c0_231 = arith.constant 0 : index
      %c0_232 = arith.constant 0 : index
      %674 = vector.load %arg18[%c0_231, %c0_232] : memref<8x128xf32, #tpu.memory_space<vmem>>, vector<8x128xf32>
      tpu.vector_store %arg18[%c0_231, %c0_232], %673 {strides = array<i32>} : memref<8x128xf32, #tpu.memory_space<vmem>>, vector<8x128xf32>,
      %cst_233 = arith.constant 0.000000e+00 : f32
      %675 = vector.broadcast %cst_233 : f32 to vector<1x128xf32>
      %c0_234 = arith.constant 0 : index
      %c0_235 = arith.constant 0 : index
      %676 = vector.load %arg19[%c0_234, %c0_235] : memref<1x128xf32, #tpu.memory_space<vmem>>, vector<1x128xf32>
      tpu.vector_store %arg19[%c0_234, %c0_235], %675 {strides = array<i32>} : memref<1x128xf32, #tpu.memory_space<vmem>>, vector<1x128xf32>,
    } else {
    }
    %3 = arith.index_cast %arg0 : i32 to index
    %4 = memref.load %arg1[%3] : memref<3xi32, #tpu.memory_space<smem>>
    %5 = arith.index_cast %arg0 : i32 to index
    %6 = memref.load %arg2[%5] : memref<3xi32, #tpu.memory_space<smem>>
    %7 = arith.index_cast %arg0 : i32 to index
    %8 = memref.load %arg3[%7] : memref<3xi32, #tpu.memory_space<smem>>
    %9 = arith.index_cast %arg0 : i32 to index
    %10 = memref.load %arg4[%9] : memref<3xi32, #tpu.memory_space<smem>>
    %11 = arith.index_cast %arg0 : i32 to index
    %12 = memref.load %arg5[%11] : memref<3xi32, #tpu.memory_space<smem>>
    %13 = tpu.iota {dimensions = array<i32: 0>} : vector<8x1xi32>
    %14 = vector.broadcast %6 : i32 to vector<8x1xi32>
    %15 = arith.cmpi slt, %13, %14 : vector<8x1xi32>
    %16 = arith.extui %15 : vector<8x1xi1> to vector<8x1xi32>
    %17 = arith.sitofp %16 : vector<8x1xi32> to vector<8x1xf32>
    %18 = tpu.iota {dimensions = array<i32: 0>} : vector<8x1xi32>
    %19 = vector.broadcast %4 : i32 to vector<8x1xi32>
    %20 = arith.cmpi slt, %18, %19 : vector<8x1xi32>
    %21 = arith.extui %20 : vector<8x1xi1> to vector<8x1xi32>
    %22 = arith.sitofp %21 : vector<8x1xi32> to vector<8x1xf32>
    %c0 = arith.constant 0 : index
    %c0_1 = arith.constant 0 : index
    %23 = vector.load %arg11[%c0, %c0_1] : memref<8x8xf32, #tpu.memory_space<vmem>>, vector<8x8xf32>
    %24 = vector.broadcast %17 : vector<8x1xf32> to vector<8x8xf32>
    %25 = arith.mulf %23, %24 : vector<8x8xf32>
    %c0_2 = arith.constant 0 : index
    %c0_3 = arith.constant 0 : index
    %26 = vector.load %arg12[%c0_2, %c0_3] : memref<8x8xf32, #tpu.memory_space<vmem>>, vector<8x8xf32>
    %27 = vector.broadcast %17 : vector<8x1xf32> to vector<8x8xf32>
    %28 = arith.mulf %26, %27 : vector<8x8xf32>
    %c0_4 = arith.constant 0 : index
    %c0_5 = arith.constant 0 : index
    %29 = vector.load %arg13[%c0_4, %c0_5] : memref<8x8xf32, #tpu.memory_space<vmem>>, vector<8x8xf32>
    %c0_6 = arith.constant 0 : index
    %c0_7 = arith.constant 0 : index
    %30 = vector.load %arg10[%c0_6, %c0_7] : memref<8x128xf32, #tpu.memory_space<vmem>>, vector<8x128xf32>
    %c0_8 = arith.constant 0 : index
    %c0_9 = arith.constant 0 : index
    %31 = vector.load %arg18[%c0_8, %c0_9] : memref<8x128xf32, #tpu.memory_space<vmem>>, vector<8x128xf32>
    %cst = arith.constant 0.000000e+00 : f32
    %32 = vector.broadcast %cst : f32 to vector<8x128xf32>
    %33 = arith.truncf %28 : vector<8x8xf32> to vector<8x8xbf16>
    %34 = arith.truncf %31 : vector<8x128xf32> to vector<8x128xbf16>
    %cst_10 = arith.constant dense<0.000000e+00> : vector<8x128xf32>
    %35 = tpu.matmul %33, %34, %cst_10 {dimension_numbers = #tpu.dot_dimension_numbers<[1], [0], [0], [1], [0, 0, 1, 1], [], []>} : vector<8x8xbf16>, vector<8x128xbf16>, vector<8x128xf32> -> vector<8x128xf32>
    %36 = arith.truncf %25 : vector<8x8xf32> to vector<8x8xbf16>
    %37 = arith.truncf %31 : vector<8x128xf32> to vector<8x128xbf16>
    %cst_11 = arith.constant dense<0.000000e+00> : vector<8x128xf32>
    %38 = tpu.matmul %36, %37, %cst_11 {dimension_numbers = #tpu.dot_dimension_numbers<[1], [0], [0], [1], [0, 0, 1, 1], [], []>} : vector<8x8xbf16>, vector<8x128xbf16>, vector<8x128xf32> -> vector<8x128xf32>
    %c0_12 = arith.constant 0 : index
    %c0_13 = arith.constant 0 : index
    %39 = vector.load %arg14[%c0_12, %c0_13] : memref<3456x128xbf16, #tpu.memory_space<vmem>>, vector<128x128xbf16>
    %40 = arith.truncf %35 : vector<8x128xf32> to vector<8x128xbf16>
    %cst_14 = arith.constant dense<0.000000e+00> : vector<8x128xf32>
    %41 = tpu.matmul %40, %39, %cst_14 {dimension_numbers = #tpu.dot_dimension_numbers<[1], [0], [0], [1], [0, 0, 1, 1], [], []>} : vector<8x128xbf16>, vector<128x128xbf16>, vector<8x128xf32> -> vector<8x128xf32>
    %c128 = arith.constant 128 : index
    %c0_15 = arith.constant 0 : index
    %42 = vector.load %arg14[%c128, %c0_15] : memref<3456x128xbf16, #tpu.memory_space<vmem>>, vector<128x128xbf16>
    %43 = arith.truncf %38 : vector<8x128xf32> to vector<8x128xbf16>
    %cst_16 = arith.constant dense<0.000000e+00> : vector<8x128xf32>
    %44 = tpu.matmul %43, %42, %cst_16 {dimension_numbers = #tpu.dot_dimension_numbers<[1], [0], [0], [1], [0, 0, 1, 1], [], []>} : vector<8x128xbf16>, vector<128x128xbf16>, vector<8x128xf32> -> vector<8x128xf32>
    %45 = arith.addf %41, %44 : vector<8x128xf32>
    %c256 = arith.constant 256 : index
    %c0_17 = arith.constant 0 : index
    %46 = vector.load %arg14[%c256, %c0_17] : memref<3456x128xbf16, #tpu.memory_space<vmem>>, vector<128x128xbf16>
    %47 = arith.truncf %30 : vector<8x128xf32> to vector<8x128xbf16>
    %cst_18 = arith.constant dense<0.000000e+00> : vector<8x128xf32>
    %48 = tpu.matmul %47, %46, %cst_18 {dimension_numbers = #tpu.dot_dimension_numbers<[1], [0], [0], [1], [0, 0, 1, 1], [], []>} : vector<8x128xbf16>, vector<128x128xbf16>, vector<8x128xf32> -> vector<8x128xf32>
    %49 = arith.addf %45, %48 : vector<8x128xf32>
    %c0_19 = arith.constant 0 : index
    %c0_20 = arith.constant 0 : index
    %50 = vector.load %arg16[%c0_19, %c0_20] : memref<32x128xf32, #tpu.memory_space<vmem>>, vector<1x128xf32>
    %51 = vector.broadcast %50 : vector<1x128xf32> to vector<8x128xf32>
    %52 = arith.addf %49, %51 : vector<8x128xf32>
    %cst_21 = arith.constant 0.000000e+00 : f32
    %53 = vector.broadcast %cst_21 : f32 to vector<8x128xf32>
    %54 = arith.maximumf %52, %53 : vector<8x128xf32>
    %c384 = arith.constant 384 : index
    %c0_22 = arith.constant 0 : index
    %55 = vector.load %arg14[%c384, %c0_22] : memref<3456x128xbf16, #tpu.memory_space<vmem>>, vector<128x128xbf16>
    %56 = arith.truncf %54 : vector<8x128xf32> to vector<8x128xbf16>
    %cst_23 = arith.constant dense<0.000000e+00> : vector<8x128xf32>
    %57 = tpu.matmul %56, %55, %cst_23 {dimension_numbers = #tpu.dot_dimension_numbers<[1], [0], [0], [1], [0, 0, 1, 1], [], []>} : vector<8x128xbf16>, vector<128x128xbf16>, vector<8x128xf32> -> vector<8x128xf32>
    %c1 = arith.constant 1 : index
    %c0_24 = arith.constant 0 : index
    %58 = vector.load %arg16[%c1, %c0_24] : memref<32x128xf32, #tpu.memory_space<vmem>>, vector<1x128xf32>
    %59 = vector.broadcast %58 : vector<1x128xf32> to vector<8x128xf32>
    %60 = arith.addf %57, %59 : vector<8x128xf32>
    %61 = vector.broadcast %17 : vector<8x1xf32> to vector<8x128xf32>
    %62 = arith.mulf %60, %61 : vector<8x128xf32>
    %63 = arith.truncf %29 : vector<8x8xf32> to vector<8x8xbf16>
    %64 = arith.truncf %62 : vector<8x128xf32> to vector<8x128xbf16>
    %cst_25 = arith.constant dense<0.000000e+00> : vector<8x128xf32>
    %65 = tpu.matmul %63, %64, %cst_25 {dimension_numbers = #tpu.dot_dimension_numbers<[1], [0], [0], [1], [0, 0, 1, 1], [], []>} : vector<8x8xbf16>, vector<8x128xbf16>, vector<8x128xf32> -> vector<8x128xf32>
    %c0_26 = arith.constant 0 : index
    %c0_27 = arith.constant 0 : index
    %66 = vector.load %arg15[%c0_26, %c0_27] : memref<1024x512xbf16, #tpu.memory_space<vmem>>, vector<128x512xbf16>
    %67 = arith.truncf %31 : vector<8x128xf32> to vector<8x128xbf16>
    %cst_28 = arith.constant dense<0.000000e+00> : vector<8x512xf32>
    %68 = tpu.matmul %67, %66, %cst_28 {dimension_numbers = #tpu.dot_dimension_numbers<[1], [0], [0], [1], [0, 0, 1, 1], [], []>} : vector<8x128xbf16>, vector<128x512xbf16>, vector<8x512xf32> -> vector<8x512xf32>
    %c128_29 = arith.constant 128 : index
    %c0_30 = arith.constant 0 : index
    %69 = vector.load %arg15[%c128_29, %c0_30] : memref<1024x512xbf16, #tpu.memory_space<vmem>>, vector<128x512xbf16>
    %70 = arith.truncf %65 : vector<8x128xf32> to vector<8x128xbf16>
    %cst_31 = arith.constant dense<0.000000e+00> : vector<8x512xf32>
    %71 = tpu.matmul %70, %69, %cst_31 {dimension_numbers = #tpu.dot_dimension_numbers<[1], [0], [0], [1], [0, 0, 1, 1], [], []>} : vector<8x128xbf16>, vector<128x512xbf16>, vector<8x512xf32> -> vector<8x512xf32>
    %72 = arith.addf %68, %71 : vector<8x512xf32>
    %73 = vector.extract_strided_slice %72 {offsets = [0, 0], sizes = [8, 128], strides = [1, 1]} : vector<8x512xf32> to vector<8x128xf32>
    %c2 = arith.constant 2 : index
    %c0_32 = arith.constant 0 : index
    %74 = vector.load %arg16[%c2, %c0_32] : memref<32x128xf32, #tpu.memory_space<vmem>>, vector<1x128xf32>
    %75 = vector.broadcast %74 : vector<1x128xf32> to vector<8x128xf32>
    %76 = arith.addf %73, %75 : vector<8x128xf32>
    %77 = arith.negf %76 : vector<8x128xf32>
    %78 = math.exp %77 : vector<8x128xf32>
    %cst_33 = arith.constant 1.000000e+00 : f32
    %79 = vector.broadcast %cst_33 : f32 to vector<8x128xf32>
    %80 = arith.addf %79, %78 : vector<8x128xf32>
    %81 = arith.divf %79, %80 : vector<8x128xf32>
    %82 = vector.extract_strided_slice %72 {offsets = [0, 128], sizes = [8, 128], strides = [1, 1]} : vector<8x512xf32> to vector<8x128xf32>
    %c3 = arith.constant 3 : index
    %c0_34 = arith.constant 0 : index
    %83 = vector.load %arg16[%c3, %c0_34] : memref<32x128xf32, #tpu.memory_space<vmem>>, vector<1x128xf32>
    %84 = vector.broadcast %83 : vector<1x128xf32> to vector<8x128xf32>
    %85 = arith.addf %82, %84 : vector<8x128xf32>
    %86 = arith.negf %85 : vector<8x128xf32>
    %87 = math.exp %86 : vector<8x128xf32>
    %cst_35 = arith.constant 1.000000e+00 : f32
    %88 = vector.broadcast %cst_35 : f32 to vector<8x128xf32>
    %89 = arith.addf %88, %87 : vector<8x128xf32>
    %90 = arith.divf %88, %89 : vector<8x128xf32>
    %91 = vector.extract_strided_slice %72 {offsets = [0, 256], sizes = [8, 128], strides = [1, 1]} : vector<8x512xf32> to vector<8x128xf32>
    %c4 = arith.constant 4 : index
    %c0_36 = arith.constant 0 : index
    %92 = vector.load %arg16[%c4, %c0_36] : memref<32x128xf32, #tpu.memory_space<vmem>>, vector<1x128xf32>
    %93 = vector.broadcast %92 : vector<1x128xf32> to vector<8x128xf32>
    %94 = arith.addf %91, %93 : vector<8x128xf32>
    %95 = math.tanh %94 : vector<8x128xf32>
    %96 = vector.extract_strided_slice %72 {offsets = [0, 384], sizes = [8, 128], strides = [1, 1]} : vector<8x512xf32> to vector<8x128xf32>
    %c5 = arith.constant 5 : index
    %c0_37 = arith.constant 0 : index
    %97 = vector.load %arg16[%c5, %c0_37] : memref<32x128xf32, #tpu.memory_space<vmem>>, vector<1x128xf32>
    %98 = vector.broadcast %97 : vector<1x128xf32> to vector<8x128xf32>
    %99 = arith.addf %96, %98 : vector<8x128xf32>
    %100 = arith.negf %99 : vector<8x128xf32>
    %101 = math.exp %100 : vector<8x128xf32>
    %cst_38 = arith.constant 1.000000e+00 : f32
    %102 = vector.broadcast %cst_38 : f32 to vector<8x128xf32>
    %103 = arith.addf %102, %101 : vector<8x128xf32>
    %104 = arith.divf %102, %103 : vector<8x128xf32>
    %105 = arith.mulf %90, %32 : vector<8x128xf32>
    %106 = arith.mulf %81, %95 : vector<8x128xf32>
    %107 = arith.addf %105, %106 : vector<8x128xf32>
    %108 = math.tanh %107 : vector<8x128xf32>
    %109 = arith.mulf %104, %108 : vector<8x128xf32>
    %110 = arith.truncf %28 : vector<8x8xf32> to vector<8x8xbf16>
    %111 = arith.truncf %109 : vector<8x128xf32> to vector<8x128xbf16>
    %cst_39 = arith.constant dense<0.000000e+00> : vector<8x128xf32>
    %112 = tpu.matmul %110, %111, %cst_39 {dimension_numbers = #tpu.dot_dimension_numbers<[1], [0], [0], [1], [0, 0, 1, 1], [], []>} : vector<8x8xbf16>, vector<8x128xbf16>, vector<8x128xf32> -> vector<8x128xf32>
    %113 = arith.truncf %25 : vector<8x8xf32> to vector<8x8xbf16>
    %114 = arith.truncf %109 : vector<8x128xf32> to vector<8x128xbf16>
    %cst_40 = arith.constant dense<0.000000e+00> : vector<8x128xf32>
    %115 = tpu.matmul %113, %114, %cst_40 {dimension_numbers = #tpu.dot_dimension_numbers<[1], [0], [0], [1], [0, 0, 1, 1], [], []>} : vector<8x8xbf16>, vector<8x128xbf16>, vector<8x128xf32> -> vector<8x128xf32>
    %c512 = arith.constant 512 : index
    %c0_41 = arith.constant 0 : index
    %116 = vector.load %arg14[%c512, %c0_41] : memref<3456x128xbf16, #tpu.memory_space<vmem>>, vector<128x128xbf16>
    %117 = arith.truncf %112 : vector<8x128xf32> to vector<8x128xbf16>
    %cst_42 = arith.constant dense<0.000000e+00> : vector<8x128xf32>
    %118 = tpu.matmul %117, %116, %cst_42 {dimension_numbers = #tpu.dot_dimension_numbers<[1], [0], [0], [1], [0, 0, 1, 1], [], []>} : vector<8x128xbf16>, vector<128x128xbf16>, vector<8x128xf32> -> vector<8x128xf32>
    %c640 = arith.constant 640 : index
    %c0_43 = arith.constant 0 : index
    %119 = vector.load %arg14[%c640, %c0_43] : memref<3456x128xbf16, #tpu.memory_space<vmem>>, vector<128x128xbf16>
    %120 = arith.truncf %115 : vector<8x128xf32> to vector<8x128xbf16>
    %cst_44 = arith.constant dense<0.000000e+00> : vector<8x128xf32>
    %121 = tpu.matmul %120, %119, %cst_44 {dimension_numbers = #tpu.dot_dimension_numbers<[1], [0], [0], [1], [0, 0, 1, 1], [], []>} : vector<8x128xbf16>, vector<128x128xbf16>, vector<8x128xf32> -> vector<8x128xf32>
    %122 = arith.addf %118, %121 : vector<8x128xf32>
    %c768 = arith.constant 768 : index
    %c0_45 = arith.constant 0 : index
    %123 = vector.load %arg14[%c768, %c0_45] : memref<3456x128xbf16, #tpu.memory_space<vmem>>, vector<128x128xbf16>
    %124 = arith.truncf %30 : vector<8x128xf32> to vector<8x128xbf16>
    %cst_46 = arith.constant dense<0.000000e+00> : vector<8x128xf32>
    %125 = tpu.matmul %124, %123, %cst_46 {dimension_numbers = #tpu.dot_dimension_numbers<[1], [0], [0], [1], [0, 0, 1, 1], [], []>} : vector<8x128xbf16>, vector<128x128xbf16>, vector<8x128xf32> -> vector<8x128xf32>
    %126 = arith.addf %122, %125 : vector<8x128xf32>
    %c6 = arith.constant 6 : index
    %c0_47 = arith.constant 0 : index
    %127 = vector.load %arg16[%c6, %c0_47] : memref<32x128xf32, #tpu.memory_space<vmem>>, vector<1x128xf32>
    %128 = vector.broadcast %127 : vector<1x128xf32> to vector<8x128xf32>
    %129 = arith.addf %126, %128 : vector<8x128xf32>
    %cst_48 = arith.constant 0.000000e+00 : f32
    %130 = vector.broadcast %cst_48 : f32 to vector<8x128xf32>
    %131 = arith.maximumf %129, %130 : vector<8x128xf32>
    %c896 = arith.constant 896 : index
    %c0_49 = arith.constant 0 : index
    %132 = vector.load %arg14[%c896, %c0_49] : memref<3456x128xbf16, #tpu.memory_space<vmem>>, vector<128x128xbf16>
    %133 = arith.truncf %131 : vector<8x128xf32> to vector<8x128xbf16>
    %cst_50 = arith.constant dense<0.000000e+00> : vector<8x128xf32>
    %134 = tpu.matmul %133, %132, %cst_50 {dimension_numbers = #tpu.dot_dimension_numbers<[1], [0], [0], [1], [0, 0, 1, 1], [], []>} : vector<8x128xbf16>, vector<128x128xbf16>, vector<8x128xf32> -> vector<8x128xf32>
    %c7 = arith.constant 7 : index
    %c0_51 = arith.constant 0 : index
    %135 = vector.load %arg16[%c7, %c0_51] : memref<32x128xf32, #tpu.memory_space<vmem>>, vector<1x128xf32>
    %136 = vector.broadcast %135 : vector<1x128xf32> to vector<8x128xf32>
    %137 = arith.addf %134, %136 : vector<8x128xf32>
    %138 = vector.broadcast %17 : vector<8x1xf32> to vector<8x128xf32>
    %139 = arith.mulf %137, %138 : vector<8x128xf32>
    %140 = arith.truncf %29 : vector<8x8xf32> to vector<8x8xbf16>
    %141 = arith.truncf %139 : vector<8x128xf32> to vector<8x128xbf16>
    %cst_52 = arith.constant dense<0.000000e+00> : vector<8x128xf32>
    %142 = tpu.matmul %140, %141, %cst_52 {dimension_numbers = #tpu.dot_dimension_numbers<[1], [0], [0], [1], [0, 0, 1, 1], [], []>} : vector<8x8xbf16>, vector<8x128xbf16>, vector<8x128xf32> -> vector<8x128xf32>
    %c256_53 = arith.constant 256 : index
    %c0_54 = arith.constant 0 : index
    %143 = vector.load %arg15[%c256_53, %c0_54] : memref<1024x512xbf16, #tpu.memory_space<vmem>>, vector<128x512xbf16>
    %144 = arith.truncf %109 : vector<8x128xf32> to vector<8x128xbf16>
    %cst_55 = arith.constant dense<0.000000e+00> : vector<8x512xf32>
    %145 = tpu.matmul %144, %143, %cst_55 {dimension_numbers = #tpu.dot_dimension_numbers<[1], [0], [0], [1], [0, 0, 1, 1], [], []>} : vector<8x128xbf16>, vector<128x512xbf16>, vector<8x512xf32> -> vector<8x512xf32>
    %c384_56 = arith.constant 384 : index
    %c0_57 = arith.constant 0 : index
    %146 = vector.load %arg15[%c384_56, %c0_57] : memref<1024x512xbf16, #tpu.memory_space<vmem>>, vector<128x512xbf16>
    %147 = arith.truncf %142 : vector<8x128xf32> to vector<8x128xbf16>
    %cst_58 = arith.constant dense<0.000000e+00> : vector<8x512xf32>
    %148 = tpu.matmul %147, %146, %cst_58 {dimension_numbers = #tpu.dot_dimension_numbers<[1], [0], [0], [1], [0, 0, 1, 1], [], []>} : vector<8x128xbf16>, vector<128x512xbf16>, vector<8x512xf32> -> vector<8x512xf32>
    %149 = arith.addf %145, %148 : vector<8x512xf32>
    %150 = vector.extract_strided_slice %149 {offsets = [0, 0], sizes = [8, 128], strides = [1, 1]} : vector<8x512xf32> to vector<8x128xf32>
    %c8 = arith.constant 8 : index
    %c0_59 = arith.constant 0 : index
    %151 = vector.load %arg16[%c8, %c0_59] : memref<32x128xf32, #tpu.memory_space<vmem>>, vector<1x128xf32>
    %152 = vector.broadcast %151 : vector<1x128xf32> to vector<8x128xf32>
    %153 = arith.addf %150, %152 : vector<8x128xf32>
    %154 = arith.negf %153 : vector<8x128xf32>
    %155 = math.exp %154 : vector<8x128xf32>
    %cst_60 = arith.constant 1.000000e+00 : f32
    %156 = vector.broadcast %cst_60 : f32 to vector<8x128xf32>
    %157 = arith.addf %156, %155 : vector<8x128xf32>
    %158 = arith.divf %156, %157 : vector<8x128xf32>
    %159 = vector.extract_strided_slice %149 {offsets = [0, 128], sizes = [8, 128], strides = [1, 1]} : vector<8x512xf32> to vector<8x128xf32>
    %c9 = arith.constant 9 : index
    %c0_61 = arith.constant 0 : index
    %160 = vector.load %arg16[%c9, %c0_61] : memref<32x128xf32, #tpu.memory_space<vmem>>, vector<1x128xf32>
    %161 = vector.broadcast %160 : vector<1x128xf32> to vector<8x128xf32>
    %162 = arith.addf %159, %161 : vector<8x128xf32>
    %163 = arith.negf %162 : vector<8x128xf32>
    %164 = math.exp %163 : vector<8x128xf32>
    %cst_62 = arith.constant 1.000000e+00 : f32
    %165 = vector.broadcast %cst_62 : f32 to vector<8x128xf32>
    %166 = arith.addf %165, %164 : vector<8x128xf32>
    %167 = arith.divf %165, %166 : vector<8x128xf32>
    %168 = vector.extract_strided_slice %149 {offsets = [0, 256], sizes = [8, 128], strides = [1, 1]} : vector<8x512xf32> to vector<8x128xf32>
    %c10 = arith.constant 10 : index
    %c0_63 = arith.constant 0 : index
    %169 = vector.load %arg16[%c10, %c0_63] : memref<32x128xf32, #tpu.memory_space<vmem>>, vector<1x128xf32>
    %170 = vector.broadcast %169 : vector<1x128xf32> to vector<8x128xf32>
    %171 = arith.addf %168, %170 : vector<8x128xf32>
    %172 = math.tanh %171 : vector<8x128xf32>
    %173 = vector.extract_strided_slice %149 {offsets = [0, 384], sizes = [8, 128], strides = [1, 1]} : vector<8x512xf32> to vector<8x128xf32>
    %c11 = arith.constant 11 : index
    %c0_64 = arith.constant 0 : index
    %174 = vector.load %arg16[%c11, %c0_64] : memref<32x128xf32, #tpu.memory_space<vmem>>, vector<1x128xf32>
    %175 = vector.broadcast %174 : vector<1x128xf32> to vector<8x128xf32>
    %176 = arith.addf %173, %175 : vector<8x128xf32>
    %177 = arith.negf %176 : vector<8x128xf32>
    %178 = math.exp %177 : vector<8x128xf32>
    %cst_65 = arith.constant 1.000000e+00 : f32
    %179 = vector.broadcast %cst_65 : f32 to vector<8x128xf32>
    %180 = arith.addf %179, %178 : vector<8x128xf32>
    %181 = arith.divf %179, %180 : vector<8x128xf32>
    %182 = arith.mulf %167, %107 : vector<8x128xf32>
    %183 = arith.mulf %158, %172 : vector<8x128xf32>
    %184 = arith.addf %182, %183 : vector<8x128xf32>
    %185 = math.tanh %184 : vector<8x128xf32>
    %186 = arith.mulf %181, %185 : vector<8x128xf32>
    %c2048 = arith.constant 2048 : index
    %c0_66 = arith.constant 0 : index
    %187 = vector.load %arg14[%c2048, %c0_66] : memref<3456x128xbf16, #tpu.memory_space<vmem>>, vector<128x128xbf16>
    %188 = arith.truncf %186 : vector<8x128xf32> to vector<8x128xbf16>
    %cst_67 = arith.constant dense<0.000000e+00> : vector<8x128xf32>
    %189 = tpu.matmul %188, %187, %cst_67 {dimension_numbers = #tpu.dot_dimension_numbers<[1], [0], [0], [1], [0, 0, 1, 1], [], []>} : vector<8x128xbf16>, vector<128x128xbf16>, vector<8x128xf32> -> vector<8x128xf32>
    %c24 = arith.constant 24 : index
    %c0_68 = arith.constant 0 : index
    %190 = vector.load %arg16[%c24, %c0_68] : memref<32x128xf32, #tpu.memory_space<vmem>>, vector<1x128xf32>
    %191 = vector.broadcast %190 : vector<1x128xf32> to vector<8x128xf32>
    %192 = arith.addf %189, %191 : vector<8x128xf32>
    %193 = arith.negf %192 : vector<8x128xf32>
    %194 = math.exp %193 : vector<8x128xf32>
    %cst_69 = arith.constant 1.000000e+00 : f32
    %195 = vector.broadcast %cst_69 : f32 to vector<8x128xf32>
    %196 = arith.addf %195, %194 : vector<8x128xf32>
    %197 = arith.divf %195, %196 : vector<8x128xf32>
    %c2176 = arith.constant 2176 : index
    %c0_70 = arith.constant 0 : index
    %198 = vector.load %arg14[%c2176, %c0_70] : memref<3456x128xbf16, #tpu.memory_space<vmem>>, vector<128x128xbf16>
    %199 = arith.truncf %186 : vector<8x128xf32> to vector<8x128xbf16>
    %cst_71 = arith.constant dense<0.000000e+00> : vector<8x128xf32>
    %200 = tpu.matmul %199, %198, %cst_71 {dimension_numbers = #tpu.dot_dimension_numbers<[1], [0], [0], [1], [0, 0, 1, 1], [], []>} : vector<8x128xbf16>, vector<128x128xbf16>, vector<8x128xf32> -> vector<8x128xf32>
    %c25 = arith.constant 25 : index
    %c0_72 = arith.constant 0 : index
    %201 = vector.load %arg16[%c25, %c0_72] : memref<32x128xf32, #tpu.memory_space<vmem>>, vector<1x128xf32>
    %202 = vector.broadcast %201 : vector<1x128xf32> to vector<8x128xf32>
    %203 = arith.addf %200, %202 : vector<8x128xf32>
    %204 = arith.mulf %197, %203 : vector<8x128xf32>
    %205 = vector.broadcast %22 : vector<8x1xf32> to vector<8x128xf32>
    %206 = arith.mulf %204, %205 : vector<8x128xf32>
    %cst_73 = arith.constant dense<0.000000e+00> : vector<128xf32>
    %207 = vector.multi_reduction <add>, %206, %cst_73 [0] : vector<8x128xf32> to vector<128xf32>
    %208 = vector.shape_cast %207 : vector<128xf32> to vector<1x128xf32>
    %cst_74 = arith.constant 0.000000e+00 : f32
    %209 = vector.broadcast %cst_74 : f32 to vector<8x128xf32>
    %210 = arith.truncf %28 : vector<8x8xf32> to vector<8x8xbf16>
    %211 = arith.truncf %186 : vector<8x128xf32> to vector<8x128xbf16>
    %cst_75 = arith.constant dense<0.000000e+00> : vector<8x128xf32>
    %212 = tpu.matmul %210, %211, %cst_75 {dimension_numbers = #tpu.dot_dimension_numbers<[1], [0], [0], [1], [0, 0, 1, 1], [], []>} : vector<8x8xbf16>, vector<8x128xbf16>, vector<8x128xf32> -> vector<8x128xf32>
    %213 = arith.truncf %25 : vector<8x8xf32> to vector<8x8xbf16>
    %214 = arith.truncf %186 : vector<8x128xf32> to vector<8x128xbf16>
    %cst_76 = arith.constant dense<0.000000e+00> : vector<8x128xf32>
    %215 = tpu.matmul %213, %214, %cst_76 {dimension_numbers = #tpu.dot_dimension_numbers<[1], [0], [0], [1], [0, 0, 1, 1], [], []>} : vector<8x8xbf16>, vector<8x128xbf16>, vector<8x128xf32> -> vector<8x128xf32>
    %c1024 = arith.constant 1024 : index
    %c0_77 = arith.constant 0 : index
    %216 = vector.load %arg14[%c1024, %c0_77] : memref<3456x128xbf16, #tpu.memory_space<vmem>>, vector<128x128xbf16>
    %217 = arith.truncf %212 : vector<8x128xf32> to vector<8x128xbf16>
    %cst_78 = arith.constant dense<0.000000e+00> : vector<8x128xf32>
    %218 = tpu.matmul %217, %216, %cst_78 {dimension_numbers = #tpu.dot_dimension_numbers<[1], [0], [0], [1], [0, 0, 1, 1], [], []>} : vector<8x128xbf16>, vector<128x128xbf16>, vector<8x128xf32> -> vector<8x128xf32>
    %c1152 = arith.constant 1152 : index
    %c0_79 = arith.constant 0 : index
    %219 = vector.load %arg14[%c1152, %c0_79] : memref<3456x128xbf16, #tpu.memory_space<vmem>>, vector<128x128xbf16>
    %220 = arith.truncf %215 : vector<8x128xf32> to vector<8x128xbf16>
    %cst_80 = arith.constant dense<0.000000e+00> : vector<8x128xf32>
    %221 = tpu.matmul %220, %219, %cst_80 {dimension_numbers = #tpu.dot_dimension_numbers<[1], [0], [0], [1], [0, 0, 1, 1], [], []>} : vector<8x128xbf16>, vector<128x128xbf16>, vector<8x128xf32> -> vector<8x128xf32>
    %222 = arith.addf %218, %221 : vector<8x128xf32>
    %c1280 = arith.constant 1280 : index
    %c0_81 = arith.constant 0 : index
    %223 = vector.load %arg14[%c1280, %c0_81] : memref<3456x128xbf16, #tpu.memory_space<vmem>>, vector<128x128xbf16>
    %224 = arith.truncf %30 : vector<8x128xf32> to vector<8x128xbf16>
    %cst_82 = arith.constant dense<0.000000e+00> : vector<8x128xf32>
    %225 = tpu.matmul %224, %223, %cst_82 {dimension_numbers = #tpu.dot_dimension_numbers<[1], [0], [0], [1], [0, 0, 1, 1], [], []>} : vector<8x128xbf16>, vector<128x128xbf16>, vector<8x128xf32> -> vector<8x128xf32>
    %226 = arith.addf %222, %225 : vector<8x128xf32>
    %c12 = arith.constant 12 : index
    %c0_83 = arith.constant 0 : index
    %227 = vector.load %arg16[%c12, %c0_83] : memref<32x128xf32, #tpu.memory_space<vmem>>, vector<1x128xf32>
    %228 = vector.broadcast %227 : vector<1x128xf32> to vector<8x128xf32>
    %229 = arith.addf %226, %228 : vector<8x128xf32>
    %cst_84 = arith.constant 0.000000e+00 : f32
    %230 = vector.broadcast %cst_84 : f32 to vector<8x128xf32>
    %231 = arith.maximumf %229, %230 : vector<8x128xf32>
    %c1408 = arith.constant 1408 : index
    %c0_85 = arith.constant 0 : index
    %232 = vector.load %arg14[%c1408, %c0_85] : memref<3456x128xbf16, #tpu.memory_space<vmem>>, vector<128x128xbf16>
    %233 = arith.truncf %231 : vector<8x128xf32> to vector<8x128xbf16>
    %cst_86 = arith.constant dense<0.000000e+00> : vector<8x128xf32>
    %234 = tpu.matmul %233, %232, %cst_86 {dimension_numbers = #tpu.dot_dimension_numbers<[1], [0], [0], [1], [0, 0, 1, 1], [], []>} : vector<8x128xbf16>, vector<128x128xbf16>, vector<8x128xf32> -> vector<8x128xf32>
    %c13 = arith.constant 13 : index
    %c0_87 = arith.constant 0 : index
    %235 = vector.load %arg16[%c13, %c0_87] : memref<32x128xf32, #tpu.memory_space<vmem>>, vector<1x128xf32>
    %236 = vector.broadcast %235 : vector<1x128xf32> to vector<8x128xf32>
    %237 = arith.addf %234, %236 : vector<8x128xf32>
    %238 = vector.broadcast %17 : vector<8x1xf32> to vector<8x128xf32>
    %239 = arith.mulf %237, %238 : vector<8x128xf32>
    %240 = arith.truncf %29 : vector<8x8xf32> to vector<8x8xbf16>
    %241 = arith.truncf %239 : vector<8x128xf32> to vector<8x128xbf16>
    %cst_88 = arith.constant dense<0.000000e+00> : vector<8x128xf32>
    %242 = tpu.matmul %240, %241, %cst_88 {dimension_numbers = #tpu.dot_dimension_numbers<[1], [0], [0], [1], [0, 0, 1, 1], [], []>} : vector<8x8xbf16>, vector<8x128xbf16>, vector<8x128xf32> -> vector<8x128xf32>
    %c512_89 = arith.constant 512 : index
    %c0_90 = arith.constant 0 : index
    %243 = vector.load %arg15[%c512_89, %c0_90] : memref<1024x512xbf16, #tpu.memory_space<vmem>>, vector<128x512xbf16>
    %244 = arith.truncf %186 : vector<8x128xf32> to vector<8x128xbf16>
    %cst_91 = arith.constant dense<0.000000e+00> : vector<8x512xf32>
    %245 = tpu.matmul %244, %243, %cst_91 {dimension_numbers = #tpu.dot_dimension_numbers<[1], [0], [0], [1], [0, 0, 1, 1], [], []>} : vector<8x128xbf16>, vector<128x512xbf16>, vector<8x512xf32> -> vector<8x512xf32>
    %c640_92 = arith.constant 640 : index
    %c0_93 = arith.constant 0 : index
    %246 = vector.load %arg15[%c640_92, %c0_93] : memref<1024x512xbf16, #tpu.memory_space<vmem>>, vector<128x512xbf16>
    %247 = arith.truncf %242 : vector<8x128xf32> to vector<8x128xbf16>
    %cst_94 = arith.constant dense<0.000000e+00> : vector<8x512xf32>
    %248 = tpu.matmul %247, %246, %cst_94 {dimension_numbers = #tpu.dot_dimension_numbers<[1], [0], [0], [1], [0, 0, 1, 1], [], []>} : vector<8x128xbf16>, vector<128x512xbf16>, vector<8x512xf32> -> vector<8x512xf32>
    %249 = arith.addf %245, %248 : vector<8x512xf32>
    %250 = vector.extract_strided_slice %249 {offsets = [0, 0], sizes = [8, 128], strides = [1, 1]} : vector<8x512xf32> to vector<8x128xf32>
    %c14 = arith.constant 14 : index
    %c0_95 = arith.constant 0 : index
    %251 = vector.load %arg16[%c14, %c0_95] : memref<32x128xf32, #tpu.memory_space<vmem>>, vector<1x128xf32>
    %252 = vector.broadcast %251 : vector<1x128xf32> to vector<8x128xf32>
    %253 = arith.addf %250, %252 : vector<8x128xf32>
    %254 = arith.negf %253 : vector<8x128xf32>
    %255 = math.exp %254 : vector<8x128xf32>
    %cst_96 = arith.constant 1.000000e+00 : f32
    %256 = vector.broadcast %cst_96 : f32 to vector<8x128xf32>
    %257 = arith.addf %256, %255 : vector<8x128xf32>
    %258 = arith.divf %256, %257 : vector<8x128xf32>
    %259 = vector.extract_strided_slice %249 {offsets = [0, 128], sizes = [8, 128], strides = [1, 1]} : vector<8x512xf32> to vector<8x128xf32>
    %c15 = arith.constant 15 : index
    %c0_97 = arith.constant 0 : index
    %260 = vector.load %arg16[%c15, %c0_97] : memref<32x128xf32, #tpu.memory_space<vmem>>, vector<1x128xf32>
    %261 = vector.broadcast %260 : vector<1x128xf32> to vector<8x128xf32>
    %262 = arith.addf %259, %261 : vector<8x128xf32>
    %263 = arith.negf %262 : vector<8x128xf32>
    %264 = math.exp %263 : vector<8x128xf32>
    %cst_98 = arith.constant 1.000000e+00 : f32
    %265 = vector.broadcast %cst_98 : f32 to vector<8x128xf32>
    %266 = arith.addf %265, %264 : vector<8x128xf32>
    %267 = arith.divf %265, %266 : vector<8x128xf32>
    %268 = vector.extract_strided_slice %249 {offsets = [0, 256], sizes = [8, 128], strides = [1, 1]} : vector<8x512xf32> to vector<8x128xf32>
    %c16 = arith.constant 16 : index
    %c0_99 = arith.constant 0 : index
    %269 = vector.load %arg16[%c16, %c0_99] : memref<32x128xf32, #tpu.memory_space<vmem>>, vector<1x128xf32>
    %270 = vector.broadcast %269 : vector<1x128xf32> to vector<8x128xf32>
    %271 = arith.addf %268, %270 : vector<8x128xf32>
    %272 = math.tanh %271 : vector<8x128xf32>
    %273 = vector.extract_strided_slice %249 {offsets = [0, 384], sizes = [8, 128], strides = [1, 1]} : vector<8x512xf32> to vector<8x128xf32>
    %c17 = arith.constant 17 : index
    %c0_100 = arith.constant 0 : index
    %274 = vector.load %arg16[%c17, %c0_100] : memref<32x128xf32, #tpu.memory_space<vmem>>, vector<1x128xf32>
    %275 = vector.broadcast %274 : vector<1x128xf32> to vector<8x128xf32>
    %276 = arith.addf %273, %275 : vector<8x128xf32>
    %277 = arith.negf %276 : vector<8x128xf32>
    %278 = math.exp %277 : vector<8x128xf32>
    %cst_101 = arith.constant 1.000000e+00 : f32
    %279 = vector.broadcast %cst_101 : f32 to vector<8x128xf32>
    %280 = arith.addf %279, %278 : vector<8x128xf32>
    %281 = arith.divf %279, %280 : vector<8x128xf32>
    %282 = arith.mulf %267, %209 : vector<8x128xf32>
    %283 = arith.mulf %258, %272 : vector<8x128xf32>
    %284 = arith.addf %282, %283 : vector<8x128xf32>
    %285 = math.tanh %284 : vector<8x128xf32>
    %286 = arith.mulf %281, %285 : vector<8x128xf32>
    %287 = arith.truncf %28 : vector<8x8xf32> to vector<8x8xbf16>
    %288 = arith.truncf %286 : vector<8x128xf32> to vector<8x128xbf16>
    %cst_102 = arith.constant dense<0.000000e+00> : vector<8x128xf32>
    %289 = tpu.matmul %287, %288, %cst_102 {dimension_numbers = #tpu.dot_dimension_numbers<[1], [0], [0], [1], [0, 0, 1, 1], [], []>} : vector<8x8xbf16>, vector<8x128xbf16>, vector<8x128xf32> -> vector<8x128xf32>
    %290 = arith.truncf %25 : vector<8x8xf32> to vector<8x8xbf16>
    %291 = arith.truncf %286 : vector<8x128xf32> to vector<8x128xbf16>
    %cst_103 = arith.constant dense<0.000000e+00> : vector<8x128xf32>
    %292 = tpu.matmul %290, %291, %cst_103 {dimension_numbers = #tpu.dot_dimension_numbers<[1], [0], [0], [1], [0, 0, 1, 1], [], []>} : vector<8x8xbf16>, vector<8x128xbf16>, vector<8x128xf32> -> vector<8x128xf32>
    %c1536 = arith.constant 1536 : index
    %c0_104 = arith.constant 0 : index
    %293 = vector.load %arg14[%c1536, %c0_104] : memref<3456x128xbf16, #tpu.memory_space<vmem>>, vector<128x128xbf16>
    %294 = arith.truncf %289 : vector<8x128xf32> to vector<8x128xbf16>
    %cst_105 = arith.constant dense<0.000000e+00> : vector<8x128xf32>
    %295 = tpu.matmul %294, %293, %cst_105 {dimension_numbers = #tpu.dot_dimension_numbers<[1], [0], [0], [1], [0, 0, 1, 1], [], []>} : vector<8x128xbf16>, vector<128x128xbf16>, vector<8x128xf32> -> vector<8x128xf32>
    %c1664 = arith.constant 1664 : index
    %c0_106 = arith.constant 0 : index
    %296 = vector.load %arg14[%c1664, %c0_106] : memref<3456x128xbf16, #tpu.memory_space<vmem>>, vector<128x128xbf16>
    %297 = arith.truncf %292 : vector<8x128xf32> to vector<8x128xbf16>
    %cst_107 = arith.constant dense<0.000000e+00> : vector<8x128xf32>
    %298 = tpu.matmul %297, %296, %cst_107 {dimension_numbers = #tpu.dot_dimension_numbers<[1], [0], [0], [1], [0, 0, 1, 1], [], []>} : vector<8x128xbf16>, vector<128x128xbf16>, vector<8x128xf32> -> vector<8x128xf32>
    %299 = arith.addf %295, %298 : vector<8x128xf32>
    %c1792 = arith.constant 1792 : index
    %c0_108 = arith.constant 0 : index
    %300 = vector.load %arg14[%c1792, %c0_108] : memref<3456x128xbf16, #tpu.memory_space<vmem>>, vector<128x128xbf16>
    %301 = arith.truncf %30 : vector<8x128xf32> to vector<8x128xbf16>
    %cst_109 = arith.constant dense<0.000000e+00> : vector<8x128xf32>
    %302 = tpu.matmul %301, %300, %cst_109 {dimension_numbers = #tpu.dot_dimension_numbers<[1], [0], [0], [1], [0, 0, 1, 1], [], []>} : vector<8x128xbf16>, vector<128x128xbf16>, vector<8x128xf32> -> vector<8x128xf32>
    %303 = arith.addf %299, %302 : vector<8x128xf32>
    %c18 = arith.constant 18 : index
    %c0_110 = arith.constant 0 : index
    %304 = vector.load %arg16[%c18, %c0_110] : memref<32x128xf32, #tpu.memory_space<vmem>>, vector<1x128xf32>
    %305 = vector.broadcast %304 : vector<1x128xf32> to vector<8x128xf32>
    %306 = arith.addf %303, %305 : vector<8x128xf32>
    %cst_111 = arith.constant 0.000000e+00 : f32
    %307 = vector.broadcast %cst_111 : f32 to vector<8x128xf32>
    %308 = arith.maximumf %306, %307 : vector<8x128xf32>
    %c1920 = arith.constant 1920 : index
    %c0_112 = arith.constant 0 : index
    %309 = vector.load %arg14[%c1920, %c0_112] : memref<3456x128xbf16, #tpu.memory_space<vmem>>, vector<128x128xbf16>
    %310 = arith.truncf %308 : vector<8x128xf32> to vector<8x128xbf16>
    %cst_113 = arith.constant dense<0.000000e+00> : vector<8x128xf32>
    %311 = tpu.matmul %310, %309, %cst_113 {dimension_numbers = #tpu.dot_dimension_numbers<[1], [0], [0], [1], [0, 0, 1, 1], [], []>} : vector<8x128xbf16>, vector<128x128xbf16>, vector<8x128xf32> -> vector<8x128xf32>
    %c19 = arith.constant 19 : index
    %c0_114 = arith.constant 0 : index
    %312 = vector.load %arg16[%c19, %c0_114] : memref<32x128xf32, #tpu.memory_space<vmem>>, vector<1x128xf32>
    %313 = vector.broadcast %312 : vector<1x128xf32> to vector<8x128xf32>
    %314 = arith.addf %311, %313 : vector<8x128xf32>
    %315 = vector.broadcast %17 : vector<8x1xf32> to vector<8x128xf32>
    %316 = arith.mulf %314, %315 : vector<8x128xf32>
    %317 = arith.truncf %29 : vector<8x8xf32> to vector<8x8xbf16>
    %318 = arith.truncf %316 : vector<8x128xf32> to vector<8x128xbf16>
    %cst_115 = arith.constant dense<0.000000e+00> : vector<8x128xf32>
    %319 = tpu.matmul %317, %318, %cst_115 {dimension_numbers = #tpu.dot_dimension_numbers<[1], [0], [0], [1], [0, 0, 1, 1], [], []>} : vector<8x8xbf16>, vector<8x128xbf16>, vector<8x128xf32> -> vector<8x128xf32>
    %c768_116 = arith.constant 768 : index
    %c0_117 = arith.constant 0 : index
    %320 = vector.load %arg15[%c768_116, %c0_117] : memref<1024x512xbf16, #tpu.memory_space<vmem>>, vector<128x512xbf16>
    %321 = arith.truncf %286 : vector<8x128xf32> to vector<8x128xbf16>
    %cst_118 = arith.constant dense<0.000000e+00> : vector<8x512xf32>
    %322 = tpu.matmul %321, %320, %cst_118 {dimension_numbers = #tpu.dot_dimension_numbers<[1], [0], [0], [1], [0, 0, 1, 1], [], []>} : vector<8x128xbf16>, vector<128x512xbf16>, vector<8x512xf32> -> vector<8x512xf32>
    %c896_119 = arith.constant 896 : index
    %c0_120 = arith.constant 0 : index
    %323 = vector.load %arg15[%c896_119, %c0_120] : memref<1024x512xbf16, #tpu.memory_space<vmem>>, vector<128x512xbf16>
    %324 = arith.truncf %319 : vector<8x128xf32> to vector<8x128xbf16>
    %cst_121 = arith.constant dense<0.000000e+00> : vector<8x512xf32>
    %325 = tpu.matmul %324, %323, %cst_121 {dimension_numbers = #tpu.dot_dimension_numbers<[1], [0], [0], [1], [0, 0, 1, 1], [], []>} : vector<8x128xbf16>, vector<128x512xbf16>, vector<8x512xf32> -> vector<8x512xf32>
    %326 = arith.addf %322, %325 : vector<8x512xf32>
    %327 = vector.extract_strided_slice %326 {offsets = [0, 0], sizes = [8, 128], strides = [1, 1]} : vector<8x512xf32> to vector<8x128xf32>
    %c20 = arith.constant 20 : index
    %c0_122 = arith.constant 0 : index
    %328 = vector.load %arg16[%c20, %c0_122] : memref<32x128xf32, #tpu.memory_space<vmem>>, vector<1x128xf32>
    %329 = vector.broadcast %328 : vector<1x128xf32> to vector<8x128xf32>
    %330 = arith.addf %327, %329 : vector<8x128xf32>
    %331 = arith.negf %330 : vector<8x128xf32>
    %332 = math.exp %331 : vector<8x128xf32>
    %cst_123 = arith.constant 1.000000e+00 : f32
    %333 = vector.broadcast %cst_123 : f32 to vector<8x128xf32>
    %334 = arith.addf %333, %332 : vector<8x128xf32>
    %335 = arith.divf %333, %334 : vector<8x128xf32>
    %336 = vector.extract_strided_slice %326 {offsets = [0, 128], sizes = [8, 128], strides = [1, 1]} : vector<8x512xf32> to vector<8x128xf32>
    %c21 = arith.constant 21 : index
    %c0_124 = arith.constant 0 : index
    %337 = vector.load %arg16[%c21, %c0_124] : memref<32x128xf32, #tpu.memory_space<vmem>>, vector<1x128xf32>
    %338 = vector.broadcast %337 : vector<1x128xf32> to vector<8x128xf32>
    %339 = arith.addf %336, %338 : vector<8x128xf32>
    %340 = arith.negf %339 : vector<8x128xf32>
    %341 = math.exp %340 : vector<8x128xf32>
    %cst_125 = arith.constant 1.000000e+00 : f32
    %342 = vector.broadcast %cst_125 : f32 to vector<8x128xf32>
    %343 = arith.addf %342, %341 : vector<8x128xf32>
    %344 = arith.divf %342, %343 : vector<8x128xf32>
    %345 = vector.extract_strided_slice %326 {offsets = [0, 256], sizes = [8, 128], strides = [1, 1]} : vector<8x512xf32> to vector<8x128xf32>
    %c22 = arith.constant 22 : index
    %c0_126 = arith.constant 0 : index
    %346 = vector.load %arg16[%c22, %c0_126] : memref<32x128xf32, #tpu.memory_space<vmem>>, vector<1x128xf32>
    %347 = vector.broadcast %346 : vector<1x128xf32> to vector<8x128xf32>
    %348 = arith.addf %345, %347 : vector<8x128xf32>
    %349 = math.tanh %348 : vector<8x128xf32>
    %350 = vector.extract_strided_slice %326 {offsets = [0, 384], sizes = [8, 128], strides = [1, 1]} : vector<8x512xf32> to vector<8x128xf32>
    %c23 = arith.constant 23 : index
    %c0_127 = arith.constant 0 : index
    %351 = vector.load %arg16[%c23, %c0_127] : memref<32x128xf32, #tpu.memory_space<vmem>>, vector<1x128xf32>
    %352 = vector.broadcast %351 : vector<1x128xf32> to vector<8x128xf32>
    %353 = arith.addf %350, %352 : vector<8x128xf32>
    %354 = arith.negf %353 : vector<8x128xf32>
    %355 = math.exp %354 : vector<8x128xf32>
    %cst_128 = arith.constant 1.000000e+00 : f32
    %356 = vector.broadcast %cst_128 : f32 to vector<8x128xf32>
    %357 = arith.addf %356, %355 : vector<8x128xf32>
    %358 = arith.divf %356, %357 : vector<8x128xf32>
    %359 = arith.mulf %344, %284 : vector<8x128xf32>
    %360 = arith.mulf %335, %349 : vector<8x128xf32>
    %361 = arith.addf %359, %360 : vector<8x128xf32>
    %362 = math.tanh %361 : vector<8x128xf32>
    %363 = arith.mulf %358, %362 : vector<8x128xf32>
    %c2304 = arith.constant 2304 : index
    %c0_129 = arith.constant 0 : index
    %364 = vector.load %arg14[%c2304, %c0_129] : memref<3456x128xbf16, #tpu.memory_space<vmem>>, vector<128x128xbf16>
    %365 = arith.truncf %363 : vector<8x128xf32> to vector<8x128xbf16>
    %cst_130 = arith.constant dense<0.000000e+00> : vector<8x128xf32>
    %366 = tpu.matmul %365, %364, %cst_130 {dimension_numbers = #tpu.dot_dimension_numbers<[1], [0], [0], [1], [0, 0, 1, 1], [], []>} : vector<8x128xbf16>, vector<128x128xbf16>, vector<8x128xf32> -> vector<8x128xf32>
    %c26 = arith.constant 26 : index
    %c0_131 = arith.constant 0 : index
    %367 = vector.load %arg16[%c26, %c0_131] : memref<32x128xf32, #tpu.memory_space<vmem>>, vector<1x128xf32>
    %368 = vector.broadcast %367 : vector<1x128xf32> to vector<8x128xf32>
    %369 = arith.addf %366, %368 : vector<8x128xf32>
    %370 = arith.negf %369 : vector<8x128xf32>
    %371 = math.exp %370 : vector<8x128xf32>
    %cst_132 = arith.constant 1.000000e+00 : f32
    %372 = vector.broadcast %cst_132 : f32 to vector<8x128xf32>
    %373 = arith.addf %372, %371 : vector<8x128xf32>
    %374 = arith.divf %372, %373 : vector<8x128xf32>
    %c2432 = arith.constant 2432 : index
    %c0_133 = arith.constant 0 : index
    %375 = vector.load %arg14[%c2432, %c0_133] : memref<3456x128xbf16, #tpu.memory_space<vmem>>, vector<128x128xbf16>
    %376 = arith.truncf %363 : vector<8x128xf32> to vector<8x128xbf16>
    %cst_134 = arith.constant dense<0.000000e+00> : vector<8x128xf32>
    %377 = tpu.matmul %376, %375, %cst_134 {dimension_numbers = #tpu.dot_dimension_numbers<[1], [0], [0], [1], [0, 0, 1, 1], [], []>} : vector<8x128xbf16>, vector<128x128xbf16>, vector<8x128xf32> -> vector<8x128xf32>
    %c27 = arith.constant 27 : index
    %c0_135 = arith.constant 0 : index
    %378 = vector.load %arg16[%c27, %c0_135] : memref<32x128xf32, #tpu.memory_space<vmem>>, vector<1x128xf32>
    %379 = vector.broadcast %378 : vector<1x128xf32> to vector<8x128xf32>
    %380 = arith.addf %377, %379 : vector<8x128xf32>
    %381 = arith.mulf %374, %380 : vector<8x128xf32>
    %382 = vector.broadcast %22 : vector<8x1xf32> to vector<8x128xf32>
    %383 = arith.mulf %381, %382 : vector<8x128xf32>
    %cst_136 = arith.constant dense<0.000000e+00> : vector<128xf32>
    %384 = vector.multi_reduction <add>, %383, %cst_136 [0] : vector<8x128xf32> to vector<128xf32>
    %385 = vector.shape_cast %384 : vector<128xf32> to vector<1x128xf32>
    %c2560 = arith.constant 2560 : index
    %c0_137 = arith.constant 0 : index
    %386 = vector.load %arg14[%c2560, %c0_137] : memref<3456x128xbf16, #tpu.memory_space<vmem>>, vector<128x128xbf16>
    %387 = arith.truncf %208 : vector<1x128xf32> to vector<1x128xbf16>
    %cst_138 = arith.constant dense<0.000000e+00> : vector<1x128xf32>
    %388 = tpu.matmul %387, %386, %cst_138 {dimension_numbers = #tpu.dot_dimension_numbers<[1], [0], [0], [1], [0, 0, 1, 1], [], []>} : vector<1x128xbf16>, vector<128x128xbf16>, vector<1x128xf32> -> vector<1x128xf32>
    %c28 = arith.constant 28 : index
    %c0_139 = arith.constant 0 : index
    %389 = vector.load %arg16[%c28, %c0_139] : memref<32x128xf32, #tpu.memory_space<vmem>>, vector<1x128xf32>
    %390 = arith.addf %388, %389 : vector<1x128xf32>
    %391 = tpu.iota {dimensions = array<i32: 1>} : vector<1x128xi32>
    %c115_i32 = arith.constant 115 : i32
    %392 = vector.broadcast %c115_i32 : i32 to vector<1x128xi32>
    %393 = arith.cmpi slt, %391, %392 : vector<1x128xi32>
    %cst_140 = arith.constant -1.000000e+30 : f32
    %394 = vector.broadcast %cst_140 : f32 to vector<1x128xf32>
    %395 = arith.select %393, %390, %394 : vector<1x128xi1>, vector<1x128xf32>
    %cst_141 = arith.constant dense<0xFF800000> : vector<1xf32>
    %396 = vector.multi_reduction <maximumf>, %395, %cst_141 [1] : vector<1x128xf32> to vector<1xf32>
    %397 = vector.shape_cast %396 : vector<1xf32> to vector<1x1xf32>
    %398 = vector.broadcast %397 : vector<1x1xf32> to vector<1x128xf32>
    %399 = arith.subf %395, %398 : vector<1x128xf32>
    %400 = math.exp %399 : vector<1x128xf32>
    %cst_142 = arith.constant dense<0.000000e+00> : vector<1xf32>
    %401 = vector.multi_reduction <add>, %400, %cst_142 [1] : vector<1x128xf32> to vector<1xf32>
    %402 = vector.shape_cast %401 : vector<1xf32> to vector<1x1xf32>
    %403 = math.log %402 : vector<1x1xf32>
    %404 = vector.broadcast %403 : vector<1x1xf32> to vector<1x128xf32>
    %405 = arith.subf %399, %404 : vector<1x128xf32>
    %406 = math.exp %405 : vector<1x128xf32>
    %c2688 = arith.constant 2688 : index
    %c0_143 = arith.constant 0 : index
    %407 = vector.load %arg14[%c2688, %c0_143] : memref<3456x128xbf16, #tpu.memory_space<vmem>>, vector<128x128xbf16>
    %408 = arith.truncf %385 : vector<1x128xf32> to vector<1x128xbf16>
    %cst_144 = arith.constant dense<0.000000e+00> : vector<1x128xf32>
    %409 = tpu.matmul %408, %407, %cst_144 {dimension_numbers = #tpu.dot_dimension_numbers<[1], [0], [0], [1], [0, 0, 1, 1], [], []>} : vector<1x128xbf16>, vector<128x128xbf16>, vector<1x128xf32> -> vector<1x128xf32>
    %c2816 = arith.constant 2816 : index
    %c0_145 = arith.constant 0 : index
    %410 = vector.load %arg14[%c2816, %c0_145] : memref<3456x128xbf16, #tpu.memory_space<vmem>>, vector<128x128xbf16>
    %411 = arith.truncf %406 : vector<1x128xf32> to vector<1x128xbf16>
    %cst_146 = arith.constant dense<0.000000e+00> : vector<1x128xf32>
    %412 = tpu.matmul %411, %410, %cst_146 {dimension_numbers = #tpu.dot_dimension_numbers<[1], [0], [0], [1], [0, 0, 1, 1], [], []>} : vector<1x128xbf16>, vector<128x128xbf16>, vector<1x128xf32> -> vector<1x128xf32>
    %413 = arith.addf %409, %412 : vector<1x128xf32>
    %c29 = arith.constant 29 : index
    %c0_147 = arith.constant 0 : index
    %414 = vector.load %arg16[%c29, %c0_147] : memref<32x128xf32, #tpu.memory_space<vmem>>, vector<1x128xf32>
    %415 = arith.addf %413, %414 : vector<1x128xf32>
    %c2944 = arith.constant 2944 : index
    %c0_148 = arith.constant 0 : index
    %416 = vector.load %arg14[%c2944, %c0_148] : memref<3456x128xbf16, #tpu.memory_space<vmem>>, vector<128x128xbf16>
    %417 = arith.truncf %208 : vector<1x128xf32> to vector<1x128xbf16>
    %cst_149 = arith.constant dense<0.000000e+00> : vector<1x128xf32>
    %418 = tpu.matmul %417, %416, %cst_149 {dimension_numbers = #tpu.dot_dimension_numbers<[1], [0], [0], [1], [0, 0, 1, 1], [], []>} : vector<1x128xbf16>, vector<128x128xbf16>, vector<1x128xf32> -> vector<1x128xf32>
    %c3072 = arith.constant 3072 : index
    %c0_150 = arith.constant 0 : index
    %419 = vector.load %arg14[%c3072, %c0_150] : memref<3456x128xbf16, #tpu.memory_space<vmem>>, vector<128x128xbf16>
    %420 = arith.truncf %415 : vector<1x128xf32> to vector<1x128xbf16>
    %cst_151 = arith.constant dense<0.000000e+00> : vector<1x128xf32>
    %421 = tpu.matmul %420, %419, %cst_151 {dimension_numbers = #tpu.dot_dimension_numbers<[1], [0], [0], [1], [0, 0, 1, 1], [], []>} : vector<1x128xbf16>, vector<128x128xbf16>, vector<1x128xf32> -> vector<1x128xf32>
    %422 = arith.addf %418, %421 : vector<1x128xf32>
    %c30 = arith.constant 30 : index
    %c0_152 = arith.constant 0 : index
    %423 = vector.load %arg16[%c30, %c0_152] : memref<32x128xf32, #tpu.memory_space<vmem>>, vector<1x128xf32>
    %424 = arith.addf %422, %423 : vector<1x128xf32>
    %425 = tpu.iota {dimensions = array<i32: 1>} : vector<1x128xi32>
    %c2_i32 = arith.constant 2 : i32
    %426 = vector.broadcast %c2_i32 : i32 to vector<1x128xi32>
    %427 = arith.cmpi slt, %425, %426 : vector<1x128xi32>
    %cst_153 = arith.constant -1.000000e+30 : f32
    %428 = vector.broadcast %cst_153 : f32 to vector<1x128xf32>
    %429 = arith.select %427, %424, %428 : vector<1x128xi1>, vector<1x128xf32>
    %cst_154 = arith.constant dense<0xFF800000> : vector<1xf32>
    %430 = vector.multi_reduction <maximumf>, %429, %cst_154 [1] : vector<1x128xf32> to vector<1xf32>
    %431 = vector.shape_cast %430 : vector<1xf32> to vector<1x1xf32>
    %432 = vector.broadcast %431 : vector<1x1xf32> to vector<1x128xf32>
    %433 = arith.subf %429, %432 : vector<1x128xf32>
    %434 = math.exp %433 : vector<1x128xf32>
    %cst_155 = arith.constant dense<0.000000e+00> : vector<1xf32>
    %435 = vector.multi_reduction <add>, %434, %cst_155 [1] : vector<1x128xf32> to vector<1xf32>
    %436 = vector.shape_cast %435 : vector<1xf32> to vector<1x1xf32>
    %437 = math.log %436 : vector<1x1xf32>
    %438 = vector.broadcast %437 : vector<1x1xf32> to vector<1x128xf32>
    %439 = arith.subf %433, %438 : vector<1x128xf32>
    %c3200 = arith.constant 3200 : index
    %c0_156 = arith.constant 0 : index
    %440 = vector.load %arg14[%c3200, %c0_156] : memref<3456x128xbf16, #tpu.memory_space<vmem>>, vector<128x128xbf16>
    %441 = arith.truncf %363 : vector<8x128xf32> to vector<8x128xbf16>
    %cst_157 = arith.constant dense<0.000000e+00> : vector<8x128xf32>
    %442 = tpu.matmul %441, %440, %cst_157 {dimension_numbers = #tpu.dot_dimension_numbers<[1], [0], [0], [1], [0, 0, 1, 1], [], []>} : vector<8x128xbf16>, vector<128x128xbf16>, vector<8x128xf32> -> vector<8x128xf32>
    %c3328 = arith.constant 3328 : index
    %c0_158 = arith.constant 0 : index
    %443 = vector.load %arg14[%c3328, %c0_158] : memref<3456x128xbf16, #tpu.memory_space<vmem>>, vector<128x128xbf16>
    %444 = arith.truncf %415 : vector<1x128xf32> to vector<1x128xbf16>
    %cst_159 = arith.constant dense<0.000000e+00> : vector<1x128xf32>
    %445 = tpu.matmul %444, %443, %cst_159 {dimension_numbers = #tpu.dot_dimension_numbers<[1], [0], [0], [1], [0, 0, 1, 1], [], []>} : vector<1x128xbf16>, vector<128x128xbf16>, vector<1x128xf32> -> vector<1x128xf32>
    %446 = vector.broadcast %445 : vector<1x128xf32> to vector<8x128xf32>
    %447 = arith.addf %442, %446 : vector<8x128xf32>
    %c31 = arith.constant 31 : index
    %c0_160 = arith.constant 0 : index
    %448 = vector.load %arg16[%c31, %c0_160] : memref<32x128xf32, #tpu.memory_space<vmem>>, vector<1x128xf32>
    %449 = vector.broadcast %448 : vector<1x128xf32> to vector<8x128xf32>
    %450 = arith.addf %447, %449 : vector<8x128xf32>
    %451 = tpu.iota {dimensions = array<i32: 1>} : vector<8x128xi32>
    %c20_i32 = arith.constant 20 : i32
    %452 = vector.broadcast %c20_i32 : i32 to vector<8x128xi32>
    %453 = arith.cmpi slt, %451, %452 : vector<8x128xi32>
    %cst_161 = arith.constant -1.000000e+30 : f32
    %454 = vector.broadcast %cst_161 : f32 to vector<8x128xf32>
    %455 = arith.select %453, %450, %454 : vector<8x128xi1>, vector<8x128xf32>
    %cst_162 = arith.constant dense<0xFF800000> : vector<8xf32>
    %456 = vector.multi_reduction <maximumf>, %455, %cst_162 [1] : vector<8x128xf32> to vector<8xf32>
    %457 = vector.shape_cast %456 : vector<8xf32> to vector<8x1xf32>
    %458 = vector.broadcast %457 : vector<8x1xf32> to vector<8x128xf32>
    %459 = arith.subf %455, %458 : vector<8x128xf32>
    %460 = math.exp %459 : vector<8x128xf32>
    %cst_163 = arith.constant dense<0.000000e+00> : vector<8xf32>
    %461 = vector.multi_reduction <add>, %460, %cst_163 [1] : vector<8x128xf32> to vector<8xf32>
    %462 = vector.shape_cast %461 : vector<8xf32> to vector<8x1xf32>
    %463 = math.log %462 : vector<8x1xf32>
    %464 = vector.broadcast %463 : vector<8x1xf32> to vector<8x128xf32>
    %465 = arith.subf %459, %464 : vector<8x128xf32>
    %466 = tpu.iota {dimensions = array<i32: 1>} : vector<1x128xi32>
    %467 = vector.broadcast %8 : i32 to vector<1x128xi32>
    %468 = arith.cmpi eq, %466, %467 : vector<1x128xi32>
    %cst_164 = arith.constant 0.000000e+00 : f32
    %469 = vector.broadcast %cst_164 : f32 to vector<1x128xf32>
    %470 = arith.select %468, %405, %469 : vector<1x128xi1>, vector<1x128xf32>
    %471 = vector.shape_cast %470 : vector<1x128xf32> to vector<1x1x128xf32>
    %cst_165 = arith.constant dense<0.000000e+00> : vector<1xf32>
    %472 = vector.multi_reduction <add>, %471, %cst_165 [1, 2] : vector<1x1x128xf32> to vector<1xf32>
    %473 = vector.shape_cast %472 : vector<1xf32> to vector<1x1x1xf32>
    %474 = vector.extract %473[0, 0, 0] : f32 from vector<1x1x1xf32>
    %c0_i32_166 = arith.constant 0 : i32
    %475 = vector.broadcast %c0_i32_166 : i32 to vector<1x128xi32>
    %476 = arith.cmpi eq, %466, %475 : vector<1x128xi32>
    %cst_167 = arith.constant 0.000000e+00 : f32
    %477 = vector.broadcast %cst_167 : f32 to vector<1x128xf32>
    %478 = arith.select %476, %439, %477 : vector<1x128xi1>, vector<1x128xf32>
    %479 = vector.shape_cast %478 : vector<1x128xf32> to vector<1x1x128xf32>
    %cst_168 = arith.constant dense<0.000000e+00> : vector<1xf32>
    %480 = vector.multi_reduction <add>, %479, %cst_168 [1, 2] : vector<1x1x128xf32> to vector<1xf32>
    %481 = vector.shape_cast %480 : vector<1xf32> to vector<1x1x1xf32>
    %482 = vector.extract %481[0, 0, 0] : f32 from vector<1x1x1xf32>
    %c1_i32 = arith.constant 1 : i32
    %483 = vector.broadcast %c1_i32 : i32 to vector<1x128xi32>
    %484 = arith.cmpi eq, %466, %483 : vector<1x128xi32>
    %cst_169 = arith.constant 0.000000e+00 : f32
    %485 = vector.broadcast %cst_169 : f32 to vector<1x128xf32>
    %486 = arith.select %484, %439, %485 : vector<1x128xi1>, vector<1x128xf32>
    %487 = vector.shape_cast %486 : vector<1x128xf32> to vector<1x1x128xf32>
    %cst_170 = arith.constant dense<0.000000e+00> : vector<1xf32>
    %488 = vector.multi_reduction <add>, %487, %cst_170 [1, 2] : vector<1x1x128xf32> to vector<1xf32>
    %489 = vector.shape_cast %488 : vector<1xf32> to vector<1x1x1xf32>
    %490 = vector.extract %489[0, 0, 0] : f32 from vector<1x1x1xf32>
    %491 = tpu.iota {dimensions = array<i32: 0>} : vector<8x128xi32>
    %492 = tpu.iota {dimensions = array<i32: 1>} : vector<8x128xi32>
    %493 = arith.index_cast %arg0 : i32 to index
    %c0_171 = arith.constant 0 : index
    %494 = memref.load %arg6[%493, %c0_171] : memref<3x8xi32, #tpu.memory_space<smem>>
    %495 = arith.index_cast %arg0 : i32 to index
    %c0_172 = arith.constant 0 : index
    %496 = memref.load %arg7[%495, %c0_172] : memref<3x8xi32, #tpu.memory_space<smem>>
    %497 = vector.broadcast %494 : i32 to vector<8x128xi32>
    %498 = arith.cmpi eq, %491, %497 : vector<8x128xi32>
    %499 = vector.broadcast %496 : i32 to vector<8x128xi32>
    %500 = arith.cmpi eq, %492, %499 : vector<8x128xi32>
    %501 = arith.andi %498, %500 : vector<8x128xi1>
    %cst_173 = arith.constant 0.000000e+00 : f32
    %502 = vector.broadcast %cst_173 : f32 to vector<8x128xf32>
    %503 = arith.select %501, %465, %502 : vector<8x128xi1>, vector<8x128xf32>
    %504 = vector.shape_cast %503 : vector<8x128xf32> to vector<1x8x128xf32>
    %cst_174 = arith.constant dense<0.000000e+00> : vector<1xf32>
    %505 = vector.multi_reduction <add>, %504, %cst_174 [1, 2] : vector<1x8x128xf32> to vector<1xf32>
    %506 = vector.shape_cast %505 : vector<1xf32> to vector<1x1x1xf32>
    %507 = vector.extract %506[0, 0, 0] : f32 from vector<1x1x1xf32>
    %c0_i32_175 = arith.constant 0 : i32
    %508 = arith.cmpi sgt, %12, %c0_i32_175 : i32
    %509 = arith.addf %482, %507 : f32
    %cst_176 = arith.constant 0.000000e+00 : f32
    %510 = arith.select %508, %509, %cst_176 : f32
    %cst_177 = arith.constant 0.000000e+00 : f32
    %511 = arith.addf %cst_177, %510 : f32
    %512 = arith.index_cast %arg0 : i32 to index
    %c1_178 = arith.constant 1 : index
    %513 = memref.load %arg6[%512, %c1_178] : memref<3x8xi32, #tpu.memory_space<smem>>
    %514 = arith.index_cast %arg0 : i32 to index
    %c1_179 = arith.constant 1 : index
    %515 = memref.load %arg7[%514, %c1_179] : memref<3x8xi32, #tpu.memory_space<smem>>
    %516 = vector.broadcast %513 : i32 to vector<8x128xi32>
    %517 = arith.cmpi eq, %491, %516 : vector<8x128xi32>
    %518 = vector.broadcast %515 : i32 to vector<8x128xi32>
    %519 = arith.cmpi eq, %492, %518 : vector<8x128xi32>
    %520 = arith.andi %517, %519 : vector<8x128xi1>
    %cst_180 = arith.constant 0.000000e+00 : f32
    %521 = vector.broadcast %cst_180 : f32 to vector<8x128xf32>
    %522 = arith.select %520, %465, %521 : vector<8x128xi1>, vector<8x128xf32>
    %523 = vector.shape_cast %522 : vector<8x128xf32> to vector<1x8x128xf32>
    %cst_181 = arith.constant dense<0.000000e+00> : vector<1xf32>
    %524 = vector.multi_reduction <add>, %523, %cst_181 [1, 2] : vector<1x8x128xf32> to vector<1xf32>
    %525 = vector.shape_cast %524 : vector<1xf32> to vector<1x1x1xf32>
    %526 = vector.extract %525[0, 0, 0] : f32 from vector<1x1x1xf32>
    %c1_i32_182 = arith.constant 1 : i32
    %527 = arith.cmpi sgt, %12, %c1_i32_182 : i32
    %528 = arith.addf %482, %526 : f32
    %cst_183 = arith.constant 0.000000e+00 : f32
    %529 = arith.select %527, %528, %cst_183 : f32
    %530 = arith.addf %511, %529 : f32
    %531 = arith.index_cast %arg0 : i32 to index
    %c2_184 = arith.constant 2 : index
    %532 = memref.load %arg6[%531, %c2_184] : memref<3x8xi32, #tpu.memory_space<smem>>
    %533 = arith.index_cast %arg0 : i32 to index
    %c2_185 = arith.constant 2 : index
    %534 = memref.load %arg7[%533, %c2_185] : memref<3x8xi32, #tpu.memory_space<smem>>
    %535 = vector.broadcast %532 : i32 to vector<8x128xi32>
    %536 = arith.cmpi eq, %491, %535 : vector<8x128xi32>
    %537 = vector.broadcast %534 : i32 to vector<8x128xi32>
    %538 = arith.cmpi eq, %492, %537 : vector<8x128xi32>
    %539 = arith.andi %536, %538 : vector<8x128xi1>
    %cst_186 = arith.constant 0.000000e+00 : f32
    %540 = vector.broadcast %cst_186 : f32 to vector<8x128xf32>
    %541 = arith.select %539, %465, %540 : vector<8x128xi1>, vector<8x128xf32>
    %542 = vector.shape_cast %541 : vector<8x128xf32> to vector<1x8x128xf32>
    %cst_187 = arith.constant dense<0.000000e+00> : vector<1xf32>
    %543 = vector.multi_reduction <add>, %542, %cst_187 [1, 2] : vector<1x8x128xf32> to vector<1xf32>
    %544 = vector.shape_cast %543 : vector<1xf32> to vector<1x1x1xf32>
    %545 = vector.extract %544[0, 0, 0] : f32 from vector<1x1x1xf32>
    %c2_i32_188 = arith.constant 2 : i32
    %546 = arith.cmpi sgt, %12, %c2_i32_188 : i32
    %547 = arith.addf %482, %545 : f32
    %cst_189 = arith.constant 0.000000e+00 : f32
    %548 = arith.select %546, %547, %cst_189 : f32
    %549 = arith.addf %530, %548 : f32
    %550 = arith.index_cast %arg0 : i32 to index
    %c3_190 = arith.constant 3 : index
    %551 = memref.load %arg6[%550, %c3_190] : memref<3x8xi32, #tpu.memory_space<smem>>
    %552 = arith.index_cast %arg0 : i32 to index
    %c3_191 = arith.constant 3 : index
    %553 = memref.load %arg7[%552, %c3_191] : memref<3x8xi32, #tpu.memory_space<smem>>
    %554 = vector.broadcast %551 : i32 to vector<8x128xi32>
    %555 = arith.cmpi eq, %491, %554 : vector<8x128xi32>
    %556 = vector.broadcast %553 : i32 to vector<8x128xi32>
    %557 = arith.cmpi eq, %492, %556 : vector<8x128xi32>
    %558 = arith.andi %555, %557 : vector<8x128xi1>
    %cst_192 = arith.constant 0.000000e+00 : f32
    %559 = vector.broadcast %cst_192 : f32 to vector<8x128xf32>
    %560 = arith.select %558, %465, %559 : vector<8x128xi1>, vector<8x128xf32>
    %561 = vector.shape_cast %560 : vector<8x128xf32> to vector<1x8x128xf32>
    %cst_193 = arith.constant dense<0.000000e+00> : vector<1xf32>
    %562 = vector.multi_reduction <add>, %561, %cst_193 [1, 2] : vector<1x8x128xf32> to vector<1xf32>
    %563 = vector.shape_cast %562 : vector<1xf32> to vector<1x1x1xf32>
    %564 = vector.extract %563[0, 0, 0] : f32 from vector<1x1x1xf32>
    %c3_i32 = arith.constant 3 : i32
    %565 = arith.cmpi sgt, %12, %c3_i32 : i32
    %566 = arith.addf %482, %564 : f32
    %cst_194 = arith.constant 0.000000e+00 : f32
    %567 = arith.select %565, %566, %cst_194 : f32
    %568 = arith.addf %549, %567 : f32
    %569 = arith.index_cast %arg0 : i32 to index
    %c4_195 = arith.constant 4 : index
    %570 = memref.load %arg6[%569, %c4_195] : memref<3x8xi32, #tpu.memory_space<smem>>
    %571 = arith.index_cast %arg0 : i32 to index
    %c4_196 = arith.constant 4 : index
    %572 = memref.load %arg7[%571, %c4_196] : memref<3x8xi32, #tpu.memory_space<smem>>
    %573 = vector.broadcast %570 : i32 to vector<8x128xi32>
    %574 = arith.cmpi eq, %491, %573 : vector<8x128xi32>
    %575 = vector.broadcast %572 : i32 to vector<8x128xi32>
    %576 = arith.cmpi eq, %492, %575 : vector<8x128xi32>
    %577 = arith.andi %574, %576 : vector<8x128xi1>
    %cst_197 = arith.constant 0.000000e+00 : f32
    %578 = vector.broadcast %cst_197 : f32 to vector<8x128xf32>
    %579 = arith.select %577, %465, %578 : vector<8x128xi1>, vector<8x128xf32>
    %580 = vector.shape_cast %579 : vector<8x128xf32> to vector<1x8x128xf32>
    %cst_198 = arith.constant dense<0.000000e+00> : vector<1xf32>
    %581 = vector.multi_reduction <add>, %580, %cst_198 [1, 2] : vector<1x8x128xf32> to vector<1xf32>
    %582 = vector.shape_cast %581 : vector<1xf32> to vector<1x1x1xf32>
    %583 = vector.extract %582[0, 0, 0] : f32 from vector<1x1x1xf32>
    %c4_i32 = arith.constant 4 : i32
    %584 = arith.cmpi sgt, %12, %c4_i32 : i32
    %585 = arith.addf %482, %583 : f32
    %cst_199 = arith.constant 0.000000e+00 : f32
    %586 = arith.select %584, %585, %cst_199 : f32
    %587 = arith.addf %568, %586 : f32
    %588 = arith.index_cast %arg0 : i32 to index
    %c5_200 = arith.constant 5 : index
    %589 = memref.load %arg6[%588, %c5_200] : memref<3x8xi32, #tpu.memory_space<smem>>
    %590 = arith.index_cast %arg0 : i32 to index
    %c5_201 = arith.constant 5 : index
    %591 = memref.load %arg7[%590, %c5_201] : memref<3x8xi32, #tpu.memory_space<smem>>
    %592 = vector.broadcast %589 : i32 to vector<8x128xi32>
    %593 = arith.cmpi eq, %491, %592 : vector<8x128xi32>
    %594 = vector.broadcast %591 : i32 to vector<8x128xi32>
    %595 = arith.cmpi eq, %492, %594 : vector<8x128xi32>
    %596 = arith.andi %593, %595 : vector<8x128xi1>
    %cst_202 = arith.constant 0.000000e+00 : f32
    %597 = vector.broadcast %cst_202 : f32 to vector<8x128xf32>
    %598 = arith.select %596, %465, %597 : vector<8x128xi1>, vector<8x128xf32>
    %599 = vector.shape_cast %598 : vector<8x128xf32> to vector<1x8x128xf32>
    %cst_203 = arith.constant dense<0.000000e+00> : vector<1xf32>
    %600 = vector.multi_reduction <add>, %599, %cst_203 [1, 2] : vector<1x8x128xf32> to vector<1xf32>
    %601 = vector.shape_cast %600 : vector<1xf32> to vector<1x1x1xf32>
    %602 = vector.extract %601[0, 0, 0] : f32 from vector<1x1x1xf32>
    %c5_i32 = arith.constant 5 : i32
    %603 = arith.cmpi sgt, %12, %c5_i32 : i32
    %604 = arith.addf %482, %602 : f32
    %cst_204 = arith.constant 0.000000e+00 : f32
    %605 = arith.select %603, %604, %cst_204 : f32
    %606 = arith.addf %587, %605 : f32
    %607 = arith.index_cast %arg0 : i32 to index
    %c6_205 = arith.constant 6 : index
    %608 = memref.load %arg6[%607, %c6_205] : memref<3x8xi32, #tpu.memory_space<smem>>
    %609 = arith.index_cast %arg0 : i32 to index
    %c6_206 = arith.constant 6 : index
    %610 = memref.load %arg7[%609, %c6_206] : memref<3x8xi32, #tpu.memory_space<smem>>
    %611 = vector.broadcast %608 : i32 to vector<8x128xi32>
    %612 = arith.cmpi eq, %491, %611 : vector<8x128xi32>
    %613 = vector.broadcast %610 : i32 to vector<8x128xi32>
    %614 = arith.cmpi eq, %492, %613 : vector<8x128xi32>
    %615 = arith.andi %612, %614 : vector<8x128xi1>
    %cst_207 = arith.constant 0.000000e+00 : f32
    %616 = vector.broadcast %cst_207 : f32 to vector<8x128xf32>
    %617 = arith.select %615, %465, %616 : vector<8x128xi1>, vector<8x128xf32>
    %618 = vector.shape_cast %617 : vector<8x128xf32> to vector<1x8x128xf32>
    %cst_208 = arith.constant dense<0.000000e+00> : vector<1xf32>
    %619 = vector.multi_reduction <add>, %618, %cst_208 [1, 2] : vector<1x8x128xf32> to vector<1xf32>
    %620 = vector.shape_cast %619 : vector<1xf32> to vector<1x1x1xf32>
    %621 = vector.extract %620[0, 0, 0] : f32 from vector<1x1x1xf32>
    %c6_i32 = arith.constant 6 : i32
    %622 = arith.cmpi sgt, %12, %c6_i32 : i32
    %623 = arith.addf %482, %621 : f32
    %cst_209 = arith.constant 0.000000e+00 : f32
    %624 = arith.select %622, %623, %cst_209 : f32
    %625 = arith.addf %606, %624 : f32
    %626 = arith.index_cast %arg0 : i32 to index
    %c7_210 = arith.constant 7 : index
    %627 = memref.load %arg6[%626, %c7_210] : memref<3x8xi32, #tpu.memory_space<smem>>
    %628 = arith.index_cast %arg0 : i32 to index
    %c7_211 = arith.constant 7 : index
    %629 = memref.load %arg7[%628, %c7_211] : memref<3x8xi32, #tpu.memory_space<smem>>
    %630 = vector.broadcast %627 : i32 to vector<8x128xi32>
    %631 = arith.cmpi eq, %491, %630 : vector<8x128xi32>
    %632 = vector.broadcast %629 : i32 to vector<8x128xi32>
    %633 = arith.cmpi eq, %492, %632 : vector<8x128xi32>
    %634 = arith.andi %631, %633 : vector<8x128xi1>
    %cst_212 = arith.constant 0.000000e+00 : f32
    %635 = vector.broadcast %cst_212 : f32 to vector<8x128xf32>
    %636 = arith.select %634, %465, %635 : vector<8x128xi1>, vector<8x128xf32>
    %637 = vector.shape_cast %636 : vector<8x128xf32> to vector<1x8x128xf32>
    %cst_213 = arith.constant dense<0.000000e+00> : vector<1xf32>
    %638 = vector.multi_reduction <add>, %637, %cst_213 [1, 2] : vector<1x8x128xf32> to vector<1xf32>
    %639 = vector.shape_cast %638 : vector<1xf32> to vector<1x1x1xf32>
    %640 = vector.extract %639[0, 0, 0] : f32 from vector<1x1x1xf32>
    %c7_i32 = arith.constant 7 : i32
    %641 = arith.cmpi sgt, %12, %c7_i32 : i32
    %642 = arith.addf %482, %640 : f32
    %cst_214 = arith.constant 0.000000e+00 : f32
    %643 = arith.select %641, %642, %cst_214 : f32
    %644 = arith.addf %625, %643 : f32
    %c2_i32_215 = arith.constant 2 : i32
    %645 = arith.cmpi eq, %arg0, %c2_i32_215 : i32
    %cst_216 = arith.constant 0.000000e+00 : f32
    %646 = arith.select %645, %cst_216, %490 : f32
    %c0_217 = arith.constant 0 : index
    %c0_218 = arith.constant 0 : index
    %647 = vector.load %arg19[%c0_217, %c0_218] : memref<1x128xf32, #tpu.memory_space<vmem>>, vector<1x128xf32>
    %648 = arith.addf %474, %646 : f32
    %649 = arith.addf %648, %644 : f32
    %650 = vector.broadcast %649 : f32 to vector<1x128xf32>
    %651 = arith.addf %647, %650 : vector<1x128xf32>
    %c0_219 = arith.constant 0 : index
    %c0_220 = arith.constant 0 : index
    %652 = vector.load %arg19[%c0_219, %c0_220] : memref<1x128xf32, #tpu.memory_space<vmem>>, vector<1x128xf32>
    tpu.vector_store %arg19[%c0_219, %c0_220], %651 {strides = array<i32>} : memref<1x128xf32, #tpu.memory_space<vmem>>, vector<1x128xf32>,
    %c0_221 = arith.constant 0 : index
    %c0_222 = arith.constant 0 : index
    %653 = vector.load %arg17[%c0_221, %c0_222] : memref<1x128xf32, #tpu.memory_space<vmem>>, vector<1x128xf32>
    tpu.vector_store %arg17[%c0_221, %c0_222], %651 {strides = array<i32>} : memref<1x128xf32, #tpu.memory_space<vmem>>, vector<1x128xf32>,
    %654 = tpu.iota {dimensions = array<i32: 0>} : vector<8x1xi32>
    %655 = vector.broadcast %10 : i32 to vector<8x1xi32>
    %656 = arith.cmpi eq, %654, %655 : vector<8x1xi32>
    %c0_223 = arith.constant 0 : index
    %c0_224 = arith.constant 0 : index
    %657 = vector.load %arg9[%c0_223, %c0_224] : memref<8x128xf32, #tpu.memory_space<vmem>>, vector<8x128xf32>
    %cst_225 = arith.constant 0.000000e+00 : f32
    %658 = vector.shape_cast %656 : vector<8x1xi1> to vector<8x1xi1>
    %659 = vector.broadcast %658 : vector<8x1xi1> to vector<8x128xi1>
    %660 = vector.broadcast %cst_225 : f32 to vector<8x128xf32>
    %661 = arith.select %659, %657, %660 : vector<8x128xi1>, vector<8x128xf32>
    %cst_226 = arith.constant dense<0.000000e+00> : vector<128xf32>
    %662 = vector.multi_reduction <add>, %661, %cst_226 [0] : vector<8x128xf32> to vector<128xf32>
    %663 = vector.shape_cast %662 : vector<128xf32> to vector<1x128xf32>
    %664 = tpu.iota {dimensions = array<i32: 0>} : vector<8x1xi32>
    %665 = vector.broadcast %4 : i32 to vector<8x1xi32>
    %666 = arith.cmpi eq, %664, %665 : vector<8x1xi32>
    %667 = vector.shape_cast %666 : vector<8x1xi1> to vector<8x1xi1>
    %668 = vector.broadcast %667 : vector<8x1xi1> to vector<8x128xi1>
    %669 = vector.shape_cast %663 : vector<1x128xf32> to vector<1x128xf32>
    %670 = vector.broadcast %669 : vector<1x128xf32> to vector<8x128xf32>
    %671 = arith.select %668, %670, %363 : vector<8x128xi1>, vector<8x128xf32>
    %c0_227 = arith.constant 0 : index
    %c0_228 = arith.constant 0 : index
    %672 = vector.load %arg18[%c0_227, %c0_228] : memref<8x128xf32, #tpu.memory_space<vmem>>, vector<8x128xf32>
    tpu.vector_store %arg18[%c0_227, %c0_228], %671 {strides = array<i32>} : memref<8x128xf32, #tpu.memory_space<vmem>>, vector<8x128xf32>,
    return
  }
  func.func @transform_0(%arg0: i32, %arg1: memref<3xi32, #tpu.memory_space<smem>>, %arg2: memref<3xi32, #tpu.memory_space<smem>>, %arg3: memref<3xi32, #tpu.memory_space<smem>>, %arg4: memref<3xi32, #tpu.memory_space<smem>>, %arg5: memref<3xi32, #tpu.memory_space<smem>>, %arg6: memref<3x8xi32, #tpu.memory_space<smem>>, %arg7: memref<3x8xi32, #tpu.memory_space<smem>>) -> (i32, i32) {
    %c0_i32 = arith.constant 0 : i32
    %c0_i32_0 = arith.constant 0 : i32
    %c0_i32_1 = arith.constant 0 : i32
    return %c0_i32, %c0_i32_0 : i32, i32
  }
  func.func @transform_1(%arg0: i32, %arg1: memref<3xi32, #tpu.memory_space<smem>>, %arg2: memref<3xi32, #tpu.memory_space<smem>>, %arg3: memref<3xi32, #tpu.memory_space<smem>>, %arg4: memref<3xi32, #tpu.memory_space<smem>>, %arg5: memref<3xi32, #tpu.memory_space<smem>>, %arg6: memref<3x8xi32, #tpu.memory_space<smem>>, %arg7: memref<3x8xi32, #tpu.memory_space<smem>>) -> (i32, i32) {
    %c0_i32 = arith.constant 0 : i32
    %c0_i32_0 = arith.constant 0 : i32
    %c0_i32_1 = arith.constant 0 : i32
    return %c0_i32, %c0_i32_0 : i32, i32
  }
  func.func @transform_2(%arg0: i32, %arg1: memref<3xi32, #tpu.memory_space<smem>>, %arg2: memref<3xi32, #tpu.memory_space<smem>>, %arg3: memref<3xi32, #tpu.memory_space<smem>>, %arg4: memref<3xi32, #tpu.memory_space<smem>>, %arg5: memref<3xi32, #tpu.memory_space<smem>>, %arg6: memref<3x8xi32, #tpu.memory_space<smem>>, %arg7: memref<3x8xi32, #tpu.memory_space<smem>>) -> (i32, i32) {
    %c0_i32 = arith.constant 0 : i32
    %c0_i32_0 = arith.constant 0 : i32
    %c0_i32_1 = arith.constant 0 : i32
    return %c0_i32, %c0_i32_0 : i32, i32
  }
  func.func @transform_3(%arg0: i32, %arg1: memref<3xi32, #tpu.memory_space<smem>>, %arg2: memref<3xi32, #tpu.memory_space<smem>>, %arg3: memref<3xi32, #tpu.memory_space<smem>>, %arg4: memref<3xi32, #tpu.memory_space<smem>>, %arg5: memref<3xi32, #tpu.memory_space<smem>>, %arg6: memref<3x8xi32, #tpu.memory_space<smem>>, %arg7: memref<3x8xi32, #tpu.memory_space<smem>>) -> (i32, i32) {
    %c0_i32 = arith.constant 0 : i32
    %c0_i32_0 = arith.constant 0 : i32
    %c0_i32_1 = arith.constant 0 : i32
    return %c0_i32, %c0_i32_0 : i32, i32
  }
  func.func @transform_4(%arg0: i32, %arg1: memref<3xi32, #tpu.memory_space<smem>>, %arg2: memref<3xi32, #tpu.memory_space<smem>>, %arg3: memref<3xi32, #tpu.memory_space<smem>>, %arg4: memref<3xi32, #tpu.memory_space<smem>>, %arg5: memref<3xi32, #tpu.memory_space<smem>>, %arg6: memref<3x8xi32, #tpu.memory_space<smem>>, %arg7: memref<3x8xi32, #tpu.memory_space<smem>>) -> (i32, i32) {
    %c0_i32 = arith.constant 0 : i32
    %c0_i32_0 = arith.constant 0 : i32
    %c0_i32_1 = arith.constant 0 : i32
    return %c0_i32, %c0_i32_0 : i32, i32
  }
  func.func @transform_5(%arg0: i32, %arg1: memref<3xi32, #tpu.memory_space<smem>>, %arg2: memref<3xi32, #tpu.memory_space<smem>>, %arg3: memref<3xi32, #tpu.memory_space<smem>>, %arg4: memref<3xi32, #tpu.memory_space<smem>>, %arg5: memref<3xi32, #tpu.memory_space<smem>>, %arg6: memref<3x8xi32, #tpu.memory_space<smem>>, %arg7: memref<3x8xi32, #tpu.memory_space<smem>>) -> (i32, i32) {
    %c0_i32 = arith.constant 0 : i32
    %c0_i32_0 = arith.constant 0 : i32
    %c0_i32_1 = arith.constant 0 : i32
    return %c0_i32, %c0_i32_0 : i32, i32
  }
  func.func @transform_6(%arg0: i32, %arg1: memref<3xi32, #tpu.memory_space<smem>>, %arg2: memref<3xi32, #tpu.memory_space<smem>>, %arg3: memref<3xi32, #tpu.memory_space<smem>>, %arg4: memref<3xi32, #tpu.memory_space<smem>>, %arg5: memref<3xi32, #tpu.memory_space<smem>>, %arg6: memref<3x8xi32, #tpu.memory_space<smem>>, %arg7: memref<3x8xi32, #tpu.memory_space<smem>>) -> (i32, i32) {
    %c0_i32 = arith.constant 0 : i32
    %c0_i32_0 = arith.constant 0 : i32
    %c0_i32_1 = arith.constant 0 : i32
    return %c0_i32, %c0_i32_0 : i32, i32
  }
  func.func @transform_7(%arg0: i32, %arg1: memref<3xi32, #tpu.memory_space<smem>>, %arg2: memref<3xi32, #tpu.memory_space<smem>>, %arg3: memref<3xi32, #tpu.memory_space<smem>>, %arg4: memref<3xi32, #tpu.memory_space<smem>>, %arg5: memref<3xi32, #tpu.memory_space<smem>>, %arg6: memref<3x8xi32, #tpu.memory_space<smem>>, %arg7: memref<3x8xi32, #tpu.memory_space<smem>>) -> (i32, i32) {
    %c0_i32 = arith.constant 0 : i32
    %c0_i32_0 = arith.constant 0 : i32
    %c0_i32_1 = arith.constant 0 : i32
    return %c0_i32, %c0_i32_0 : i32, i32
  }
  func.func @transform_8(%arg0: i32, %arg1: memref<3xi32, #tpu.memory_space<smem>>, %arg2: memref<3xi32, #tpu.memory_space<smem>>, %arg3: memref<3xi32, #tpu.memory_space<smem>>, %arg4: memref<3xi32, #tpu.memory_space<smem>>, %arg5: memref<3xi32, #tpu.memory_space<smem>>, %arg6: memref<3x8xi32, #tpu.memory_space<smem>>, %arg7: memref<3x8xi32, #tpu.memory_space<smem>>) -> (i32, i32) {
    %c0_i32 = arith.constant 0 : i32
    %c0_i32_0 = arith.constant 0 : i32
    %c0_i32_1 = arith.constant 0 : i32
    return %c0_i32, %c0_i32_0 : i32, i32
  }
  func.func @transform_9(%arg0: i32, %arg1: memref<3xi32, #tpu.memory_space<smem>>, %arg2: memref<3xi32, #tpu.memory_space<smem>>, %arg3: memref<3xi32, #tpu.memory_space<smem>>, %arg4: memref<3xi32, #tpu.memory_space<smem>>, %arg5: memref<3xi32, #tpu.memory_space<smem>>, %arg6: memref<3x8xi32, #tpu.memory_space<smem>>, %arg7: memref<3x8xi32, #tpu.memory_space<smem>>) -> (i32, i32) {
    %c0_i32 = arith.constant 0 : i32
    %c0_i32_0 = arith.constant 0 : i32
    %c0_i32_1 = arith.constant 0 : i32
    return %c0_i32, %c0_i32_0 : i32, i32
  }
}

</mosaic_0001>

<llo_original>
// kernel: tpu_custom_call.1
$region0: #{tpu_custom_call.1}
  #allocation0 [shape = 'u32[]', space=smem, size = 0x4, offset = 0x4, fixed_abs, tag = 'smem constant byte address 0x4 - core index']
  #allocation1 [shape = 'u32[144,128]{1,0:T(1,128)}', space=vmem, size = 0x12000, scoped, tag = 'internal scratch']
  #allocation2 [shape = 'f32[8,128]{1,0:T(8,128)}', space=vmem, size = 0x1000, scoped, tag = 'scratch operand']
  #allocation3 [shape = 'f32[1,128]{1,0:T(1,128)}', space=vmem, size = 0x200, scoped, tag = 'scratch operand']
  #allocation4 [shape = 's32[1]{0}', space=sflag, size = 0x4, scoped, tag = 'scoped memory for tpu_custom_call.1']
  #allocation5 [shape = 'u8[512]{0}', space=smem, size = 0x200, scoped, tag = 'prefetched SMEM operand 0']
  #allocation6 [shape = 'u8[512]{0}', space=smem, size = 0x200, scoped, tag = 'prefetched SMEM operand 1']
  #allocation7 [shape = 'u8[512]{0}', space=smem, size = 0x200, scoped, tag = 'prefetched SMEM operand 2']
  #allocation8 [shape = 'u8[512]{0}', space=smem, size = 0x200, scoped, tag = 'prefetched SMEM operand 3']
  #allocation9 [shape = 'u8[512]{0}', space=smem, size = 0x200, scoped, tag = 'prefetched SMEM operand 4']
  #allocation10 [shape = 'u8[2048]{0}', space=smem, size = 0x800, scoped, tag = 'prefetched SMEM operand 5']
  #allocation11 [shape = 'u8[2048]{0}', space=smem, size = 0x800, scoped, tag = 'prefetched SMEM operand 6']
  %s0 = inlined_call_operand.hbm [shape: s32[3], index: 0, kind: input, shape index: {}]
  %s1 = inlined_call_operand.hbm [shape: s32[3], index: 1, kind: input, shape index: {}]
  %s2 = inlined_call_operand.hbm [shape: s32[3], index: 2, kind: input, shape index: {}]
  %s3 = inlined_call_operand.hbm [shape: s32[3], index: 3, kind: input, shape index: {}]
  %s4 = inlined_call_operand.hbm [shape: s32[3], index: 4, kind: input, shape index: {}]
  %s5 = inlined_call_operand.hbm [shape: s32[3,8], index: 5, kind: input, shape index: {}]
  %s6 = inlined_call_operand.hbm [shape: s32[3,8], index: 6, kind: input, shape index: {}]
  %s7 = inlined_call_operand.vmem [shape: f32[8,128], index: 7, kind: input, shape index: {}]
  %s8 = inlined_call_operand.vmem [shape: f32[8,128], index: 8, kind: input, shape index: {}]
  %s9 = inlined_call_operand.vmem [shape: f32[8,128], index: 9, kind: input, shape index: {}]
  %s10 = inlined_call_operand.hbm [shape: f32[8,8], index: 10, kind: input, shape index: {}]
  %s11 = inlined_call_operand.hbm [shape: f32[8,8], index: 11, kind: input, shape index: {}]
  %s12 = inlined_call_operand.hbm [shape: f32[8,8], index: 12, kind: input, shape index: {}]
  %s13 = inlined_call_operand.hbm [shape: bf16[3456,128], index: 13, kind: input, shape index: {}]
  %s14 = inlined_call_operand.hbm [shape: bf16[1024,512], index: 14, kind: input, shape index: {}]
  %s15 = inlined_call_operand.vmem [shape: f32[32,128], index: 15, kind: input, shape index: {}]
  %s16 = inlined_call_operand.hbm [shape: f32[1,128], index: 16, kind: output, shape index: {}]
  %s17 = sld [smem:[#allocation0]]
  $region93: #{tpu_custom_call.1} parent=0
    _
  %s19 = ssub.s32 1, %s17
  %s20 = scalar_select 0, %s19, %s17
  %22 = dma.hbm_to_smem %s0, 16, [#allocation5], [#allocation4]
  %24 = dma.hbm_to_smem %s1, 16, [#allocation6], [#allocation4]
  %26 = dma.hbm_to_smem %s2, 16, [#allocation7], [#allocation4]
  %28 = dma.hbm_to_smem %s3, 16, [#allocation8], [#allocation4]
  %30 = dma.hbm_to_smem %s4, 16, [#allocation9], [#allocation4]
  %32 = dma.hbm_to_smem %s5, 64, [#allocation10], [#allocation4]
  %34 = dma.hbm_to_smem %s6, 64, [#allocation11], [#allocation4]
  %35 = dma.done [#allocation4], 208
  %36 = sfence
  $region1: #{tpu_custom_call.1} parent=0
    #allocation12 [shape = 'u8[4096]{0}', space=vmem, size = 0x1000, scoped, tag = 'input window, operand 10, single buffered']
    #allocation13 [shape = 's32[2]{0}', space=sflag, size = 0x8, scoped, tag = 'scoped memory for tpu_custom_call.1']
    #allocation14 [shape = 's32[2]{0}', space=sflag, size = 0x8, scoped, tag = 'scoped memory for tpu_custom_call.1']
    #allocation15 [shape = 'u8[4096]{0}', space=vmem, size = 0x1000, scoped, tag = 'input window, operand 11, single buffered']
    #allocation16 [shape = 's32[1]{0}', space=sflag, size = 0x4, scoped, tag = 'scoped memory for tpu_custom_call.1']
    #allocation17 [shape = 'u8[4096]{0}', space=vmem, size = 0x1000, scoped, tag = 'input window, operand 12, single buffered']
    #allocation18 [shape = 'u8[884736]{0}', space=vmem, size = 0xd8000, scoped, tag = 'input window, operand 13, single buffered']
    #allocation19 [shape = 's32[1]{0}', space=sflag, size = 0x4, scoped, tag = 'scoped memory for tpu_custom_call.1']
    #allocation20 [shape = 'u8[1048576]{0}', space=vmem, size = 0x100000, scoped, tag = 'input window, operand 14, single buffered']
    #allocation21 [shape = 'u8[512]{0}', space=vmem, size = 0x400, scoped, tag = 'output window, operand 0, single buffered']
    %37 = vsyncpa [#allocation13], 0
    %38 = vsyncpa [#allocation16], 0
    %39 = vsyncpa [#allocation19], 0
    %40 = vsyncpa [#allocation14], 0
    loop: start=0, step=1, limit=5
    $region2: #{tpu_custom_call.1} parent=1 // loop_pre_header
      _
    $region3: #{tpu_custom_call.1} parent=1 // loop_header
      %s42 = sphi 0, %s46
      %p43 = scmp.ge.s32.totalorder %s42, 5
      %s50 = sphi 0, %s50
      %s52 = sphi 0, %s50
      %s53 = sphi 0, %s52
      %s67 = sphi 0, %s53
      %s71 = sphi 0, %s71
      %s73 = sphi 0, %s71
      %s74 = sphi 0, %s73
      %s88 = sphi 0, %s74
      %s92 = sphi 0, %s92
      %s94 = sphi 0, %s92
      %s95 = sphi 0, %s94
      %s109 = sphi 0, %s95
      %s113 = sphi 0, %s113
      %s115 = sphi 0, %s113
      %s116 = sphi 0, %s115
      %s130 = sphi 0, %s116
      %s134 = sphi 0, %s134
      %s136 = sphi 0, %s134
      %s137 = sphi 0, %s136
      %s151 = sphi 0, %s137
      %s155 = sphi 0, %s155
      %s157 = sphi 0, %s155
      %s158 = sphi 0, %s157
      %s172 = sphi 0, %s158
      %s176 = sphi 0, %s176
      %s178 = sphi 0, %s176
      %s179 = sphi 0, %s178
      %s193 = sphi 0, %s179
      %s197 = sphi 0, %s197
      %s199 = sphi 0, %s197
      %s200 = sphi 0, %s199
      %s214 = sphi 0, %s200
      %s218 = sphi 0, %s218
      %s220 = sphi 0, %s218
      %s221 = sphi 0, %s220
      %s235 = sphi 0, %s221
      %s239 = sphi 0, %s239
      %s241 = sphi 0, %s239
      %s242 = sphi 0, %s241
      %s256 = sphi 0, %s242
    $region4: #{tpu_custom_call.1} parent=1 // loop_header_branch
      %45 = sbr.rel (%p43) target = $region8
    $region5: #{tpu_custom_call.1} parent=1 // loop_body
      %s47 = ssub.s32 %s42, 1
      %s48 = ssub.s32 %s42, 2
      %s49 = sadd.s32 %s42, 1
      %s51 = sadd.s32 %s50, 1
      %p54 = scmp.eq.s32.totalorder %s42, 2
      %p55 = scmp.ne.s32.totalorder %s50, %s52
      %p56 = scmp.eq.s32.totalorder %s42, 0
      %p57 = por %p55, %p56
      %p58 = scmp.ne.s32.totalorder %s50, %s52
      %p59 = scmp.eq.s32.totalorder %s47, 2
      %p60 = por %p58, %p59
      %p61 = scmp.ne.s32.totalorder %s52, %s53
      %p62 = scmp.eq.s32.totalorder %s47, 0
      %p63 = por %p61, %p62
      %p64 = scmp.ne.s32.totalorder %s52, %s53
      %p65 = scmp.eq.s32.totalorder %s48, 2
      %p66 = por %p64, %p65
      %p68 = scmp.ne.s32.totalorder %s53, %s67
      %p69 = scmp.eq.s32.totalorder %s48, 0
      %p70 = por %p68, %p69
      %s72 = sadd.s32 %s71, 1
      %p75 = scmp.eq.s32.totalorder %s42, 2
      %p76 = scmp.ne.s32.totalorder %s71, %s73
      %p77 = scmp.eq.s32.totalorder %s42, 0
      %p78 = por %p76, %p77
      %p79 = scmp.ne.s32.totalorder %s71, %s73
      %p80 = scmp.eq.s32.totalorder %s47, 2
      %p81 = por %p79, %p80
      %p82 = scmp.ne.s32.totalorder %s73, %s74
      %p83 = scmp.eq.s32.totalorder %s47, 0
      %p84 = por %p82, %p83
      %p85 = scmp.ne.s32.totalorder %s73, %s74
      %p86 = scmp.eq.s32.totalorder %s48, 2
      %p87 = por %p85, %p86
      %p89 = scmp.ne.s32.totalorder %s74, %s88
      %p90 = scmp.eq.s32.totalorder %s48, 0
      %p91 = por %p89, %p90
      %s93 = sadd.s32 %s92, 1
      %p96 = scmp.eq.s32.totalorder %s42, 2
      %p97 = scmp.ne.s32.totalorder %s92, %s94
      %p98 = scmp.eq.s32.totalorder %s42, 0
      %p99 = por %p97, %p98
      %p100 = scmp.ne.s32.totalorder %s92, %s94
      %p101 = scmp.eq.s32.totalorder %s47, 2
      %p102 = por %p100, %p101
      %p103 = scmp.ne.s32.totalorder %s94, %s95
      %p104 = scmp.eq.s32.totalorder %s47, 0
      %p105 = por %p103, %p104
      %p106 = scmp.ne.s32.totalorder %s94, %s95
      %p107 = scmp.eq.s32.totalorder %s48, 2
      %p108 = por %p106, %p107
      %p110 = scmp.ne.s32.totalorder %s95, %s109
      %p111 = scmp.eq.s32.totalorder %s48, 0
      %p112 = por %p110, %p111
      %s114 = sadd.s32 %s113, 1
      %p117 = scmp.eq.s32.totalorder %s42, 2
      %p118 = scmp.ne.s32.totalorder %s113, %s115
      %p119 = scmp.eq.s32.totalorder %s42, 0
      %p120 = por %p118, %p119
      %p121 = scmp.ne.s32.totalorder %s113, %s115
      %p122 = scmp.eq.s32.totalorder %s47, 2
      %p123 = por %p121, %p122
      %p124 = scmp.ne.s32.totalorder %s115, %s116
      %p125 = scmp.eq.s32.totalorder %s47, 0
      %p126 = por %p124, %p125
      %p127 = scmp.ne.s32.totalorder %s115, %s116
      %p128 = scmp.eq.s32.totalorder %s48, 2
      %p129 = por %p127, %p128
      %p131 = scmp.ne.s32.totalorder %s116, %s130
      %p132 = scmp.eq.s32.totalorder %s48, 0
      %p133 = por %p131, %p132
      %s135 = sadd.s32 %s134, 1
      %p138 = scmp.eq.s32.totalorder %s42, 2
      %p139 = scmp.ne.s32.totalorder %s134, %s136
      %p140 = scmp.eq.s32.totalorder %s42, 0
      %p141 = por %p139, %p140
      %p142 = scmp.ne.s32.totalorder %s134, %s136
      %p143 = scmp.eq.s32.totalorder %s47, 2
      %p144 = por %p142, %p143
      %p145 = scmp.ne.s32.totalorder %s136, %s137
      %p146 = scmp.eq.s32.totalorder %s47, 0
      %p147 = por %p145, %p146
      %p148 = scmp.ne.s32.totalorder %s136, %s137
      %p149 = scmp.eq.s32.totalorder %s48, 2
      %p150 = por %p148, %p149
      %p152 = scmp.ne.s32.totalorder %s137, %s151
      %p153 = scmp.eq.s32.totalorder %s48, 0
      %p154 = por %p152, %p153
      %s156 = sadd.s32 %s155, 1
      %p159 = scmp.eq.s32.totalorder %s42, 2
      %p160 = scmp.ne.s32.totalorder %s155, %s157
      %p161 = scmp.eq.s32.totalorder %s42, 0
      %p162 = por %p160, %p161
      %p163 = scmp.ne.s32.totalorder %s155, %s157
      %p164 = scmp.eq.s32.totalorder %s47, 2
      %p165 = por %p163, %p164
      %p166 = scmp.ne.s32.totalorder %s157, %s158
      %p167 = scmp.eq.s32.totalorder %s47, 0
      %p168 = por %p166, %p167
      %p169 = scmp.ne.s32.totalorder %s157, %s158
      %p170 = scmp.eq.s32.totalorder %s48, 2
      %p171 = por %p169, %p170
      %p173 = scmp.ne.s32.totalorder %s158, %s172
      %p174 = scmp.eq.s32.totalorder %s48, 0
      %p175 = por %p173, %p174
      %s177 = sadd.s32 %s176, 1
      %p180 = scmp.eq.s32.totalorder %s42, 2
      %p181 = scmp.ne.s32.totalorder %s176, %s178
      %p182 = scmp.eq.s32.totalorder %s42, 0
      %p183 = por %p181, %p182
      %p184 = scmp.ne.s32.totalorder %s176, %s178
      %p185 = scmp.eq.s32.totalorder %s47, 2
      %p186 = por %p184, %p185
      %p187 = scmp.ne.s32.totalorder %s178, %s179
      %p188 = scmp.eq.s32.totalorder %s47, 0
      %p189 = por %p187, %p188
      %p190 = scmp.ne.s32.totalorder %s178, %s179
      %p191 = scmp.eq.s32.totalorder %s48, 2
      %p192 = por %p190, %p191
      %p194 = scmp.ne.s32.totalorder %s179, %s193
      %p195 = scmp.eq.s32.totalorder %s48, 0
      %p196 = por %p194, %p195
      %s198 = sadd.s32 %s197, 1
      %p201 = scmp.eq.s32.totalorder %s42, 2
      %p202 = scmp.ne.s32.totalorder %s197, %s199
      %p203 = scmp.eq.s32.totalorder %s42, 0
      %p204 = por %p202, %p203
      %p205 = scmp.ne.s32.totalorder %s197, %s199
      %p206 = scmp.eq.s32.totalorder %s47, 2
      %p207 = por %p205, %p206
      %p208 = scmp.ne.s32.totalorder %s199, %s200
      %p209 = scmp.eq.s32.totalorder %s47, 0
      %p210 = por %p208, %p209
      %p211 = scmp.ne.s32.totalorder %s199, %s200
      %p212 = scmp.eq.s32.totalorder %s48, 2
      %p213 = por %p211, %p212
      %p215 = scmp.ne.s32.totalorder %s200, %s214
      %p216 = scmp.eq.s32.totalorder %s48, 0
      %p217 = por %p215, %p216
      %s219 = sadd.s32 %s218, 1
      %p222 = scmp.eq.s32.totalorder %s42, 2
      %p223 = scmp.ne.s32.totalorder %s218, %s220
      %p224 = scmp.eq.s32.totalorder %s42, 0
      %p225 = por %p223, %p224
      %p226 = scmp.ne.s32.totalorder %s218, %s220
      %p227 = scmp.eq.s32.totalorder %s47, 2
      %p228 = por %p226, %p227
      %p229 = scmp.ne.s32.totalorder %s220, %s221
      %p230 = scmp.eq.s32.totalorder %s47, 0
      %p231 = por %p229, %p230
      %p232 = scmp.ne.s32.totalorder %s220, %s221
      %p233 = scmp.eq.s32.totalorder %s48, 2
      %p234 = por %p232, %p233
      %p236 = scmp.ne.s32.totalorder %s221, %s235
      %p237 = scmp.eq.s32.totalorder %s48, 0
      %p238 = por %p236, %p237
      %s240 = sadd.s32 %s239, 1
      %p243 = scmp.eq.s32.totalorder %s42, 2
      %p244 = scmp.ne.s32.totalorder %s239, %s241
      %p245 = scmp.eq.s32.totalorder %s42, 0
      %p246 = por %p244, %p245
      %p247 = scmp.ne.s32.totalorder %s239, %s241
      %p248 = scmp.eq.s32.totalorder %s47, 2
      %p249 = por %p247, %p248
      %p250 = scmp.ne.s32.totalorder %s241, %s242
      %p251 = scmp.eq.s32.totalorder %s47, 0
      %p252 = por %p250, %p251
      %p253 = scmp.ne.s32.totalorder %s241, %s242
      %p254 = scmp.eq.s32.totalorder %s48, 2
      %p255 = por %p253, %p254
      %p257 = scmp.ne.s32.totalorder %s242, %s256
      %p258 = scmp.eq.s32.totalorder %s48, 0
      %p259 = por %p257, %p258
      %p260 = scmp.le.s32.totalorder 1, %s42
      %p261 = scmp.lt.s32.totalorder %s42, 4
      %p262 = pnand %p260, %p261
      %p263 = pneg %p262
      // Predicated region
      $region9: #{tpu_custom_call.1} parent=5 // pred_check
        _
      $region10: #{tpu_custom_call.1} parent=5 // pred_check_branch
        %265 = sbr.rel (%p262) target = $region12
      $region11: #{tpu_custom_call.1} parent=5 // pred_region
        %s266 = ssub.s32 %s42, 1
        // Predicated region
        $region13: #{tpu_custom_call.1} parent=11 // pred_check
          %p267 = pneg %p63
        $region14: #{tpu_custom_call.1} parent=11 // pred_check_branch
          %269 = sbr.rel (%p267) target = $region16
        $region15: #{tpu_custom_call.1} parent=11 // pred_region
          _
        $region16: #{tpu_custom_call.1} parent=11 // pred_fallthru
          _
        // Predicated region
        $region17: #{tpu_custom_call.1} parent=11 // pred_check
          %p270 = pneg %p84
        $region18: #{tpu_custom_call.1} parent=11 // pred_check_branch
          %272 = sbr.rel (%p270) target = $region20
        $region19: #{tpu_custom_call.1} parent=11 // pred_region
          _
        $region20: #{tpu_custom_call.1} parent=11 // pred_fallthru
          _
        // Predicated region
        $region21: #{tpu_custom_call.1} parent=11 // pred_check
          %p273 = pneg %p105
        $region22: #{tpu_custom_call.1} parent=11 // pred_check_branch
          %275 = sbr.rel (%p273) target = $region24
        $region23: #{tpu_custom_call.1} parent=11 // pred_region
          _
        $region24: #{tpu_custom_call.1} parent=11 // pred_fallthru
          _
        // Predicated region
        $region25: #{tpu_custom_call.1} parent=11 // pred_check
          %p276 = pneg %p126
        $region26: #{tpu_custom_call.1} parent=11 // pred_check_branch
          %278 = sbr.rel (%p276) target = $region28
        $region27: #{tpu_custom_call.1} parent=11 // pred_region
          %s280 = ssub.s32 128, 128
          %281 = vsyncadd [#allocation13], %s280
          %s283 = sshll.u32 [#allocation12], 4
          %s284 = int_to_ptr.vmem [resolvable:$true] %s283
          %286 = dma.hbm_to_vmem [thread:$0]  %s10, 128, %s284, [#allocation13]
        $region28: #{tpu_custom_call.1} parent=11 // pred_fallthru
          _
        // Predicated region
        $region29: #{tpu_custom_call.1} parent=11 // pred_check
          %p287 = pneg %p147
        $region30: #{tpu_custom_call.1} parent=11 // pred_check_branch
          %289 = sbr.rel (%p287) target = $region32
        $region31: #{tpu_custom_call.1} parent=11 // pred_region
          %s291 = ssub.s32 128, 128
          %292 = vsyncadd [#allocation16], %s291
          %s294 = sshll.u32 [#allocation15], 4
          %s295 = int_to_ptr.vmem [resolvable:$true] %s294
          %297 = dma.hbm_to_vmem [thread:$0]  %s11, 128, %s295, [#allocation16]
        $region32: #{tpu_custom_call.1} parent=11 // pred_fallthru
          _
        // Predicated region
        $region33: #{tpu_custom_call.1} parent=11 // pred_check
          %p298 = pneg %p168
        $region34: #{tpu_custom_call.1} parent=11 // pred_check_branch
          %300 = sbr.rel (%p298) target = $region36
        $region35: #{tpu_custom_call.1} parent=11 // pred_region
          %s302 = ssub.s32 128, 128
          %303 = vsyncadd [#allocation16], %s302
          %s305 = sshll.u32 [#allocation17], 4
          %s306 = int_to_ptr.vmem [resolvable:$true] %s305
          %308 = dma.hbm_to_vmem [thread:$0]  %s12, 128, %s306, [#allocation16]
        $region36: #{tpu_custom_call.1} parent=11 // pred_fallthru
          _
        // Predicated region
        $region37: #{tpu_custom_call.1} parent=11 // pred_check
          %p309 = pneg %p189
        $region38: #{tpu_custom_call.1} parent=11 // pred_check_branch
          %311 = sbr.rel (%p309) target = $region40
        $region39: #{tpu_custom_call.1} parent=11 // pred_region
          %s313 = ssub.s32 27648, 27648
          %314 = vsyncadd [#allocation19], %s313
          %s315 = sshll.u32 [#allocation18], 4
          %s316 = int_to_ptr.vmem [resolvable:$true] %s315
          %321 = dma.hbm_to_vmem [thread:$0]  %s13, 27648, %s316, [#allocation19], 64, 64, 4
        $region40: #{tpu_custom_call.1} parent=11 // pred_fallthru
          _
        // Predicated region
        $region41: #{tpu_custom_call.1} parent=11 // pred_check
          %p322 = pneg %p210
        $region42: #{tpu_custom_call.1} parent=11 // pred_check_branch
          %324 = sbr.rel (%p322) target = $region44
        $region43: #{tpu_custom_call.1} parent=11 // pred_region
          %s326 = ssub.s32 32768, 32768
          %327 = vsyncadd [#allocation19], %s326
          %s328 = sshll.u32 [#allocation20], 4
          %s329 = int_to_ptr.vmem [resolvable:$true] %s328
          %334 = dma.hbm_to_vmem [thread:$0]  %s14, 32768, %s329, [#allocation19], 256, 256, 16
        $region44: #{tpu_custom_call.1} parent=11 // pred_fallthru
          _
        // Predicated region
        $region45: #{tpu_custom_call.1} parent=11 // pred_check
          %p335 = pneg %p231
        $region46: #{tpu_custom_call.1} parent=11 // pred_check_branch
          %337 = sbr.rel (%p335) target = $region48
        $region47: #{tpu_custom_call.1} parent=11 // pred_region
          _
        $region48: #{tpu_custom_call.1} parent=11 // pred_fallthru
          _
      $region12: #{tpu_custom_call.1} parent=5 // pred_fallthru
        _
      %p338 = scmp.lt.s32.totalorder %s42, 3
      // Predicated region
      $region49: #{tpu_custom_call.1} parent=5 // pred_check
        %p339 = pneg %p338
      $region50: #{tpu_custom_call.1} parent=5 // pred_check_branch
        %341 = sbr.rel (%p339) target = $region52
      $region51: #{tpu_custom_call.1} parent=5 // pred_region
        _
      $region52: #{tpu_custom_call.1} parent=5 // pred_fallthru
        _
      %p342 = scmp.le.s32.totalorder 1, %s42
      %p343 = scmp.lt.s32.totalorder %s42, 4
      %p344 = pnand %p342, %p343
      %p345 = pneg %p344
      // Predicated region
      $region53: #{tpu_custom_call.1} parent=5 // pred_check
        _
      $region54: #{tpu_custom_call.1} parent=5 // pred_check_branch
        %347 = sbr.rel (%p344) target = $region56
      $region55: #{tpu_custom_call.1} parent=5 // pred_region
        %s348 = ssub.s32 %s42, 1
        // Predicated region
        $region57: #{tpu_custom_call.1} parent=55 // pred_check
          %p349 = pneg %p126
        $region58: #{tpu_custom_call.1} parent=55 // pred_check_branch
          %351 = sbr.rel (%p349) target = $region60
        $region59: #{tpu_custom_call.1} parent=55 // pred_region
          %352 = dma.done [#allocation13], 128
        $region60: #{tpu_custom_call.1} parent=55 // pred_fallthru
          _
        // Predicated region
        $region61: #{tpu_custom_call.1} parent=55 // pred_check
          %p353 = pneg %p147
        $region62: #{tpu_custom_call.1} parent=55 // pred_check_branch
          %355 = sbr.rel (%p353) target = $region64
        $region63: #{tpu_custom_call.1} parent=55 // pred_region
          %356 = dma.done [#allocation16], 128
        $region64: #{tpu_custom_call.1} parent=55 // pred_fallthru
          _
        // Predicated region
        $region65: #{tpu_custom_call.1} parent=55 // pred_check
          %p357 = pneg %p168
        $region66: #{tpu_custom_call.1} parent=55 // pred_check_branch
          %359 = sbr.rel (%p357) target = $region68
        $region67: #{tpu_custom_call.1} parent=55 // pred_region
          %360 = dma.done [#allocation16], 128
        $region68: #{tpu_custom_call.1} parent=55 // pred_fallthru
          _
        // Predicated region
        $region69: #{tpu_custom_call.1} parent=55 // pred_check
          %p361 = pneg %p189
        $region70: #{tpu_custom_call.1} parent=55 // pred_check_branch
          %363 = sbr.rel (%p361) target = $region72
        $region71: #{tpu_custom_call.1} parent=55 // pred_region
          %364 = dma.done [#allocation19], 27648
        $region72: #{tpu_custom_call.1} parent=55 // pred_fallthru
          _
        // Predicated region
        $region73: #{tpu_custom_call.1} parent=55 // pred_check
          %p365 = pneg %p210
        $region74: #{tpu_custom_call.1} parent=55 // pred_check_branch
          %367 = sbr.rel (%p365) target = $region76
        $region75: #{tpu_custom_call.1} parent=55 // pred_region
          %368 = dma.done [#allocation19], 32768
        $region76: #{tpu_custom_call.1} parent=55 // pred_fallthru
          _
        %p369 = pneg %p63
        %p370 = pneg %p60
        %p371 = pneg %p84
        %p372 = pneg %p81
        %p373 = pneg %p105
        %p374 = pneg %p102
        %p375 = pneg %p126
        %p376 = pneg %p123
        %p377 = pneg %p147
        %p378 = pneg %p144
        %p379 = pneg %p168
        %p380 = pneg %p165
        %p381 = pneg %p189
        %p382 = pneg %p186
        %p383 = pneg %p210
        %p384 = pneg %p207
        %p385 = pneg %p231
        %p386 = pneg %p228
        %p387 = pneg %p252
        %p388 = pneg %p249
        %p390 = scmp.eq.s32.totalorder %s47, 0
        // Predicated region
        $region77: #{tpu_custom_call.1} parent=55 // pred_check
          %p391 = pneg %p390
        $region78: #{tpu_custom_call.1} parent=55 // pred_check_branch
          %393 = sbr.rel (%p391) target = $region80
        $region79: #{tpu_custom_call.1} parent=55 // pred_region
          %v394 = vld [vmem:[%s7] sm:$0xff]
          %395 = vst [vmem:[#allocation2] sm:$0xff] %v394
          %396 = vst [vmem:[#allocation3] sm:$0x1] 0.0
        $region80: #{tpu_custom_call.1} parent=55 // pred_fallthru
          _
        %s397 = sld [smem:[#allocation5 + %s47]]
        %s398 = sld [smem:[#allocation6 + %s47]]
        %s399 = sld [smem:[#allocation7 + %s47]]
        %s400 = sld [smem:[#allocation8 + %s47]]
        %s401 = sld [smem:[#allocation9 + %s47]]
        %v402 = vlaneseq
        %v403 = vshrl.u32 %v402, 7
        %v404 = vstv %s398
        %vm405 = vcmp.lt.s32.totalorder %v403, %v404
        %v406 = vsel %vm405, 1, 0
        %v407 = vcvt.s32.f32 %v406
        %v408 = vstv %s397
        %vm409 = vcmp.lt.s32.totalorder %v403, %v408
        %v410 = vsel %vm409, 1, 0
        %v411 = vcvt.s32.f32 %v410
        %v412 = vld [vmem:[#allocation12] sm:$0xff]
        %v413 = vmul.f32 %v412, %v407
        %v414 = vld [vmem:[#allocation15] sm:$0xff]
        %v415 = vmul.f32 %v414, %v407
        %v416 = vld [vmem:[#allocation17] sm:$0xff]
        %v417 = vld [vmem:[%s9] sm:$0xff]
        %v418 = vld [vmem:[#allocation2] sm:$0xff]
        %v419 = vpack.c.bf16 %v415, %v415
        %v420 = vpack.c.bf16 %v418, %v418
        %vm421 = vcmask 64512
        %v423 = vsel %vm421, %v419, 0
        %vm425 = vcmask 1043456
        %v427 = vsel %vm425, %v420, 0
        %429 = vmatprep.subr.bf16.mxu0 0
        %430 = vmatpush1.bf16.msra.mxu0 %v427
        %431 = vmatprep.subr.bf16.mxu0 0
        %432 = vmatpush1.bf16.msra.mxu0 0
        %433 = vmatprep.subr.bf16.mxu0 0
        %434 = vmatpush1.bf16.msra.mxu0 0
        %435 = vmatprep.subr.bf16.mxu0 0
        %436 = vmatpush1.bf16.msra.mxu0 0
        %437 = vmatprep.subr.bf16.mxu0 0
        %438 = vmatpush1.bf16.msra.mxu0 0
        %439 = vmatprep.subr.bf16.mxu0 0
        %440 = vmatpush1.bf16.msra.mxu0 0
        %441 = vmatprep.subr.bf16.mxu0 0
        %442 = vmatpush1.bf16.msra.mxu0 0
        %443 = vmatprep.subr.bf16.mxu0 0
        %444 = vmatpush1.bf16.msra.mxu0 0
        %445 = vmatprep.subr.bf16.mxu0 0
        %446 = vmatpush1.bf16.msra.mxu0 0
        %447 = vmatprep.subr.bf16.mxu0 0
        %448 = vmatpush1.bf16.msra.mxu0 0
        %449 = vmatprep.subr.bf16.mxu0 0
        %450 = vmatpush1.bf16.msra.mxu0 0
        %451 = vmatprep.subr.bf16.mxu0 0
        %452 = vmatpush1.bf16.msra.mxu0 0
        %453 = vmatprep.subr.bf16.mxu0 0
        %454 = vmatpush1.bf16.msra.mxu0 0
        %455 = vmatprep.subr.bf16.mxu0 0
        %456 = vmatpush1.bf16.msra.mxu0 0
        %457 = vmatprep.subr.bf16.mxu0 0
        %458 = vmatpush1.bf16.msra.mxu0 0
        %459 = vmatprep.subr.bf16.mxu0 0
        %460 = vmatpush1.bf16.msra.mxu0 0
        %461 = vmatprep.mubr.bf16.mxu0 0
        %462 = vmatmul.mubr.bf16.gmra.mrb[0].mxu0 %v423
        %v463 = vpop.f32.mrb[0].mxu0
        %v464 = vadd.f32 0.0, %v463
        %v465 = vpop.f32.mrb[0].mxu0
        %v466 = vpop.f32.mrb[0].mxu0
        %v467 = vpop.f32.mrb[0].mxu0
        %468 = vdwg.mxu0
        %v469 = vpack.c.bf16 %v413, %v413
        %v471 = vsel %vm421, %v469, 0
        %473 = vmatprep.subr.bf16.mxu0 0
        %474 = vmatpush1.bf16.msra.mxu0 %v427
        %475 = vmatprep.subr.bf16.mxu0 0
        %476 = vmatpush1.bf16.msra.mxu0 0
        %477 = vmatprep.subr.bf16.mxu0 0
        %478 = vmatpush1.bf16.msra.mxu0 0
        %479 = vmatprep.subr.bf16.mxu0 0
        %480 = vmatpush1.bf16.msra.mxu0 0
        %481 = vmatprep.subr.bf16.mxu0 0
        %482 = vmatpush1.bf16.msra.mxu0 0
        %483 = vmatprep.subr.bf16.mxu0 0
        %484 = vmatpush1.bf16.msra.mxu0 0
        %485 = vmatprep.subr.bf16.mxu0 0
        %486 = vmatpush1.bf16.msra.mxu0 0
        %487 = vmatprep.subr.bf16.mxu0 0
        %488 = vmatpush1.bf16.msra.mxu0 0
        %489 = vmatprep.subr.bf16.mxu0 0
        %490 = vmatpush1.bf16.msra.mxu0 0
        %491 = vmatprep.subr.bf16.mxu0 0
        %492 = vmatpush1.bf16.msra.mxu0 0
        %493 = vmatprep.subr.bf16.mxu0 0
        %494 = vmatpush1.bf16.msra.mxu0 0
        %495 = vmatprep.subr.bf16.mxu0 0
        %496 = vmatpush1.bf16.msra.mxu0 0
        %497 = vmatprep.subr.bf16.mxu0 0
        %498 = vmatpush1.bf16.msra.mxu0 0
        %499 = vmatprep.subr.bf16.mxu0 0
        %500 = vmatpush1.bf16.msra.mxu0 0
        %501 = vmatprep.subr.bf16.mxu0 0
        %502 = vmatpush1.bf16.msra.mxu0 0
        %503 = vmatprep.subr.bf16.mxu0 0
        %504 = vmatpush1.bf16.msra.mxu0 0
        %505 = vmatprep.mubr.bf16.mxu0 0
        %506 = vmatmul.mubr.bf16.gmra.mrb[0].mxu0 %v471
        %v507 = vpop.f32.mrb[0].mxu0
        %v508 = vadd.f32 0.0, %v507
        %v509 = vpop.f32.mrb[0].mxu0
        %v510 = vpop.f32.mrb[0].mxu0
        %v511 = vpop.f32.mrb[0].mxu0
        %512 = vdwg.mxu0
        %v513 = vld [vmem:[#allocation18] sm:$0xf]
        %v514 = vld [vmem:[#allocation18 + $0x4] sm:$0xf]
        %v515 = vld [vmem:[#allocation18 + $0x8] sm:$0xf]
        %v516 = vld [vmem:[#allocation18 + $0xc] sm:$0xf]
        %v517 = vld [vmem:[#allocation18 + $0x10] sm:$0xf]
        %v518 = vld [vmem:[#allocation18 + $0x14] sm:$0xf]
        %v519 = vld [vmem:[#allocation18 + $0x18] sm:$0xf]
        %v520 = vld [vmem:[#allocation18 + $0x1c] sm:$0xf]
        %v521 = vld [vmem:[#allocation18 + $0x20] sm:$0xf]
        %v522 = vld [vmem:[#allocation18 + $0x24] sm:$0xf]
        %v523 = vld [vmem:[#allocation18 + $0x28] sm:$0xf]
        %v524 = vld [vmem:[#allocation18 + $0x2c] sm:$0xf]
        %v525 = vld [vmem:[#allocation18 + $0x30] sm:$0xf]
        %v526 = vld [vmem:[#allocation18 + $0x34] sm:$0xf]
        %v527 = vld [vmem:[#allocation18 + $0x38] sm:$0xf]
        %v528 = vld [vmem:[#allocation18 + $0x3c] sm:$0xf]
        %v529 = vpack.c.bf16 %v464, %v464
        %v530 = vld [vmem:[#allocation18 + $0x40] sm:$0xf]
        %v531 = vld [vmem:[#allocation18 + $0x44] sm:$0xf]
        %v532 = vld [vmem:[#allocation18 + $0x48] sm:$0xf]
        %v533 = vld [vmem:[#allocation18 + $0x4c] sm:$0xf]
        %v534 = vld [vmem:[#allocation18 + $0x50] sm:$0xf]
        %v535 = vld [vmem:[#allocation18 + $0x54] sm:$0xf]
        %v536 = vld [vmem:[#allocation18 + $0x58] sm:$0xf]
        %v537 = vld [vmem:[#allocation18 + $0x5c] sm:$0xf]
        %v538 = vld [vmem:[#allocation18 + $0x60] sm:$0xf]
        %v539 = vld [vmem:[#allocation18 + $0x64] sm:$0xf]
        %v540 = vld [vmem:[#allocation18 + $0x68] sm:$0xf]
        %v541 = vld [vmem:[#allocation18 + $0x6c] sm:$0xf]
        %v542 = vld [vmem:[#allocation18 + $0x70] sm:$0xf]
        %v543 = vld [vmem:[#allocation18 + $0x74] sm:$0xf]
        %v544 = vld [vmem:[#allocation18 + $0x78] sm:$0xf]
        %v545 = vld [vmem:[#allocation18 + $0x7c] sm:$0xf]
        %v546 = vpack.c.bf16 %v508, %v508
        %v563 = vunpack.c.l.b16 %v530
        %v564 = vunpack.c.l.b16 %v531
        %v565 = vunpack.c.l.b16 %v532
        %v566 = vunpack.c.l.b16 %v533
        %v567 = vunpack.c.l.b16 %v534
        %v568 = vunpack.c.l.b16 %v535
        %v569 = vunpack.c.l.b16 %v536
        %v570 = vunpack.c.l.b16 %v537
        %v571 = vunpack.c.l.b16 %v538
        %v572 = vunpack.c.l.b16 %v539
        %v573 = vunpack.c.l.b16 %v540
        %v574 = vunpack.c.l.b16 %v541
        %v575 = vunpack.c.l.b16 %v542
        %v576 = vunpack.c.l.b16 %v543
        %v577 = vunpack.c.l.b16 %v544
        %v578 = vunpack.c.l.b16 %v545
        %v579 = vpack.c.b16 %v564, %v563
        %v580 = vpack.c.b16 %v566, %v565
        %v581 = vpack.c.b16 %v568, %v567
        %v582 = vpack.c.b16 %v570, %v569
        %v583 = vpack.c.b16 %v572, %v571
        %v584 = vpack.c.b16 %v574, %v573
        %v585 = vpack.c.b16 %v576, %v575
        %v586 = vpack.c.b16 %v578, %v577
        %595 = vmatprep.subr.bf16.mxu0 0
        %596 = vmatpush1.bf16.msra.mxu0 %v579
        %597 = vmatprep.subr.bf16.mxu0 0
        %598 = vmatpush1.bf16.msra.mxu0 %v580
        %599 = vmatprep.subr.bf16.mxu0 0
        %600 = vmatpush1.bf16.msra.mxu0 %v581
        %601 = vmatprep.subr.bf16.mxu0 0
        %602 = vmatpush1.bf16.msra.mxu0 %v582
        %603 = vmatprep.subr.bf16.mxu0 0
        %604 = vmatpush1.bf16.msra.mxu0 %v583
        %605 = vmatprep.subr.bf16.mxu0 0
        %606 = vmatpush1.bf16.msra.mxu0 %v584
        %607 = vmatprep.subr.bf16.mxu0 0
        %608 = vmatpush1.bf16.msra.mxu0 %v585
        %609 = vmatprep.subr.bf16.mxu0 0
        %610 = vmatpush1.bf16.msra.mxu0 %v586
        %611 = vmatprep.subr.bf16.mxu0 0
        %612 = vmatpush1.bf16.msra.mxu0 0
        %613 = vmatprep.subr.bf16.mxu0 0
        %614 = vmatpush1.bf16.msra.mxu0 0
        %615 = vmatprep.subr.bf16.mxu0 0
        %616 = vmatpush1.bf16.msra.mxu0 0
        %617 = vmatprep.subr.bf16.mxu0 0
        %618 = vmatpush1.bf16.msra.mxu0 0
        %619 = vmatprep.subr.bf16.mxu0 0
        %620 = vmatpush1.bf16.msra.mxu0 0
        %621 = vmatprep.subr.bf16.mxu0 0
        %622 = vmatpush1.bf16.msra.mxu0 0
        %623 = vmatprep.subr.bf16.mxu0 0
        %624 = vmatpush1.bf16.msra.mxu0 0
        %625 = vmatprep.subr.bf16.mxu0 0
        %626 = vmatpush1.bf16.msra.mxu0 0
        %627 = vmatprep.mubr.bf16.mxu0 0
        %628 = vmatmul.mubr.bf16.gmra.mrb[0].mxu0 %v546
        %v629 = vpop.f32.mrb[0].mxu0
        %v630 = vadd.f32 0.0, %v629
        %v631 = vpop.f32.mrb[0].mxu0
        %v632 = vpop.f32.mrb[0].mxu0
        %v633 = vpop.f32.mrb[0].mxu0
        %634 = vdwg.mxu0
        %v651 = vunpack.c.l.b16 %v513
        %v652 = vunpack.c.l.b16 %v514
        %v653 = vunpack.c.l.b16 %v515
        %v654 = vunpack.c.l.b16 %v516
        %v655 = vunpack.c.l.b16 %v517
        %v656 = vunpack.c.l.b16 %v518
        %v657 = vunpack.c.l.b16 %v519
        %v658 = vunpack.c.l.b16 %v520
        %v659 = vunpack.c.l.b16 %v521
        %v660 = vunpack.c.l.b16 %v522
        %v661 = vunpack.c.l.b16 %v523
        %v662 = vunpack.c.l.b16 %v524
        %v663 = vunpack.c.l.b16 %v525
        %v664 = vunpack.c.l.b16 %v526
        %v665 = vunpack.c.l.b16 %v527
        %v666 = vunpack.c.l.b16 %v528
        %v667 = vpack.c.b16 %v652, %v651
        %v668 = vpack.c.b16 %v654, %v653
        %v669 = vpack.c.b16 %v656, %v655
        %v670 = vpack.c.b16 %v658, %v657
        %v671 = vpack.c.b16 %v660, %v659
        %v672 = vpack.c.b16 %v662, %v661
        %v673 = vpack.c.b16 %v664, %v663
        %v674 = vpack.c.b16 %v666, %v665
        %683 = vmatprep.subr.bf16.mxu0 0
        %684 = vmatpush1.bf16.msra.mxu0 %v667
        %685 = vmatprep.subr.bf16.mxu0 0
        %686 = vmatpush1.bf16.msra.mxu0 %v668
        %687 = vmatprep.subr.bf16.mxu0 0
        %688 = vmatpush1.bf16.msra.mxu0 %v669
        %689 = vmatprep.subr.bf16.mxu0 0
        %690 = vmatpush1.bf16.msra.mxu0 %v670
        %691 = vmatprep.subr.bf16.mxu0 0
        %692 = vmatpush1.bf16.msra.mxu0 %v671
        %693 = vmatprep.subr.bf16.mxu0 0
        %694 = vmatpush1.bf16.msra.mxu0 %v672
        %695 = vmatprep.subr.bf16.mxu0 0
        %696 = vmatpush1.bf16.msra.mxu0 %v673
        %697 = vmatprep.subr.bf16.mxu0 0
        %698 = vmatpush1.bf16.msra.mxu0 %v674
        %699 = vmatprep.subr.bf16.mxu0 0
        %700 = vmatpush1.bf16.msra.mxu0 0
        %701 = vmatprep.subr.bf16.mxu0 0
        %702 = vmatpush1.bf16.msra.mxu0 0
        %703 = vmatprep.subr.bf16.mxu0 0
        %704 = vmatpush1.bf16.msra.mxu0 0
        %705 = vmatprep.subr.bf16.mxu0 0
        %706 = vmatpush1.bf16.msra.mxu0 0
        %707 = vmatprep.subr.bf16.mxu0 0
        %708 = vmatpush1.bf16.msra.mxu0 0
        %709 = vmatprep.subr.bf16.mxu0 0
        %710 = vmatpush1.bf16.msra.mxu0 0
        %711 = vmatprep.subr.bf16.mxu0 0
        %712 = vmatpush1.bf16.msra.mxu0 0
        %713 = vmatprep.subr.bf16.mxu0 0
        %714 = vmatpush1.bf16.msra.mxu0 0
        %715 = vmatprep.mubr.bf16.mxu0 0
        %716 = vmatmul.mubr.bf16.gmra.mrb[0].mxu0 %v529
        %v717 = vpop.f32.mrb[0].mxu0
        %v718 = vadd.f32 %v630, %v717
        %v719 = vpop.f32.mrb[0].mxu0
        %v720 = vpop.f32.mrb[0].mxu0
        %v721 = vpop.f32.mrb[0].mxu0
        %722 = vdwg.mxu0
        %v723 = vld [vmem:[#allocation18 + $0x80] sm:$0xf]
        %v724 = vld [vmem:[#allocation18 + $0x84] sm:$0xf]
        %v725 = vld [vmem:[#allocation18 + $0x88] sm:$0xf]
        %v726 = vld [vmem:[#allocation18 + $0x8c] sm:$0xf]
        %v727 = vld [vmem:[#allocation18 + $0x90] sm:$0xf]
        %v728 = vld [vmem:[#allocation18 + $0x94] sm:$0xf]
        %v729 = vld [vmem:[#allocation18 + $0x98] sm:$0xf]
        %v730 = vld [vmem:[#allocation18 + $0x9c] sm:$0xf]
        %v731 = vld [vmem:[#allocation18 + $0xa0] sm:$0xf]
        %v732 = vld [vmem:[#allocation18 + $0xa4] sm:$0xf]
        %v733 = vld [vmem:[#allocation18 + $0xa8] sm:$0xf]
        %v734 = vld [vmem:[#allocation18 + $0xac] sm:$0xf]
        %v735 = vld [vmem:[#allocation18 + $0xb0] sm:$0xf]
        %v736 = vld [vmem:[#allocation18 + $0xb4] sm:$0xf]
        %v737 = vld [vmem:[#allocation18 + $0xb8] sm:$0xf]
        %v738 = vld [vmem:[#allocation18 + $0xbc] sm:$0xf]
        %v739 = vpack.c.bf16 %v417, %v417
        %v756 = vunpack.c.l.b16 %v723
        %v757 = vunpack.c.l.b16 %v724
        %v758 = vunpack.c.l.b16 %v725
        %v759 = vunpack.c.l.b16 %v726
        %v760 = vunpack.c.l.b16 %v727
        %v761 = vunpack.c.l.b16 %v728
        %v762 = vunpack.c.l.b16 %v729
        %v763 = vunpack.c.l.b16 %v730
        %v764 = vunpack.c.l.b16 %v731
        %v765 = vunpack.c.l.b16 %v732
        %v766 = vunpack.c.l.b16 %v733
        %v767 = vunpack.c.l.b16 %v734
        %v768 = vunpack.c.l.b16 %v735
        %v769 = vunpack.c.l.b16 %v736
        %v770 = vunpack.c.l.b16 %v737
        %v771 = vunpack.c.l.b16 %v738
        %v772 = vpack.c.b16 %v757, %v756
        %v773 = vpack.c.b16 %v759, %v758
        %v774 = vpack.c.b16 %v761, %v760
        %v775 = vpack.c.b16 %v763, %v762
        %v776 = vpack.c.b16 %v765, %v764
        %v777 = vpack.c.b16 %v767, %v766
        %v778 = vpack.c.b16 %v769, %v768
        %v779 = vpack.c.b16 %v771, %v770
        %788 = vmatprep.subr.bf16.mxu0 0
        %789 = vmatpush1.bf16.msra.mxu0 %v772
        %790 = vmatprep.subr.bf16.mxu0 0
        %791 = vmatpush1.bf16.msra.mxu0 %v773
        %792 = vmatprep.subr.bf16.mxu0 0
        %793 = vmatpush1.bf16.msra.mxu0 %v774
        %794 = vmatprep.subr.bf16.mxu0 0
        %795 = vmatpush1.bf16.msra.mxu0 %v775
        %796 = vmatprep.subr.bf16.mxu0 0
        %797 = vmatpush1.bf16.msra.mxu0 %v776
        %798 = vmatprep.subr.bf16.mxu0 0
        %799 = vmatpush1.bf16.msra.mxu0 %v777
        %800 = vmatprep.subr.bf16.mxu0 0
        %801 = vmatpush1.bf16.msra.mxu0 %v778
        %802 = vmatprep.subr.bf16.mxu0 0
        %803 = vmatpush1.bf16.msra.mxu0 %v779
        %804 = vmatprep.subr.bf16.mxu0 0
        %805 = vmatpush1.bf16.msra.mxu0 0
        %806 = vmatprep.subr.bf16.mxu0 0
        %807 = vmatpush1.bf16.msra.mxu0 0
        %808 = vmatprep.subr.bf16.mxu0 0
        %809 = vmatpush1.bf16.msra.mxu0 0
        %810 = vmatprep.subr.bf16.mxu0 0
        %811 = vmatpush1.bf16.msra.mxu0 0
        %812 = vmatprep.subr.bf16.mxu0 0
        %813 = vmatpush1.bf16.msra.mxu0 0
        %814 = vmatprep.subr.bf16.mxu0 0
        %815 = vmatpush1.bf16.msra.mxu0 0
        %816 = vmatprep.subr.bf16.mxu0 0
        %817 = vmatpush1.bf16.msra.mxu0 0
        %818 = vmatprep.subr.bf16.mxu0 0
        %819 = vmatpush1.bf16.msra.mxu0 0
        %820 = vmatprep.mubr.bf16.mxu0 0
        %821 = vmatmul.mubr.bf16.gmra.mrb[0].mxu0 %v739
        %v822 = vpop.f32.mrb[0].mxu0
        %v823 = vadd.f32 0.0, %v822
        %v824 = vpop.f32.mrb[0].mxu0
        %v825 = vpop.f32.mrb[0].mxu0
        %v826 = vpop.f32.mrb[0].mxu0
        %827 = vdwg.mxu0
        %v828 = vadd.f32 %v718, %v823
        %v829 = vld [vmem:[%s15] sm:$0x1]
        %v830 = vlaneseq
        %v831 = vshrl.u32 %v830, 7
        %v832 = vsub.s32 0, %v831
        %v833 = vrot.slane %v829, %v832
        %v834 = vadd.f32 %v828, %v833
        %v835 = vmax.f32 %v834, 0.0
        %v836 = vld [vmem:[#allocation18 + $0xc0] sm:$0xf]
        %v837 = vld [vmem:[#allocation18 + $0xc4] sm:$0xf]
        %v838 = vld [vmem:[#allocation18 + $0xc8] sm:$0xf]
        %v839 = vld [vmem:[#allocation18 + $0xcc] sm:$0xf]
        %v840 = vld [vmem:[#allocation18 + $0xd0] sm:$0xf]
        %v841 = vld [vmem:[#allocation18 + $0xd4] sm:$0xf]
        %v842 = vld [vmem:[#allocation18 + $0xd8] sm:$0xf]
        %v843 = vld [vmem:[#allocation18 + $0xdc] sm:$0xf]
        %v844 = vld [vmem:[#allocation18 + $0xe0] sm:$0xf]
        %v845 = vld [vmem:[#allocation18 + $0xe4] sm:$0xf]
        %v846 = vld [vmem:[#allocation18 + $0xe8] sm:$0xf]
        %v847 = vld [vmem:[#allocation18 + $0xec] sm:$0xf]
        %v848 = vld [vmem:[#allocation18 + $0xf0] sm:$0xf]
        %v849 = vld [vmem:[#allocation18 + $0xf4] sm:$0xf]
        %v850 = vld [vmem:[#allocation18 + $0xf8] sm:$0xf]
        %v851 = vld [vmem:[#allocation18 + $0xfc] sm:$0xf]
        %v852 = vpack.c.bf16 %v835, %v835
        %v853 = vld [vmem:[%s15 + $0x1] sm:$0x1]
        %v854 = vlaneseq
        %v855 = vshrl.u32 %v854, 7
        %v856 = vsub.s32 0, %v855
        %v857 = vrot.slane %v853, %v856
        %v874 = vunpack.c.l.b16 %v836
        %v875 = vunpack.c.l.b16 %v837
        %v876 = vunpack.c.l.b16 %v838
        %v877 = vunpack.c.l.b16 %v839
        %v878 = vunpack.c.l.b16 %v840
        %v879 = vunpack.c.l.b16 %v841
        %v880 = vunpack.c.l.b16 %v842
        %v881 = vunpack.c.l.b16 %v843
        %v882 = vunpack.c.l.b16 %v844
        %v883 = vunpack.c.l.b16 %v845
        %v884 = vunpack.c.l.b16 %v846
        %v885 = vunpack.c.l.b16 %v847
        %v886 = vunpack.c.l.b16 %v848
        %v887 = vunpack.c.l.b16 %v849
        %v888 = vunpack.c.l.b16 %v850
        %v889 = vunpack.c.l.b16 %v851
        %v890 = vpack.c.b16 %v875, %v874
        %v891 = vpack.c.b16 %v877, %v876
        %v892 = vpack.c.b16 %v879, %v878
        %v893 = vpack.c.b16 %v881, %v880
        %v894 = vpack.c.b16 %v883, %v882
        %v895 = vpack.c.b16 %v885, %v884
        %v896 = vpack.c.b16 %v887, %v886
        %v897 = vpack.c.b16 %v889, %v888
        %906 = vmatprep.subr.bf16.mxu0 0
        %907 = vmatpush1.bf16.msra.mxu0 %v890
        %908 = vmatprep.subr.bf16.mxu0 0
        %909 = vmatpush1.bf16.msra.mxu0 %v891
        %910 = vmatprep.subr.bf16.mxu0 0
        %911 = vmatpush1.bf16.msra.mxu0 %v892
        %912 = vmatprep.subr.bf16.mxu0 0
        %913 = vmatpush1.bf16.msra.mxu0 %v893
        %914 = vmatprep.subr.bf16.mxu0 0
        %915 = vmatpush1.bf16.msra.mxu0 %v894
        %916 = vmatprep.subr.bf16.mxu0 0
        %917 = vmatpush1.bf16.msra.mxu0 %v895
        %918 = vmatprep.subr.bf16.mxu0 0
        %919 = vmatpush1.bf16.msra.mxu0 %v896
        %920 = vmatprep.subr.bf16.mxu0 0
        %921 = vmatpush1.bf16.msra.mxu0 %v897
        %922 = vmatprep.subr.bf16.mxu0 0
        %923 = vmatpush1.bf16.msra.mxu0 0
        %924 = vmatprep.subr.bf16.mxu0 0
        %925 = vmatpush1.bf16.msra.mxu0 0
        %926 = vmatprep.subr.bf16.mxu0 0
        %927 = vmatpush1.bf16.msra.mxu0 0
        %928 = vmatprep.subr.bf16.mxu0 0
        %929 = vmatpush1.bf16.msra.mxu0 0
        %930 = vmatprep.subr.bf16.mxu0 0
        %931 = vmatpush1.bf16.msra.mxu0 0
        %932 = vmatprep.subr.bf16.mxu0 0
        %933 = vmatpush1.bf16.msra.mxu0 0
        %934 = vmatprep.subr.bf16.mxu0 0
        %935 = vmatpush1.bf16.msra.mxu0 0
        %936 = vmatprep.subr.bf16.mxu0 0
        %937 = vmatpush1.bf16.msra.mxu0 0
        %938 = vmatprep.mubr.bf16.mxu0 0
        %939 = vmatmul.mubr.bf16.gmra.mrb[0].mxu0 %v852
        %v940 = vpop.f32.mrb[0].mxu0
        %v941 = vadd.f32 %v857, %v940
        %v942 = vpop.f32.mrb[0].mxu0
        %v943 = vpop.f32.mrb[0].mxu0
        %v944 = vpop.f32.mrb[0].mxu0
        %945 = vdwg.mxu0
        %v946 = vmul.f32 %v941, %v407
        %v947 = vpack.c.bf16 %v416, %v416
        %v948 = vpack.c.bf16 %v946, %v946
        %v950 = vsel %vm421, %v947, 0
        %v953 = vsel %vm425, %v948, 0
        %955 = vmatprep.subr.bf16.mxu0 0
        %956 = vmatpush1.bf16.msra.mxu0 %v953
        %957 = vmatprep.subr.bf16.mxu0 0
        %958 = vmatpush1.bf16.msra.mxu0 0
        %959 = vmatprep.subr.bf16.mxu0 0
        %960 = vmatpush1.bf16.msra.mxu0 0
        %961 = vmatprep.subr.bf16.mxu0 0
        %962 = vmatpush1.bf16.msra.mxu0 0
        %963 = vmatprep.subr.bf16.mxu0 0
        %964 = vmatpush1.bf16.msra.mxu0 0
        %965 = vmatprep.subr.bf16.mxu0 0
        %966 = vmatpush1.bf16.msra.mxu0 0
        %967 = vmatprep.subr.bf16.mxu0 0
        %968 = vmatpush1.bf16.msra.mxu0 0
        %969 = vmatprep.subr.bf16.mxu0 0
        %970 = vmatpush1.bf16.msra.mxu0 0
        %971 = vmatprep.subr.bf16.mxu0 0
        %972 = vmatpush1.bf16.msra.mxu0 0
        %973 = vmatprep.subr.bf16.mxu0 0
        %974 = vmatpush1.bf16.msra.mxu0 0
        %975 = vmatprep.subr.bf16.mxu0 0
        %976 = vmatpush1.bf16.msra.mxu0 0
        %977 = vmatprep.subr.bf16.mxu0 0
        %978 = vmatpush1.bf16.msra.mxu0 0
        %979 = vmatprep.subr.bf16.mxu0 0
        %980 = vmatpush1.bf16.msra.mxu0 0
        %981 = vmatprep.subr.bf16.mxu0 0
        %982 = vmatpush1.bf16.msra.mxu0 0
        %983 = vmatprep.subr.bf16.mxu0 0
        %984 = vmatpush1.bf16.msra.mxu0 0
        %985 = vmatprep.subr.bf16.mxu0 0
        %986 = vmatpush1.bf16.msra.mxu0 0
        %987 = vmatprep.mubr.bf16.mxu0 0
        %988 = vmatmul.mubr.bf16.gmra.mrb[0].mxu0 %v950
        %v989 = vpop.f32.mrb[0].mxu0
        %v990 = vadd.f32 0.0, %v989
        %v991 = vpop.f32.mrb[0].mxu0
        %v992 = vpop.f32.mrb[0].mxu0
        %v993 = vpop.f32.mrb[0].mxu0
        %994 = vdwg.mxu0
        %v995 = vld [vmem:[#allocation20] sm:$0xff]
        %v996 = vld [vmem:[#allocation20 + $0x8] sm:$0xff]
        %v997 = vld [vmem:[#allocation20 + $0x10] sm:$0xff]
        %v998 = vld [vmem:[#allocation20 + $0x18] sm:$0xff]
        %v999 = vld [vmem:[#allocation20 + $0x20] sm:$0xff]
        %v1000 = vld [vmem:[#allocation20 + $0x28] sm:$0xff]
        %v1001 = vld [vmem:[#allocation20 + $0x30] sm:$0xff]
        %v1002 = vld [vmem:[#allocation20 + $0x38] sm:$0xff]
        %v1003 = vld [vmem:[#allocation20 + $0x40] sm:$0xff]
        %v1004 = vld [vmem:[#allocation20 + $0x48] sm:$0xff]
        %v1005 = vld [vmem:[#allocation20 + $0x50] sm:$0xff]
        %v1006 = vld [vmem:[#allocation20 + $0x58] sm:$0xff]
        %v1007 = vld [vmem:[#allocation20 + $0x60] sm:$0xff]
        %v1008 = vld [vmem:[#allocation20 + $0x68] sm:$0xff]
        %v1009 = vld [vmem:[#allocation20 + $0x70] sm:$0xff]
        %v1010 = vld [vmem:[#allocation20 + $0x78] sm:$0xff]
        %v1011 = vld [vmem:[#allocation20 + $0x80] sm:$0xff]
        %v1012 = vld [vmem:[#allocation20 + $0x88] sm:$0xff]
        %v1013 = vld [vmem:[#allocation20 + $0x90] sm:$0xff]
        %v1014 = vld [vmem:[#allocation20 + $0x98] sm:$0xff]
        %v1015 = vld [vmem:[#allocation20 + $0xa0] sm:$0xff]
        %v1016 = vld [vmem:[#allocation20 + $0xa8] sm:$0xff]
        %v1017 = vld [vmem:[#allocation20 + $0xb0] sm:$0xff]
        %v1018 = vld [vmem:[#allocation20 + $0xb8] sm:$0xff]
        %v1019 = vld [vmem:[#allocation20 + $0xc0] sm:$0xff]
        %v1020 = vld [vmem:[#allocation20 + $0xc8] sm:$0xff]
        %v1021 = vld [vmem:[#allocation20 + $0xd0] sm:$0xff]
        %v1022 = vld [vmem:[#allocation20 + $0xd8] sm:$0xff]
        %v1023 = vld [vmem:[#allocation20 + $0xe0] sm:$0xff]
        %v1024 = vld [vmem:[#allocation20 + $0xe8] sm:$0xff]
        %v1025 = vld [vmem:[#allocation20 + $0xf0] sm:$0xff]
        %v1026 = vld [vmem:[#allocation20 + $0xf8] sm:$0xff]
        %v1027 = vld [vmem:[#allocation20 + $0x100] sm:$0xff]
        %v1028 = vld [vmem:[#allocation20 + $0x108] sm:$0xff]
        %v1029 = vld [vmem:[#allocation20 + $0x110] sm:$0xff]
        %v1030 = vld [vmem:[#allocation20 + $0x118] sm:$0xff]
        %v1031 = vld [vmem:[#allocation20 + $0x120] sm:$0xff]
        %v1032 = vld [vmem:[#allocation20 + $0x128] sm:$0xff]
        %v1033 = vld [vmem:[#allocation20 + $0x130] sm:$0xff]
        %v1034 = vld [vmem:[#allocation20 + $0x138] sm:$0xff]
        %v1035 = vld [vmem:[#allocation20 + $0x140] sm:$0xff]
        %v1036 = vld [vmem:[#allocation20 + $0x148] sm:$0xff]
        %v1037 = vld [vmem:[#allocation20 + $0x150] sm:$0xff]
        %v1038 = vld [vmem:[#allocation20 + $0x158] sm:$0xff]
        %v1039 = vld [vmem:[#allocation20 + $0x160] sm:$0xff]
        %v1040 = vld [vmem:[#allocation20 + $0x168] sm:$0xff]
        %v1041 = vld [vmem:[#allocation20 + $0x170] sm:$0xff]
        %v1042 = vld [vmem:[#allocation20 + $0x178] sm:$0xff]
        %v1043 = vld [vmem:[#allocation20 + $0x180] sm:$0xff]
        %v1044 = vld [vmem:[#allocation20 + $0x188] sm:$0xff]
        %v1045 = vld [vmem:[#allocation20 + $0x190] sm:$0xff]
        %v1046 = vld [vmem:[#allocation20 + $0x198] sm:$0xff]
        %v1047 = vld [vmem:[#allocation20 + $0x1a0] sm:$0xff]
        %v1048 = vld [vmem:[#allocation20 + $0x1a8] sm:$0xff]
        %v1049 = vld [vmem:[#allocation20 + $0x1b0] sm:$0xff]
        %v1050 = vld [vmem:[#allocation20 + $0x1b8] sm:$0xff]
        %v1051 = vld [vmem:[#allocation20 + $0x1c0] sm:$0xff]
        %v1052 = vld [vmem:[#allocation20 + $0x1c8] sm:$0xff]
        %v1053 = vld [vmem:[#allocation20 + $0x1d0] sm:$0xff]
        %v1054 = vld [vmem:[#allocation20 + $0x1d8] sm:$0xff]
        %v1055 = vld [vmem:[#allocation20 + $0x1e0] sm:$0xff]
        %v1056 = vld [vmem:[#allocation20 + $0x1e8] sm:$0xff]
        %v1057 = vld [vmem:[#allocation20 + $0x1f0] sm:$0xff]
        %v1058 = vld [vmem:[#allocation20 + $0x1f8] sm:$0xff]
        %v1059 = vpack.c.bf16 %v990, %v990
        %v1092 = vunpack.c.l.b16 %v1027
        %v1093 = vunpack.c.h.b16 %v1027
        %v1094 = vunpack.c.l.b16 %v1028
        %v1095 = vunpack.c.h.b16 %v1028
        %v1096 = vunpack.c.l.b16 %v1029
        %v1097 = vunpack.c.h.b16 %v1029
        %v1098 = vunpack.c.l.b16 %v1030
        %v1099 = vunpack.c.h.b16 %v1030
        %v1100 = vunpack.c.l.b16 %v1031
        %v1101 = vunpack.c.h.b16 %v1031
        %v1102 = vunpack.c.l.b16 %v1032
        %v1103 = vunpack.c.h.b16 %v1032
        %v1104 = vunpack.c.l.b16 %v1033
        %v1105 = vunpack.c.h.b16 %v1033
        %v1106 = vunpack.c.l.b16 %v1034
        %v1107 = vunpack.c.h.b16 %v1034
        %v1108 = vunpack.c.l.b16 %v1035
        %v1109 = vunpack.c.h.b16 %v1035
        %v1110 = vunpack.c.l.b16 %v1036
        %v1111 = vunpack.c.h.b16 %v1036
        %v1112 = vunpack.c.l.b16 %v1037
        %v1113 = vunpack.c.h.b16 %v1037
        %v1114 = vunpack.c.l.b16 %v1038
        %v1115 = vunpack.c.h.b16 %v1038
        %v1116 = vunpack.c.l.b16 %v1039
        %v1117 = vunpack.c.h.b16 %v1039
        %v1118 = vunpack.c.l.b16 %v1040
        %v1119 = vunpack.c.h.b16 %v1040
        %v1120 = vunpack.c.l.b16 %v1041
        %v1121 = vunpack.c.h.b16 %v1041
        %v1122 = vunpack.c.l.b16 %v1042
        %v1123 = vunpack.c.h.b16 %v1042
        %v1124 = vunpack.c.l.b16 %v1043
        %v1125 = vunpack.c.h.b16 %v1043
        %v1126 = vunpack.c.l.b16 %v1044
        %v1127 = vunpack.c.h.b16 %v1044
        %v1128 = vunpack.c.l.b16 %v1045
        %v1129 = vunpack.c.h.b16 %v1045
        %v1130 = vunpack.c.l.b16 %v1046
        %v1131 = vunpack.c.h.b16 %v1046
        %v1132 = vunpack.c.l.b16 %v1047
        %v1133 = vunpack.c.h.b16 %v1047
        %v1134 = vunpack.c.l.b16 %v1048
        %v1135 = vunpack.c.h.b16 %v1048
        %v1136 = vunpack.c.l.b16 %v1049
        %v1137 = vunpack.c.h.b16 %v1049
        %v1138 = vunpack.c.l.b16 %v1050
        %v1139 = vunpack.c.h.b16 %v1050
        %v1140 = vunpack.c.l.b16 %v1051
        %v1141 = vunpack.c.h.b16 %v1051
        %v1142 = vunpack.c.l.b16 %v1052
        %v1143 = vunpack.c.h.b16 %v1052
        %v1144 = vunpack.c.l.b16 %v1053
        %v1145 = vunpack.c.h.b16 %v1053
        %v1146 = vunpack.c.l.b16 %v1054
        %v1147 = vunpack.c.h.b16 %v1054
        %v1148 = vunpack.c.l.b16 %v1055
        %v1149 = vunpack.c.h.b16 %v1055
        %v1150 = vunpack.c.l.b16 %v1056
        %v1151 = vunpack.c.h.b16 %v1056
        %v1152 = vunpack.c.l.b16 %v1057
        %v1153 = vunpack.c.h.b16 %v1057
        %v1154 = vunpack.c.l.b16 %v1058
        %v1155 = vunpack.c.h.b16 %v1058
        %v1156 = vpack.c.b16 %v1096, %v1092
        %v1157 = vpack.c.b16 %v1097, %v1093
        %v1158 = vpack.c.b16 %v1098, %v1094
        %v1159 = vpack.c.b16 %v1099, %v1095
        %v1160 = vpack.c.b16 %v1104, %v1100
        %v1161 = vpack.c.b16 %v1105, %v1101
        %v1162 = vpack.c.b16 %v1106, %v1102
        %v1163 = vpack.c.b16 %v1107, %v1103
        %v1164 = vpack.c.b16 %v1112, %v1108
        %v1165 = vpack.c.b16 %v1113, %v1109
        %v1166 = vpack.c.b16 %v1114, %v1110
        %v1167 = vpack.c.b16 %v1115, %v1111
        %v1168 = vpack.c.b16 %v1120, %v1116
        %v1169 = vpack.c.b16 %v1121, %v1117
        %v1170 = vpack.c.b16 %v1122, %v1118
        %v1171 = vpack.c.b16 %v1123, %v1119
        %v1172 = vpack.c.b16 %v1128, %v1124
        %v1173 = vpack.c.b16 %v1129, %v1125
        %v1174 = vpack.c.b16 %v1130, %v1126
        %v1175 = vpack.c.b16 %v1131, %v1127
        %v1176 = vpack.c.b16 %v1136, %v1132
        %v1177 = vpack.c.b16 %v1137, %v1133
        %v1178 = vpack.c.b16 %v1138, %v1134
        %v1179 = vpack.c.b16 %v1139, %v1135
        %v1180 = vpack.c.b16 %v1144, %v1140
        %v1181 = vpack.c.b16 %v1145, %v1141
        %v1182 = vpack.c.b16 %v1146, %v1142
        %v1183 = vpack.c.b16 %v1147, %v1143
        %v1184 = vpack.c.b16 %v1152, %v1148
        %v1185 = vpack.c.b16 %v1153, %v1149
        %v1186 = vpack.c.b16 %v1154, %v1150
        %v1187 = vpack.c.b16 %v1155, %v1151
        %1220 = vmatprep.subr.bf16.mxu0 %v1157
        %1221 = vmatpush1.bf16.msra.mxu0 %v1156
        %1222 = vmatprep.subr.bf16.mxu0 %v1161
        %1223 = vmatpush1.bf16.msra.mxu0 %v1160
        %1224 = vmatprep.subr.bf16.mxu0 %v1165
        %1225 = vmatpush1.bf16.msra.mxu0 %v1164
        %1226 = vmatprep.subr.bf16.mxu0 %v1169
        %1227 = vmatpush1.bf16.msra.mxu0 %v1168
        %1228 = vmatprep.subr.bf16.mxu0 %v1173
        %1229 = vmatpush1.bf16.msra.mxu0 %v1172
        %1230 = vmatprep.subr.bf16.mxu0 %v1177
        %1231 = vmatpush1.bf16.msra.mxu0 %v1176
        %1232 = vmatprep.subr.bf16.mxu0 %v1181
        %1233 = vmatpush1.bf16.msra.mxu0 %v1180
        %1234 = vmatprep.subr.bf16.mxu0 %v1185
        %1235 = vmatpush1.bf16.msra.mxu0 %v1184
        %1236 = vmatprep.subr.bf16.mxu0 0
        %1237 = vmatpush1.bf16.msra.mxu0 0
        %1238 = vmatprep.subr.bf16.mxu0 0
        %1239 = vmatpush1.bf16.msra.mxu0 0
        %1240 = vmatprep.subr.bf16.mxu0 0
        %1241 = vmatpush1.bf16.msra.mxu0 0
        %1242 = vmatprep.subr.bf16.mxu0 0
        %1243 = vmatpush1.bf16.msra.mxu0 0
        %1244 = vmatprep.subr.bf16.mxu0 0
        %1245 = vmatpush1.bf16.msra.mxu0 0
        %1246 = vmatprep.subr.bf16.mxu0 0
        %1247 = vmatpush1.bf16.msra.mxu0 0
        %1248 = vmatprep.subr.bf16.mxu0 0
        %1249 = vmatpush1.bf16.msra.mxu0 0
        %1250 = vmatprep.subr.bf16.mxu0 0
        %1251 = vmatpush1.bf16.msra.mxu0 0
        %1252 = vmatprep.mubr.bf16.mxu0 0
        %1253 = vmatmul.mubr.bf16.gmra.mrb[0].mxu0 %v1059
        %v1254 = vpop.f32.mrb[0].mxu0
        %v1255 = vadd.f32 0.0, %v1254
        %v1256 = vpop.f32.mrb[0].mxu0
        %v1257 = vadd.f32 0.0, %v1256
        %v1258 = vpop.f32.mrb[0].mxu0
        %v1259 = vpop.f32.mrb[0].mxu0
        %1260 = vdwg.mxu0
        %1261 = vmatprep.subr.bf16.mxu0 %v1159
        %1262 = vmatpush1.bf16.msra.mxu0 %v1158
        %1263 = vmatprep.subr.bf16.mxu0 %v1163
        %1264 = vmatpush1.bf16.msra.mxu0 %v1162
        %1265 = vmatprep.subr.bf16.mxu0 %v1167
        %1266 = vmatpush1.bf16.msra.mxu0 %v1166
        %1267 = vmatprep.subr.bf16.mxu0 %v1171
        %1268 = vmatpush1.bf16.msra.mxu0 %v1170
        %1269 = vmatprep.subr.bf16.mxu0 %v1175
        %1270 = vmatpush1.bf16.msra.mxu0 %v1174
        %1271 = vmatprep.subr.bf16.mxu0 %v1179
        %1272 = vmatpush1.bf16.msra.mxu0 %v1178
        %1273 = vmatprep.subr.bf16.mxu0 %v1183
        %1274 = vmatpush1.bf16.msra.mxu0 %v1182
        %1275 = vmatprep.subr.bf16.mxu0 %v1187
        %1276 = vmatpush1.bf16.msra.mxu0 %v1186
        %1277 = vmatprep.subr.bf16.mxu0 0
        %1278 = vmatpush1.bf16.msra.mxu0 0
        %1279 = vmatprep.subr.bf16.mxu0 0
        %1280 = vmatpush1.bf16.msra.mxu0 0
        %1281 = vmatprep.subr.bf16.mxu0 0
        %1282 = vmatpush1.bf16.msra.mxu0 0
        %1283 = vmatprep.subr.bf16.mxu0 0
        %1284 = vmatpush1.bf16.msra.mxu0 0
        %1285 = vmatprep.subr.bf16.mxu0 0
        %1286 = vmatpush1.bf16.msra.mxu0 0
        %1287 = vmatprep.subr.bf16.mxu0 0
        %1288 = vmatpush1.bf16.msra.mxu0 0
        %1289 = vmatprep.subr.bf16.mxu0 0
        %1290 = vmatpush1.bf16.msra.mxu0 0
        %1291 = vmatprep.subr.bf16.mxu0 0
        %1292 = vmatpush1.bf16.msra.mxu0 0
        %1293 = vmatprep.mubr.bf16.mxu0 0
        %1294 = vmatmul.mubr.bf16.gmra.mrb[0].mxu0 %v1059
        %v1295 = vpop.f32.mrb[0].mxu0
        %v1296 = vadd.f32 0.0, %v1295
        %v1297 = vpop.f32.mrb[0].mxu0
        %v1298 = vadd.f32 0.0, %v1297
        %v1299 = vpop.f32.mrb[0].mxu0
        %v1300 = vpop.f32.mrb[0].mxu0
        %1301 = vdwg.mxu0
        %v1334 = vunpack.c.l.b16 %v995
        %v1335 = vunpack.c.h.b16 %v995
        %v1336 = vunpack.c.l.b16 %v996
        %v1337 = vunpack.c.h.b16 %v996
        %v1338 = vunpack.c.l.b16 %v997
        %v1339 = vunpack.c.h.b16 %v997
        %v1340 = vunpack.c.l.b16 %v998
        %v1341 = vunpack.c.h.b16 %v998
        %v1342 = vunpack.c.l.b16 %v999
        %v1343 = vunpack.c.h.b16 %v999
        %v1344 = vunpack.c.l.b16 %v1000
        %v1345 = vunpack.c.h.b16 %v1000
        %v1346 = vunpack.c.l.b16 %v1001
        %v1347 = vunpack.c.h.b16 %v1001
        %v1348 = vunpack.c.l.b16 %v1002
        %v1349 = vunpack.c.h.b16 %v1002
        %v1350 = vunpack.c.l.b16 %v1003
        %v1351 = vunpack.c.h.b16 %v1003
        %v1352 = vunpack.c.l.b16 %v1004
        %v1353 = vunpack.c.h.b16 %v1004
        %v1354 = vunpack.c.l.b16 %v1005
        %v1355 = vunpack.c.h.b16 %v1005
        %v1356 = vunpack.c.l.b16 %v1006
        %v1357 = vunpack.c.h.b16 %v1006
        %v1358 = vunpack.c.l.b16 %v1007
        %v1359 = vunpack.c.h.b16 %v1007
        %v1360 = vunpack.c.l.b16 %v1008
        %v1361 = vunpack.c.h.b16 %v1008
        %v1362 = vunpack.c.l.b16 %v1009
        %v1363 = vunpack.c.h.b16 %v1009
        %v1364 = vunpack.c.l.b16 %v1010
        %v1365 = vunpack.c.h.b16 %v1010
        %v1366 = vunpack.c.l.b16 %v1011
        %v1367 = vunpack.c.h.b16 %v1011
        %v1368 = vunpack.c.l.b16 %v1012
        %v1369 = vunpack.c.h.b16 %v1012
        %v1370 = vunpack.c.l.b16 %v1013
        %v1371 = vunpack.c.h.b16 %v1013
        %v1372 = vunpack.c.l.b16 %v1014
        %v1373 = vunpack.c.h.b16 %v1014
        %v1374 = vunpack.c.l.b16 %v1015
        %v1375 = vunpack.c.h.b16 %v1015
        %v1376 = vunpack.c.l.b16 %v1016
        %v1377 = vunpack.c.h.b16 %v1016
        %v1378 = vunpack.c.l.b16 %v1017
        %v1379 = vunpack.c.h.b16 %v1017
        %v1380 = vunpack.c.l.b16 %v1018
        %v1381 = vunpack.c.h.b16 %v1018
        %v1382 = vunpack.c.l.b16 %v1019
        %v1383 = vunpack.c.h.b16 %v1019
        %v1384 = vunpack.c.l.b16 %v1020
        %v1385 = vunpack.c.h.b16 %v1020
        %v1386 = vunpack.c.l.b16 %v1021
        %v1387 = vunpack.c.h.b16 %v1021
        %v1388 = vunpack.c.l.b16 %v1022
        %v1389 = vunpack.c.h.b16 %v1022
        %v1390 = vunpack.c.l.b16 %v1023
        %v1391 = vunpack.c.h.b16 %v1023
        %v1392 = vunpack.c.l.b16 %v1024
        %v1393 = vunpack.c.h.b16 %v1024
        %v1394 = vunpack.c.l.b16 %v1025
        %v1395 = vunpack.c.h.b16 %v1025
        %v1396 = vunpack.c.l.b16 %v1026
        %v1397 = vunpack.c.h.b16 %v1026
        %v1398 = vpack.c.b16 %v1338, %v1334
        %v1399 = vpack.c.b16 %v1339, %v1335
        %v1400 = vpack.c.b16 %v1340, %v1336
        %v1401 = vpack.c.b16 %v1341, %v1337
        %v1402 = vpack.c.b16 %v1346, %v1342
        %v1403 = vpack.c.b16 %v1347, %v1343
        %v1404 = vpack.c.b16 %v1348, %v1344
        %v1405 = vpack.c.b16 %v1349, %v1345
        %v1406 = vpack.c.b16 %v1354, %v1350
        %v1407 = vpack.c.b16 %v1355, %v1351
        %v1408 = vpack.c.b16 %v1356, %v1352
        %v1409 = vpack.c.b16 %v1357, %v1353
        %v1410 = vpack.c.b16 %v1362, %v1358
        %v1411 = vpack.c.b16 %v1363, %v1359
        %v1412 = vpack.c.b16 %v1364, %v1360
        %v1413 = vpack.c.b16 %v1365, %v1361
        %v1414 = vpack.c.b16 %v1370, %v1366
        %v1415 = vpack.c.b16 %v1371, %v1367
        %v1416 = vpack.c.b16 %v1372, %v1368
        %v1417 = vpack.c.b16 %v1373, %v1369
        %v1418 = vpack.c.b16 %v1378, %v1374
        %v1419 = vpack.c.b16 %v1379, %v1375
        %v1420 = vpack.c.b16 %v1380, %v1376
        %v1421 = vpack.c.b16 %v1381, %v1377
        %v1422 = vpack.c.b16 %v1386, %v1382
        %v1423 = vpack.c.b16 %v1387, %v1383
        %v1424 = vpack.c.b16 %v1388, %v1384
        %v1425 = vpack.c.b16 %v1389, %v1385
        %v1426 = vpack.c.b16 %v1394, %v1390
        %v1427 = vpack.c.b16 %v1395, %v1391
        %v1428 = vpack.c.b16 %v1396, %v1392
        %v1429 = vpack.c.b16 %v1397, %v1393
        %1462 = vmatprep.subr.bf16.mxu0 %v1399
        %1463 = vmatpush1.bf16.msra.mxu0 %v1398
        %1464 = vmatprep.subr.bf16.mxu0 %v1403
        %1465 = vmatpush1.bf16.msra.mxu0 %v1402
        %1466 = vmatprep.subr.bf16.mxu0 %v1407
        %1467 = vmatpush1.bf16.msra.mxu0 %v1406
        %1468 = vmatprep.subr.bf16.mxu0 %v1411
        %1469 = vmatpush1.bf16.msra.mxu0 %v1410
        %1470 = vmatprep.subr.bf16.mxu0 %v1415
        %1471 = vmatpush1.bf16.msra.mxu0 %v1414
        %1472 = vmatprep.subr.bf16.mxu0 %v1419
        %1473 = vmatpush1.bf16.msra.mxu0 %v1418
        %1474 = vmatprep.subr.bf16.mxu0 %v1423
        %1475 = vmatpush1.bf16.msra.mxu0 %v1422
        %1476 = vmatprep.subr.bf16.mxu0 %v1427
        %1477 = vmatpush1.bf16.msra.mxu0 %v1426
        %1478 = vmatprep.subr.bf16.mxu0 0
        %1479 = vmatpush1.bf16.msra.mxu0 0
        %1480 = vmatprep.subr.bf16.mxu0 0
        %1481 = vmatpush1.bf16.msra.mxu0 0
        %1482 = vmatprep.subr.bf16.mxu0 0
        %1483 = vmatpush1.bf16.msra.mxu0 0
        %1484 = vmatprep.subr.bf16.mxu0 0
        %1485 = vmatpush1.bf16.msra.mxu0 0
        %1486 = vmatprep.subr.bf16.mxu0 0
        %1487 = vmatpush1.bf16.msra.mxu0 0
        %1488 = vmatprep.subr.bf16.mxu0 0
        %1489 = vmatpush1.bf16.msra.mxu0 0
        %1490 = vmatprep.subr.bf16.mxu0 0
        %1491 = vmatpush1.bf16.msra.mxu0 0
        %1492 = vmatprep.subr.bf16.mxu0 0
        %1493 = vmatpush1.bf16.msra.mxu0 0
        %1494 = vmatprep.mubr.bf16.mxu0 0
        %1495 = vmatmul.mubr.bf16.gmra.mrb[0].mxu0 %v420
        %v1496 = vpop.f32.mrb[0].mxu0
        %v1497 = vadd.f32 %v1255, %v1496
        %v1498 = vpop.f32.mrb[0].mxu0
        %v1499 = vadd.f32 %v1257, %v1498
        %v1500 = vpop.f32.mrb[0].mxu0
        %v1501 = vpop.f32.mrb[0].mxu0
        %1502 = vdwg.mxu0
        %1503 = vmatprep.subr.bf16.mxu0 %v1401
        %1504 = vmatpush1.bf16.msra.mxu0 %v1400
        %1505 = vmatprep.subr.bf16.mxu0 %v1405
        %1506 = vmatpush1.bf16.msra.mxu0 %v1404
        %1507 = vmatprep.subr.bf16.mxu0 %v1409
        %1508 = vmatpush1.bf16.msra.mxu0 %v1408
        %1509 = vmatprep.subr.bf16.mxu0 %v1413
        %1510 = vmatpush1.bf16.msra.mxu0 %v1412
        %1511 = vmatprep.subr.bf16.mxu0 %v1417
        %1512 = vmatpush1.bf16.msra.mxu0 %v1416
        %1513 = vmatprep.subr.bf16.mxu0 %v1421
        %1514 = vmatpush1.bf16.msra.mxu0 %v1420
        %1515 = vmatprep.subr.bf16.mxu0 %v1425
        %1516 = vmatpush1.bf16.msra.mxu0 %v1424
        %1517 = vmatprep.subr.bf16.mxu0 %v1429
        %1518 = vmatpush1.bf16.msra.mxu0 %v1428
        %1519 = vmatprep.subr.bf16.mxu0 0
        %1520 = vmatpush1.bf16.msra.mxu0 0
        %1521 = vmatprep.subr.bf16.mxu0 0
        %1522 = vmatpush1.bf16.msra.mxu0 0
        %1523 = vmatprep.subr.bf16.mxu0 0
        %1524 = vmatpush1.bf16.msra.mxu0 0
        %1525 = vmatprep.subr.bf16.mxu0 0
        %1526 = vmatpush1.bf16.msra.mxu0 0
        %1527 = vmatprep.subr.bf16.mxu0 0
        %1528 = vmatpush1.bf16.msra.mxu0 0
        %1529 = vmatprep.subr.bf16.mxu0 0
        %1530 = vmatpush1.bf16.msra.mxu0 0
        %1531 = vmatprep.subr.bf16.mxu0 0
        %1532 = vmatpush1.bf16.msra.mxu0 0
        %1533 = vmatprep.subr.bf16.mxu0 0
        %1534 = vmatpush1.bf16.msra.mxu0 0
        %1535 = vmatprep.mubr.bf16.mxu0 0
        %1536 = vmatmul.mubr.bf16.gmra.mrb[0].mxu0 %v420
        %v1537 = vpop.f32.mrb[0].mxu0
        %v1538 = vadd.f32 %v1296, %v1537
        %v1539 = vpop.f32.mrb[0].mxu0
        %v1540 = vadd.f32 %v1298, %v1539
        %v1541 = vpop.f32.mrb[0].mxu0
        %v1542 = vpop.f32.mrb[0].mxu0
        %1543 = vdwg.mxu0
        %v1544 = vld [vmem:[%s15 + $0x2] sm:$0x1]
        %v1545 = vlaneseq
        %v1546 = vshrl.u32 %v1545, 7
        %v1547 = vsub.s32 0, %v1546
        %v1548 = vrot.slane %v1544, %v1547
        %v1549 = vadd.f32 %v1497, %v1548
        %v1550 = vxor.u32 %v1549, 2147483648
        %v1551 = vmul.f32 %v1550, 1.442695
        %v1552 = vpow.pop %v1551
        %v1553 = vadd.f32 %v1552, 1.0
        %v1554 = vrcp.pop %v1553
        %v1555 = vmul.f32 1.0, %v1554
        %v1556 = vld [vmem:[%s15 + $0x3] sm:$0x1]
        %v1557 = vlaneseq
        %v1558 = vshrl.u32 %v1557, 7
        %v1559 = vsub.s32 0, %v1558
        %v1560 = vrot.slane %v1556, %v1559
        %v1561 = vadd.f32 %v1499, %v1560
        %v1562 = vxor.u32 %v1561, 2147483648
        %v1563 = vmul.f32 %v1562, 1.442695
        %v1564 = vpow.pop %v1563
        %v1565 = vadd.f32 %v1564, 1.0
        %v1566 = vrcp.pop %v1565
        %v1567 = vmul.f32 1.0, %v1566
        %v1568 = vld [vmem:[%s15 + $0x4] sm:$0x1]
        %v1569 = vlaneseq
        %v1570 = vshrl.u32 %v1569, 7
        %v1571 = vsub.s32 0, %v1570
        %v1572 = vrot.slane %v1568, %v1571
        %v1573 = vadd.f32 %v1538, %v1572
        %v1574 = vtanh.pop %v1573
        %v1575 = vld [vmem:[%s15 + $0x5] sm:$0x1]
        %v1576 = vlaneseq
        %v1577 = vshrl.u32 %v1576, 7
        %v1578 = vsub.s32 0, %v1577
        %v1579 = vrot.slane %v1575, %v1578
        %v1580 = vadd.f32 %v1540, %v1579
        %v1581 = vxor.u32 %v1580, 2147483648
        %v1582 = vmul.f32 %v1581, 1.442695
        %v1583 = vpow.pop %v1582
        %v1584 = vadd.f32 %v1583, 1.0
        %v1585 = vrcp.pop %v1584
        %v1586 = vmul.f32 1.0, %v1585
        %v1587 = vmul.f32 %v1567, 0.0
        %v1588 = vmul.f32 %v1555, %v1574
        %v1589 = vadd.f32 %v1587, %v1588
        %v1590 = vtanh.pop %v1589
        %v1591 = vmul.f32 %v1586, %v1590
        %v1592 = vpack.c.bf16 %v1591, %v1591
        %v1594 = vsel %vm425, %v1592, 0
        %1596 = vmatprep.subr.bf16.mxu0 0
        %1597 = vmatpush1.bf16.msra.mxu0 %v1594
        %1598 = vmatprep.subr.bf16.mxu0 0
        %1599 = vmatpush1.bf16.msra.mxu0 0
        %1600 = vmatprep.subr.bf16.mxu0 0
        %1601 = vmatpush1.bf16.msra.mxu0 0
        %1602 = vmatprep.subr.bf16.mxu0 0
        %1603 = vmatpush1.bf16.msra.mxu0 0
        %1604 = vmatprep.subr.bf16.mxu0 0
        %1605 = vmatpush1.bf16.msra.mxu0 0
        %1606 = vmatprep.subr.bf16.mxu0 0
        %1607 = vmatpush1.bf16.msra.mxu0 0
        %1608 = vmatprep.subr.bf16.mxu0 0
        %1609 = vmatpush1.bf16.msra.mxu0 0
        %1610 = vmatprep.subr.bf16.mxu0 0
        %1611 = vmatpush1.bf16.msra.mxu0 0
        %1612 = vmatprep.subr.bf16.mxu0 0
        %1613 = vmatpush1.bf16.msra.mxu0 0
        %1614 = vmatprep.subr.bf16.mxu0 0
        %1615 = vmatpush1.bf16.msra.mxu0 0
        %1616 = vmatprep.subr.bf16.mxu0 0
        %1617 = vmatpush1.bf16.msra.mxu0 0
        %1618 = vmatprep.subr.bf16.mxu0 0
        %1619 = vmatpush1.bf16.msra.mxu0 0
        %1620 = vmatprep.subr.bf16.mxu0 0
        %1621 = vmatpush1.bf16.msra.mxu0 0
        %1622 = vmatprep.subr.bf16.mxu0 0
        %1623 = vmatpush1.bf16.msra.mxu0 0
        %1624 = vmatprep.subr.bf16.mxu0 0
        %1625 = vmatpush1.bf16.msra.mxu0 0
        %1626 = vmatprep.subr.bf16.mxu0 0
        %1627 = vmatpush1.bf16.msra.mxu0 0
        %1628 = vmatprep.mubr.bf16.mxu0 0
        %1629 = vmatmul.mubr.bf16.gmra.mrb[0].mxu0 %v423
        %v1630 = vpop.f32.mrb[0].mxu0
        %v1631 = vadd.f32 0.0, %v1630
        %v1632 = vpop.f32.mrb[0].mxu0
        %v1633 = vpop.f32.mrb[0].mxu0
        %v1634 = vpop.f32.mrb[0].mxu0
        %1635 = vdwg.mxu0
        %1636 = vmatprep.subr.bf16.mxu0 0
        %1637 = vmatpush1.bf16.msra.mxu0 %v1594
        %1638 = vmatprep.subr.bf16.mxu0 0
        %1639 = vmatpush1.bf16.msra.mxu0 0
        %1640 = vmatprep.subr.bf16.mxu0 0
        %1641 = vmatpush1.bf16.msra.mxu0 0
        %1642 = vmatprep.subr.bf16.mxu0 0
        %1643 = vmatpush1.bf16.msra.mxu0 0
        %1644 = vmatprep.subr.bf16.mxu0 0
        %1645 = vmatpush1.bf16.msra.mxu0 0
        %1646 = vmatprep.subr.bf16.mxu0 0
        %1647 = vmatpush1.bf16.msra.mxu0 0
        %1648 = vmatprep.subr.bf16.mxu0 0
        %1649 = vmatpush1.bf16.msra.mxu0 0
        %1650 = vmatprep.subr.bf16.mxu0 0
        %1651 = vmatpush1.bf16.msra.mxu0 0
        %1652 = vmatprep.subr.bf16.mxu0 0
        %1653 = vmatpush1.bf16.msra.mxu0 0
        %1654 = vmatprep.subr.bf16.mxu0 0
        %1655 = vmatpush1.bf16.msra.mxu0 0
        %1656 = vmatprep.subr.bf16.mxu0 0
        %1657 = vmatpush1.bf16.msra.mxu0 0
        %1658 = vmatprep.subr.bf16.mxu0 0
        %1659 = vmatpush1.bf16.msra.mxu0 0
        %1660 = vmatprep.subr.bf16.mxu0 0
        %1661 = vmatpush1.bf16.msra.mxu0 0
        %1662 = vmatprep.subr.bf16.mxu0 0
        %1663 = vmatpush1.bf16.msra.mxu0 0
        %1664 = vmatprep.subr.bf16.mxu0 0
        %1665 = vmatpush1.bf16.msra.mxu0 0
        %1666 = vmatprep.subr.bf16.mxu0 0
        %1667 = vmatpush1.bf16.msra.mxu0 0
        %1668 = vmatprep.mubr.bf16.mxu0 0
        %1669 = vmatmul.mubr.bf16.gmra.mrb[0].mxu0 %v471
        %v1670 = vpop.f32.mrb[0].mxu0
        %v1671 = vadd.f32 0.0, %v1670
        %v1672 = vpop.f32.mrb[0].mxu0
        %v1673 = vpop.f32.mrb[0].mxu0
        %v1674 = vpop.f32.mrb[0].mxu0
        %1675 = vdwg.mxu0
        %v1676 = vld [vmem:[#allocation18 + $0x100] sm:$0xf]
        %v1677 = vld [vmem:[#allocation18 + $0x104] sm:$0xf]
        %v1678 = vld [vmem:[#allocation18 + $0x108] sm:$0xf]
        %v1679 = vld [vmem:[#allocation18 + $0x10c] sm:$0xf]
        %v1680 = vld [vmem:[#allocation18 + $0x110] sm:$0xf]
        %v1681 = vld [vmem:[#allocation18 + $0x114] sm:$0xf]
        %v1682 = vld [vmem:[#allocation18 + $0x118] sm:$0xf]
        %v1683 = vld [vmem:[#allocation18 + $0x11c] sm:$0xf]
        %v1684 = vld [vmem:[#allocation18 + $0x120] sm:$0xf]
        %v1685 = vld [vmem:[#allocation18 + $0x124] sm:$0xf]
        %v1686 = vld [vmem:[#allocation18 + $0x128] sm:$0xf]
        %v1687 = vld [vmem:[#allocation18 + $0x12c] sm:$0xf]
        %v1688 = vld [vmem:[#allocation18 + $0x130] sm:$0xf]
        %v1689 = vld [vmem:[#allocation18 + $0x134] sm:$0xf]
        %v1690 = vld [vmem:[#allocation18 + $0x138] sm:$0xf]
        %v1691 = vld [vmem:[#allocation18 + $0x13c] sm:$0xf]
        %v1692 = vpack.c.bf16 %v1631, %v1631
        %v1693 = vld [vmem:[#allocation18 + $0x140] sm:$0xf]
        %v1694 = vld [vmem:[#allocation18 + $0x144] sm:$0xf]
        %v1695 = vld [vmem:[#allocation18 + $0x148] sm:$0xf]
        %v1696 = vld [vmem:[#allocation18 + $0x14c] sm:$0xf]
        %v1697 = vld [vmem:[#allocation18 + $0x150] sm:$0xf]
        %v1698 = vld [vmem:[#allocation18 + $0x154] sm:$0xf]
        %v1699 = vld [vmem:[#allocation18 + $0x158] sm:$0xf]
        %v1700 = vld [vmem:[#allocation18 + $0x15c] sm:$0xf]
        %v1701 = vld [vmem:[#allocation18 + $0x160] sm:$0xf]
        %v1702 = vld [vmem:[#allocation18 + $0x164] sm:$0xf]
        %v1703 = vld [vmem:[#allocation18 + $0x168] sm:$0xf]
        %v1704 = vld [vmem:[#allocation18 + $0x16c] sm:$0xf]
        %v1705 = vld [vmem:[#allocation18 + $0x170] sm:$0xf]
        %v1706 = vld [vmem:[#allocation18 + $0x174] sm:$0xf]
        %v1707 = vld [vmem:[#allocation18 + $0x178] sm:$0xf]
        %v1708 = vld [vmem:[#allocation18 + $0x17c] sm:$0xf]
        %v1709 = vpack.c.bf16 %v1671, %v1671
        %v1726 = vunpack.c.l.b16 %v1693
        %v1727 = vunpack.c.l.b16 %v1694
        %v1728 = vunpack.c.l.b16 %v1695
        %v1729 = vunpack.c.l.b16 %v1696
        %v1730 = vunpack.c.l.b16 %v1697
        %v1731 = vunpack.c.l.b16 %v1698
        %v1732 = vunpack.c.l.b16 %v1699
        %v1733 = vunpack.c.l.b16 %v1700
        %v1734 = vunpack.c.l.b16 %v1701
        %v1735 = vunpack.c.l.b16 %v1702
        %v1736 = vunpack.c.l.b16 %v1703
        %v1737 = vunpack.c.l.b16 %v1704
        %v1738 = vunpack.c.l.b16 %v1705
        %v1739 = vunpack.c.l.b16 %v1706
        %v1740 = vunpack.c.l.b16 %v1707
        %v1741 = vunpack.c.l.b16 %v1708
        %v1742 = vpack.c.b16 %v1727, %v1726
        %v1743 = vpack.c.b16 %v1729, %v1728
        %v1744 = vpack.c.b16 %v1731, %v1730
        %v1745 = vpack.c.b16 %v1733, %v1732
        %v1746 = vpack.c.b16 %v1735, %v1734
        %v1747 = vpack.c.b16 %v1737, %v1736
        %v1748 = vpack.c.b16 %v1739, %v1738
        %v1749 = vpack.c.b16 %v1741, %v1740
        %1758 = vmatprep.subr.bf16.mxu0 0
        %1759 = vmatpush1.bf16.msra.mxu0 %v1742
        %1760 = vmatprep.subr.bf16.mxu0 0
        %1761 = vmatpush1.bf16.msra.mxu0 %v1743
        %1762 = vmatprep.subr.bf16.mxu0 0
        %1763 = vmatpush1.bf16.msra.mxu0 %v1744
        %1764 = vmatprep.subr.bf16.mxu0 0
        %1765 = vmatpush1.bf16.msra.mxu0 %v1745
        %1766 = vmatprep.subr.bf16.mxu0 0
        %1767 = vmatpush1.bf16.msra.mxu0 %v1746
        %1768 = vmatprep.subr.bf16.mxu0 0
        %1769 = vmatpush1.bf16.msra.mxu0 %v1747
        %1770 = vmatprep.subr.bf16.mxu0 0
        %1771 = vmatpush1.bf16.msra.mxu0 %v1748
        %1772 = vmatprep.subr.bf16.mxu0 0
        %1773 = vmatpush1.bf16.msra.mxu0 %v1749
        %1774 = vmatprep.subr.bf16.mxu0 0
        %1775 = vmatpush1.bf16.msra.mxu0 0
        %1776 = vmatprep.subr.bf16.mxu0 0
        %1777 = vmatpush1.bf16.msra.mxu0 0
        %1778 = vmatprep.subr.bf16.mxu0 0
        %1779 = vmatpush1.bf16.msra.mxu0 0
        %1780 = vmatprep.subr.bf16.mxu0 0
        %1781 = vmatpush1.bf16.msra.mxu0 0
        %1782 = vmatprep.subr.bf16.mxu0 0
        %1783 = vmatpush1.bf16.msra.mxu0 0
        %1784 = vmatprep.subr.bf16.mxu0 0
        %1785 = vmatpush1.bf16.msra.mxu0 0
        %1786 = vmatprep.subr.bf16.mxu0 0
        %1787 = vmatpush1.bf16.msra.mxu0 0
        %1788 = vmatprep.subr.bf16.mxu0 0
        %1789 = vmatpush1.bf16.msra.mxu0 0
        %1790 = vmatprep.mubr.bf16.mxu0 0
        %1791 = vmatmul.mubr.bf16.gmra.mrb[0].mxu0 %v1709
        %v1792 = vpop.f32.mrb[0].mxu0
        %v1793 = vadd.f32 0.0, %v1792
        %v1794 = vpop.f32.mrb[0].mxu0
        %v1795 = vpop.f32.mrb[0].mxu0
        %v1796 = vpop.f32.mrb[0].mxu0
        %1797 = vdwg.mxu0
        %v1814 = vunpack.c.l.b16 %v1676
        %v1815 = vunpack.c.l.b16 %v1677
        %v1816 = vunpack.c.l.b16 %v1678
        %v1817 = vunpack.c.l.b16 %v1679
        %v1818 = vunpack.c.l.b16 %v1680
        %v1819 = vunpack.c.l.b16 %v1681
        %v1820 = vunpack.c.l.b16 %v1682
        %v1821 = vunpack.c.l.b16 %v1683
        %v1822 = vunpack.c.l.b16 %v1684
        %v1823 = vunpack.c.l.b16 %v1685
        %v1824 = vunpack.c.l.b16 %v1686
        %v1825 = vunpack.c.l.b16 %v1687
        %v1826 = vunpack.c.l.b16 %v1688
        %v1827 = vunpack.c.l.b16 %v1689
        %v1828 = vunpack.c.l.b16 %v1690
        %v1829 = vunpack.c.l.b16 %v1691
        %v1830 = vpack.c.b16 %v1815, %v1814
        %v1831 = vpack.c.b16 %v1817, %v1816
        %v1832 = vpack.c.b16 %v1819, %v1818
        %v1833 = vpack.c.b16 %v1821, %v1820
        %v1834 = vpack.c.b16 %v1823, %v1822
        %v1835 = vpack.c.b16 %v1825, %v1824
        %v1836 = vpack.c.b16 %v1827, %v1826
        %v1837 = vpack.c.b16 %v1829, %v1828
        %1846 = vmatprep.subr.bf16.mxu0 0
        %1847 = vmatpush1.bf16.msra.mxu0 %v1830
        %1848 = vmatprep.subr.bf16.mxu0 0
        %1849 = vmatpush1.bf16.msra.mxu0 %v1831
        %1850 = vmatprep.subr.bf16.mxu0 0
        %1851 = vmatpush1.bf16.msra.mxu0 %v1832
        %1852 = vmatprep.subr.bf16.mxu0 0
        %1853 = vmatpush1.bf16.msra.mxu0 %v1833
        %1854 = vmatprep.subr.bf16.mxu0 0
        %1855 = vmatpush1.bf16.msra.mxu0 %v1834
        %1856 = vmatprep.subr.bf16.mxu0 0
        %1857 = vmatpush1.bf16.msra.mxu0 %v1835
        %1858 = vmatprep.subr.bf16.mxu0 0
        %1859 = vmatpush1.bf16.msra.mxu0 %v1836
        %1860 = vmatprep.subr.bf16.mxu0 0
        %1861 = vmatpush1.bf16.msra.mxu0 %v1837
        %1862 = vmatprep.subr.bf16.mxu0 0
        %1863 = vmatpush1.bf16.msra.mxu0 0
        %1864 = vmatprep.subr.bf16.mxu0 0
        %1865 = vmatpush1.bf16.msra.mxu0 0
        %1866 = vmatprep.subr.bf16.mxu0 0
        %1867 = vmatpush1.bf16.msra.mxu0 0
        %1868 = vmatprep.subr.bf16.mxu0 0
        %1869 = vmatpush1.bf16.msra.mxu0 0
        %1870 = vmatprep.subr.bf16.mxu0 0
        %1871 = vmatpush1.bf16.msra.mxu0 0
        %1872 = vmatprep.subr.bf16.mxu0 0
        %1873 = vmatpush1.bf16.msra.mxu0 0
        %1874 = vmatprep.subr.bf16.mxu0 0
        %1875 = vmatpush1.bf16.msra.mxu0 0
        %1876 = vmatprep.subr.bf16.mxu0 0
        %1877 = vmatpush1.bf16.msra.mxu0 0
        %1878 = vmatprep.mubr.bf16.mxu0 0
        %1879 = vmatmul.mubr.bf16.gmra.mrb[0].mxu0 %v1692
        %v1880 = vpop.f32.mrb[0].mxu0
        %v1881 = vadd.f32 %v1793, %v1880
        %v1882 = vpop.f32.mrb[0].mxu0
        %v1883 = vpop.f32.mrb[0].mxu0
        %v1884 = vpop.f32.mrb[0].mxu0
        %1885 = vdwg.mxu0
        %v1886 = vld [vmem:[#allocation18 + $0x180] sm:$0xf]
        %v1887 = vld [vmem:[#allocation18 + $0x184] sm:$0xf]
        %v1888 = vld [vmem:[#allocation18 + $0x188] sm:$0xf]
        %v1889 = vld [vmem:[#allocation18 + $0x18c] sm:$0xf]
        %v1890 = vld [vmem:[#allocation18 + $0x190] sm:$0xf]
        %v1891 = vld [vmem:[#allocation18 + $0x194] sm:$0xf]
        %v1892 = vld [vmem:[#allocation18 + $0x198] sm:$0xf]
        %v1893 = vld [vmem:[#allocation18 + $0x19c] sm:$0xf]
        %v1894 = vld [vmem:[#allocation18 + $0x1a0] sm:$0xf]
        %v1895 = vld [vmem:[#allocation18 + $0x1a4] sm:$0xf]
        %v1896 = vld [vmem:[#allocation18 + $0x1a8] sm:$0xf]
        %v1897 = vld [vmem:[#allocation18 + $0x1ac] sm:$0xf]
        %v1898 = vld [vmem:[#allocation18 + $0x1b0] sm:$0xf]
        %v1899 = vld [vmem:[#allocation18 + $0x1b4] sm:$0xf]
        %v1900 = vld [vmem:[#allocation18 + $0x1b8] sm:$0xf]
        %v1901 = vld [vmem:[#allocation18 + $0x1bc] sm:$0xf]
        %v1918 = vunpack.c.l.b16 %v1886
        %v1919 = vunpack.c.l.b16 %v1887
        %v1920 = vunpack.c.l.b16 %v1888
        %v1921 = vunpack.c.l.b16 %v1889
        %v1922 = vunpack.c.l.b16 %v1890
        %v1923 = vunpack.c.l.b16 %v1891
        %v1924 = vunpack.c.l.b16 %v1892
        %v1925 = vunpack.c.l.b16 %v1893
        %v1926 = vunpack.c.l.b16 %v1894
        %v1927 = vunpack.c.l.b16 %v1895
        %v1928 = vunpack.c.l.b16 %v1896
        %v1929 = vunpack.c.l.b16 %v1897
        %v1930 = vunpack.c.l.b16 %v1898
        %v1931 = vunpack.c.l.b16 %v1899
        %v1932 = vunpack.c.l.b16 %v1900
        %v1933 = vunpack.c.l.b16 %v1901
        %v1934 = vpack.c.b16 %v1919, %v1918
        %v1935 = vpack.c.b16 %v1921, %v1920
        %v1936 = vpack.c.b16 %v1923, %v1922
        %v1937 = vpack.c.b16 %v1925, %v1924
        %v1938 = vpack.c.b16 %v1927, %v1926
        %v1939 = vpack.c.b16 %v1929, %v1928
        %v1940 = vpack.c.b16 %v1931, %v1930
        %v1941 = vpack.c.b16 %v1933, %v1932
        %1950 = vmatprep.subr.bf16.mxu0 0
        %1951 = vmatpush1.bf16.msra.mxu0 %v1934
        %1952 = vmatprep.subr.bf16.mxu0 0
        %1953 = vmatpush1.bf16.msra.mxu0 %v1935
        %1954 = vmatprep.subr.bf16.mxu0 0
        %1955 = vmatpush1.bf16.msra.mxu0 %v1936
        %1956 = vmatprep.subr.bf16.mxu0 0
        %1957 = vmatpush1.bf16.msra.mxu0 %v1937
        %1958 = vmatprep.subr.bf16.mxu0 0
        %1959 = vmatpush1.bf16.msra.mxu0 %v1938
        %1960 = vmatprep.subr.bf16.mxu0 0
        %1961 = vmatpush1.bf16.msra.mxu0 %v1939
        %1962 = vmatprep.subr.bf16.mxu0 0
        %1963 = vmatpush1.bf16.msra.mxu0 %v1940
        %1964 = vmatprep.subr.bf16.mxu0 0
        %1965 = vmatpush1.bf16.msra.mxu0 %v1941
        %1966 = vmatprep.subr.bf16.mxu0 0
        %1967 = vmatpush1.bf16.msra.mxu0 0
        %1968 = vmatprep.subr.bf16.mxu0 0
        %1969 = vmatpush1.bf16.msra.mxu0 0
        %1970 = vmatprep.subr.bf16.mxu0 0
        %1971 = vmatpush1.bf16.msra.mxu0 0
        %1972 = vmatprep.subr.bf16.mxu0 0
        %1973 = vmatpush1.bf16.msra.mxu0 0
        %1974 = vmatprep.subr.bf16.mxu0 0
        %1975 = vmatpush1.bf16.msra.mxu0 0
        %1976 = vmatprep.subr.bf16.mxu0 0
        %1977 = vmatpush1.bf16.msra.mxu0 0
        %1978 = vmatprep.subr.bf16.mxu0 0
        %1979 = vmatpush1.bf16.msra.mxu0 0
        %1980 = vmatprep.subr.bf16.mxu0 0
        %1981 = vmatpush1.bf16.msra.mxu0 0
        %1982 = vmatprep.mubr.bf16.mxu0 0
        %1983 = vmatmul.mubr.bf16.gmra.mrb[0].mxu0 %v739
        %v1984 = vpop.f32.mrb[0].mxu0
        %v1985 = vadd.f32 0.0, %v1984
        %v1986 = vpop.f32.mrb[0].mxu0
        %v1987 = vpop.f32.mrb[0].mxu0
        %v1988 = vpop.f32.mrb[0].mxu0
        %1989 = vdwg.mxu0
        %v1990 = vadd.f32 %v1881, %v1985
        %v1991 = vld [vmem:[%s15 + $0x6] sm:$0x1]
        %v1992 = vlaneseq
        %v1993 = vshrl.u32 %v1992, 7
        %v1994 = vsub.s32 0, %v1993
        %v1995 = vrot.slane %v1991, %v1994
        %v1996 = vadd.f32 %v1990, %v1995
        %v1997 = vmax.f32 %v1996, 0.0
        %v1998 = vld [vmem:[#allocation18 + $0x1c0] sm:$0xf]
        %v1999 = vld [vmem:[#allocation18 + $0x1c4] sm:$0xf]
        %v2000 = vld [vmem:[#allocation18 + $0x1c8] sm:$0xf]
        %v2001 = vld [vmem:[#allocation18 + $0x1cc] sm:$0xf]
        %v2002 = vld [vmem:[#allocation18 + $0x1d0] sm:$0xf]
        %v2003 = vld [vmem:[#allocation18 + $0x1d4] sm:$0xf]
        %v2004 = vld [vmem:[#allocation18 + $0x1d8] sm:$0xf]
        %v2005 = vld [vmem:[#allocation18 + $0x1dc] sm:$0xf]
        %v2006 = vld [vmem:[#allocation18 + $0x1e0] sm:$0xf]
        %v2007 = vld [vmem:[#allocation18 + $0x1e4] sm:$0xf]
        %v2008 = vld [vmem:[#allocation18 + $0x1e8] sm:$0xf]
        %v2009 = vld [vmem:[#allocation18 + $0x1ec] sm:$0xf]
        %v2010 = vld [vmem:[#allocation18 + $0x1f0] sm:$0xf]
        %v2011 = vld [vmem:[#allocation18 + $0x1f4] sm:$0xf]
        %v2012 = vld [vmem:[#allocation18 + $0x1f8] sm:$0xf]
        %v2013 = vld [vmem:[#allocation18 + $0x1fc] sm:$0xf]
        %v2014 = vpack.c.bf16 %v1997, %v1997
        %v2015 = vld [vmem:[%s15 + $0x7] sm:$0x1]
        %v2016 = vlaneseq
        %v2017 = vshrl.u32 %v2016, 7
        %v2018 = vsub.s32 0, %v2017
        %v2019 = vrot.slane %v2015, %v2018
        %v2036 = vunpack.c.l.b16 %v1998
        %v2037 = vunpack.c.l.b16 %v1999
        %v2038 = vunpack.c.l.b16 %v2000
        %v2039 = vunpack.c.l.b16 %v2001
        %v2040 = vunpack.c.l.b16 %v2002
        %v2041 = vunpack.c.l.b16 %v2003
        %v2042 = vunpack.c.l.b16 %v2004
        %v2043 = vunpack.c.l.b16 %v2005
        %v2044 = vunpack.c.l.b16 %v2006
        %v2045 = vunpack.c.l.b16 %v2007
        %v2046 = vunpack.c.l.b16 %v2008
        %v2047 = vunpack.c.l.b16 %v2009
        %v2048 = vunpack.c.l.b16 %v2010
        %v2049 = vunpack.c.l.b16 %v2011
        %v2050 = vunpack.c.l.b16 %v2012
        %v2051 = vunpack.c.l.b16 %v2013
        %v2052 = vpack.c.b16 %v2037, %v2036
        %v2053 = vpack.c.b16 %v2039, %v2038
        %v2054 = vpack.c.b16 %v2041, %v2040
        %v2055 = vpack.c.b16 %v2043, %v2042
        %v2056 = vpack.c.b16 %v2045, %v2044
        %v2057 = vpack.c.b16 %v2047, %v2046
        %v2058 = vpack.c.b16 %v2049, %v2048
        %v2059 = vpack.c.b16 %v2051, %v2050
        %2068 = vmatprep.subr.bf16.mxu0 0
        %2069 = vmatpush1.bf16.msra.mxu0 %v2052
        %2070 = vmatprep.subr.bf16.mxu0 0
        %2071 = vmatpush1.bf16.msra.mxu0 %v2053
        %2072 = vmatprep.subr.bf16.mxu0 0
        %2073 = vmatpush1.bf16.msra.mxu0 %v2054
        %2074 = vmatprep.subr.bf16.mxu0 0
        %2075 = vmatpush1.bf16.msra.mxu0 %v2055
        %2076 = vmatprep.subr.bf16.mxu0 0
        %2077 = vmatpush1.bf16.msra.mxu0 %v2056
        %2078 = vmatprep.subr.bf16.mxu0 0
        %2079 = vmatpush1.bf16.msra.mxu0 %v2057
        %2080 = vmatprep.subr.bf16.mxu0 0
        %2081 = vmatpush1.bf16.msra.mxu0 %v2058
        %2082 = vmatprep.subr.bf16.mxu0 0
        %2083 = vmatpush1.bf16.msra.mxu0 %v2059
        %2084 = vmatprep.subr.bf16.mxu0 0
        %2085 = vmatpush1.bf16.msra.mxu0 0
        %2086 = vmatprep.subr.bf16.mxu0 0
        %2087 = vmatpush1.bf16.msra.mxu0 0
        %2088 = vmatprep.subr.bf16.mxu0 0
        %2089 = vmatpush1.bf16.msra.mxu0 0
        %2090 = vmatprep.subr.bf16.mxu0 0
        %2091 = vmatpush1.bf16.msra.mxu0 0
        %2092 = vmatprep.subr.bf16.mxu0 0
        %2093 = vmatpush1.bf16.msra.mxu0 0
        %2094 = vmatprep.subr.bf16.mxu0 0
        %2095 = vmatpush1.bf16.msra.mxu0 0
        %2096 = vmatprep.subr.bf16.mxu0 0
        %2097 = vmatpush1.bf16.msra.mxu0 0
        %2098 = vmatprep.subr.bf16.mxu0 0
        %2099 = vmatpush1.bf16.msra.mxu0 0
        %2100 = vmatprep.mubr.bf16.mxu0 0
        %2101 = vmatmul.mubr.bf16.gmra.mrb[0].mxu0 %v2014
        %v2102 = vpop.f32.mrb[0].mxu0
        %v2103 = vadd.f32 %v2019, %v2102
        %v2104 = vpop.f32.mrb[0].mxu0
        %v2105 = vpop.f32.mrb[0].mxu0
        %v2106 = vpop.f32.mrb[0].mxu0
        %2107 = vdwg.mxu0
        %v2108 = vmul.f32 %v2103, %v407
        %v2109 = vpack.c.bf16 %v2108, %v2108
        %v2111 = vsel %vm425, %v2109, 0
        %2113 = vmatprep.subr.bf16.mxu0 0
        %2114 = vmatpush1.bf16.msra.mxu0 %v2111
        %2115 = vmatprep.subr.bf16.mxu0 0
        %2116 = vmatpush1.bf16.msra.mxu0 0
        %2117 = vmatprep.subr.bf16.mxu0 0
        %2118 = vmatpush1.bf16.msra.mxu0 0
        %2119 = vmatprep.subr.bf16.mxu0 0
        %2120 = vmatpush1.bf16.msra.mxu0 0
        %2121 = vmatprep.subr.bf16.mxu0 0
        %2122 = vmatpush1.bf16.msra.mxu0 0
        %2123 = vmatprep.subr.bf16.mxu0 0
        %2124 = vmatpush1.bf16.msra.mxu0 0
        %2125 = vmatprep.subr.bf16.mxu0 0
        %2126 = vmatpush1.bf16.msra.mxu0 0
        %2127 = vmatprep.subr.bf16.mxu0 0
        %2128 = vmatpush1.bf16.msra.mxu0 0
        %2129 = vmatprep.subr.bf16.mxu0 0
        %2130 = vmatpush1.bf16.msra.mxu0 0
        %2131 = vmatprep.subr.bf16.mxu0 0
        %2132 = vmatpush1.bf16.msra.mxu0 0
        %2133 = vmatprep.subr.bf16.mxu0 0
        %2134 = vmatpush1.bf16.msra.mxu0 0
        %2135 = vmatprep.subr.bf16.mxu0 0
        %2136 = vmatpush1.bf16.msra.mxu0 0
        %2137 = vmatprep.subr.bf16.mxu0 0
        %2138 = vmatpush1.bf16.msra.mxu0 0
        %2139 = vmatprep.subr.bf16.mxu0 0
        %2140 = vmatpush1.bf16.msra.mxu0 0
        %2141 = vmatprep.subr.bf16.mxu0 0
        %2142 = vmatpush1.bf16.msra.mxu0 0
        %2143 = vmatprep.subr.bf16.mxu0 0
        %2144 = vmatpush1.bf16.msra.mxu0 0
        %2145 = vmatprep.mubr.bf16.mxu0 0
        %2146 = vmatmul.mubr.bf16.gmra.mrb[0].mxu0 %v950
        %v2147 = vpop.f32.mrb[0].mxu0
        %v2148 = vadd.f32 0.0, %v2147
        %v2149 = vpop.f32.mrb[0].mxu0
        %v2150 = vpop.f32.mrb[0].mxu0
        %v2151 = vpop.f32.mrb[0].mxu0
        %2152 = vdwg.mxu0
        %v2153 = vld [vmem:[#allocation20 + $0x200] sm:$0xff]
        %v2154 = vld [vmem:[#allocation20 + $0x208] sm:$0xff]
        %v2155 = vld [vmem:[#allocation20 + $0x210] sm:$0xff]
        %v2156 = vld [vmem:[#allocation20 + $0x218] sm:$0xff]
        %v2157 = vld [vmem:[#allocation20 + $0x220] sm:$0xff]
        %v2158 = vld [vmem:[#allocation20 + $0x228] sm:$0xff]
        %v2159 = vld [vmem:[#allocation20 + $0x230] sm:$0xff]
        %v2160 = vld [vmem:[#allocation20 + $0x238] sm:$0xff]
        %v2161 = vld [vmem:[#allocation20 + $0x240] sm:$0xff]
        %v2162 = vld [vmem:[#allocation20 + $0x248] sm:$0xff]
        %v2163 = vld [vmem:[#allocation20 + $0x250] sm:$0xff]
        %v2164 = vld [vmem:[#allocation20 + $0x258] sm:$0xff]
        %v2165 = vld [vmem:[#allocation20 + $0x260] sm:$0xff]
        %v2166 = vld [vmem:[#allocation20 + $0x268] sm:$0xff]
        %v2167 = vld [vmem:[#allocation20 + $0x270] sm:$0xff]
        %v2168 = vld [vmem:[#allocation20 + $0x278] sm:$0xff]
        %v2169 = vld [vmem:[#allocation20 + $0x280] sm:$0xff]
        %v2170 = vld [vmem:[#allocation20 + $0x288] sm:$0xff]
        %v2171 = vld [vmem:[#allocation20 + $0x290] sm:$0xff]
        %v2172 = vld [vmem:[#allocation20 + $0x298] sm:$0xff]
        %v2173 = vld [vmem:[#allocation20 + $0x2a0] sm:$0xff]
        %v2174 = vld [vmem:[#allocation20 + $0x2a8] sm:$0xff]
        %v2175 = vld [vmem:[#allocation20 + $0x2b0] sm:$0xff]
        %v2176 = vld [vmem:[#allocation20 + $0x2b8] sm:$0xff]
        %v2177 = vld [vmem:[#allocation20 + $0x2c0] sm:$0xff]
        %v2178 = vld [vmem:[#allocation20 + $0x2c8] sm:$0xff]
        %v2179 = vld [vmem:[#allocation20 + $0x2d0] sm:$0xff]
        %v2180 = vld [vmem:[#allocation20 + $0x2d8] sm:$0xff]
        %v2181 = vld [vmem:[#allocation20 + $0x2e0] sm:$0xff]
        %v2182 = vld [vmem:[#allocation20 + $0x2e8] sm:$0xff]
        %v2183 = vld [vmem:[#allocation20 + $0x2f0] sm:$0xff]
        %v2184 = vld [vmem:[#allocation20 + $0x2f8] sm:$0xff]
        %v2185 = vld [vmem:[#allocation20 + $0x300] sm:$0xff]
        %v2186 = vld [vmem:[#allocation20 + $0x308] sm:$0xff]
        %v2187 = vld [vmem:[#allocation20 + $0x310] sm:$0xff]
        %v2188 = vld [vmem:[#allocation20 + $0x318] sm:$0xff]
        %v2189 = vld [vmem:[#allocation20 + $0x320] sm:$0xff]
        %v2190 = vld [vmem:[#allocation20 + $0x328] sm:$0xff]
        %v2191 = vld [vmem:[#allocation20 + $0x330] sm:$0xff]
        %v2192 = vld [vmem:[#allocation20 + $0x338] sm:$0xff]
        %v2193 = vld [vmem:[#allocation20 + $0x340] sm:$0xff]
        %v2194 = vld [vmem:[#allocation20 + $0x348] sm:$0xff]
        %v2195 = vld [vmem:[#allocation20 + $0x350] sm:$0xff]
        %v2196 = vld [vmem:[#allocation20 + $0x358] sm:$0xff]
        %v2197 = vld [vmem:[#allocation20 + $0x360] sm:$0xff]
        %v2198 = vld [vmem:[#allocation20 + $0x368] sm:$0xff]
        %v2199 = vld [vmem:[#allocation20 + $0x370] sm:$0xff]
        %v2200 = vld [vmem:[#allocation20 + $0x378] sm:$0xff]
        %v2201 = vld [vmem:[#allocation20 + $0x380] sm:$0xff]
        %v2202 = vld [vmem:[#allocation20 + $0x388] sm:$0xff]
        %v2203 = vld [vmem:[#allocation20 + $0x390] sm:$0xff]
        %v2204 = vld [vmem:[#allocation20 + $0x398] sm:$0xff]
        %v2205 = vld [vmem:[#allocation20 + $0x3a0] sm:$0xff]
        %v2206 = vld [vmem:[#allocation20 + $0x3a8] sm:$0xff]
        %v2207 = vld [vmem:[#allocation20 + $0x3b0] sm:$0xff]
        %v2208 = vld [vmem:[#allocation20 + $0x3b8] sm:$0xff]
        %v2209 = vld [vmem:[#allocation20 + $0x3c0] sm:$0xff]
        %v2210 = vld [vmem:[#allocation20 + $0x3c8] sm:$0xff]
        %v2211 = vld [vmem:[#allocation20 + $0x3d0] sm:$0xff]
        %v2212 = vld [vmem:[#allocation20 + $0x3d8] sm:$0xff]
        %v2213 = vld [vmem:[#allocation20 + $0x3e0] sm:$0xff]
        %v2214 = vld [vmem:[#allocation20 + $0x3e8] sm:$0xff]
        %v2215 = vld [vmem:[#allocation20 + $0x3f0] sm:$0xff]
        %v2216 = vld [vmem:[#allocation20 + $0x3f8] sm:$0xff]
        %v2217 = vpack.c.bf16 %v2148, %v2148
        %v2250 = vunpack.c.l.b16 %v2185
        %v2251 = vunpack.c.h.b16 %v2185
        %v2252 = vunpack.c.l.b16 %v2186
        %v2253 = vunpack.c.h.b16 %v2186
        %v2254 = vunpack.c.l.b16 %v2187
        %v2255 = vunpack.c.h.b16 %v2187
        %v2256 = vunpack.c.l.b16 %v2188
        %v2257 = vunpack.c.h.b16 %v2188
        %v2258 = vunpack.c.l.b16 %v2189
        %v2259 = vunpack.c.h.b16 %v2189
        %v2260 = vunpack.c.l.b16 %v2190
        %v2261 = vunpack.c.h.b16 %v2190
        %v2262 = vunpack.c.l.b16 %v2191
        %v2263 = vunpack.c.h.b16 %v2191
        %v2264 = vunpack.c.l.b16 %v2192
        %v2265 = vunpack.c.h.b16 %v2192
        %v2266 = vunpack.c.l.b16 %v2193
        %v2267 = vunpack.c.h.b16 %v2193
        %v2268 = vunpack.c.l.b16 %v2194
        %v2269 = vunpack.c.h.b16 %v2194
        %v2270 = vunpack.c.l.b16 %v2195
        %v2271 = vunpack.c.h.b16 %v2195
        %v2272 = vunpack.c.l.b16 %v2196
        %v2273 = vunpack.c.h.b16 %v2196
        %v2274 = vunpack.c.l.b16 %v2197
        %v2275 = vunpack.c.h.b16 %v2197
        %v2276 = vunpack.c.l.b16 %v2198
        %v2277 = vunpack.c.h.b16 %v2198
        %v2278 = vunpack.c.l.b16 %v2199
        %v2279 = vunpack.c.h.b16 %v2199
        %v2280 = vunpack.c.l.b16 %v2200
        %v2281 = vunpack.c.h.b16 %v2200
        %v2282 = vunpack.c.l.b16 %v2201
        %v2283 = vunpack.c.h.b16 %v2201
        %v2284 = vunpack.c.l.b16 %v2202
        %v2285 = vunpack.c.h.b16 %v2202
        %v2286 = vunpack.c.l.b16 %v2203
        %v2287 = vunpack.c.h.b16 %v2203
        %v2288 = vunpack.c.l.b16 %v2204
        %v2289 = vunpack.c.h.b16 %v2204
        %v2290 = vunpack.c.l.b16 %v2205
        %v2291 = vunpack.c.h.b16 %v2205
        %v2292 = vunpack.c.l.b16 %v2206
        %v2293 = vunpack.c.h.b16 %v2206
        %v2294 = vunpack.c.l.b16 %v2207
        %v2295 = vunpack.c.h.b16 %v2207
        %v2296 = vunpack.c.l.b16 %v2208
        %v2297 = vunpack.c.h.b16 %v2208
        %v2298 = vunpack.c.l.b16 %v2209
        %v2299 = vunpack.c.h.b16 %v2209
        %v2300 = vunpack.c.l.b16 %v2210
        %v2301 = vunpack.c.h.b16 %v2210
        %v2302 = vunpack.c.l.b16 %v2211
        %v2303 = vunpack.c.h.b16 %v2211
        %v2304 = vunpack.c.l.b16 %v2212
        %v2305 = vunpack.c.h.b16 %v2212
        %v2306 = vunpack.c.l.b16 %v2213
        %v2307 = vunpack.c.h.b16 %v2213
        %v2308 = vunpack.c.l.b16 %v2214
        %v2309 = vunpack.c.h.b16 %v2214
        %v2310 = vunpack.c.l.b16 %v2215
        %v2311 = vunpack.c.h.b16 %v2215
        %v2312 = vunpack.c.l.b16 %v2216
        %v2313 = vunpack.c.h.b16 %v2216
        %v2314 = vpack.c.b16 %v2254, %v2250
        %v2315 = vpack.c.b16 %v2255, %v2251
        %v2316 = vpack.c.b16 %v2256, %v2252
        %v2317 = vpack.c.b16 %v2257, %v2253
        %v2318 = vpack.c.b16 %v2262, %v2258
        %v2319 = vpack.c.b16 %v2263, %v2259
        %v2320 = vpack.c.b16 %v2264, %v2260
        %v2321 = vpack.c.b16 %v2265, %v2261
        %v2322 = vpack.c.b16 %v2270, %v2266
        %v2323 = vpack.c.b16 %v2271, %v2267
        %v2324 = vpack.c.b16 %v2272, %v2268
        %v2325 = vpack.c.b16 %v2273, %v2269
        %v2326 = vpack.c.b16 %v2278, %v2274
        %v2327 = vpack.c.b16 %v2279, %v2275
        %v2328 = vpack.c.b16 %v2280, %v2276
        %v2329 = vpack.c.b16 %v2281, %v2277
        %v2330 = vpack.c.b16 %v2286, %v2282
        %v2331 = vpack.c.b16 %v2287, %v2283
        %v2332 = vpack.c.b16 %v2288, %v2284
        %v2333 = vpack.c.b16 %v2289, %v2285
        %v2334 = vpack.c.b16 %v2294, %v2290
        %v2335 = vpack.c.b16 %v2295, %v2291
        %v2336 = vpack.c.b16 %v2296, %v2292
        %v2337 = vpack.c.b16 %v2297, %v2293
        %v2338 = vpack.c.b16 %v2302, %v2298
        %v2339 = vpack.c.b16 %v2303, %v2299
        %v2340 = vpack.c.b16 %v2304, %v2300
        %v2341 = vpack.c.b16 %v2305, %v2301
        %v2342 = vpack.c.b16 %v2310, %v2306
        %v2343 = vpack.c.b16 %v2311, %v2307
        %v2344 = vpack.c.b16 %v2312, %v2308
        %v2345 = vpack.c.b16 %v2313, %v2309
        %2378 = vmatprep.subr.bf16.mxu0 %v2315
        %2379 = vmatpush1.bf16.msra.mxu0 %v2314
        %2380 = vmatprep.subr.bf16.mxu0 %v2319
        %2381 = vmatpush1.bf16.msra.mxu0 %v2318
        %2382 = vmatprep.subr.bf16.mxu0 %v2323
        %2383 = vmatpush1.bf16.msra.mxu0 %v2322
        %2384 = vmatprep.subr.bf16.mxu0 %v2327
        %2385 = vmatpush1.bf16.msra.mxu0 %v2326
        %2386 = vmatprep.subr.bf16.mxu0 %v2331
        %2387 = vmatpush1.bf16.msra.mxu0 %v2330
        %2388 = vmatprep.subr.bf16.mxu0 %v2335
        %2389 = vmatpush1.bf16.msra.mxu0 %v2334
        %2390 = vmatprep.subr.bf16.mxu0 %v2339
        %2391 = vmatpush1.bf16.msra.mxu0 %v2338
        %2392 = vmatprep.subr.bf16.mxu0 %v2343
        %2393 = vmatpush1.bf16.msra.mxu0 %v2342
        %2394 = vmatprep.subr.bf16.mxu0 0
        %2395 = vmatpush1.bf16.msra.mxu0 0
        %2396 = vmatprep.subr.bf16.mxu0 0
        %2397 = vmatpush1.bf16.msra.mxu0 0
        %2398 = vmatprep.subr.bf16.mxu0 0
        %2399 = vmatpush1.bf16.msra.mxu0 0
        %2400 = vmatprep.subr.bf16.mxu0 0
        %2401 = vmatpush1.bf16.msra.mxu0 0
        %2402 = vmatprep.subr.bf16.mxu0 0
        %2403 = vmatpush1.bf16.msra.mxu0 0
        %2404 = vmatprep.subr.bf16.mxu0 0
        %2405 = vmatpush1.bf16.msra.mxu0 0
        %2406 = vmatprep.subr.bf16.mxu0 0
        %2407 = vmatpush1.bf16.msra.mxu0 0
        %2408 = vmatprep.subr.bf16.mxu0 0
        %2409 = vmatpush1.bf16.msra.mxu0 0
        %2410 = vmatprep.mubr.bf16.mxu0 0
        %2411 = vmatmul.mubr.bf16.gmra.mrb[0].mxu0 %v2217
        %v2412 = vpop.f32.mrb[0].mxu0
        %v2413 = vadd.f32 0.0, %v2412
        %v2414 = vpop.f32.mrb[0].mxu0
        %v2415 = vadd.f32 0.0, %v2414
        %v2416 = vpop.f32.mrb[0].mxu0
        %v2417 = vpop.f32.mrb[0].mxu0
        %2418 = vdwg.mxu0
        %2419 = vmatprep.subr.bf16.mxu0 %v2317
        %2420 = vmatpush1.bf16.msra.mxu0 %v2316
        %2421 = vmatprep.subr.bf16.mxu0 %v2321
        %2422 = vmatpush1.bf16.msra.mxu0 %v2320
        %2423 = vmatprep.subr.bf16.mxu0 %v2325
        %2424 = vmatpush1.bf16.msra.mxu0 %v2324
        %2425 = vmatprep.subr.bf16.mxu0 %v2329
        %2426 = vmatpush1.bf16.msra.mxu0 %v2328
        %2427 = vmatprep.subr.bf16.mxu0 %v2333
        %2428 = vmatpush1.bf16.msra.mxu0 %v2332
        %2429 = vmatprep.subr.bf16.mxu0 %v2337
        %2430 = vmatpush1.bf16.msra.mxu0 %v2336
        %2431 = vmatprep.subr.bf16.mxu0 %v2341
        %2432 = vmatpush1.bf16.msra.mxu0 %v2340
        %2433 = vmatprep.subr.bf16.mxu0 %v2345
        %2434 = vmatpush1.bf16.msra.mxu0 %v2344
        %2435 = vmatprep.subr.bf16.mxu0 0
        %2436 = vmatpush1.bf16.msra.mxu0 0
        %2437 = vmatprep.subr.bf16.mxu0 0
        %2438 = vmatpush1.bf16.msra.mxu0 0
        %2439 = vmatprep.subr.bf16.mxu0 0
        %2440 = vmatpush1.bf16.msra.mxu0 0
        %2441 = vmatprep.subr.bf16.mxu0 0
        %2442 = vmatpush1.bf16.msra.mxu0 0
        %2443 = vmatprep.subr.bf16.mxu0 0
        %2444 = vmatpush1.bf16.msra.mxu0 0
        %2445 = vmatprep.subr.bf16.mxu0 0
        %2446 = vmatpush1.bf16.msra.mxu0 0
        %2447 = vmatprep.subr.bf16.mxu0 0
        %2448 = vmatpush1.bf16.msra.mxu0 0
        %2449 = vmatprep.subr.bf16.mxu0 0
        %2450 = vmatpush1.bf16.msra.mxu0 0
        %2451 = vmatprep.mubr.bf16.mxu0 0
        %2452 = vmatmul.mubr.bf16.gmra.mrb[0].mxu0 %v2217
        %v2453 = vpop.f32.mrb[0].mxu0
        %v2454 = vadd.f32 0.0, %v2453
        %v2455 = vpop.f32.mrb[0].mxu0
        %v2456 = vadd.f32 0.0, %v2455
        %v2457 = vpop.f32.mrb[0].mxu0
        %v2458 = vpop.f32.mrb[0].mxu0
        %2459 = vdwg.mxu0
        %v2492 = vunpack.c.l.b16 %v2153
        %v2493 = vunpack.c.h.b16 %v2153
        %v2494 = vunpack.c.l.b16 %v2154
        %v2495 = vunpack.c.h.b16 %v2154
        %v2496 = vunpack.c.l.b16 %v2155
        %v2497 = vunpack.c.h.b16 %v2155
        %v2498 = vunpack.c.l.b16 %v2156
        %v2499 = vunpack.c.h.b16 %v2156
        %v2500 = vunpack.c.l.b16 %v2157
        %v2501 = vunpack.c.h.b16 %v2157
        %v2502 = vunpack.c.l.b16 %v2158
        %v2503 = vunpack.c.h.b16 %v2158
        %v2504 = vunpack.c.l.b16 %v2159
        %v2505 = vunpack.c.h.b16 %v2159
        %v2506 = vunpack.c.l.b16 %v2160
        %v2507 = vunpack.c.h.b16 %v2160
        %v2508 = vunpack.c.l.b16 %v2161
        %v2509 = vunpack.c.h.b16 %v2161
        %v2510 = vunpack.c.l.b16 %v2162
        %v2511 = vunpack.c.h.b16 %v2162
        %v2512 = vunpack.c.l.b16 %v2163
        %v2513 = vunpack.c.h.b16 %v2163
        %v2514 = vunpack.c.l.b16 %v2164
        %v2515 = vunpack.c.h.b16 %v2164
        %v2516 = vunpack.c.l.b16 %v2165
        %v2517 = vunpack.c.h.b16 %v2165
        %v2518 = vunpack.c.l.b16 %v2166
        %v2519 = vunpack.c.h.b16 %v2166
        %v2520 = vunpack.c.l.b16 %v2167
        %v2521 = vunpack.c.h.b16 %v2167
        %v2522 = vunpack.c.l.b16 %v2168
        %v2523 = vunpack.c.h.b16 %v2168
        %v2524 = vunpack.c.l.b16 %v2169
        %v2525 = vunpack.c.h.b16 %v2169
        %v2526 = vunpack.c.l.b16 %v2170
        %v2527 = vunpack.c.h.b16 %v2170
        %v2528 = vunpack.c.l.b16 %v2171
        %v2529 = vunpack.c.h.b16 %v2171
        %v2530 = vunpack.c.l.b16 %v2172
        %v2531 = vunpack.c.h.b16 %v2172
        %v2532 = vunpack.c.l.b16 %v2173
        %v2533 = vunpack.c.h.b16 %v2173
        %v2534 = vunpack.c.l.b16 %v2174
        %v2535 = vunpack.c.h.b16 %v2174
        %v2536 = vunpack.c.l.b16 %v2175
        %v2537 = vunpack.c.h.b16 %v2175
        %v2538 = vunpack.c.l.b16 %v2176
        %v2539 = vunpack.c.h.b16 %v2176
        %v2540 = vunpack.c.l.b16 %v2177
        %v2541 = vunpack.c.h.b16 %v2177
        %v2542 = vunpack.c.l.b16 %v2178
        %v2543 = vunpack.c.h.b16 %v2178
        %v2544 = vunpack.c.l.b16 %v2179
        %v2545 = vunpack.c.h.b16 %v2179
        %v2546 = vunpack.c.l.b16 %v2180
        %v2547 = vunpack.c.h.b16 %v2180
        %v2548 = vunpack.c.l.b16 %v2181
        %v2549 = vunpack.c.h.b16 %v2181
        %v2550 = vunpack.c.l.b16 %v2182
        %v2551 = vunpack.c.h.b16 %v2182
        %v2552 = vunpack.c.l.b16 %v2183
        %v2553 = vunpack.c.h.b16 %v2183
        %v2554 = vunpack.c.l.b16 %v2184
        %v2555 = vunpack.c.h.b16 %v2184
        %v2556 = vpack.c.b16 %v2496, %v2492
        %v2557 = vpack.c.b16 %v2497, %v2493
        %v2558 = vpack.c.b16 %v2498, %v2494
        %v2559 = vpack.c.b16 %v2499, %v2495
        %v2560 = vpack.c.b16 %v2504, %v2500
        %v2561 = vpack.c.b16 %v2505, %v2501
        %v2562 = vpack.c.b16 %v2506, %v2502
        %v2563 = vpack.c.b16 %v2507, %v2503
        %v2564 = vpack.c.b16 %v2512, %v2508
        %v2565 = vpack.c.b16 %v2513, %v2509
        %v2566 = vpack.c.b16 %v2514, %v2510
        %v2567 = vpack.c.b16 %v2515, %v2511
        %v2568 = vpack.c.b16 %v2520, %v2516
        %v2569 = vpack.c.b16 %v2521, %v2517
        %v2570 = vpack.c.b16 %v2522, %v2518
        %v2571 = vpack.c.b16 %v2523, %v2519
        %v2572 = vpack.c.b16 %v2528, %v2524
        %v2573 = vpack.c.b16 %v2529, %v2525
        %v2574 = vpack.c.b16 %v2530, %v2526
        %v2575 = vpack.c.b16 %v2531, %v2527
        %v2576 = vpack.c.b16 %v2536, %v2532
        %v2577 = vpack.c.b16 %v2537, %v2533
        %v2578 = vpack.c.b16 %v2538, %v2534
        %v2579 = vpack.c.b16 %v2539, %v2535
        %v2580 = vpack.c.b16 %v2544, %v2540
        %v2581 = vpack.c.b16 %v2545, %v2541
        %v2582 = vpack.c.b16 %v2546, %v2542
        %v2583 = vpack.c.b16 %v2547, %v2543
        %v2584 = vpack.c.b16 %v2552, %v2548
        %v2585 = vpack.c.b16 %v2553, %v2549
        %v2586 = vpack.c.b16 %v2554, %v2550
        %v2587 = vpack.c.b16 %v2555, %v2551
        %2620 = vmatprep.subr.bf16.mxu0 %v2557
        %2621 = vmatpush1.bf16.msra.mxu0 %v2556
        %2622 = vmatprep.subr.bf16.mxu0 %v2561
        %2623 = vmatpush1.bf16.msra.mxu0 %v2560
        %2624 = vmatprep.subr.bf16.mxu0 %v2565
        %2625 = vmatpush1.bf16.msra.mxu0 %v2564
        %2626 = vmatprep.subr.bf16.mxu0 %v2569
        %2627 = vmatpush1.bf16.msra.mxu0 %v2568
        %2628 = vmatprep.subr.bf16.mxu0 %v2573
        %2629 = vmatpush1.bf16.msra.mxu0 %v2572
        %2630 = vmatprep.subr.bf16.mxu0 %v2577
        %2631 = vmatpush1.bf16.msra.mxu0 %v2576
        %2632 = vmatprep.subr.bf16.mxu0 %v2581
        %2633 = vmatpush1.bf16.msra.mxu0 %v2580
        %2634 = vmatprep.subr.bf16.mxu0 %v2585
        %2635 = vmatpush1.bf16.msra.mxu0 %v2584
        %2636 = vmatprep.subr.bf16.mxu0 0
        %2637 = vmatpush1.bf16.msra.mxu0 0
        %2638 = vmatprep.subr.bf16.mxu0 0
        %2639 = vmatpush1.bf16.msra.mxu0 0
        %2640 = vmatprep.subr.bf16.mxu0 0
        %2641 = vmatpush1.bf16.msra.mxu0 0
        %2642 = vmatprep.subr.bf16.mxu0 0
        %2643 = vmatpush1.bf16.msra.mxu0 0
        %2644 = vmatprep.subr.bf16.mxu0 0
        %2645 = vmatpush1.bf16.msra.mxu0 0
        %2646 = vmatprep.subr.bf16.mxu0 0
        %2647 = vmatpush1.bf16.msra.mxu0 0
        %2648 = vmatprep.subr.bf16.mxu0 0
        %2649 = vmatpush1.bf16.msra.mxu0 0
        %2650 = vmatprep.subr.bf16.mxu0 0
        %2651 = vmatpush1.bf16.msra.mxu0 0
        %2652 = vmatprep.mubr.bf16.mxu0 0
        %2653 = vmatmul.mubr.bf16.gmra.mrb[0].mxu0 %v1592
        %v2654 = vpop.f32.mrb[0].mxu0
        %v2655 = vadd.f32 %v2413, %v2654
        %v2656 = vpop.f32.mrb[0].mxu0
        %v2657 = vadd.f32 %v2415, %v2656
        %v2658 = vpop.f32.mrb[0].mxu0
        %v2659 = vpop.f32.mrb[0].mxu0
        %2660 = vdwg.mxu0
        %2661 = vmatprep.subr.bf16.mxu0 %v2559
        %2662 = vmatpush1.bf16.msra.mxu0 %v2558
        %2663 = vmatprep.subr.bf16.mxu0 %v2563
        %2664 = vmatpush1.bf16.msra.mxu0 %v2562
        %2665 = vmatprep.subr.bf16.mxu0 %v2567
        %2666 = vmatpush1.bf16.msra.mxu0 %v2566
        %2667 = vmatprep.subr.bf16.mxu0 %v2571
        %2668 = vmatpush1.bf16.msra.mxu0 %v2570
        %2669 = vmatprep.subr.bf16.mxu0 %v2575
        %2670 = vmatpush1.bf16.msra.mxu0 %v2574
        %2671 = vmatprep.subr.bf16.mxu0 %v2579
        %2672 = vmatpush1.bf16.msra.mxu0 %v2578
        %2673 = vmatprep.subr.bf16.mxu0 %v2583
        %2674 = vmatpush1.bf16.msra.mxu0 %v2582
        %2675 = vmatprep.subr.bf16.mxu0 %v2587
        %2676 = vmatpush1.bf16.msra.mxu0 %v2586
        %2677 = vmatprep.subr.bf16.mxu0 0
        %2678 = vmatpush1.bf16.msra.mxu0 0
        %2679 = vmatprep.subr.bf16.mxu0 0
        %2680 = vmatpush1.bf16.msra.mxu0 0
        %2681 = vmatprep.subr.bf16.mxu0 0
        %2682 = vmatpush1.bf16.msra.mxu0 0
        %2683 = vmatprep.subr.bf16.mxu0 0
        %2684 = vmatpush1.bf16.msra.mxu0 0
        %2685 = vmatprep.subr.bf16.mxu0 0
        %2686 = vmatpush1.bf16.msra.mxu0 0
        %2687 = vmatprep.subr.bf16.mxu0 0
        %2688 = vmatpush1.bf16.msra.mxu0 0
        %2689 = vmatprep.subr.bf16.mxu0 0
        %2690 = vmatpush1.bf16.msra.mxu0 0
        %2691 = vmatprep.subr.bf16.mxu0 0
        %2692 = vmatpush1.bf16.msra.mxu0 0
        %2693 = vmatprep.mubr.bf16.mxu0 0
        %2694 = vmatmul.mubr.bf16.gmra.mrb[0].mxu0 %v1592
        %v2695 = vpop.f32.mrb[0].mxu0
        %v2696 = vadd.f32 %v2454, %v2695
        %v2697 = vpop.f32.mrb[0].mxu0
        %v2698 = vadd.f32 %v2456, %v2697
        %v2699 = vpop.f32.mrb[0].mxu0
        %v2700 = vpop.f32.mrb[0].mxu0
        %2701 = vdwg.mxu0
        %v2702 = vld [vmem:[%s15 + $0x8] sm:$0x1]
        %v2703 = vlaneseq
        %v2704 = vshrl.u32 %v2703, 7
        %v2705 = vsub.s32 0, %v2704
        %v2706 = vrot.slane %v2702, %v2705
        %v2707 = vadd.f32 %v2655, %v2706
        %v2708 = vxor.u32 %v2707, 2147483648
        %v2709 = vmul.f32 %v2708, 1.442695
        %v2710 = vpow.pop %v2709
        %v2711 = vadd.f32 %v2710, 1.0
        %v2712 = vrcp.pop %v2711
        %v2713 = vmul.f32 1.0, %v2712
        %v2714 = vld [vmem:[%s15 + $0x9] sm:$0x1]
        %v2715 = vlaneseq
        %v2716 = vshrl.u32 %v2715, 7
        %v2717 = vsub.s32 0, %v2716
        %v2718 = vrot.slane %v2714, %v2717
        %v2719 = vadd.f32 %v2657, %v2718
        %v2720 = vxor.u32 %v2719, 2147483648
        %v2721 = vmul.f32 %v2720, 1.442695
        %v2722 = vpow.pop %v2721
        %v2723 = vadd.f32 %v2722, 1.0
        %v2724 = vrcp.pop %v2723
        %v2725 = vmul.f32 1.0, %v2724
        %v2726 = vld [vmem:[%s15 + $0xa] sm:$0x1]
        %v2727 = vlaneseq
        %v2728 = vshrl.u32 %v2727, 7
        %v2729 = vsub.s32 0, %v2728
        %v2730 = vrot.slane %v2726, %v2729
        %v2731 = vadd.f32 %v2696, %v2730
        %v2732 = vtanh.pop %v2731
        %v2733 = vld [vmem:[%s15 + $0xb] sm:$0x1]
        %v2734 = vlaneseq
        %v2735 = vshrl.u32 %v2734, 7
        %v2736 = vsub.s32 0, %v2735
        %v2737 = vrot.slane %v2733, %v2736
        %v2738 = vadd.f32 %v2698, %v2737
        %v2739 = vxor.u32 %v2738, 2147483648
        %v2740 = vmul.f32 %v2739, 1.442695
        %v2741 = vpow.pop %v2740
        %v2742 = vadd.f32 %v2741, 1.0
        %v2743 = vrcp.pop %v2742
        %v2744 = vmul.f32 1.0, %v2743
        %v2745 = vmul.f32 %v2725, %v1589
        %v2746 = vmul.f32 %v2713, %v2732
        %v2747 = vadd.f32 %v2745, %v2746
        %v2748 = vtanh.pop %v2747
        %v2749 = vmul.f32 %v2744, %v2748
        %v2750 = vld [vmem:[#allocation18 + $0x400] sm:$0xf]
        %v2751 = vld [vmem:[#allocation18 + $0x404] sm:$0xf]
        %v2752 = vld [vmem:[#allocation18 + $0x408] sm:$0xf]
        %v2753 = vld [vmem:[#allocation18 + $0x40c] sm:$0xf]
        %v2754 = vld [vmem:[#allocation18 + $0x410] sm:$0xf]
        %v2755 = vld [vmem:[#allocation18 + $0x414] sm:$0xf]
        %v2756 = vld [vmem:[#allocation18 + $0x418] sm:$0xf]
        %v2757 = vld [vmem:[#allocation18 + $0x41c] sm:$0xf]
        %v2758 = vld [vmem:[#allocation18 + $0x420] sm:$0xf]
        %v2759 = vld [vmem:[#allocation18 + $0x424] sm:$0xf]
        %v2760 = vld [vmem:[#allocation18 + $0x428] sm:$0xf]
        %v2761 = vld [vmem:[#allocation18 + $0x42c] sm:$0xf]
        %v2762 = vld [vmem:[#allocation18 + $0x430] sm:$0xf]
        %v2763 = vld [vmem:[#allocation18 + $0x434] sm:$0xf]
        %v2764 = vld [vmem:[#allocation18 + $0x438] sm:$0xf]
        %v2765 = vld [vmem:[#allocation18 + $0x43c] sm:$0xf]
        %v2766 = vpack.c.bf16 %v2749, %v2749
        %v2767 = vld [vmem:[%s15 + $0x18] sm:$0x1]
        %v2768 = vlaneseq
        %v2769 = vshrl.u32 %v2768, 7
        %v2770 = vsub.s32 0, %v2769
        %v2771 = vrot.slane %v2767, %v2770
        %v2788 = vunpack.c.l.b16 %v2750
        %v2789 = vunpack.c.l.b16 %v2751
        %v2790 = vunpack.c.l.b16 %v2752
        %v2791 = vunpack.c.l.b16 %v2753
        %v2792 = vunpack.c.l.b16 %v2754
        %v2793 = vunpack.c.l.b16 %v2755
        %v2794 = vunpack.c.l.b16 %v2756
        %v2795 = vunpack.c.l.b16 %v2757
        %v2796 = vunpack.c.l.b16 %v2758
        %v2797 = vunpack.c.l.b16 %v2759
        %v2798 = vunpack.c.l.b16 %v2760
        %v2799 = vunpack.c.l.b16 %v2761
        %v2800 = vunpack.c.l.b16 %v2762
        %v2801 = vunpack.c.l.b16 %v2763
        %v2802 = vunpack.c.l.b16 %v2764
        %v2803 = vunpack.c.l.b16 %v2765
        %v2804 = vpack.c.b16 %v2789, %v2788
        %v2805 = vpack.c.b16 %v2791, %v2790
        %v2806 = vpack.c.b16 %v2793, %v2792
        %v2807 = vpack.c.b16 %v2795, %v2794
        %v2808 = vpack.c.b16 %v2797, %v2796
        %v2809 = vpack.c.b16 %v2799, %v2798
        %v2810 = vpack.c.b16 %v2801, %v2800
        %v2811 = vpack.c.b16 %v2803, %v2802
        %2820 = vmatprep.subr.bf16.mxu0 0
        %2821 = vmatpush1.bf16.msra.mxu0 %v2804
        %2822 = vmatprep.subr.bf16.mxu0 0
        %2823 = vmatpush1.bf16.msra.mxu0 %v2805
        %2824 = vmatprep.subr.bf16.mxu0 0
        %2825 = vmatpush1.bf16.msra.mxu0 %v2806
        %2826 = vmatprep.subr.bf16.mxu0 0
        %2827 = vmatpush1.bf16.msra.mxu0 %v2807
        %2828 = vmatprep.subr.bf16.mxu0 0
        %2829 = vmatpush1.bf16.msra.mxu0 %v2808
        %2830 = vmatprep.subr.bf16.mxu0 0
        %2831 = vmatpush1.bf16.msra.mxu0 %v2809
        %2832 = vmatprep.subr.bf16.mxu0 0
        %2833 = vmatpush1.bf16.msra.mxu0 %v2810
        %2834 = vmatprep.subr.bf16.mxu0 0
        %2835 = vmatpush1.bf16.msra.mxu0 %v2811
        %2836 = vmatprep.subr.bf16.mxu0 0
        %2837 = vmatpush1.bf16.msra.mxu0 0
        %2838 = vmatprep.subr.bf16.mxu0 0
        %2839 = vmatpush1.bf16.msra.mxu0 0
        %2840 = vmatprep.subr.bf16.mxu0 0
        %2841 = vmatpush1.bf16.msra.mxu0 0
        %2842 = vmatprep.subr.bf16.mxu0 0
        %2843 = vmatpush1.bf16.msra.mxu0 0
        %2844 = vmatprep.subr.bf16.mxu0 0
        %2845 = vmatpush1.bf16.msra.mxu0 0
        %2846 = vmatprep.subr.bf16.mxu0 0
        %2847 = vmatpush1.bf16.msra.mxu0 0
        %2848 = vmatprep.subr.bf16.mxu0 0
        %2849 = vmatpush1.bf16.msra.mxu0 0
        %2850 = vmatprep.subr.bf16.mxu0 0
        %2851 = vmatpush1.bf16.msra.mxu0 0
        %2852 = vmatprep.mubr.bf16.mxu0 0
        %2853 = vmatmul.mubr.bf16.gmra.mrb[0].mxu0 %v2766
        %v2854 = vpop.f32.mrb[0].mxu0
        %v2855 = vadd.f32 %v2771, %v2854
        %v2856 = vpop.f32.mrb[0].mxu0
        %v2857 = vpop.f32.mrb[0].mxu0
        %v2858 = vpop.f32.mrb[0].mxu0
        %2859 = vdwg.mxu0
        %v2860 = vxor.u32 %v2855, 2147483648
        %v2861 = vmul.f32 %v2860, 1.442695
        %v2862 = vpow.pop %v2861
        %v2863 = vadd.f32 %v2862, 1.0
        %v2864 = vrcp.pop %v2863
        %v2865 = vmul.f32 1.0, %v2864
        %v2866 = vld [vmem:[#allocation18 + $0x440] sm:$0xf]
        %v2867 = vld [vmem:[#allocation18 + $0x444] sm:$0xf]
        %v2868 = vld [vmem:[#allocation18 + $0x448] sm:$0xf]
        %v2869 = vld [vmem:[#allocation18 + $0x44c] sm:$0xf]
        %v2870 = vld [vmem:[#allocation18 + $0x450] sm:$0xf]
        %v2871 = vld [vmem:[#allocation18 + $0x454] sm:$0xf]
        %v2872 = vld [vmem:[#allocation18 + $0x458] sm:$0xf]
        %v2873 = vld [vmem:[#allocation18 + $0x45c] sm:$0xf]
        %v2874 = vld [vmem:[#allocation18 + $0x460] sm:$0xf]
        %v2875 = vld [vmem:[#allocation18 + $0x464] sm:$0xf]
        %v2876 = vld [vmem:[#allocation18 + $0x468] sm:$0xf]
        %v2877 = vld [vmem:[#allocation18 + $0x46c] sm:$0xf]
        %v2878 = vld [vmem:[#allocation18 + $0x470] sm:$0xf]
        %v2879 = vld [vmem:[#allocation18 + $0x474] sm:$0xf]
        %v2880 = vld [vmem:[#allocation18 + $0x478] sm:$0xf]
        %v2881 = vld [vmem:[#allocation18 + $0x47c] sm:$0xf]
        %v2882 = vld [vmem:[%s15 + $0x19] sm:$0x1]
        %v2883 = vlaneseq
        %v2884 = vshrl.u32 %v2883, 7
        %v2885 = vsub.s32 0, %v2884
        %v2886 = vrot.slane %v2882, %v2885
        %v2903 = vunpack.c.l.b16 %v2866
        %v2904 = vunpack.c.l.b16 %v2867
        %v2905 = vunpack.c.l.b16 %v2868
        %v2906 = vunpack.c.l.b16 %v2869
        %v2907 = vunpack.c.l.b16 %v2870
        %v2908 = vunpack.c.l.b16 %v2871
        %v2909 = vunpack.c.l.b16 %v2872
        %v2910 = vunpack.c.l.b16 %v2873
        %v2911 = vunpack.c.l.b16 %v2874
        %v2912 = vunpack.c.l.b16 %v2875
        %v2913 = vunpack.c.l.b16 %v2876
        %v2914 = vunpack.c.l.b16 %v2877
        %v2915 = vunpack.c.l.b16 %v2878
        %v2916 = vunpack.c.l.b16 %v2879
        %v2917 = vunpack.c.l.b16 %v2880
        %v2918 = vunpack.c.l.b16 %v2881
        %v2919 = vpack.c.b16 %v2904, %v2903
        %v2920 = vpack.c.b16 %v2906, %v2905
        %v2921 = vpack.c.b16 %v2908, %v2907
        %v2922 = vpack.c.b16 %v2910, %v2909
        %v2923 = vpack.c.b16 %v2912, %v2911
        %v2924 = vpack.c.b16 %v2914, %v2913
        %v2925 = vpack.c.b16 %v2916, %v2915
        %v2926 = vpack.c.b16 %v2918, %v2917
        %2935 = vmatprep.subr.bf16.mxu0 0
        %2936 = vmatpush1.bf16.msra.mxu0 %v2919
        %2937 = vmatprep.subr.bf16.mxu0 0
        %2938 = vmatpush1.bf16.msra.mxu0 %v2920
        %2939 = vmatprep.subr.bf16.mxu0 0
        %2940 = vmatpush1.bf16.msra.mxu0 %v2921
        %2941 = vmatprep.subr.bf16.mxu0 0
        %2942 = vmatpush1.bf16.msra.mxu0 %v2922
        %2943 = vmatprep.subr.bf16.mxu0 0
        %2944 = vmatpush1.bf16.msra.mxu0 %v2923
        %2945 = vmatprep.subr.bf16.mxu0 0
        %2946 = vmatpush1.bf16.msra.mxu0 %v2924
        %2947 = vmatprep.subr.bf16.mxu0 0
        %2948 = vmatpush1.bf16.msra.mxu0 %v2925
        %2949 = vmatprep.subr.bf16.mxu0 0
        %2950 = vmatpush1.bf16.msra.mxu0 %v2926
        %2951 = vmatprep.subr.bf16.mxu0 0
        %2952 = vmatpush1.bf16.msra.mxu0 0
        %2953 = vmatprep.subr.bf16.mxu0 0
        %2954 = vmatpush1.bf16.msra.mxu0 0
        %2955 = vmatprep.subr.bf16.mxu0 0
        %2956 = vmatpush1.bf16.msra.mxu0 0
        %2957 = vmatprep.subr.bf16.mxu0 0
        %2958 = vmatpush1.bf16.msra.mxu0 0
        %2959 = vmatprep.subr.bf16.mxu0 0
        %2960 = vmatpush1.bf16.msra.mxu0 0
        %2961 = vmatprep.subr.bf16.mxu0 0
        %2962 = vmatpush1.bf16.msra.mxu0 0
        %2963 = vmatprep.subr.bf16.mxu0 0
        %2964 = vmatpush1.bf16.msra.mxu0 0
        %2965 = vmatprep.subr.bf16.mxu0 0
        %2966 = vmatpush1.bf16.msra.mxu0 0
        %2967 = vmatprep.mubr.bf16.mxu0 0
        %2968 = vmatmul.mubr.bf16.gmra.mrb[0].mxu0 %v2766
        %v2969 = vpop.f32.mrb[0].mxu0
        %v2970 = vadd.f32 %v2886, %v2969
        %v2971 = vpop.f32.mrb[0].mxu0
        %v2972 = vpop.f32.mrb[0].mxu0
        %v2973 = vpop.f32.mrb[0].mxu0
        %2974 = vdwg.mxu0
        %v2975 = vmul.f32 %v2865, %v2970
        %v2976 = vmul.f32 %v2975, %v411
        %v2977 = vrot.slane %v2976, 4
        %v2978 = vadd.f32 %v2976, %v2977
        %v2979 = vrot.slane %v2978, 2
        %v2980 = vadd.f32 %v2978, %v2979
        %v2981 = vrot.slane %v2980, 1
        %v2982 = vadd.f32 %v2980, %v2981
        %v2984 = vsel %vm425, %v2766, 0
        %2986 = vmatprep.subr.bf16.mxu0 0
        %2987 = vmatpush1.bf16.msra.mxu0 %v2984
        %2988 = vmatprep.subr.bf16.mxu0 0
        %2989 = vmatpush1.bf16.msra.mxu0 0
        %2990 = vmatprep.subr.bf16.mxu0 0
        %2991 = vmatpush1.bf16.msra.mxu0 0
        %2992 = vmatprep.subr.bf16.mxu0 0
        %2993 = vmatpush1.bf16.msra.mxu0 0
        %2994 = vmatprep.subr.bf16.mxu0 0
        %2995 = vmatpush1.bf16.msra.mxu0 0
        %2996 = vmatprep.subr.bf16.mxu0 0
        %2997 = vmatpush1.bf16.msra.mxu0 0
        %2998 = vmatprep.subr.bf16.mxu0 0
        %2999 = vmatpush1.bf16.msra.mxu0 0
        %3000 = vmatprep.subr.bf16.mxu0 0
        %3001 = vmatpush1.bf16.msra.mxu0 0
        %3002 = vmatprep.subr.bf16.mxu0 0
        %3003 = vmatpush1.bf16.msra.mxu0 0
        %3004 = vmatprep.subr.bf16.mxu0 0
        %3005 = vmatpush1.bf16.msra.mxu0 0
        %3006 = vmatprep.subr.bf16.mxu0 0
        %3007 = vmatpush1.bf16.msra.mxu0 0
        %3008 = vmatprep.subr.bf16.mxu0 0
        %3009 = vmatpush1.bf16.msra.mxu0 0
        %3010 = vmatprep.subr.bf16.mxu0 0
        %3011 = vmatpush1.bf16.msra.mxu0 0
        %3012 = vmatprep.subr.bf16.mxu0 0
        %3013 = vmatpush1.bf16.msra.mxu0 0
        %3014 = vmatprep.subr.bf16.mxu0 0
        %3015 = vmatpush1.bf16.msra.mxu0 0
        %3016 = vmatprep.subr.bf16.mxu0 0
        %3017 = vmatpush1.bf16.msra.mxu0 0
        %3018 = vmatprep.mubr.bf16.mxu0 0
        %3019 = vmatmul.mubr.bf16.gmra.mrb[0].mxu0 %v423
        %v3020 = vpop.f32.mrb[0].mxu0
        %v3021 = vadd.f32 0.0, %v3020
        %v3022 = vpop.f32.mrb[0].mxu0
        %v3023 = vpop.f32.mrb[0].mxu0
        %v3024 = vpop.f32.mrb[0].mxu0
        %3025 = vdwg.mxu0
        %3026 = vmatprep.subr.bf16.mxu0 0
        %3027 = vmatpush1.bf16.msra.mxu0 %v2984
        %3028 = vmatprep.subr.bf16.mxu0 0
        %3029 = vmatpush1.bf16.msra.mxu0 0
        %3030 = vmatprep.subr.bf16.mxu0 0
        %3031 = vmatpush1.bf16.msra.mxu0 0
        %3032 = vmatprep.subr.bf16.mxu0 0
        %3033 = vmatpush1.bf16.msra.mxu0 0
        %3034 = vmatprep.subr.bf16.mxu0 0
        %3035 = vmatpush1.bf16.msra.mxu0 0
        %3036 = vmatprep.subr.bf16.mxu0 0
        %3037 = vmatpush1.bf16.msra.mxu0 0
        %3038 = vmatprep.subr.bf16.mxu0 0
        %3039 = vmatpush1.bf16.msra.mxu0 0
        %3040 = vmatprep.subr.bf16.mxu0 0
        %3041 = vmatpush1.bf16.msra.mxu0 0
        %3042 = vmatprep.subr.bf16.mxu0 0
        %3043 = vmatpush1.bf16.msra.mxu0 0
        %3044 = vmatprep.subr.bf16.mxu0 0
        %3045 = vmatpush1.bf16.msra.mxu0 0
        %3046 = vmatprep.subr.bf16.mxu0 0
        %3047 = vmatpush1.bf16.msra.mxu0 0
        %3048 = vmatprep.subr.bf16.mxu0 0
        %3049 = vmatpush1.bf16.msra.mxu0 0
        %3050 = vmatprep.subr.bf16.mxu0 0
        %3051 = vmatpush1.bf16.msra.mxu0 0
        %3052 = vmatprep.subr.bf16.mxu0 0
        %3053 = vmatpush1.bf16.msra.mxu0 0
        %3054 = vmatprep.subr.bf16.mxu0 0
        %3055 = vmatpush1.bf16.msra.mxu0 0
        %3056 = vmatprep.subr.bf16.mxu0 0
        %3057 = vmatpush1.bf16.msra.mxu0 0
        %3058 = vmatprep.mubr.bf16.mxu0 0
        %3059 = vmatmul.mubr.bf16.gmra.mrb[0].mxu0 %v471
        %v3060 = vpop.f32.mrb[0].mxu0
        %v3061 = vadd.f32 0.0, %v3060
        %v3062 = vpop.f32.mrb[0].mxu0
        %v3063 = vpop.f32.mrb[0].mxu0
        %v3064 = vpop.f32.mrb[0].mxu0
        %3065 = vdwg.mxu0
        %v3066 = vld [vmem:[#allocation18 + $0x200] sm:$0xf]
        %v3067 = vld [vmem:[#allocation18 + $0x204] sm:$0xf]
        %v3068 = vld [vmem:[#allocation18 + $0x208] sm:$0xf]
        %v3069 = vld [vmem:[#allocation18 + $0x20c] sm:$0xf]
        %v3070 = vld [vmem:[#allocation18 + $0x210] sm:$0xf]
        %v3071 = vld [vmem:[#allocation18 + $0x214] sm:$0xf]
        %v3072 = vld [vmem:[#allocation18 + $0x218] sm:$0xf]
        %v3073 = vld [vmem:[#allocation18 + $0x21c] sm:$0xf]
        %v3074 = vld [vmem:[#allocation18 + $0x220] sm:$0xf]
        %v3075 = vld [vmem:[#allocation18 + $0x224] sm:$0xf]
        %v3076 = vld [vmem:[#allocation18 + $0x228] sm:$0xf]
        %v3077 = vld [vmem:[#allocation18 + $0x22c] sm:$0xf]
        %v3078 = vld [vmem:[#allocation18 + $0x230] sm:$0xf]
        %v3079 = vld [vmem:[#allocation18 + $0x234] sm:$0xf]
        %v3080 = vld [vmem:[#allocation18 + $0x238] sm:$0xf]
        %v3081 = vld [vmem:[#allocation18 + $0x23c] sm:$0xf]
        %v3082 = vpack.c.bf16 %v3021, %v3021
        %v3083 = vld [vmem:[#allocation18 + $0x240] sm:$0xf]
        %v3084 = vld [vmem:[#allocation18 + $0x244] sm:$0xf]
        %v3085 = vld [vmem:[#allocation18 + $0x248] sm:$0xf]
        %v3086 = vld [vmem:[#allocation18 + $0x24c] sm:$0xf]
        %v3087 = vld [vmem:[#allocation18 + $0x250] sm:$0xf]
        %v3088 = vld [vmem:[#allocation18 + $0x254] sm:$0xf]
        %v3089 = vld [vmem:[#allocation18 + $0x258] sm:$0xf]
        %v3090 = vld [vmem:[#allocation18 + $0x25c] sm:$0xf]
        %v3091 = vld [vmem:[#allocation18 + $0x260] sm:$0xf]
        %v3092 = vld [vmem:[#allocation18 + $0x264] sm:$0xf]
        %v3093 = vld [vmem:[#allocation18 + $0x268] sm:$0xf]
        %v3094 = vld [vmem:[#allocation18 + $0x26c] sm:$0xf]
        %v3095 = vld [vmem:[#allocation18 + $0x270] sm:$0xf]
        %v3096 = vld [vmem:[#allocation18 + $0x274] sm:$0xf]
        %v3097 = vld [vmem:[#allocation18 + $0x278] sm:$0xf]
        %v3098 = vld [vmem:[#allocation18 + $0x27c] sm:$0xf]
        %v3099 = vpack.c.bf16 %v3061, %v3061
        %v3116 = vunpack.c.l.b16 %v3083
        %v3117 = vunpack.c.l.b16 %v3084
        %v3118 = vunpack.c.l.b16 %v3085
        %v3119 = vunpack.c.l.b16 %v3086
        %v3120 = vunpack.c.l.b16 %v3087
        %v3121 = vunpack.c.l.b16 %v3088
        %v3122 = vunpack.c.l.b16 %v3089
        %v3123 = vunpack.c.l.b16 %v3090
        %v3124 = vunpack.c.l.b16 %v3091
        %v3125 = vunpack.c.l.b16 %v3092
        %v3126 = vunpack.c.l.b16 %v3093
        %v3127 = vunpack.c.l.b16 %v3094
        %v3128 = vunpack.c.l.b16 %v3095
        %v3129 = vunpack.c.l.b16 %v3096
        %v3130 = vunpack.c.l.b16 %v3097
        %v3131 = vunpack.c.l.b16 %v3098
        %v3132 = vpack.c.b16 %v3117, %v3116
        %v3133 = vpack.c.b16 %v3119, %v3118
        %v3134 = vpack.c.b16 %v3121, %v3120
        %v3135 = vpack.c.b16 %v3123, %v3122
        %v3136 = vpack.c.b16 %v3125, %v3124
        %v3137 = vpack.c.b16 %v3127, %v3126
        %v3138 = vpack.c.b16 %v3129, %v3128
        %v3139 = vpack.c.b16 %v3131, %v3130
        %3148 = vmatprep.subr.bf16.mxu0 0
        %3149 = vmatpush1.bf16.msra.mxu0 %v3132
        %3150 = vmatprep.subr.bf16.mxu0 0
        %3151 = vmatpush1.bf16.msra.mxu0 %v3133
        %3152 = vmatprep.subr.bf16.mxu0 0
        %3153 = vmatpush1.bf16.msra.mxu0 %v3134
        %3154 = vmatprep.subr.bf16.mxu0 0
        %3155 = vmatpush1.bf16.msra.mxu0 %v3135
        %3156 = vmatprep.subr.bf16.mxu0 0
        %3157 = vmatpush1.bf16.msra.mxu0 %v3136
        %3158 = vmatprep.subr.bf16.mxu0 0
        %3159 = vmatpush1.bf16.msra.mxu0 %v3137
        %3160 = vmatprep.subr.bf16.mxu0 0
        %3161 = vmatpush1.bf16.msra.mxu0 %v3138
        %3162 = vmatprep.subr.bf16.mxu0 0
        %3163 = vmatpush1.bf16.msra.mxu0 %v3139
        %3164 = vmatprep.subr.bf16.mxu0 0
        %3165 = vmatpush1.bf16.msra.mxu0 0
        %3166 = vmatprep.subr.bf16.mxu0 0
        %3167 = vmatpush1.bf16.msra.mxu0 0
        %3168 = vmatprep.subr.bf16.mxu0 0
        %3169 = vmatpush1.bf16.msra.mxu0 0
        %3170 = vmatprep.subr.bf16.mxu0 0
        %3171 = vmatpush1.bf16.msra.mxu0 0
        %3172 = vmatprep.subr.bf16.mxu0 0
        %3173 = vmatpush1.bf16.msra.mxu0 0
        %3174 = vmatprep.subr.bf16.mxu0 0
        %3175 = vmatpush1.bf16.msra.mxu0 0
        %3176 = vmatprep.subr.bf16.mxu0 0
        %3177 = vmatpush1.bf16.msra.mxu0 0
        %3178 = vmatprep.subr.bf16.mxu0 0
        %3179 = vmatpush1.bf16.msra.mxu0 0
        %3180 = vmatprep.mubr.bf16.mxu0 0
        %3181 = vmatmul.mubr.bf16.gmra.mrb[0].mxu0 %v3099
        %v3182 = vpop.f32.mrb[0].mxu0
        %v3183 = vadd.f32 0.0, %v3182
        %v3184 = vpop.f32.mrb[0].mxu0
        %v3185 = vpop.f32.mrb[0].mxu0
        %v3186 = vpop.f32.mrb[0].mxu0
        %3187 = vdwg.mxu0
        %v3204 = vunpack.c.l.b16 %v3066
        %v3205 = vunpack.c.l.b16 %v3067
        %v3206 = vunpack.c.l.b16 %v3068
        %v3207 = vunpack.c.l.b16 %v3069
        %v3208 = vunpack.c.l.b16 %v3070
        %v3209 = vunpack.c.l.b16 %v3071
        %v3210 = vunpack.c.l.b16 %v3072
        %v3211 = vunpack.c.l.b16 %v3073
        %v3212 = vunpack.c.l.b16 %v3074
        %v3213 = vunpack.c.l.b16 %v3075
        %v3214 = vunpack.c.l.b16 %v3076
        %v3215 = vunpack.c.l.b16 %v3077
        %v3216 = vunpack.c.l.b16 %v3078
        %v3217 = vunpack.c.l.b16 %v3079
        %v3218 = vunpack.c.l.b16 %v3080
        %v3219 = vunpack.c.l.b16 %v3081
        %v3220 = vpack.c.b16 %v3205, %v3204
        %v3221 = vpack.c.b16 %v3207, %v3206
        %v3222 = vpack.c.b16 %v3209, %v3208
        %v3223 = vpack.c.b16 %v3211, %v3210
        %v3224 = vpack.c.b16 %v3213, %v3212
        %v3225 = vpack.c.b16 %v3215, %v3214
        %v3226 = vpack.c.b16 %v3217, %v3216
        %v3227 = vpack.c.b16 %v3219, %v3218
        %3236 = vmatprep.subr.bf16.mxu0 0
        %3237 = vmatpush1.bf16.msra.mxu0 %v3220
        %3238 = vmatprep.subr.bf16.mxu0 0
        %3239 = vmatpush1.bf16.msra.mxu0 %v3221
        %3240 = vmatprep.subr.bf16.mxu0 0
        %3241 = vmatpush1.bf16.msra.mxu0 %v3222
        %3242 = vmatprep.subr.bf16.mxu0 0
        %3243 = vmatpush1.bf16.msra.mxu0 %v3223
        %3244 = vmatprep.subr.bf16.mxu0 0
        %3245 = vmatpush1.bf16.msra.mxu0 %v3224
        %3246 = vmatprep.subr.bf16.mxu0 0
        %3247 = vmatpush1.bf16.msra.mxu0 %v3225
        %3248 = vmatprep.subr.bf16.mxu0 0
        %3249 = vmatpush1.bf16.msra.mxu0 %v3226
        %3250 = vmatprep.subr.bf16.mxu0 0
        %3251 = vmatpush1.bf16.msra.mxu0 %v3227
        %3252 = vmatprep.subr.bf16.mxu0 0
        %3253 = vmatpush1.bf16.msra.mxu0 0
        %3254 = vmatprep.subr.bf16.mxu0 0
        %3255 = vmatpush1.bf16.msra.mxu0 0
        %3256 = vmatprep.subr.bf16.mxu0 0
        %3257 = vmatpush1.bf16.msra.mxu0 0
        %3258 = vmatprep.subr.bf16.mxu0 0
        %3259 = vmatpush1.bf16.msra.mxu0 0
        %3260 = vmatprep.subr.bf16.mxu0 0
        %3261 = vmatpush1.bf16.msra.mxu0 0
        %3262 = vmatprep.subr.bf16.mxu0 0
        %3263 = vmatpush1.bf16.msra.mxu0 0
        %3264 = vmatprep.subr.bf16.mxu0 0
        %3265 = vmatpush1.bf16.msra.mxu0 0
        %3266 = vmatprep.subr.bf16.mxu0 0
        %3267 = vmatpush1.bf16.msra.mxu0 0
        %3268 = vmatprep.mubr.bf16.mxu0 0
        %3269 = vmatmul.mubr.bf16.gmra.mrb[0].mxu0 %v3082
        %v3270 = vpop.f32.mrb[0].mxu0
        %v3271 = vadd.f32 %v3183, %v3270
        %v3272 = vpop.f32.mrb[0].mxu0
        %v3273 = vpop.f32.mrb[0].mxu0
        %v3274 = vpop.f32.mrb[0].mxu0
        %3275 = vdwg.mxu0
        %v3276 = vld [vmem:[#allocation18 + $0x280] sm:$0xf]
        %v3277 = vld [vmem:[#allocation18 + $0x284] sm:$0xf]
        %v3278 = vld [vmem:[#allocation18 + $0x288] sm:$0xf]
        %v3279 = vld [vmem:[#allocation18 + $0x28c] sm:$0xf]
        %v3280 = vld [vmem:[#allocation18 + $0x290] sm:$0xf]
        %v3281 = vld [vmem:[#allocation18 + $0x294] sm:$0xf]
        %v3282 = vld [vmem:[#allocation18 + $0x298] sm:$0xf]
        %v3283 = vld [vmem:[#allocation18 + $0x29c] sm:$0xf]
        %v3284 = vld [vmem:[#allocation18 + $0x2a0] sm:$0xf]
        %v3285 = vld [vmem:[#allocation18 + $0x2a4] sm:$0xf]
        %v3286 = vld [vmem:[#allocation18 + $0x2a8] sm:$0xf]
        %v3287 = vld [vmem:[#allocation18 + $0x2ac] sm:$0xf]
        %v3288 = vld [vmem:[#allocation18 + $0x2b0] sm:$0xf]
        %v3289 = vld [vmem:[#allocation18 + $0x2b4] sm:$0xf]
        %v3290 = vld [vmem:[#allocation18 + $0x2b8] sm:$0xf]
        %v3291 = vld [vmem:[#allocation18 + $0x2bc] sm:$0xf]
        %v3308 = vunpack.c.l.b16 %v3276
        %v3309 = vunpack.c.l.b16 %v3277
        %v3310 = vunpack.c.l.b16 %v3278
        %v3311 = vunpack.c.l.b16 %v3279
        %v3312 = vunpack.c.l.b16 %v3280
        %v3313 = vunpack.c.l.b16 %v3281
        %v3314 = vunpack.c.l.b16 %v3282
        %v3315 = vunpack.c.l.b16 %v3283
        %v3316 = vunpack.c.l.b16 %v3284
        %v3317 = vunpack.c.l.b16 %v3285
        %v3318 = vunpack.c.l.b16 %v3286
        %v3319 = vunpack.c.l.b16 %v3287
        %v3320 = vunpack.c.l.b16 %v3288
        %v3321 = vunpack.c.l.b16 %v3289
        %v3322 = vunpack.c.l.b16 %v3290
        %v3323 = vunpack.c.l.b16 %v3291
        %v3324 = vpack.c.b16 %v3309, %v3308
        %v3325 = vpack.c.b16 %v3311, %v3310
        %v3326 = vpack.c.b16 %v3313, %v3312
        %v3327 = vpack.c.b16 %v3315, %v3314
        %v3328 = vpack.c.b16 %v3317, %v3316
        %v3329 = vpack.c.b16 %v3319, %v3318
        %v3330 = vpack.c.b16 %v3321, %v3320
        %v3331 = vpack.c.b16 %v3323, %v3322
        %3340 = vmatprep.subr.bf16.mxu0 0
        %3341 = vmatpush1.bf16.msra.mxu0 %v3324
        %3342 = vmatprep.subr.bf16.mxu0 0
        %3343 = vmatpush1.bf16.msra.mxu0 %v3325
        %3344 = vmatprep.subr.bf16.mxu0 0
        %3345 = vmatpush1.bf16.msra.mxu0 %v3326
        %3346 = vmatprep.subr.bf16.mxu0 0
        %3347 = vmatpush1.bf16.msra.mxu0 %v3327
        %3348 = vmatprep.subr.bf16.mxu0 0
        %3349 = vmatpush1.bf16.msra.mxu0 %v3328
        %3350 = vmatprep.subr.bf16.mxu0 0
        %3351 = vmatpush1.bf16.msra.mxu0 %v3329
        %3352 = vmatprep.subr.bf16.mxu0 0
        %3353 = vmatpush1.bf16.msra.mxu0 %v3330
        %3354 = vmatprep.subr.bf16.mxu0 0
        %3355 = vmatpush1.bf16.msra.mxu0 %v3331
        %3356 = vmatprep.subr.bf16.mxu0 0
        %3357 = vmatpush1.bf16.msra.mxu0 0
        %3358 = vmatprep.subr.bf16.mxu0 0
        %3359 = vmatpush1.bf16.msra.mxu0 0
        %3360 = vmatprep.subr.bf16.mxu0 0
        %3361 = vmatpush1.bf16.msra.mxu0 0
        %3362 = vmatprep.subr.bf16.mxu0 0
        %3363 = vmatpush1.bf16.msra.mxu0 0
        %3364 = vmatprep.subr.bf16.mxu0 0
        %3365 = vmatpush1.bf16.msra.mxu0 0
        %3366 = vmatprep.subr.bf16.mxu0 0
        %3367 = vmatpush1.bf16.msra.mxu0 0
        %3368 = vmatprep.subr.bf16.mxu0 0
        %3369 = vmatpush1.bf16.msra.mxu0 0
        %3370 = vmatprep.subr.bf16.mxu0 0
        %3371 = vmatpush1.bf16.msra.mxu0 0
        %3372 = vmatprep.mubr.bf16.mxu0 0
        %3373 = vmatmul.mubr.bf16.gmra.mrb[0].mxu0 %v739
        %v3374 = vpop.f32.mrb[0].mxu0
        %v3375 = vadd.f32 0.0, %v3374
        %v3376 = vpop.f32.mrb[0].mxu0
        %v3377 = vpop.f32.mrb[0].mxu0
        %v3378 = vpop.f32.mrb[0].mxu0
        %3379 = vdwg.mxu0
        %v3380 = vadd.f32 %v3271, %v3375
        %v3381 = vld [vmem:[%s15 + $0xc] sm:$0x1]
        %v3382 = vlaneseq
        %v3383 = vshrl.u32 %v3382, 7
        %v3384 = vsub.s32 0, %v3383
        %v3385 = vrot.slane %v3381, %v3384
        %v3386 = vadd.f32 %v3380, %v3385
        %v3387 = vmax.f32 %v3386, 0.0
        %v3388 = vld [vmem:[#allocation18 + $0x2c0] sm:$0xf]
        %v3389 = vld [vmem:[#allocation18 + $0x2c4] sm:$0xf]
        %v3390 = vld [vmem:[#allocation18 + $0x2c8] sm:$0xf]
        %v3391 = vld [vmem:[#allocation18 + $0x2cc] sm:$0xf]
        %v3392 = vld [vmem:[#allocation18 + $0x2d0] sm:$0xf]
        %v3393 = vld [vmem:[#allocation18 + $0x2d4] sm:$0xf]
        %v3394 = vld [vmem:[#allocation18 + $0x2d8] sm:$0xf]
        %v3395 = vld [vmem:[#allocation18 + $0x2dc] sm:$0xf]
        %v3396 = vld [vmem:[#allocation18 + $0x2e0] sm:$0xf]
        %v3397 = vld [vmem:[#allocation18 + $0x2e4] sm:$0xf]
        %v3398 = vld [vmem:[#allocation18 + $0x2e8] sm:$0xf]
        %v3399 = vld [vmem:[#allocation18 + $0x2ec] sm:$0xf]
        %v3400 = vld [vmem:[#allocation18 + $0x2f0] sm:$0xf]
        %v3401 = vld [vmem:[#allocation18 + $0x2f4] sm:$0xf]
        %v3402 = vld [vmem:[#allocation18 + $0x2f8] sm:$0xf]
        %v3403 = vld [vmem:[#allocation18 + $0x2fc] sm:$0xf]
        %v3404 = vpack.c.bf16 %v3387, %v3387
        %v3405 = vld [vmem:[%s15 + $0xd] sm:$0x1]
        %v3406 = vlaneseq
        %v3407 = vshrl.u32 %v3406, 7
        %v3408 = vsub.s32 0, %v3407
        %v3409 = vrot.slane %v3405, %v3408
        %v3426 = vunpack.c.l.b16 %v3388
        %v3427 = vunpack.c.l.b16 %v3389
        %v3428 = vunpack.c.l.b16 %v3390
        %v3429 = vunpack.c.l.b16 %v3391
        %v3430 = vunpack.c.l.b16 %v3392
        %v3431 = vunpack.c.l.b16 %v3393
        %v3432 = vunpack.c.l.b16 %v3394
        %v3433 = vunpack.c.l.b16 %v3395
        %v3434 = vunpack.c.l.b16 %v3396
        %v3435 = vunpack.c.l.b16 %v3397
        %v3436 = vunpack.c.l.b16 %v3398
        %v3437 = vunpack.c.l.b16 %v3399
        %v3438 = vunpack.c.l.b16 %v3400
        %v3439 = vunpack.c.l.b16 %v3401
        %v3440 = vunpack.c.l.b16 %v3402
        %v3441 = vunpack.c.l.b16 %v3403
        %v3442 = vpack.c.b16 %v3427, %v3426
        %v3443 = vpack.c.b16 %v3429, %v3428
        %v3444 = vpack.c.b16 %v3431, %v3430
        %v3445 = vpack.c.b16 %v3433, %v3432
        %v3446 = vpack.c.b16 %v3435, %v3434
        %v3447 = vpack.c.b16 %v3437, %v3436
        %v3448 = vpack.c.b16 %v3439, %v3438
        %v3449 = vpack.c.b16 %v3441, %v3440
        %3458 = vmatprep.subr.bf16.mxu0 0
        %3459 = vmatpush1.bf16.msra.mxu0 %v3442
        %3460 = vmatprep.subr.bf16.mxu0 0
        %3461 = vmatpush1.bf16.msra.mxu0 %v3443
        %3462 = vmatprep.subr.bf16.mxu0 0
        %3463 = vmatpush1.bf16.msra.mxu0 %v3444
        %3464 = vmatprep.subr.bf16.mxu0 0
        %3465 = vmatpush1.bf16.msra.mxu0 %v3445
        %3466 = vmatprep.subr.bf16.mxu0 0
        %3467 = vmatpush1.bf16.msra.mxu0 %v3446
        %3468 = vmatprep.subr.bf16.mxu0 0
        %3469 = vmatpush1.bf16.msra.mxu0 %v3447
        %3470 = vmatprep.subr.bf16.mxu0 0
        %3471 = vmatpush1.bf16.msra.mxu0 %v3448
        %3472 = vmatprep.subr.bf16.mxu0 0
        %3473 = vmatpush1.bf16.msra.mxu0 %v3449
        %3474 = vmatprep.subr.bf16.mxu0 0
        %3475 = vmatpush1.bf16.msra.mxu0 0
        %3476 = vmatprep.subr.bf16.mxu0 0
        %3477 = vmatpush1.bf16.msra.mxu0 0
        %3478 = vmatprep.subr.bf16.mxu0 0
        %3479 = vmatpush1.bf16.msra.mxu0 0
        %3480 = vmatprep.subr.bf16.mxu0 0
        %3481 = vmatpush1.bf16.msra.mxu0 0
        %3482 = vmatprep.subr.bf16.mxu0 0
        %3483 = vmatpush1.bf16.msra.mxu0 0
        %3484 = vmatprep.subr.bf16.mxu0 0
        %3485 = vmatpush1.bf16.msra.mxu0 0
        %3486 = vmatprep.subr.bf16.mxu0 0
        %3487 = vmatpush1.bf16.msra.mxu0 0
        %3488 = vmatprep.subr.bf16.mxu0 0
        %3489 = vmatpush1.bf16.msra.mxu0 0
        %3490 = vmatprep.mubr.bf16.mxu0 0
        %3491 = vmatmul.mubr.bf16.gmra.mrb[0].mxu0 %v3404
        %v3492 = vpop.f32.mrb[0].mxu0
        %v3493 = vadd.f32 %v3409, %v3492
        %v3494 = vpop.f32.mrb[0].mxu0
        %v3495 = vpop.f32.mrb[0].mxu0
        %v3496 = vpop.f32.mrb[0].mxu0
        %3497 = vdwg.mxu0
        %v3498 = vmul.f32 %v3493, %v407
        %v3499 = vpack.c.bf16 %v3498, %v3498
        %v3501 = vsel %vm425, %v3499, 0
        %3503 = vmatprep.subr.bf16.mxu0 0
        %3504 = vmatpush1.bf16.msra.mxu0 %v3501
        %3505 = vmatprep.subr.bf16.mxu0 0
        %3506 = vmatpush1.bf16.msra.mxu0 0
        %3507 = vmatprep.subr.bf16.mxu0 0
        %3508 = vmatpush1.bf16.msra.mxu0 0
        %3509 = vmatprep.subr.bf16.mxu0 0
        %3510 = vmatpush1.bf16.msra.mxu0 0
        %3511 = vmatprep.subr.bf16.mxu0 0
        %3512 = vmatpush1.bf16.msra.mxu0 0
        %3513 = vmatprep.subr.bf16.mxu0 0
        %3514 = vmatpush1.bf16.msra.mxu0 0
        %3515 = vmatprep.subr.bf16.mxu0 0
        %3516 = vmatpush1.bf16.msra.mxu0 0
        %3517 = vmatprep.subr.bf16.mxu0 0
        %3518 = vmatpush1.bf16.msra.mxu0 0
        %3519 = vmatprep.subr.bf16.mxu0 0
        %3520 = vmatpush1.bf16.msra.mxu0 0
        %3521 = vmatprep.subr.bf16.mxu0 0
        %3522 = vmatpush1.bf16.msra.mxu0 0
        %3523 = vmatprep.subr.bf16.mxu0 0
        %3524 = vmatpush1.bf16.msra.mxu0 0
        %3525 = vmatprep.subr.bf16.mxu0 0
        %3526 = vmatpush1.bf16.msra.mxu0 0
        %3527 = vmatprep.subr.bf16.mxu0 0
        %3528 = vmatpush1.bf16.msra.mxu0 0
        %3529 = vmatprep.subr.bf16.mxu0 0
        %3530 = vmatpush1.bf16.msra.mxu0 0
        %3531 = vmatprep.subr.bf16.mxu0 0
        %3532 = vmatpush1.bf16.msra.mxu0 0
        %3533 = vmatprep.subr.bf16.mxu0 0
        %3534 = vmatpush1.bf16.msra.mxu0 0
        %3535 = vmatprep.mubr.bf16.mxu0 0
        %3536 = vmatmul.mubr.bf16.gmra.mrb[0].mxu0 %v950
        %v3537 = vpop.f32.mrb[0].mxu0
        %v3538 = vadd.f32 0.0, %v3537
        %v3539 = vpop.f32.mrb[0].mxu0
        %v3540 = vpop.f32.mrb[0].mxu0
        %v3541 = vpop.f32.mrb[0].mxu0
        %3542 = vdwg.mxu0
        %v3543 = vld [vmem:[#allocation20 + $0x400] sm:$0xff]
        %v3544 = vld [vmem:[#allocation20 + $0x408] sm:$0xff]
        %v3545 = vld [vmem:[#allocation20 + $0x410] sm:$0xff]
        %v3546 = vld [vmem:[#allocation20 + $0x418] sm:$0xff]
        %v3547 = vld [vmem:[#allocation20 + $0x420] sm:$0xff]
        %v3548 = vld [vmem:[#allocation20 + $0x428] sm:$0xff]
        %v3549 = vld [vmem:[#allocation20 + $0x430] sm:$0xff]
        %v3550 = vld [vmem:[#allocation20 + $0x438] sm:$0xff]
        %v3551 = vld [vmem:[#allocation20 + $0x440] sm:$0xff]
        %v3552 = vld [vmem:[#allocation20 + $0x448] sm:$0xff]
        %v3553 = vld [vmem:[#allocation20 + $0x450] sm:$0xff]
        %v3554 = vld [vmem:[#allocation20 + $0x458] sm:$0xff]
        %v3555 = vld [vmem:[#allocation20 + $0x460] sm:$0xff]
        %v3556 = vld [vmem:[#allocation20 + $0x468] sm:$0xff]
        %v3557 = vld [vmem:[#allocation20 + $0x470] sm:$0xff]
        %v3558 = vld [vmem:[#allocation20 + $0x478] sm:$0xff]
        %v3559 = vld [vmem:[#allocation20 + $0x480] sm:$0xff]
        %v3560 = vld [vmem:[#allocation20 + $0x488] sm:$0xff]
        %v3561 = vld [vmem:[#allocation20 + $0x490] sm:$0xff]
        %v3562 = vld [vmem:[#allocation20 + $0x498] sm:$0xff]
        %v3563 = vld [vmem:[#allocation20 + $0x4a0] sm:$0xff]
        %v3564 = vld [vmem:[#allocation20 + $0x4a8] sm:$0xff]
        %v3565 = vld [vmem:[#allocation20 + $0x4b0] sm:$0xff]
        %v3566 = vld [vmem:[#allocation20 + $0x4b8] sm:$0xff]
        %v3567 = vld [vmem:[#allocation20 + $0x4c0] sm:$0xff]
        %v3568 = vld [vmem:[#allocation20 + $0x4c8] sm:$0xff]
        %v3569 = vld [vmem:[#allocation20 + $0x4d0] sm:$0xff]
        %v3570 = vld [vmem:[#allocation20 + $0x4d8] sm:$0xff]
        %v3571 = vld [vmem:[#allocation20 + $0x4e0] sm:$0xff]
        %v3572 = vld [vmem:[#allocation20 + $0x4e8] sm:$0xff]
        %v3573 = vld [vmem:[#allocation20 + $0x4f0] sm:$0xff]
        %v3574 = vld [vmem:[#allocation20 + $0x4f8] sm:$0xff]
        %v3575 = vld [vmem:[#allocation20 + $0x500] sm:$0xff]
        %v3576 = vld [vmem:[#allocation20 + $0x508] sm:$0xff]
        %v3577 = vld [vmem:[#allocation20 + $0x510] sm:$0xff]
        %v3578 = vld [vmem:[#allocation20 + $0x518] sm:$0xff]
        %v3579 = vld [vmem:[#allocation20 + $0x520] sm:$0xff]
        %v3580 = vld [vmem:[#allocation20 + $0x528] sm:$0xff]
        %v3581 = vld [vmem:[#allocation20 + $0x530] sm:$0xff]
        %v3582 = vld [vmem:[#allocation20 + $0x538] sm:$0xff]
        %v3583 = vld [vmem:[#allocation20 + $0x540] sm:$0xff]
        %v3584 = vld [vmem:[#allocation20 + $0x548] sm:$0xff]
        %v3585 = vld [vmem:[#allocation20 + $0x550] sm:$0xff]
        %v3586 = vld [vmem:[#allocation20 + $0x558] sm:$0xff]
        %v3587 = vld [vmem:[#allocation20 + $0x560] sm:$0xff]
        %v3588 = vld [vmem:[#allocation20 + $0x568] sm:$0xff]
        %v3589 = vld [vmem:[#allocation20 + $0x570] sm:$0xff]
        %v3590 = vld [vmem:[#allocation20 + $0x578] sm:$0xff]
        %v3591 = vld [vmem:[#allocation20 + $0x580] sm:$0xff]
        %v3592 = vld [vmem:[#allocation20 + $0x588] sm:$0xff]
        %v3593 = vld [vmem:[#allocation20 + $0x590] sm:$0xff]
        %v3594 = vld [vmem:[#allocation20 + $0x598] sm:$0xff]
        %v3595 = vld [vmem:[#allocation20 + $0x5a0] sm:$0xff]
        %v3596 = vld [vmem:[#allocation20 + $0x5a8] sm:$0xff]
        %v3597 = vld [vmem:[#allocation20 + $0x5b0] sm:$0xff]
        %v3598 = vld [vmem:[#allocation20 + $0x5b8] sm:$0xff]
        %v3599 = vld [vmem:[#allocation20 + $0x5c0] sm:$0xff]
        %v3600 = vld [vmem:[#allocation20 + $0x5c8] sm:$0xff]
        %v3601 = vld [vmem:[#allocation20 + $0x5d0] sm:$0xff]
        %v3602 = vld [vmem:[#allocation20 + $0x5d8] sm:$0xff]
        %v3603 = vld [vmem:[#allocation20 + $0x5e0] sm:$0xff]
        %v3604 = vld [vmem:[#allocation20 + $0x5e8] sm:$0xff]
        %v3605 = vld [vmem:[#allocation20 + $0x5f0] sm:$0xff]
        %v3606 = vld [vmem:[#allocation20 + $0x5f8] sm:$0xff]
        %v3607 = vpack.c.bf16 %v3538, %v3538
        %v3640 = vunpack.c.l.b16 %v3575
        %v3641 = vunpack.c.h.b16 %v3575
        %v3642 = vunpack.c.l.b16 %v3576
        %v3643 = vunpack.c.h.b16 %v3576
        %v3644 = vunpack.c.l.b16 %v3577
        %v3645 = vunpack.c.h.b16 %v3577
        %v3646 = vunpack.c.l.b16 %v3578
        %v3647 = vunpack.c.h.b16 %v3578
        %v3648 = vunpack.c.l.b16 %v3579
        %v3649 = vunpack.c.h.b16 %v3579
        %v3650 = vunpack.c.l.b16 %v3580
        %v3651 = vunpack.c.h.b16 %v3580
        %v3652 = vunpack.c.l.b16 %v3581
        %v3653 = vunpack.c.h.b16 %v3581
        %v3654 = vunpack.c.l.b16 %v3582
        %v3655 = vunpack.c.h.b16 %v3582
        %v3656 = vunpack.c.l.b16 %v3583
        %v3657 = vunpack.c.h.b16 %v3583
        %v3658 = vunpack.c.l.b16 %v3584
        %v3659 = vunpack.c.h.b16 %v3584
        %v3660 = vunpack.c.l.b16 %v3585
        %v3661 = vunpack.c.h.b16 %v3585
        %v3662 = vunpack.c.l.b16 %v3586
        %v3663 = vunpack.c.h.b16 %v3586
        %v3664 = vunpack.c.l.b16 %v3587
        %v3665 = vunpack.c.h.b16 %v3587
        %v3666 = vunpack.c.l.b16 %v3588
        %v3667 = vunpack.c.h.b16 %v3588
        %v3668 = vunpack.c.l.b16 %v3589
        %v3669 = vunpack.c.h.b16 %v3589
        %v3670 = vunpack.c.l.b16 %v3590
        %v3671 = vunpack.c.h.b16 %v3590
        %v3672 = vunpack.c.l.b16 %v3591
        %v3673 = vunpack.c.h.b16 %v3591
        %v3674 = vunpack.c.l.b16 %v3592
        %v3675 = vunpack.c.h.b16 %v3592
        %v3676 = vunpack.c.l.b16 %v3593
        %v3677 = vunpack.c.h.b16 %v3593
        %v3678 = vunpack.c.l.b16 %v3594
        %v3679 = vunpack.c.h.b16 %v3594
        %v3680 = vunpack.c.l.b16 %v3595
        %v3681 = vunpack.c.h.b16 %v3595
        %v3682 = vunpack.c.l.b16 %v3596
        %v3683 = vunpack.c.h.b16 %v3596
        %v3684 = vunpack.c.l.b16 %v3597
        %v3685 = vunpack.c.h.b16 %v3597
        %v3686 = vunpack.c.l.b16 %v3598
        %v3687 = vunpack.c.h.b16 %v3598
        %v3688 = vunpack.c.l.b16 %v3599
        %v3689 = vunpack.c.h.b16 %v3599
        %v3690 = vunpack.c.l.b16 %v3600
        %v3691 = vunpack.c.h.b16 %v3600
        %v3692 = vunpack.c.l.b16 %v3601
        %v3693 = vunpack.c.h.b16 %v3601
        %v3694 = vunpack.c.l.b16 %v3602
        %v3695 = vunpack.c.h.b16 %v3602
        %v3696 = vunpack.c.l.b16 %v3603
        %v3697 = vunpack.c.h.b16 %v3603
        %v3698 = vunpack.c.l.b16 %v3604
        %v3699 = vunpack.c.h.b16 %v3604
        %v3700 = vunpack.c.l.b16 %v3605
        %v3701 = vunpack.c.h.b16 %v3605
        %v3702 = vunpack.c.l.b16 %v3606
        %v3703 = vunpack.c.h.b16 %v3606
        %v3704 = vpack.c.b16 %v3644, %v3640
        %v3705 = vpack.c.b16 %v3645, %v3641
        %v3706 = vpack.c.b16 %v3646, %v3642
        %v3707 = vpack.c.b16 %v3647, %v3643
        %v3708 = vpack.c.b16 %v3652, %v3648
        %v3709 = vpack.c.b16 %v3653, %v3649
        %v3710 = vpack.c.b16 %v3654, %v3650
        %v3711 = vpack.c.b16 %v3655, %v3651
        %v3712 = vpack.c.b16 %v3660, %v3656
        %v3713 = vpack.c.b16 %v3661, %v3657
        %v3714 = vpack.c.b16 %v3662, %v3658
        %v3715 = vpack.c.b16 %v3663, %v3659
        %v3716 = vpack.c.b16 %v3668, %v3664
        %v3717 = vpack.c.b16 %v3669, %v3665
        %v3718 = vpack.c.b16 %v3670, %v3666
        %v3719 = vpack.c.b16 %v3671, %v3667
        %v3720 = vpack.c.b16 %v3676, %v3672
        %v3721 = vpack.c.b16 %v3677, %v3673
        %v3722 = vpack.c.b16 %v3678, %v3674
        %v3723 = vpack.c.b16 %v3679, %v3675
        %v3724 = vpack.c.b16 %v3684, %v3680
        %v3725 = vpack.c.b16 %v3685, %v3681
        %v3726 = vpack.c.b16 %v3686, %v3682
        %v3727 = vpack.c.b16 %v3687, %v3683
        %v3728 = vpack.c.b16 %v3692, %v3688
        %v3729 = vpack.c.b16 %v3693, %v3689
        %v3730 = vpack.c.b16 %v3694, %v3690
        %v3731 = vpack.c.b16 %v3695, %v3691
        %v3732 = vpack.c.b16 %v3700, %v3696
        %v3733 = vpack.c.b16 %v3701, %v3697
        %v3734 = vpack.c.b16 %v3702, %v3698
        %v3735 = vpack.c.b16 %v3703, %v3699
        %3768 = vmatprep.subr.bf16.mxu0 %v3705
        %3769 = vmatpush1.bf16.msra.mxu0 %v3704
        %3770 = vmatprep.subr.bf16.mxu0 %v3709
        %3771 = vmatpush1.bf16.msra.mxu0 %v3708
        %3772 = vmatprep.subr.bf16.mxu0 %v3713
        %3773 = vmatpush1.bf16.msra.mxu0 %v3712
        %3774 = vmatprep.subr.bf16.mxu0 %v3717
        %3775 = vmatpush1.bf16.msra.mxu0 %v3716
        %3776 = vmatprep.subr.bf16.mxu0 %v3721
        %3777 = vmatpush1.bf16.msra.mxu0 %v3720
        %3778 = vmatprep.subr.bf16.mxu0 %v3725
        %3779 = vmatpush1.bf16.msra.mxu0 %v3724
        %3780 = vmatprep.subr.bf16.mxu0 %v3729
        %3781 = vmatpush1.bf16.msra.mxu0 %v3728
        %3782 = vmatprep.subr.bf16.mxu0 %v3733
        %3783 = vmatpush1.bf16.msra.mxu0 %v3732
        %3784 = vmatprep.subr.bf16.mxu0 0
        %3785 = vmatpush1.bf16.msra.mxu0 0
        %3786 = vmatprep.subr.bf16.mxu0 0
        %3787 = vmatpush1.bf16.msra.mxu0 0
        %3788 = vmatprep.subr.bf16.mxu0 0
        %3789 = vmatpush1.bf16.msra.mxu0 0
        %3790 = vmatprep.subr.bf16.mxu0 0
        %3791 = vmatpush1.bf16.msra.mxu0 0
        %3792 = vmatprep.subr.bf16.mxu0 0
        %3793 = vmatpush1.bf16.msra.mxu0 0
        %3794 = vmatprep.subr.bf16.mxu0 0
        %3795 = vmatpush1.bf16.msra.mxu0 0
        %3796 = vmatprep.subr.bf16.mxu0 0
        %3797 = vmatpush1.bf16.msra.mxu0 0
        %3798 = vmatprep.subr.bf16.mxu0 0
        %3799 = vmatpush1.bf16.msra.mxu0 0
        %3800 = vmatprep.mubr.bf16.mxu0 0
        %3801 = vmatmul.mubr.bf16.gmra.mrb[0].mxu0 %v3607
        %v3802 = vpop.f32.mrb[0].mxu0
        %v3803 = vadd.f32 0.0, %v3802
        %v3804 = vpop.f32.mrb[0].mxu0
        %v3805 = vadd.f32 0.0, %v3804
        %v3806 = vpop.f32.mrb[0].mxu0
        %v3807 = vpop.f32.mrb[0].mxu0
        %3808 = vdwg.mxu0
        %3809 = vmatprep.subr.bf16.mxu0 %v3707
        %3810 = vmatpush1.bf16.msra.mxu0 %v3706
        %3811 = vmatprep.subr.bf16.mxu0 %v3711
        %3812 = vmatpush1.bf16.msra.mxu0 %v3710
        %3813 = vmatprep.subr.bf16.mxu0 %v3715
        %3814 = vmatpush1.bf16.msra.mxu0 %v3714
        %3815 = vmatprep.subr.bf16.mxu0 %v3719
        %3816 = vmatpush1.bf16.msra.mxu0 %v3718
        %3817 = vmatprep.subr.bf16.mxu0 %v3723
        %3818 = vmatpush1.bf16.msra.mxu0 %v3722
        %3819 = vmatprep.subr.bf16.mxu0 %v3727
        %3820 = vmatpush1.bf16.msra.mxu0 %v3726
        %3821 = vmatprep.subr.bf16.mxu0 %v3731
        %3822 = vmatpush1.bf16.msra.mxu0 %v3730
        %3823 = vmatprep.subr.bf16.mxu0 %v3735
        %3824 = vmatpush1.bf16.msra.mxu0 %v3734
        %3825 = vmatprep.subr.bf16.mxu0 0
        %3826 = vmatpush1.bf16.msra.mxu0 0
        %3827 = vmatprep.subr.bf16.mxu0 0
        %3828 = vmatpush1.bf16.msra.mxu0 0
        %3829 = vmatprep.subr.bf16.mxu0 0
        %3830 = vmatpush1.bf16.msra.mxu0 0
        %3831 = vmatprep.subr.bf16.mxu0 0
        %3832 = vmatpush1.bf16.msra.mxu0 0
        %3833 = vmatprep.subr.bf16.mxu0 0
        %3834 = vmatpush1.bf16.msra.mxu0 0
        %3835 = vmatprep.subr.bf16.mxu0 0
        %3836 = vmatpush1.bf16.msra.mxu0 0
        %3837 = vmatprep.subr.bf16.mxu0 0
        %3838 = vmatpush1.bf16.msra.mxu0 0
        %3839 = vmatprep.subr.bf16.mxu0 0
        %3840 = vmatpush1.bf16.msra.mxu0 0
        %3841 = vmatprep.mubr.bf16.mxu0 0
        %3842 = vmatmul.mubr.bf16.gmra.mrb[0].mxu0 %v3607
        %v3843 = vpop.f32.mrb[0].mxu0
        %v3844 = vadd.f32 0.0, %v3843
        %v3845 = vpop.f32.mrb[0].mxu0
        %v3846 = vadd.f32 0.0, %v3845
        %v3847 = vpop.f32.mrb[0].mxu0
        %v3848 = vpop.f32.mrb[0].mxu0
        %3849 = vdwg.mxu0
        %v3882 = vunpack.c.l.b16 %v3543
        %v3883 = vunpack.c.h.b16 %v3543
        %v3884 = vunpack.c.l.b16 %v3544
        %v3885 = vunpack.c.h.b16 %v3544
        %v3886 = vunpack.c.l.b16 %v3545
        %v3887 = vunpack.c.h.b16 %v3545
        %v3888 = vunpack.c.l.b16 %v3546
        %v3889 = vunpack.c.h.b16 %v3546
        %v3890 = vunpack.c.l.b16 %v3547
        %v3891 = vunpack.c.h.b16 %v3547
        %v3892 = vunpack.c.l.b16 %v3548
        %v3893 = vunpack.c.h.b16 %v3548
        %v3894 = vunpack.c.l.b16 %v3549
        %v3895 = vunpack.c.h.b16 %v3549
        %v3896 = vunpack.c.l.b16 %v3550
        %v3897 = vunpack.c.h.b16 %v3550
        %v3898 = vunpack.c.l.b16 %v3551
        %v3899 = vunpack.c.h.b16 %v3551
        %v3900 = vunpack.c.l.b16 %v3552
        %v3901 = vunpack.c.h.b16 %v3552
        %v3902 = vunpack.c.l.b16 %v3553
        %v3903 = vunpack.c.h.b16 %v3553
        %v3904 = vunpack.c.l.b16 %v3554
        %v3905 = vunpack.c.h.b16 %v3554
        %v3906 = vunpack.c.l.b16 %v3555
        %v3907 = vunpack.c.h.b16 %v3555
        %v3908 = vunpack.c.l.b16 %v3556
        %v3909 = vunpack.c.h.b16 %v3556
        %v3910 = vunpack.c.l.b16 %v3557
        %v3911 = vunpack.c.h.b16 %v3557
        %v3912 = vunpack.c.l.b16 %v3558
        %v3913 = vunpack.c.h.b16 %v3558
        %v3914 = vunpack.c.l.b16 %v3559
        %v3915 = vunpack.c.h.b16 %v3559
        %v3916 = vunpack.c.l.b16 %v3560
        %v3917 = vunpack.c.h.b16 %v3560
        %v3918 = vunpack.c.l.b16 %v3561
        %v3919 = vunpack.c.h.b16 %v3561
        %v3920 = vunpack.c.l.b16 %v3562
        %v3921 = vunpack.c.h.b16 %v3562
        %v3922 = vunpack.c.l.b16 %v3563
        %v3923 = vunpack.c.h.b16 %v3563
        %v3924 = vunpack.c.l.b16 %v3564
        %v3925 = vunpack.c.h.b16 %v3564
        %v3926 = vunpack.c.l.b16 %v3565
        %v3927 = vunpack.c.h.b16 %v3565
        %v3928 = vunpack.c.l.b16 %v3566
        %v3929 = vunpack.c.h.b16 %v3566
        %v3930 = vunpack.c.l.b16 %v3567
        %v3931 = vunpack.c.h.b16 %v3567
        %v3932 = vunpack.c.l.b16 %v3568
        %v3933 = vunpack.c.h.b16 %v3568
        %v3934 = vunpack.c.l.b16 %v3569
        %v3935 = vunpack.c.h.b16 %v3569
        %v3936 = vunpack.c.l.b16 %v3570
        %v3937 = vunpack.c.h.b16 %v3570
        %v3938 = vunpack.c.l.b16 %v3571
        %v3939 = vunpack.c.h.b16 %v3571
        %v3940 = vunpack.c.l.b16 %v3572
        %v3941 = vunpack.c.h.b16 %v3572
        %v3942 = vunpack.c.l.b16 %v3573
        %v3943 = vunpack.c.h.b16 %v3573
        %v3944 = vunpack.c.l.b16 %v3574
        %v3945 = vunpack.c.h.b16 %v3574
        %v3946 = vpack.c.b16 %v3886, %v3882
        %v3947 = vpack.c.b16 %v3887, %v3883
        %v3948 = vpack.c.b16 %v3888, %v3884
        %v3949 = vpack.c.b16 %v3889, %v3885
        %v3950 = vpack.c.b16 %v3894, %v3890
        %v3951 = vpack.c.b16 %v3895, %v3891
        %v3952 = vpack.c.b16 %v3896, %v3892
        %v3953 = vpack.c.b16 %v3897, %v3893
        %v3954 = vpack.c.b16 %v3902, %v3898
        %v3955 = vpack.c.b16 %v3903, %v3899
        %v3956 = vpack.c.b16 %v3904, %v3900
        %v3957 = vpack.c.b16 %v3905, %v3901
        %v3958 = vpack.c.b16 %v3910, %v3906
        %v3959 = vpack.c.b16 %v3911, %v3907
        %v3960 = vpack.c.b16 %v3912, %v3908
        %v3961 = vpack.c.b16 %v3913, %v3909
        %v3962 = vpack.c.b16 %v3918, %v3914
        %v3963 = vpack.c.b16 %v3919, %v3915
        %v3964 = vpack.c.b16 %v3920, %v3916
        %v3965 = vpack.c.b16 %v3921, %v3917
        %v3966 = vpack.c.b16 %v3926, %v3922
        %v3967 = vpack.c.b16 %v3927, %v3923
        %v3968 = vpack.c.b16 %v3928, %v3924
        %v3969 = vpack.c.b16 %v3929, %v3925
        %v3970 = vpack.c.b16 %v3934, %v3930
        %v3971 = vpack.c.b16 %v3935, %v3931
        %v3972 = vpack.c.b16 %v3936, %v3932
        %v3973 = vpack.c.b16 %v3937, %v3933
        %v3974 = vpack.c.b16 %v3942, %v3938
        %v3975 = vpack.c.b16 %v3943, %v3939
        %v3976 = vpack.c.b16 %v3944, %v3940
        %v3977 = vpack.c.b16 %v3945, %v3941
        %4010 = vmatprep.subr.bf16.mxu0 %v3947
        %4011 = vmatpush1.bf16.msra.mxu0 %v3946
        %4012 = vmatprep.subr.bf16.mxu0 %v3951
        %4013 = vmatpush1.bf16.msra.mxu0 %v3950
        %4014 = vmatprep.subr.bf16.mxu0 %v3955
        %4015 = vmatpush1.bf16.msra.mxu0 %v3954
        %4016 = vmatprep.subr.bf16.mxu0 %v3959
        %4017 = vmatpush1.bf16.msra.mxu0 %v3958
        %4018 = vmatprep.subr.bf16.mxu0 %v3963
        %4019 = vmatpush1.bf16.msra.mxu0 %v3962
        %4020 = vmatprep.subr.bf16.mxu0 %v3967
        %4021 = vmatpush1.bf16.msra.mxu0 %v3966
        %4022 = vmatprep.subr.bf16.mxu0 %v3971
        %4023 = vmatpush1.bf16.msra.mxu0 %v3970
        %4024 = vmatprep.subr.bf16.mxu0 %v3975
        %4025 = vmatpush1.bf16.msra.mxu0 %v3974
        %4026 = vmatprep.subr.bf16.mxu0 0
        %4027 = vmatpush1.bf16.msra.mxu0 0
        %4028 = vmatprep.subr.bf16.mxu0 0
        %4029 = vmatpush1.bf16.msra.mxu0 0
        %4030 = vmatprep.subr.bf16.mxu0 0
        %4031 = vmatpush1.bf16.msra.mxu0 0
        %4032 = vmatprep.subr.bf16.mxu0 0
        %4033 = vmatpush1.bf16.msra.mxu0 0
        %4034 = vmatprep.subr.bf16.mxu0 0
        %4035 = vmatpush1.bf16.msra.mxu0 0
        %4036 = vmatprep.subr.bf16.mxu0 0
        %4037 = vmatpush1.bf16.msra.mxu0 0
        %4038 = vmatprep.subr.bf16.mxu0 0
        %4039 = vmatpush1.bf16.msra.mxu0 0
        %4040 = vmatprep.subr.bf16.mxu0 0
        %4041 = vmatpush1.bf16.msra.mxu0 0
        %4042 = vmatprep.mubr.bf16.mxu0 0
        %4043 = vmatmul.mubr.bf16.gmra.mrb[0].mxu0 %v2766
        %v4044 = vpop.f32.mrb[0].mxu0
        %v4045 = vadd.f32 %v3803, %v4044
        %v4046 = vpop.f32.mrb[0].mxu0
        %v4047 = vadd.f32 %v3805, %v4046
        %v4048 = vpop.f32.mrb[0].mxu0
        %v4049 = vpop.f32.mrb[0].mxu0
        %4050 = vdwg.mxu0
        %4051 = vmatprep.subr.bf16.mxu0 %v3949
        %4052 = vmatpush1.bf16.msra.mxu0 %v3948
        %4053 = vmatprep.subr.bf16.mxu0 %v3953
        %4054 = vmatpush1.bf16.msra.mxu0 %v3952
        %4055 = vmatprep.subr.bf16.mxu0 %v3957
        %4056 = vmatpush1.bf16.msra.mxu0 %v3956
        %4057 = vmatprep.subr.bf16.mxu0 %v3961
        %4058 = vmatpush1.bf16.msra.mxu0 %v3960
        %4059 = vmatprep.subr.bf16.mxu0 %v3965
        %4060 = vmatpush1.bf16.msra.mxu0 %v3964
        %4061 = vmatprep.subr.bf16.mxu0 %v3969
        %4062 = vmatpush1.bf16.msra.mxu0 %v3968
        %4063 = vmatprep.subr.bf16.mxu0 %v3973
        %4064 = vmatpush1.bf16.msra.mxu0 %v3972
        %4065 = vmatprep.subr.bf16.mxu0 %v3977
        %4066 = vmatpush1.bf16.msra.mxu0 %v3976
        %4067 = vmatprep.subr.bf16.mxu0 0
        %4068 = vmatpush1.bf16.msra.mxu0 0
        %4069 = vmatprep.subr.bf16.mxu0 0
        %4070 = vmatpush1.bf16.msra.mxu0 0
        %4071 = vmatprep.subr.bf16.mxu0 0
        %4072 = vmatpush1.bf16.msra.mxu0 0
        %4073 = vmatprep.subr.bf16.mxu0 0
        %4074 = vmatpush1.bf16.msra.mxu0 0
        %4075 = vmatprep.subr.bf16.mxu0 0
        %4076 = vmatpush1.bf16.msra.mxu0 0
        %4077 = vmatprep.subr.bf16.mxu0 0
        %4078 = vmatpush1.bf16.msra.mxu0 0
        %4079 = vmatprep.subr.bf16.mxu0 0
        %4080 = vmatpush1.bf16.msra.mxu0 0
        %4081 = vmatprep.subr.bf16.mxu0 0
        %4082 = vmatpush1.bf16.msra.mxu0 0
        %4083 = vmatprep.mubr.bf16.mxu0 0
        %4084 = vmatmul.mubr.bf16.gmra.mrb[0].mxu0 %v2766
        %v4085 = vpop.f32.mrb[0].mxu0
        %v4086 = vadd.f32 %v3844, %v4085
        %v4087 = vpop.f32.mrb[0].mxu0
        %v4088 = vadd.f32 %v3846, %v4087
        %v4089 = vpop.f32.mrb[0].mxu0
        %v4090 = vpop.f32.mrb[0].mxu0
        %4091 = vdwg.mxu0
        %v4092 = vld [vmem:[%s15 + $0xe] sm:$0x1]
        %v4093 = vlaneseq
        %v4094 = vshrl.u32 %v4093, 7
        %v4095 = vsub.s32 0, %v4094
        %v4096 = vrot.slane %v4092, %v4095
        %v4097 = vadd.f32 %v4045, %v4096
        %v4098 = vxor.u32 %v4097, 2147483648
        %v4099 = vmul.f32 %v4098, 1.442695
        %v4100 = vpow.pop %v4099
        %v4101 = vadd.f32 %v4100, 1.0
        %v4102 = vrcp.pop %v4101
        %v4103 = vmul.f32 1.0, %v4102
        %v4104 = vld [vmem:[%s15 + $0xf] sm:$0x1]
        %v4105 = vlaneseq
        %v4106 = vshrl.u32 %v4105, 7
        %v4107 = vsub.s32 0, %v4106
        %v4108 = vrot.slane %v4104, %v4107
        %v4109 = vadd.f32 %v4047, %v4108
        %v4110 = vxor.u32 %v4109, 2147483648
        %v4111 = vmul.f32 %v4110, 1.442695
        %v4112 = vpow.pop %v4111
        %v4113 = vadd.f32 %v4112, 1.0
        %v4114 = vrcp.pop %v4113
        %v4115 = vmul.f32 1.0, %v4114
        %v4116 = vld [vmem:[%s15 + $0x10] sm:$0x1]
        %v4117 = vlaneseq
        %v4118 = vshrl.u32 %v4117, 7
        %v4119 = vsub.s32 0, %v4118
        %v4120 = vrot.slane %v4116, %v4119
        %v4121 = vadd.f32 %v4086, %v4120
        %v4122 = vtanh.pop %v4121
        %v4123 = vld [vmem:[%s15 + $0x11] sm:$0x1]
        %v4124 = vlaneseq
        %v4125 = vshrl.u32 %v4124, 7
        %v4126 = vsub.s32 0, %v4125
        %v4127 = vrot.slane %v4123, %v4126
        %v4128 = vadd.f32 %v4088, %v4127
        %v4129 = vxor.u32 %v4128, 2147483648
        %v4130 = vmul.f32 %v4129, 1.442695
        %v4131 = vpow.pop %v4130
        %v4132 = vadd.f32 %v4131, 1.0
        %v4133 = vrcp.pop %v4132
        %v4134 = vmul.f32 1.0, %v4133
        %v4135 = vmul.f32 %v4115, 0.0
        %v4136 = vmul.f32 %v4103, %v4122
        %v4137 = vadd.f32 %v4135, %v4136
        %v4138 = vtanh.pop %v4137
        %v4139 = vmul.f32 %v4134, %v4138
        %v4140 = vpack.c.bf16 %v4139, %v4139
        %v4142 = vsel %vm425, %v4140, 0
        %4144 = vmatprep.subr.bf16.mxu0 0
        %4145 = vmatpush1.bf16.msra.mxu0 %v4142
        %4146 = vmatprep.subr.bf16.mxu0 0
        %4147 = vmatpush1.bf16.msra.mxu0 0
        %4148 = vmatprep.subr.bf16.mxu0 0
        %4149 = vmatpush1.bf16.msra.mxu0 0
        %4150 = vmatprep.subr.bf16.mxu0 0
        %4151 = vmatpush1.bf16.msra.mxu0 0
        %4152 = vmatprep.subr.bf16.mxu0 0
        %4153 = vmatpush1.bf16.msra.mxu0 0
        %4154 = vmatprep.subr.bf16.mxu0 0
        %4155 = vmatpush1.bf16.msra.mxu0 0
        %4156 = vmatprep.subr.bf16.mxu0 0
        %4157 = vmatpush1.bf16.msra.mxu0 0
        %4158 = vmatprep.subr.bf16.mxu0 0
        %4159 = vmatpush1.bf16.msra.mxu0 0
        %4160 = vmatprep.subr.bf16.mxu0 0
        %4161 = vmatpush1.bf16.msra.mxu0 0
        %4162 = vmatprep.subr.bf16.mxu0 0
        %4163 = vmatpush1.bf16.msra.mxu0 0
        %4164 = vmatprep.subr.bf16.mxu0 0
        %4165 = vmatpush1.bf16.msra.mxu0 0
        %4166 = vmatprep.subr.bf16.mxu0 0
        %4167 = vmatpush1.bf16.msra.mxu0 0
        %4168 = vmatprep.subr.bf16.mxu0 0
        %4169 = vmatpush1.bf16.msra.mxu0 0
        %4170 = vmatprep.subr.bf16.mxu0 0
        %4171 = vmatpush1.bf16.msra.mxu0 0
        %4172 = vmatprep.subr.bf16.mxu0 0
        %4173 = vmatpush1.bf16.msra.mxu0 0
        %4174 = vmatprep.subr.bf16.mxu0 0
        %4175 = vmatpush1.bf16.msra.mxu0 0
        %4176 = vmatprep.mubr.bf16.mxu0 0
        %4177 = vmatmul.mubr.bf16.gmra.mrb[0].mxu0 %v423
        %v4178 = vpop.f32.mrb[0].mxu0
        %v4179 = vadd.f32 0.0, %v4178
        %v4180 = vpop.f32.mrb[0].mxu0
        %v4181 = vpop.f32.mrb[0].mxu0
        %v4182 = vpop.f32.mrb[0].mxu0
        %4183 = vdwg.mxu0
        %4184 = vmatprep.subr.bf16.mxu0 0
        %4185 = vmatpush1.bf16.msra.mxu0 %v4142
        %4186 = vmatprep.subr.bf16.mxu0 0
        %4187 = vmatpush1.bf16.msra.mxu0 0
        %4188 = vmatprep.subr.bf16.mxu0 0
        %4189 = vmatpush1.bf16.msra.mxu0 0
        %4190 = vmatprep.subr.bf16.mxu0 0
        %4191 = vmatpush1.bf16.msra.mxu0 0
        %4192 = vmatprep.subr.bf16.mxu0 0
        %4193 = vmatpush1.bf16.msra.mxu0 0
        %4194 = vmatprep.subr.bf16.mxu0 0
        %4195 = vmatpush1.bf16.msra.mxu0 0
        %4196 = vmatprep.subr.bf16.mxu0 0
        %4197 = vmatpush1.bf16.msra.mxu0 0
        %4198 = vmatprep.subr.bf16.mxu0 0
        %4199 = vmatpush1.bf16.msra.mxu0 0
        %4200 = vmatprep.subr.bf16.mxu0 0
        %4201 = vmatpush1.bf16.msra.mxu0 0
        %4202 = vmatprep.subr.bf16.mxu0 0
        %4203 = vmatpush1.bf16.msra.mxu0 0
        %4204 = vmatprep.subr.bf16.mxu0 0
        %4205 = vmatpush1.bf16.msra.mxu0 0
        %4206 = vmatprep.subr.bf16.mxu0 0
        %4207 = vmatpush1.bf16.msra.mxu0 0
        %4208 = vmatprep.subr.bf16.mxu0 0
        %4209 = vmatpush1.bf16.msra.mxu0 0
        %4210 = vmatprep.subr.bf16.mxu0 0
        %4211 = vmatpush1.bf16.msra.mxu0 0
        %4212 = vmatprep.subr.bf16.mxu0 0
        %4213 = vmatpush1.bf16.msra.mxu0 0
        %4214 = vmatprep.subr.bf16.mxu0 0
        %4215 = vmatpush1.bf16.msra.mxu0 0
        %4216 = vmatprep.mubr.bf16.mxu0 0
        %4217 = vmatmul.mubr.bf16.gmra.mrb[0].mxu0 %v471
        %v4218 = vpop.f32.mrb[0].mxu0
        %v4219 = vadd.f32 0.0, %v4218
        %v4220 = vpop.f32.mrb[0].mxu0
        %v4221 = vpop.f32.mrb[0].mxu0
        %v4222 = vpop.f32.mrb[0].mxu0
        %4223 = vdwg.mxu0
        %v4224 = vld [vmem:[#allocation18 + $0x300] sm:$0xf]
        %v4225 = vld [vmem:[#allocation18 + $0x304] sm:$0xf]
        %v4226 = vld [vmem:[#allocation18 + $0x308] sm:$0xf]
        %v4227 = vld [vmem:[#allocation18 + $0x30c] sm:$0xf]
        %v4228 = vld [vmem:[#allocation18 + $0x310] sm:$0xf]
        %v4229 = vld [vmem:[#allocation18 + $0x314] sm:$0xf]
        %v4230 = vld [vmem:[#allocation18 + $0x318] sm:$0xf]
        %v4231 = vld [vmem:[#allocation18 + $0x31c] sm:$0xf]
        %v4232 = vld [vmem:[#allocation18 + $0x320] sm:$0xf]
        %v4233 = vld [vmem:[#allocation18 + $0x324] sm:$0xf]
        %v4234 = vld [vmem:[#allocation18 + $0x328] sm:$0xf]
        %v4235 = vld [vmem:[#allocation18 + $0x32c] sm:$0xf]
        %v4236 = vld [vmem:[#allocation18 + $0x330] sm:$0xf]
        %v4237 = vld [vmem:[#allocation18 + $0x334] sm:$0xf]
        %v4238 = vld [vmem:[#allocation18 + $0x338] sm:$0xf]
        %v4239 = vld [vmem:[#allocation18 + $0x33c] sm:$0xf]
        %v4240 = vpack.c.bf16 %v4179, %v4179
        %v4241 = vld [vmem:[#allocation18 + $0x340] sm:$0xf]
        %v4242 = vld [vmem:[#allocation18 + $0x344] sm:$0xf]
        %v4243 = vld [vmem:[#allocation18 + $0x348] sm:$0xf]
        %v4244 = vld [vmem:[#allocation18 + $0x34c] sm:$0xf]
        %v4245 = vld [vmem:[#allocation18 + $0x350] sm:$0xf]
        %v4246 = vld [vmem:[#allocation18 + $0x354] sm:$0xf]
        %v4247 = vld [vmem:[#allocation18 + $0x358] sm:$0xf]
        %v4248 = vld [vmem:[#allocation18 + $0x35c] sm:$0xf]
        %v4249 = vld [vmem:[#allocation18 + $0x360] sm:$0xf]
        %v4250 = vld [vmem:[#allocation18 + $0x364] sm:$0xf]
        %v4251 = vld [vmem:[#allocation18 + $0x368] sm:$0xf]
        %v4252 = vld [vmem:[#allocation18 + $0x36c] sm:$0xf]
        %v4253 = vld [vmem:[#allocation18 + $0x370] sm:$0xf]
        %v4254 = vld [vmem:[#allocation18 + $0x374] sm:$0xf]
        %v4255 = vld [vmem:[#allocation18 + $0x378] sm:$0xf]
        %v4256 = vld [vmem:[#allocation18 + $0x37c] sm:$0xf]
        %v4257 = vpack.c.bf16 %v4219, %v4219
        %v4274 = vunpack.c.l.b16 %v4241
        %v4275 = vunpack.c.l.b16 %v4242
        %v4276 = vunpack.c.l.b16 %v4243
        %v4277 = vunpack.c.l.b16 %v4244
        %v4278 = vunpack.c.l.b16 %v4245
        %v4279 = vunpack.c.l.b16 %v4246
        %v4280 = vunpack.c.l.b16 %v4247
        %v4281 = vunpack.c.l.b16 %v4248
        %v4282 = vunpack.c.l.b16 %v4249
        %v4283 = vunpack.c.l.b16 %v4250
        %v4284 = vunpack.c.l.b16 %v4251
        %v4285 = vunpack.c.l.b16 %v4252
        %v4286 = vunpack.c.l.b16 %v4253
        %v4287 = vunpack.c.l.b16 %v4254
        %v4288 = vunpack.c.l.b16 %v4255
        %v4289 = vunpack.c.l.b16 %v4256
        %v4290 = vpack.c.b16 %v4275, %v4274
        %v4291 = vpack.c.b16 %v4277, %v4276
        %v4292 = vpack.c.b16 %v4279, %v4278
        %v4293 = vpack.c.b16 %v4281, %v4280
        %v4294 = vpack.c.b16 %v4283, %v4282
        %v4295 = vpack.c.b16 %v4285, %v4284
        %v4296 = vpack.c.b16 %v4287, %v4286
        %v4297 = vpack.c.b16 %v4289, %v4288
        %4306 = vmatprep.subr.bf16.mxu0 0
        %4307 = vmatpush1.bf16.msra.mxu0 %v4290
        %4308 = vmatprep.subr.bf16.mxu0 0
        %4309 = vmatpush1.bf16.msra.mxu0 %v4291
        %4310 = vmatprep.subr.bf16.mxu0 0
        %4311 = vmatpush1.bf16.msra.mxu0 %v4292
        %4312 = vmatprep.subr.bf16.mxu0 0
        %4313 = vmatpush1.bf16.msra.mxu0 %v4293
        %4314 = vmatprep.subr.bf16.mxu0 0
        %4315 = vmatpush1.bf16.msra.mxu0 %v4294
        %4316 = vmatprep.subr.bf16.mxu0 0
        %4317 = vmatpush1.bf16.msra.mxu0 %v4295
        %4318 = vmatprep.subr.bf16.mxu0 0
        %4319 = vmatpush1.bf16.msra.mxu0 %v4296
        %4320 = vmatprep.subr.bf16.mxu0 0
        %4321 = vmatpush1.bf16.msra.mxu0 %v4297
        %4322 = vmatprep.subr.bf16.mxu0 0
        %4323 = vmatpush1.bf16.msra.mxu0 0
        %4324 = vmatprep.subr.bf16.mxu0 0
        %4325 = vmatpush1.bf16.msra.mxu0 0
        %4326 = vmatprep.subr.bf16.mxu0 0
        %4327 = vmatpush1.bf16.msra.mxu0 0
        %4328 = vmatprep.subr.bf16.mxu0 0
        %4329 = vmatpush1.bf16.msra.mxu0 0
        %4330 = vmatprep.subr.bf16.mxu0 0
        %4331 = vmatpush1.bf16.msra.mxu0 0
        %4332 = vmatprep.subr.bf16.mxu0 0
        %4333 = vmatpush1.bf16.msra.mxu0 0
        %4334 = vmatprep.subr.bf16.mxu0 0
        %4335 = vmatpush1.bf16.msra.mxu0 0
        %4336 = vmatprep.subr.bf16.mxu0 0
        %4337 = vmatpush1.bf16.msra.mxu0 0
        %4338 = vmatprep.mubr.bf16.mxu0 0
        %4339 = vmatmul.mubr.bf16.gmra.mrb[0].mxu0 %v4257
        %v4340 = vpop.f32.mrb[0].mxu0
        %v4341 = vadd.f32 0.0, %v4340
        %v4342 = vpop.f32.mrb[0].mxu0
        %v4343 = vpop.f32.mrb[0].mxu0
        %v4344 = vpop.f32.mrb[0].mxu0
        %4345 = vdwg.mxu0
        %v4362 = vunpack.c.l.b16 %v4224
        %v4363 = vunpack.c.l.b16 %v4225
        %v4364 = vunpack.c.l.b16 %v4226
        %v4365 = vunpack.c.l.b16 %v4227
        %v4366 = vunpack.c.l.b16 %v4228
        %v4367 = vunpack.c.l.b16 %v4229
        %v4368 = vunpack.c.l.b16 %v4230
        %v4369 = vunpack.c.l.b16 %v4231
        %v4370 = vunpack.c.l.b16 %v4232
        %v4371 = vunpack.c.l.b16 %v4233
        %v4372 = vunpack.c.l.b16 %v4234
        %v4373 = vunpack.c.l.b16 %v4235
        %v4374 = vunpack.c.l.b16 %v4236
        %v4375 = vunpack.c.l.b16 %v4237
        %v4376 = vunpack.c.l.b16 %v4238
        %v4377 = vunpack.c.l.b16 %v4239
        %v4378 = vpack.c.b16 %v4363, %v4362
        %v4379 = vpack.c.b16 %v4365, %v4364
        %v4380 = vpack.c.b16 %v4367, %v4366
        %v4381 = vpack.c.b16 %v4369, %v4368
        %v4382 = vpack.c.b16 %v4371, %v4370
        %v4383 = vpack.c.b16 %v4373, %v4372
        %v4384 = vpack.c.b16 %v4375, %v4374
        %v4385 = vpack.c.b16 %v4377, %v4376
        %4394 = vmatprep.subr.bf16.mxu0 0
        %4395 = vmatpush1.bf16.msra.mxu0 %v4378
        %4396 = vmatprep.subr.bf16.mxu0 0
        %4397 = vmatpush1.bf16.msra.mxu0 %v4379
        %4398 = vmatprep.subr.bf16.mxu0 0
        %4399 = vmatpush1.bf16.msra.mxu0 %v4380
        %4400 = vmatprep.subr.bf16.mxu0 0
        %4401 = vmatpush1.bf16.msra.mxu0 %v4381
        %4402 = vmatprep.subr.bf16.mxu0 0
        %4403 = vmatpush1.bf16.msra.mxu0 %v4382
        %4404 = vmatprep.subr.bf16.mxu0 0
        %4405 = vmatpush1.bf16.msra.mxu0 %v4383
        %4406 = vmatprep.subr.bf16.mxu0 0
        %4407 = vmatpush1.bf16.msra.mxu0 %v4384
        %4408 = vmatprep.subr.bf16.mxu0 0
        %4409 = vmatpush1.bf16.msra.mxu0 %v4385
        %4410 = vmatprep.subr.bf16.mxu0 0
        %4411 = vmatpush1.bf16.msra.mxu0 0
        %4412 = vmatprep.subr.bf16.mxu0 0
        %4413 = vmatpush1.bf16.msra.mxu0 0
        %4414 = vmatprep.subr.bf16.mxu0 0
        %4415 = vmatpush1.bf16.msra.mxu0 0
        %4416 = vmatprep.subr.bf16.mxu0 0
        %4417 = vmatpush1.bf16.msra.mxu0 0
        %4418 = vmatprep.subr.bf16.mxu0 0
        %4419 = vmatpush1.bf16.msra.mxu0 0
        %4420 = vmatprep.subr.bf16.mxu0 0
        %4421 = vmatpush1.bf16.msra.mxu0 0
        %4422 = vmatprep.subr.bf16.mxu0 0
        %4423 = vmatpush1.bf16.msra.mxu0 0
        %4424 = vmatprep.subr.bf16.mxu0 0
        %4425 = vmatpush1.bf16.msra.mxu0 0
        %4426 = vmatprep.mubr.bf16.mxu0 0
        %4427 = vmatmul.mubr.bf16.gmra.mrb[0].mxu0 %v4240
        %v4428 = vpop.f32.mrb[0].mxu0
        %v4429 = vadd.f32 %v4341, %v4428
        %v4430 = vpop.f32.mrb[0].mxu0
        %v4431 = vpop.f32.mrb[0].mxu0
        %v4432 = vpop.f32.mrb[0].mxu0
        %4433 = vdwg.mxu0
        %v4434 = vld [vmem:[#allocation18 + $0x380] sm:$0xf]
        %v4435 = vld [vmem:[#allocation18 + $0x384] sm:$0xf]
        %v4436 = vld [vmem:[#allocation18 + $0x388] sm:$0xf]
        %v4437 = vld [vmem:[#allocation18 + $0x38c] sm:$0xf]
        %v4438 = vld [vmem:[#allocation18 + $0x390] sm:$0xf]
        %v4439 = vld [vmem:[#allocation18 + $0x394] sm:$0xf]
        %v4440 = vld [vmem:[#allocation18 + $0x398] sm:$0xf]
        %v4441 = vld [vmem:[#allocation18 + $0x39c] sm:$0xf]
        %v4442 = vld [vmem:[#allocation18 + $0x3a0] sm:$0xf]
        %v4443 = vld [vmem:[#allocation18 + $0x3a4] sm:$0xf]
        %v4444 = vld [vmem:[#allocation18 + $0x3a8] sm:$0xf]
        %v4445 = vld [vmem:[#allocation18 + $0x3ac] sm:$0xf]
        %v4446 = vld [vmem:[#allocation18 + $0x3b0] sm:$0xf]
        %v4447 = vld [vmem:[#allocation18 + $0x3b4] sm:$0xf]
        %v4448 = vld [vmem:[#allocation18 + $0x3b8] sm:$0xf]
        %v4449 = vld [vmem:[#allocation18 + $0x3bc] sm:$0xf]
        %v4466 = vunpack.c.l.b16 %v4434
        %v4467 = vunpack.c.l.b16 %v4435
        %v4468 = vunpack.c.l.b16 %v4436
        %v4469 = vunpack.c.l.b16 %v4437
        %v4470 = vunpack.c.l.b16 %v4438
        %v4471 = vunpack.c.l.b16 %v4439
        %v4472 = vunpack.c.l.b16 %v4440
        %v4473 = vunpack.c.l.b16 %v4441
        %v4474 = vunpack.c.l.b16 %v4442
        %v4475 = vunpack.c.l.b16 %v4443
        %v4476 = vunpack.c.l.b16 %v4444
        %v4477 = vunpack.c.l.b16 %v4445
        %v4478 = vunpack.c.l.b16 %v4446
        %v4479 = vunpack.c.l.b16 %v4447
        %v4480 = vunpack.c.l.b16 %v4448
        %v4481 = vunpack.c.l.b16 %v4449
        %v4482 = vpack.c.b16 %v4467, %v4466
        %v4483 = vpack.c.b16 %v4469, %v4468
        %v4484 = vpack.c.b16 %v4471, %v4470
        %v4485 = vpack.c.b16 %v4473, %v4472
        %v4486 = vpack.c.b16 %v4475, %v4474
        %v4487 = vpack.c.b16 %v4477, %v4476
        %v4488 = vpack.c.b16 %v4479, %v4478
        %v4489 = vpack.c.b16 %v4481, %v4480
        %4498 = vmatprep.subr.bf16.mxu0 0
        %4499 = vmatpush1.bf16.msra.mxu0 %v4482
        %4500 = vmatprep.subr.bf16.mxu0 0
        %4501 = vmatpush1.bf16.msra.mxu0 %v4483
        %4502 = vmatprep.subr.bf16.mxu0 0
        %4503 = vmatpush1.bf16.msra.mxu0 %v4484
        %4504 = vmatprep.subr.bf16.mxu0 0
        %4505 = vmatpush1.bf16.msra.mxu0 %v4485
        %4506 = vmatprep.subr.bf16.mxu0 0
        %4507 = vmatpush1.bf16.msra.mxu0 %v4486
        %4508 = vmatprep.subr.bf16.mxu0 0
        %4509 = vmatpush1.bf16.msra.mxu0 %v4487
        %4510 = vmatprep.subr.bf16.mxu0 0
        %4511 = vmatpush1.bf16.msra.mxu0 %v4488
        %4512 = vmatprep.subr.bf16.mxu0 0
        %4513 = vmatpush1.bf16.msra.mxu0 %v4489
        %4514 = vmatprep.subr.bf16.mxu0 0
        %4515 = vmatpush1.bf16.msra.mxu0 0
        %4516 = vmatprep.subr.bf16.mxu0 0
        %4517 = vmatpush1.bf16.msra.mxu0 0
        %4518 = vmatprep.subr.bf16.mxu0 0
        %4519 = vmatpush1.bf16.msra.mxu0 0
        %4520 = vmatprep.subr.bf16.mxu0 0
        %4521 = vmatpush1.bf16.msra.mxu0 0
        %4522 = vmatprep.subr.bf16.mxu0 0
        %4523 = vmatpush1.bf16.msra.mxu0 0
        %4524 = vmatprep.subr.bf16.mxu0 0
        %4525 = vmatpush1.bf16.msra.mxu0 0
        %4526 = vmatprep.subr.bf16.mxu0 0
        %4527 = vmatpush1.bf16.msra.mxu0 0
        %4528 = vmatprep.subr.bf16.mxu0 0
        %4529 = vmatpush1.bf16.msra.mxu0 0
        %4530 = vmatprep.mubr.bf16.mxu0 0
        %4531 = vmatmul.mubr.bf16.gmra.mrb[0].mxu0 %v739
        %v4532 = vpop.f32.mrb[0].mxu0
        %v4533 = vadd.f32 0.0, %v4532
        %v4534 = vpop.f32.mrb[0].mxu0
        %v4535 = vpop.f32.mrb[0].mxu0
        %v4536 = vpop.f32.mrb[0].mxu0
        %4537 = vdwg.mxu0
        %v4538 = vadd.f32 %v4429, %v4533
        %v4539 = vld [vmem:[%s15 + $0x12] sm:$0x1]
        %v4540 = vlaneseq
        %v4541 = vshrl.u32 %v4540, 7
        %v4542 = vsub.s32 0, %v4541
        %v4543 = vrot.slane %v4539, %v4542
        %v4544 = vadd.f32 %v4538, %v4543
        %v4545 = vmax.f32 %v4544, 0.0
        %v4546 = vld [vmem:[#allocation18 + $0x3c0] sm:$0xf]
        %v4547 = vld [vmem:[#allocation18 + $0x3c4] sm:$0xf]
        %v4548 = vld [vmem:[#allocation18 + $0x3c8] sm:$0xf]
        %v4549 = vld [vmem:[#allocation18 + $0x3cc] sm:$0xf]
        %v4550 = vld [vmem:[#allocation18 + $0x3d0] sm:$0xf]
        %v4551 = vld [vmem:[#allocation18 + $0x3d4] sm:$0xf]
        %v4552 = vld [vmem:[#allocation18 + $0x3d8] sm:$0xf]
        %v4553 = vld [vmem:[#allocation18 + $0x3dc] sm:$0xf]
        %v4554 = vld [vmem:[#allocation18 + $0x3e0] sm:$0xf]
        %v4555 = vld [vmem:[#allocation18 + $0x3e4] sm:$0xf]
        %v4556 = vld [vmem:[#allocation18 + $0x3e8] sm:$0xf]
        %v4557 = vld [vmem:[#allocation18 + $0x3ec] sm:$0xf]
        %v4558 = vld [vmem:[#allocation18 + $0x3f0] sm:$0xf]
        %v4559 = vld [vmem:[#allocation18 + $0x3f4] sm:$0xf]
        %v4560 = vld [vmem:[#allocation18 + $0x3f8] sm:$0xf]
        %v4561 = vld [vmem:[#allocation18 + $0x3fc] sm:$0xf]
        %v4562 = vpack.c.bf16 %v4545, %v4545
        %v4563 = vld [vmem:[%s15 + $0x13] sm:$0x1]
        %v4564 = vlaneseq
        %v4565 = vshrl.u32 %v4564, 7
        %v4566 = vsub.s32 0, %v4565
        %v4567 = vrot.slane %v4563, %v4566
        %v4584 = vunpack.c.l.b16 %v4546
        %v4585 = vunpack.c.l.b16 %v4547
        %v4586 = vunpack.c.l.b16 %v4548
        %v4587 = vunpack.c.l.b16 %v4549
        %v4588 = vunpack.c.l.b16 %v4550
        %v4589 = vunpack.c.l.b16 %v4551
        %v4590 = vunpack.c.l.b16 %v4552
        %v4591 = vunpack.c.l.b16 %v4553
        %v4592 = vunpack.c.l.b16 %v4554
        %v4593 = vunpack.c.l.b16 %v4555
        %v4594 = vunpack.c.l.b16 %v4556
        %v4595 = vunpack.c.l.b16 %v4557
        %v4596 = vunpack.c.l.b16 %v4558
        %v4597 = vunpack.c.l.b16 %v4559
        %v4598 = vunpack.c.l.b16 %v4560
        %v4599 = vunpack.c.l.b16 %v4561
        %v4600 = vpack.c.b16 %v4585, %v4584
        %v4601 = vpack.c.b16 %v4587, %v4586
        %v4602 = vpack.c.b16 %v4589, %v4588
        %v4603 = vpack.c.b16 %v4591, %v4590
        %v4604 = vpack.c.b16 %v4593, %v4592
        %v4605 = vpack.c.b16 %v4595, %v4594
        %v4606 = vpack.c.b16 %v4597, %v4596
        %v4607 = vpack.c.b16 %v4599, %v4598
        %4616 = vmatprep.subr.bf16.mxu0 0
        %4617 = vmatpush1.bf16.msra.mxu0 %v4600
        %4618 = vmatprep.subr.bf16.mxu0 0
        %4619 = vmatpush1.bf16.msra.mxu0 %v4601
        %4620 = vmatprep.subr.bf16.mxu0 0
        %4621 = vmatpush1.bf16.msra.mxu0 %v4602
        %4622 = vmatprep.subr.bf16.mxu0 0
        %4623 = vmatpush1.bf16.msra.mxu0 %v4603
        %4624 = vmatprep.subr.bf16.mxu0 0
        %4625 = vmatpush1.bf16.msra.mxu0 %v4604
        %4626 = vmatprep.subr.bf16.mxu0 0
        %4627 = vmatpush1.bf16.msra.mxu0 %v4605
        %4628 = vmatprep.subr.bf16.mxu0 0
        %4629 = vmatpush1.bf16.msra.mxu0 %v4606
        %4630 = vmatprep.subr.bf16.mxu0 0
        %4631 = vmatpush1.bf16.msra.mxu0 %v4607
        %4632 = vmatprep.subr.bf16.mxu0 0
        %4633 = vmatpush1.bf16.msra.mxu0 0
        %4634 = vmatprep.subr.bf16.mxu0 0
        %4635 = vmatpush1.bf16.msra.mxu0 0
        %4636 = vmatprep.subr.bf16.mxu0 0
        %4637 = vmatpush1.bf16.msra.mxu0 0
        %4638 = vmatprep.subr.bf16.mxu0 0
        %4639 = vmatpush1.bf16.msra.mxu0 0
        %4640 = vmatprep.subr.bf16.mxu0 0
        %4641 = vmatpush1.bf16.msra.mxu0 0
        %4642 = vmatprep.subr.bf16.mxu0 0
        %4643 = vmatpush1.bf16.msra.mxu0 0
        %4644 = vmatprep.subr.bf16.mxu0 0
        %4645 = vmatpush1.bf16.msra.mxu0 0
        %4646 = vmatprep.subr.bf16.mxu0 0
        %4647 = vmatpush1.bf16.msra.mxu0 0
        %4648 = vmatprep.mubr.bf16.mxu0 0
        %4649 = vmatmul.mubr.bf16.gmra.mrb[0].mxu0 %v4562
        %v4650 = vpop.f32.mrb[0].mxu0
        %v4651 = vadd.f32 %v4567, %v4650
        %v4652 = vpop.f32.mrb[0].mxu0
        %v4653 = vpop.f32.mrb[0].mxu0
        %v4654 = vpop.f32.mrb[0].mxu0
        %4655 = vdwg.mxu0
        %v4656 = vmul.f32 %v4651, %v407
        %v4657 = vpack.c.bf16 %v4656, %v4656
        %v4659 = vsel %vm425, %v4657, 0
        %4661 = vmatprep.subr.bf16.mxu0 0
        %4662 = vmatpush1.bf16.msra.mxu0 %v4659
        %4663 = vmatprep.subr.bf16.mxu0 0
        %4664 = vmatpush1.bf16.msra.mxu0 0
        %4665 = vmatprep.subr.bf16.mxu0 0
        %4666 = vmatpush1.bf16.msra.mxu0 0
        %4667 = vmatprep.subr.bf16.mxu0 0
        %4668 = vmatpush1.bf16.msra.mxu0 0
        %4669 = vmatprep.subr.bf16.mxu0 0
        %4670 = vmatpush1.bf16.msra.mxu0 0
        %4671 = vmatprep.subr.bf16.mxu0 0
        %4672 = vmatpush1.bf16.msra.mxu0 0
        %4673 = vmatprep.subr.bf16.mxu0 0
        %4674 = vmatpush1.bf16.msra.mxu0 0
        %4675 = vmatprep.subr.bf16.mxu0 0
        %4676 = vmatpush1.bf16.msra.mxu0 0
        %4677 = vmatprep.subr.bf16.mxu0 0
        %4678 = vmatpush1.bf16.msra.mxu0 0
        %4679 = vmatprep.subr.bf16.mxu0 0
        %4680 = vmatpush1.bf16.msra.mxu0 0
        %4681 = vmatprep.subr.bf16.mxu0 0
        %4682 = vmatpush1.bf16.msra.mxu0 0
        %4683 = vmatprep.subr.bf16.mxu0 0
        %4684 = vmatpush1.bf16.msra.mxu0 0
        %4685 = vmatprep.subr.bf16.mxu0 0
        %4686 = vmatpush1.bf16.msra.mxu0 0
        %4687 = vmatprep.subr.bf16.mxu0 0
        %4688 = vmatpush1.bf16.msra.mxu0 0
        %4689 = vmatprep.subr.bf16.mxu0 0
        %4690 = vmatpush1.bf16.msra.mxu0 0
        %4691 = vmatprep.subr.bf16.mxu0 0
        %4692 = vmatpush1.bf16.msra.mxu0 0
        %4693 = vmatprep.mubr.bf16.mxu0 0
        %4694 = vmatmul.mubr.bf16.gmra.mrb[0].mxu0 %v950
        %v4695 = vpop.f32.mrb[0].mxu0
        %v4696 = vadd.f32 0.0, %v4695
        %v4697 = vpop.f32.mrb[0].mxu0
        %v4698 = vpop.f32.mrb[0].mxu0
        %v4699 = vpop.f32.mrb[0].mxu0
        %4700 = vdwg.mxu0
        %v4701 = vld [vmem:[#allocation20 + $0x600] sm:$0xff]
        %v4702 = vld [vmem:[#allocation20 + $0x608] sm:$0xff]
        %v4703 = vld [vmem:[#allocation20 + $0x610] sm:$0xff]
        %v4704 = vld [vmem:[#allocation20 + $0x618] sm:$0xff]
        %v4705 = vld [vmem:[#allocation20 + $0x620] sm:$0xff]
        %v4706 = vld [vmem:[#allocation20 + $0x628] sm:$0xff]
        %v4707 = vld [vmem:[#allocation20 + $0x630] sm:$0xff]
        %v4708 = vld [vmem:[#allocation20 + $0x638] sm:$0xff]
        %v4709 = vld [vmem:[#allocation20 + $0x640] sm:$0xff]
        %v4710 = vld [vmem:[#allocation20 + $0x648] sm:$0xff]
        %v4711 = vld [vmem:[#allocation20 + $0x650] sm:$0xff]
        %v4712 = vld [vmem:[#allocation20 + $0x658] sm:$0xff]
        %v4713 = vld [vmem:[#allocation20 + $0x660] sm:$0xff]
        %v4714 = vld [vmem:[#allocation20 + $0x668] sm:$0xff]
        %v4715 = vld [vmem:[#allocation20 + $0x670] sm:$0xff]
        %v4716 = vld [vmem:[#allocation20 + $0x678] sm:$0xff]
        %v4717 = vld [vmem:[#allocation20 + $0x680] sm:$0xff]
        %v4718 = vld [vmem:[#allocation20 + $0x688] sm:$0xff]
        %v4719 = vld [vmem:[#allocation20 + $0x690] sm:$0xff]
        %v4720 = vld [vmem:[#allocation20 + $0x698] sm:$0xff]
        %v4721 = vld [vmem:[#allocation20 + $0x6a0] sm:$0xff]
        %v4722 = vld [vmem:[#allocation20 + $0x6a8] sm:$0xff]
        %v4723 = vld [vmem:[#allocation20 + $0x6b0] sm:$0xff]
        %v4724 = vld [vmem:[#allocation20 + $0x6b8] sm:$0xff]
        %v4725 = vld [vmem:[#allocation20 + $0x6c0] sm:$0xff]
        %v4726 = vld [vmem:[#allocation20 + $0x6c8] sm:$0xff]
        %v4727 = vld [vmem:[#allocation20 + $0x6d0] sm:$0xff]
        %v4728 = vld [vmem:[#allocation20 + $0x6d8] sm:$0xff]
        %v4729 = vld [vmem:[#allocation20 + $0x6e0] sm:$0xff]
        %v4730 = vld [vmem:[#allocation20 + $0x6e8] sm:$0xff]
        %v4731 = vld [vmem:[#allocation20 + $0x6f0] sm:$0xff]
        %v4732 = vld [vmem:[#allocation20 + $0x6f8] sm:$0xff]
        %v4733 = vld [vmem:[#allocation20 + $0x700] sm:$0xff]
        %v4734 = vld [vmem:[#allocation20 + $0x708] sm:$0xff]
        %v4735 = vld [vmem:[#allocation20 + $0x710] sm:$0xff]
        %v4736 = vld [vmem:[#allocation20 + $0x718] sm:$0xff]
        %v4737 = vld [vmem:[#allocation20 + $0x720] sm:$0xff]
        %v4738 = vld [vmem:[#allocation20 + $0x728] sm:$0xff]
        %v4739 = vld [vmem:[#allocation20 + $0x730] sm:$0xff]
        %v4740 = vld [vmem:[#allocation20 + $0x738] sm:$0xff]
        %v4741 = vld [vmem:[#allocation20 + $0x740] sm:$0xff]
        %v4742 = vld [vmem:[#allocation20 + $0x748] sm:$0xff]
        %v4743 = vld [vmem:[#allocation20 + $0x750] sm:$0xff]
        %v4744 = vld [vmem:[#allocation20 + $0x758] sm:$0xff]
        %v4745 = vld [vmem:[#allocation20 + $0x760] sm:$0xff]
        %v4746 = vld [vmem:[#allocation20 + $0x768] sm:$0xff]
        %v4747 = vld [vmem:[#allocation20 + $0x770] sm:$0xff]
        %v4748 = vld [vmem:[#allocation20 + $0x778] sm:$0xff]
        %v4749 = vld [vmem:[#allocation20 + $0x780] sm:$0xff]
        %v4750 = vld [vmem:[#allocation20 + $0x788] sm:$0xff]
        %v4751 = vld [vmem:[#allocation20 + $0x790] sm:$0xff]
        %v4752 = vld [vmem:[#allocation20 + $0x798] sm:$0xff]
        %v4753 = vld [vmem:[#allocation20 + $0x7a0] sm:$0xff]
        %v4754 = vld [vmem:[#allocation20 + $0x7a8] sm:$0xff]
        %v4755 = vld [vmem:[#allocation20 + $0x7b0] sm:$0xff]
        %v4756 = vld [vmem:[#allocation20 + $0x7b8] sm:$0xff]
        %v4757 = vld [vmem:[#allocation20 + $0x7c0] sm:$0xff]
        %v4758 = vld [vmem:[#allocation20 + $0x7c8] sm:$0xff]
        %v4759 = vld [vmem:[#allocation20 + $0x7d0] sm:$0xff]
        %v4760 = vld [vmem:[#allocation20 + $0x7d8] sm:$0xff]
        %v4761 = vld [vmem:[#allocation20 + $0x7e0] sm:$0xff]
        %v4762 = vld [vmem:[#allocation20 + $0x7e8] sm:$0xff]
        %v4763 = vld [vmem:[#allocation20 + $0x7f0] sm:$0xff]
        %v4764 = vld [vmem:[#allocation20 + $0x7f8] sm:$0xff]
        %v4765 = vpack.c.bf16 %v4696, %v4696
        %v4798 = vunpack.c.l.b16 %v4733
        %v4799 = vunpack.c.h.b16 %v4733
        %v4800 = vunpack.c.l.b16 %v4734
        %v4801 = vunpack.c.h.b16 %v4734
        %v4802 = vunpack.c.l.b16 %v4735
        %v4803 = vunpack.c.h.b16 %v4735
        %v4804 = vunpack.c.l.b16 %v4736
        %v4805 = vunpack.c.h.b16 %v4736
        %v4806 = vunpack.c.l.b16 %v4737
        %v4807 = vunpack.c.h.b16 %v4737
        %v4808 = vunpack.c.l.b16 %v4738
        %v4809 = vunpack.c.h.b16 %v4738
        %v4810 = vunpack.c.l.b16 %v4739
        %v4811 = vunpack.c.h.b16 %v4739
        %v4812 = vunpack.c.l.b16 %v4740
        %v4813 = vunpack.c.h.b16 %v4740
        %v4814 = vunpack.c.l.b16 %v4741
        %v4815 = vunpack.c.h.b16 %v4741
        %v4816 = vunpack.c.l.b16 %v4742
        %v4817 = vunpack.c.h.b16 %v4742
        %v4818 = vunpack.c.l.b16 %v4743
        %v4819 = vunpack.c.h.b16 %v4743
        %v4820 = vunpack.c.l.b16 %v4744
        %v4821 = vunpack.c.h.b16 %v4744
        %v4822 = vunpack.c.l.b16 %v4745
        %v4823 = vunpack.c.h.b16 %v4745
        %v4824 = vunpack.c.l.b16 %v4746
        %v4825 = vunpack.c.h.b16 %v4746
        %v4826 = vunpack.c.l.b16 %v4747
        %v4827 = vunpack.c.h.b16 %v4747
        %v4828 = vunpack.c.l.b16 %v4748
        %v4829 = vunpack.c.h.b16 %v4748
        %v4830 = vunpack.c.l.b16 %v4749
        %v4831 = vunpack.c.h.b16 %v4749
        %v4832 = vunpack.c.l.b16 %v4750
        %v4833 = vunpack.c.h.b16 %v4750
        %v4834 = vunpack.c.l.b16 %v4751
        %v4835 = vunpack.c.h.b16 %v4751
        %v4836 = vunpack.c.l.b16 %v4752
        %v4837 = vunpack.c.h.b16 %v4752
        %v4838 = vunpack.c.l.b16 %v4753
        %v4839 = vunpack.c.h.b16 %v4753
        %v4840 = vunpack.c.l.b16 %v4754
        %v4841 = vunpack.c.h.b16 %v4754
        %v4842 = vunpack.c.l.b16 %v4755
        %v4843 = vunpack.c.h.b16 %v4755
        %v4844 = vunpack.c.l.b16 %v4756
        %v4845 = vunpack.c.h.b16 %v4756
        %v4846 = vunpack.c.l.b16 %v4757
        %v4847 = vunpack.c.h.b16 %v4757
        %v4848 = vunpack.c.l.b16 %v4758
        %v4849 = vunpack.c.h.b16 %v4758
        %v4850 = vunpack.c.l.b16 %v4759
        %v4851 = vunpack.c.h.b16 %v4759
        %v4852 = vunpack.c.l.b16 %v4760
        %v4853 = vunpack.c.h.b16 %v4760
        %v4854 = vunpack.c.l.b16 %v4761
        %v4855 = vunpack.c.h.b16 %v4761
        %v4856 = vunpack.c.l.b16 %v4762
        %v4857 = vunpack.c.h.b16 %v4762
        %v4858 = vunpack.c.l.b16 %v4763
        %v4859 = vunpack.c.h.b16 %v4763
        %v4860 = vunpack.c.l.b16 %v4764
        %v4861 = vunpack.c.h.b16 %v4764
        %v4862 = vpack.c.b16 %v4802, %v4798
        %v4863 = vpack.c.b16 %v4803, %v4799
        %v4864 = vpack.c.b16 %v4804, %v4800
        %v4865 = vpack.c.b16 %v4805, %v4801
        %v4866 = vpack.c.b16 %v4810, %v4806
        %v4867 = vpack.c.b16 %v4811, %v4807
        %v4868 = vpack.c.b16 %v4812, %v4808
        %v4869 = vpack.c.b16 %v4813, %v4809
        %v4870 = vpack.c.b16 %v4818, %v4814
        %v4871 = vpack.c.b16 %v4819, %v4815
        %v4872 = vpack.c.b16 %v4820, %v4816
        %v4873 = vpack.c.b16 %v4821, %v4817
        %v4874 = vpack.c.b16 %v4826, %v4822
        %v4875 = vpack.c.b16 %v4827, %v4823
        %v4876 = vpack.c.b16 %v4828, %v4824
        %v4877 = vpack.c.b16 %v4829, %v4825
        %v4878 = vpack.c.b16 %v4834, %v4830
        %v4879 = vpack.c.b16 %v4835, %v4831
        %v4880 = vpack.c.b16 %v4836, %v4832
        %v4881 = vpack.c.b16 %v4837, %v4833
        %v4882 = vpack.c.b16 %v4842, %v4838
        %v4883 = vpack.c.b16 %v4843, %v4839
        %v4884 = vpack.c.b16 %v4844, %v4840
        %v4885 = vpack.c.b16 %v4845, %v4841
        %v4886 = vpack.c.b16 %v4850, %v4846
        %v4887 = vpack.c.b16 %v4851, %v4847
        %v4888 = vpack.c.b16 %v4852, %v4848
        %v4889 = vpack.c.b16 %v4853, %v4849
        %v4890 = vpack.c.b16 %v4858, %v4854
        %v4891 = vpack.c.b16 %v4859, %v4855
        %v4892 = vpack.c.b16 %v4860, %v4856
        %v4893 = vpack.c.b16 %v4861, %v4857
        %4926 = vmatprep.subr.bf16.mxu0 %v4863
        %4927 = vmatpush1.bf16.msra.mxu0 %v4862
        %4928 = vmatprep.subr.bf16.mxu0 %v4867
        %4929 = vmatpush1.bf16.msra.mxu0 %v4866
        %4930 = vmatprep.subr.bf16.mxu0 %v4871
        %4931 = vmatpush1.bf16.msra.mxu0 %v4870
        %4932 = vmatprep.subr.bf16.mxu0 %v4875
        %4933 = vmatpush1.bf16.msra.mxu0 %v4874
        %4934 = vmatprep.subr.bf16.mxu0 %v4879
        %4935 = vmatpush1.bf16.msra.mxu0 %v4878
        %4936 = vmatprep.subr.bf16.mxu0 %v4883
        %4937 = vmatpush1.bf16.msra.mxu0 %v4882
        %4938 = vmatprep.subr.bf16.mxu0 %v4887
        %4939 = vmatpush1.bf16.msra.mxu0 %v4886
        %4940 = vmatprep.subr.bf16.mxu0 %v4891
        %4941 = vmatpush1.bf16.msra.mxu0 %v4890
        %4942 = vmatprep.subr.bf16.mxu0 0
        %4943 = vmatpush1.bf16.msra.mxu0 0
        %4944 = vmatprep.subr.bf16.mxu0 0
        %4945 = vmatpush1.bf16.msra.mxu0 0
        %4946 = vmatprep.subr.bf16.mxu0 0
        %4947 = vmatpush1.bf16.msra.mxu0 0
        %4948 = vmatprep.subr.bf16.mxu0 0
        %4949 = vmatpush1.bf16.msra.mxu0 0
        %4950 = vmatprep.subr.bf16.mxu0 0
        %4951 = vmatpush1.bf16.msra.mxu0 0
        %4952 = vmatprep.subr.bf16.mxu0 0
        %4953 = vmatpush1.bf16.msra.mxu0 0
        %4954 = vmatprep.subr.bf16.mxu0 0
        %4955 = vmatpush1.bf16.msra.mxu0 0
        %4956 = vmatprep.subr.bf16.mxu0 0
        %4957 = vmatpush1.bf16.msra.mxu0 0
        %4958 = vmatprep.mubr.bf16.mxu0 0
        %4959 = vmatmul.mubr.bf16.gmra.mrb[0].mxu0 %v4765
        %v4960 = vpop.f32.mrb[0].mxu0
        %v4961 = vadd.f32 0.0, %v4960
        %v4962 = vpop.f32.mrb[0].mxu0
        %v4963 = vadd.f32 0.0, %v4962
        %v4964 = vpop.f32.mrb[0].mxu0
        %v4965 = vpop.f32.mrb[0].mxu0
        %4966 = vdwg.mxu0
        %4967 = vmatprep.subr.bf16.mxu0 %v4865
        %4968 = vmatpush1.bf16.msra.mxu0 %v4864
        %4969 = vmatprep.subr.bf16.mxu0 %v4869
        %4970 = vmatpush1.bf16.msra.mxu0 %v4868
        %4971 = vmatprep.subr.bf16.mxu0 %v4873
        %4972 = vmatpush1.bf16.msra.mxu0 %v4872
        %4973 = vmatprep.subr.bf16.mxu0 %v4877
        %4974 = vmatpush1.bf16.msra.mxu0 %v4876
        %4975 = vmatprep.subr.bf16.mxu0 %v4881
        %4976 = vmatpush1.bf16.msra.mxu0 %v4880
        %4977 = vmatprep.subr.bf16.mxu0 %v4885
        %4978 = vmatpush1.bf16.msra.mxu0 %v4884
        %4979 = vmatprep.subr.bf16.mxu0 %v4889
        %4980 = vmatpush1.bf16.msra.mxu0 %v4888
        %4981 = vmatprep.subr.bf16.mxu0 %v4893
        %4982 = vmatpush1.bf16.msra.mxu0 %v4892
        %4983 = vmatprep.subr.bf16.mxu0 0
        %4984 = vmatpush1.bf16.msra.mxu0 0
        %4985 = vmatprep.subr.bf16.mxu0 0
        %4986 = vmatpush1.bf16.msra.mxu0 0
        %4987 = vmatprep.subr.bf16.mxu0 0
        %4988 = vmatpush1.bf16.msra.mxu0 0
        %4989 = vmatprep.subr.bf16.mxu0 0
        %4990 = vmatpush1.bf16.msra.mxu0 0
        %4991 = vmatprep.subr.bf16.mxu0 0
        %4992 = vmatpush1.bf16.msra.mxu0 0
        %4993 = vmatprep.subr.bf16.mxu0 0
        %4994 = vmatpush1.bf16.msra.mxu0 0
        %4995 = vmatprep.subr.bf16.mxu0 0
        %4996 = vmatpush1.bf16.msra.mxu0 0
        %4997 = vmatprep.subr.bf16.mxu0 0
        %4998 = vmatpush1.bf16.msra.mxu0 0
        %4999 = vmatprep.mubr.bf16.mxu0 0
        %5000 = vmatmul.mubr.bf16.gmra.mrb[0].mxu0 %v4765
        %v5001 = vpop.f32.mrb[0].mxu0
        %v5002 = vadd.f32 0.0, %v5001
        %v5003 = vpop.f32.mrb[0].mxu0
        %v5004 = vadd.f32 0.0, %v5003
        %v5005 = vpop.f32.mrb[0].mxu0
        %v5006 = vpop.f32.mrb[0].mxu0
        %5007 = vdwg.mxu0
        %v5040 = vunpack.c.l.b16 %v4701
        %v5041 = vunpack.c.h.b16 %v4701
        %v5042 = vunpack.c.l.b16 %v4702
        %v5043 = vunpack.c.h.b16 %v4702
        %v5044 = vunpack.c.l.b16 %v4703
        %v5045 = vunpack.c.h.b16 %v4703
        %v5046 = vunpack.c.l.b16 %v4704
        %v5047 = vunpack.c.h.b16 %v4704
        %v5048 = vunpack.c.l.b16 %v4705
        %v5049 = vunpack.c.h.b16 %v4705
        %v5050 = vunpack.c.l.b16 %v4706
        %v5051 = vunpack.c.h.b16 %v4706
        %v5052 = vunpack.c.l.b16 %v4707
        %v5053 = vunpack.c.h.b16 %v4707
        %v5054 = vunpack.c.l.b16 %v4708
        %v5055 = vunpack.c.h.b16 %v4708
        %v5056 = vunpack.c.l.b16 %v4709
        %v5057 = vunpack.c.h.b16 %v4709
        %v5058 = vunpack.c.l.b16 %v4710
        %v5059 = vunpack.c.h.b16 %v4710
        %v5060 = vunpack.c.l.b16 %v4711
        %v5061 = vunpack.c.h.b16 %v4711
        %v5062 = vunpack.c.l.b16 %v4712
        %v5063 = vunpack.c.h.b16 %v4712
        %v5064 = vunpack.c.l.b16 %v4713
        %v5065 = vunpack.c.h.b16 %v4713
        %v5066 = vunpack.c.l.b16 %v4714
        %v5067 = vunpack.c.h.b16 %v4714
        %v5068 = vunpack.c.l.b16 %v4715
        %v5069 = vunpack.c.h.b16 %v4715
        %v5070 = vunpack.c.l.b16 %v4716
        %v5071 = vunpack.c.h.b16 %v4716
        %v5072 = vunpack.c.l.b16 %v4717
        %v5073 = vunpack.c.h.b16 %v4717
        %v5074 = vunpack.c.l.b16 %v4718
        %v5075 = vunpack.c.h.b16 %v4718
        %v5076 = vunpack.c.l.b16 %v4719
        %v5077 = vunpack.c.h.b16 %v4719
        %v5078 = vunpack.c.l.b16 %v4720
        %v5079 = vunpack.c.h.b16 %v4720
        %v5080 = vunpack.c.l.b16 %v4721
        %v5081 = vunpack.c.h.b16 %v4721
        %v5082 = vunpack.c.l.b16 %v4722
        %v5083 = vunpack.c.h.b16 %v4722
        %v5084 = vunpack.c.l.b16 %v4723
        %v5085 = vunpack.c.h.b16 %v4723
        %v5086 = vunpack.c.l.b16 %v4724
        %v5087 = vunpack.c.h.b16 %v4724
        %v5088 = vunpack.c.l.b16 %v4725
        %v5089 = vunpack.c.h.b16 %v4725
        %v5090 = vunpack.c.l.b16 %v4726
        %v5091 = vunpack.c.h.b16 %v4726
        %v5092 = vunpack.c.l.b16 %v4727
        %v5093 = vunpack.c.h.b16 %v4727
        %v5094 = vunpack.c.l.b16 %v4728
        %v5095 = vunpack.c.h.b16 %v4728
        %v5096 = vunpack.c.l.b16 %v4729
        %v5097 = vunpack.c.h.b16 %v4729
        %v5098 = vunpack.c.l.b16 %v4730
        %v5099 = vunpack.c.h.b16 %v4730
        %v5100 = vunpack.c.l.b16 %v4731
        %v5101 = vunpack.c.h.b16 %v4731
        %v5102 = vunpack.c.l.b16 %v4732
        %v5103 = vunpack.c.h.b16 %v4732
        %v5104 = vpack.c.b16 %v5044, %v5040
        %v5105 = vpack.c.b16 %v5045, %v5041
        %v5106 = vpack.c.b16 %v5046, %v5042
        %v5107 = vpack.c.b16 %v5047, %v5043
        %v5108 = vpack.c.b16 %v5052, %v5048
        %v5109 = vpack.c.b16 %v5053, %v5049
        %v5110 = vpack.c.b16 %v5054, %v5050
        %v5111 = vpack.c.b16 %v5055, %v5051
        %v5112 = vpack.c.b16 %v5060, %v5056
        %v5113 = vpack.c.b16 %v5061, %v5057
        %v5114 = vpack.c.b16 %v5062, %v5058
        %v5115 = vpack.c.b16 %v5063, %v5059
        %v5116 = vpack.c.b16 %v5068, %v5064
        %v5117 = vpack.c.b16 %v5069, %v5065
        %v5118 = vpack.c.b16 %v5070, %v5066
        %v5119 = vpack.c.b16 %v5071, %v5067
        %v5120 = vpack.c.b16 %v5076, %v5072
        %v5121 = vpack.c.b16 %v5077, %v5073
        %v5122 = vpack.c.b16 %v5078, %v5074
        %v5123 = vpack.c.b16 %v5079, %v5075
        %v5124 = vpack.c.b16 %v5084, %v5080
        %v5125 = vpack.c.b16 %v5085, %v5081
        %v5126 = vpack.c.b16 %v5086, %v5082
        %v5127 = vpack.c.b16 %v5087, %v5083
        %v5128 = vpack.c.b16 %v5092, %v5088
        %v5129 = vpack.c.b16 %v5093, %v5089
        %v5130 = vpack.c.b16 %v5094, %v5090
        %v5131 = vpack.c.b16 %v5095, %v5091
        %v5132 = vpack.c.b16 %v5100, %v5096
        %v5133 = vpack.c.b16 %v5101, %v5097
        %v5134 = vpack.c.b16 %v5102, %v5098
        %v5135 = vpack.c.b16 %v5103, %v5099
        %5168 = vmatprep.subr.bf16.mxu0 %v5105
        %5169 = vmatpush1.bf16.msra.mxu0 %v5104
        %5170 = vmatprep.subr.bf16.mxu0 %v5109
        %5171 = vmatpush1.bf16.msra.mxu0 %v5108
        %5172 = vmatprep.subr.bf16.mxu0 %v5113
        %5173 = vmatpush1.bf16.msra.mxu0 %v5112
        %5174 = vmatprep.subr.bf16.mxu0 %v5117
        %5175 = vmatpush1.bf16.msra.mxu0 %v5116
        %5176 = vmatprep.subr.bf16.mxu0 %v5121
        %5177 = vmatpush1.bf16.msra.mxu0 %v5120
        %5178 = vmatprep.subr.bf16.mxu0 %v5125
        %5179 = vmatpush1.bf16.msra.mxu0 %v5124
        %5180 = vmatprep.subr.bf16.mxu0 %v5129
        %5181 = vmatpush1.bf16.msra.mxu0 %v5128
        %5182 = vmatprep.subr.bf16.mxu0 %v5133
        %5183 = vmatpush1.bf16.msra.mxu0 %v5132
        %5184 = vmatprep.subr.bf16.mxu0 0
        %5185 = vmatpush1.bf16.msra.mxu0 0
        %5186 = vmatprep.subr.bf16.mxu0 0
        %5187 = vmatpush1.bf16.msra.mxu0 0
        %5188 = vmatprep.subr.bf16.mxu0 0
        %5189 = vmatpush1.bf16.msra.mxu0 0
        %5190 = vmatprep.subr.bf16.mxu0 0
        %5191 = vmatpush1.bf16.msra.mxu0 0
        %5192 = vmatprep.subr.bf16.mxu0 0
        %5193 = vmatpush1.bf16.msra.mxu0 0
        %5194 = vmatprep.subr.bf16.mxu0 0
        %5195 = vmatpush1.bf16.msra.mxu0 0
        %5196 = vmatprep.subr.bf16.mxu0 0
        %5197 = vmatpush1.bf16.msra.mxu0 0
        %5198 = vmatprep.subr.bf16.mxu0 0
        %5199 = vmatpush1.bf16.msra.mxu0 0
        %5200 = vmatprep.mubr.bf16.mxu0 0
        %5201 = vmatmul.mubr.bf16.gmra.mrb[0].mxu0 %v4140
        %v5202 = vpop.f32.mrb[0].mxu0
        %v5203 = vadd.f32 %v4961, %v5202
        %v5204 = vpop.f32.mrb[0].mxu0
        %v5205 = vadd.f32 %v4963, %v5204
        %v5206 = vpop.f32.mrb[0].mxu0
        %v5207 = vpop.f32.mrb[0].mxu0
        %5208 = vdwg.mxu0
        %5209 = vmatprep.subr.bf16.mxu0 %v5107
        %5210 = vmatpush1.bf16.msra.mxu0 %v5106
        %5211 = vmatprep.subr.bf16.mxu0 %v5111
        %5212 = vmatpush1.bf16.msra.mxu0 %v5110
        %5213 = vmatprep.subr.bf16.mxu0 %v5115
        %5214 = vmatpush1.bf16.msra.mxu0 %v5114
        %5215 = vmatprep.subr.bf16.mxu0 %v5119
        %5216 = vmatpush1.bf16.msra.mxu0 %v5118
        %5217 = vmatprep.subr.bf16.mxu0 %v5123
        %5218 = vmatpush1.bf16.msra.mxu0 %v5122
        %5219 = vmatprep.subr.bf16.mxu0 %v5127
        %5220 = vmatpush1.bf16.msra.mxu0 %v5126
        %5221 = vmatprep.subr.bf16.mxu0 %v5131
        %5222 = vmatpush1.bf16.msra.mxu0 %v5130
        %5223 = vmatprep.subr.bf16.mxu0 %v5135
        %5224 = vmatpush1.bf16.msra.mxu0 %v5134
        %5225 = vmatprep.subr.bf16.mxu0 0
        %5226 = vmatpush1.bf16.msra.mxu0 0
        %5227 = vmatprep.subr.bf16.mxu0 0
        %5228 = vmatpush1.bf16.msra.mxu0 0
        %5229 = vmatprep.subr.bf16.mxu0 0
        %5230 = vmatpush1.bf16.msra.mxu0 0
        %5231 = vmatprep.subr.bf16.mxu0 0
        %5232 = vmatpush1.bf16.msra.mxu0 0
        %5233 = vmatprep.subr.bf16.mxu0 0
        %5234 = vmatpush1.bf16.msra.mxu0 0
        %5235 = vmatprep.subr.bf16.mxu0 0
        %5236 = vmatpush1.bf16.msra.mxu0 0
        %5237 = vmatprep.subr.bf16.mxu0 0
        %5238 = vmatpush1.bf16.msra.mxu0 0
        %5239 = vmatprep.subr.bf16.mxu0 0
        %5240 = vmatpush1.bf16.msra.mxu0 0
        %5241 = vmatprep.mubr.bf16.mxu0 0
        %5242 = vmatmul.mubr.bf16.gmra.mrb[0].mxu0 %v4140
        %v5243 = vpop.f32.mrb[0].mxu0
        %v5244 = vadd.f32 %v5002, %v5243
        %v5245 = vpop.f32.mrb[0].mxu0
        %v5246 = vadd.f32 %v5004, %v5245
        %v5247 = vpop.f32.mrb[0].mxu0
        %v5248 = vpop.f32.mrb[0].mxu0
        %5249 = vdwg.mxu0
        %v5250 = vld [vmem:[%s15 + $0x14] sm:$0x1]
        %v5251 = vlaneseq
        %v5252 = vshrl.u32 %v5251, 7
        %v5253 = vsub.s32 0, %v5252
        %v5254 = vrot.slane %v5250, %v5253
        %v5255 = vadd.f32 %v5203, %v5254
        %v5256 = vxor.u32 %v5255, 2147483648
        %v5257 = vmul.f32 %v5256, 1.442695
        %v5258 = vpow.pop %v5257
        %v5259 = vadd.f32 %v5258, 1.0
        %v5260 = vrcp.pop %v5259
        %v5261 = vmul.f32 1.0, %v5260
        %v5262 = vld [vmem:[%s15 + $0x15] sm:$0x1]
        %v5263 = vlaneseq
        %v5264 = vshrl.u32 %v5263, 7
        %v5265 = vsub.s32 0, %v5264
        %v5266 = vrot.slane %v5262, %v5265
        %v5267 = vadd.f32 %v5205, %v5266
        %v5268 = vxor.u32 %v5267, 2147483648
        %v5269 = vmul.f32 %v5268, 1.442695
        %v5270 = vpow.pop %v5269
        %v5271 = vadd.f32 %v5270, 1.0
        %v5272 = vrcp.pop %v5271
        %v5273 = vmul.f32 1.0, %v5272
        %v5274 = vld [vmem:[%s15 + $0x16] sm:$0x1]
        %v5275 = vlaneseq
        %v5276 = vshrl.u32 %v5275, 7
        %v5277 = vsub.s32 0, %v5276
        %v5278 = vrot.slane %v5274, %v5277
        %v5279 = vadd.f32 %v5244, %v5278
        %v5280 = vtanh.pop %v5279
        %v5281 = vld [vmem:[%s15 + $0x17] sm:$0x1]
        %v5282 = vlaneseq
        %v5283 = vshrl.u32 %v5282, 7
        %v5284 = vsub.s32 0, %v5283
        %v5285 = vrot.slane %v5281, %v5284
        %v5286 = vadd.f32 %v5246, %v5285
        %v5287 = vxor.u32 %v5286, 2147483648
        %v5288 = vmul.f32 %v5287, 1.442695
        %v5289 = vpow.pop %v5288
        %v5290 = vadd.f32 %v5289, 1.0
        %v5291 = vrcp.pop %v5290
        %v5292 = vmul.f32 1.0, %v5291
        %v5293 = vmul.f32 %v5273, %v4137
        %v5294 = vmul.f32 %v5261, %v5280
        %v5295 = vadd.f32 %v5293, %v5294
        %v5296 = vtanh.pop %v5295
        %v5297 = vmul.f32 %v5292, %v5296
        %v5298 = vld [vmem:[#allocation18 + $0x480] sm:$0xf]
        %v5299 = vld [vmem:[#allocation18 + $0x484] sm:$0xf]
        %v5300 = vld [vmem:[#allocation18 + $0x488] sm:$0xf]
        %v5301 = vld [vmem:[#allocation18 + $0x48c] sm:$0xf]
        %v5302 = vld [vmem:[#allocation18 + $0x490] sm:$0xf]
        %v5303 = vld [vmem:[#allocation18 + $0x494] sm:$0xf]
        %v5304 = vld [vmem:[#allocation18 + $0x498] sm:$0xf]
        %v5305 = vld [vmem:[#allocation18 + $0x49c] sm:$0xf]
        %v5306 = vld [vmem:[#allocation18 + $0x4a0] sm:$0xf]
        %v5307 = vld [vmem:[#allocation18 + $0x4a4] sm:$0xf]
        %v5308 = vld [vmem:[#allocation18 + $0x4a8] sm:$0xf]
        %v5309 = vld [vmem:[#allocation18 + $0x4ac] sm:$0xf]
        %v5310 = vld [vmem:[#allocation18 + $0x4b0] sm:$0xf]
        %v5311 = vld [vmem:[#allocation18 + $0x4b4] sm:$0xf]
        %v5312 = vld [vmem:[#allocation18 + $0x4b8] sm:$0xf]
        %v5313 = vld [vmem:[#allocation18 + $0x4bc] sm:$0xf]
        %v5314 = vpack.c.bf16 %v5297, %v5297
        %v5315 = vld [vmem:[%s15 + $0x1a] sm:$0x1]
        %v5316 = vlaneseq
        %v5317 = vshrl.u32 %v5316, 7
        %v5318 = vsub.s32 0, %v5317
        %v5319 = vrot.slane %v5315, %v5318
        %v5336 = vunpack.c.l.b16 %v5298
        %v5337 = vunpack.c.l.b16 %v5299
        %v5338 = vunpack.c.l.b16 %v5300
        %v5339 = vunpack.c.l.b16 %v5301
        %v5340 = vunpack.c.l.b16 %v5302
        %v5341 = vunpack.c.l.b16 %v5303
        %v5342 = vunpack.c.l.b16 %v5304
        %v5343 = vunpack.c.l.b16 %v5305
        %v5344 = vunpack.c.l.b16 %v5306
        %v5345 = vunpack.c.l.b16 %v5307
        %v5346 = vunpack.c.l.b16 %v5308
        %v5347 = vunpack.c.l.b16 %v5309
        %v5348 = vunpack.c.l.b16 %v5310
        %v5349 = vunpack.c.l.b16 %v5311
        %v5350 = vunpack.c.l.b16 %v5312
        %v5351 = vunpack.c.l.b16 %v5313
        %v5352 = vpack.c.b16 %v5337, %v5336
        %v5353 = vpack.c.b16 %v5339, %v5338
        %v5354 = vpack.c.b16 %v5341, %v5340
        %v5355 = vpack.c.b16 %v5343, %v5342
        %v5356 = vpack.c.b16 %v5345, %v5344
        %v5357 = vpack.c.b16 %v5347, %v5346
        %v5358 = vpack.c.b16 %v5349, %v5348
        %v5359 = vpack.c.b16 %v5351, %v5350
        %5368 = vmatprep.subr.bf16.mxu0 0
        %5369 = vmatpush1.bf16.msra.mxu0 %v5352
        %5370 = vmatprep.subr.bf16.mxu0 0
        %5371 = vmatpush1.bf16.msra.mxu0 %v5353
        %5372 = vmatprep.subr.bf16.mxu0 0
        %5373 = vmatpush1.bf16.msra.mxu0 %v5354
        %5374 = vmatprep.subr.bf16.mxu0 0
        %5375 = vmatpush1.bf16.msra.mxu0 %v5355
        %5376 = vmatprep.subr.bf16.mxu0 0
        %5377 = vmatpush1.bf16.msra.mxu0 %v5356
        %5378 = vmatprep.subr.bf16.mxu0 0
        %5379 = vmatpush1.bf16.msra.mxu0 %v5357
        %5380 = vmatprep.subr.bf16.mxu0 0
        %5381 = vmatpush1.bf16.msra.mxu0 %v5358
        %5382 = vmatprep.subr.bf16.mxu0 0
        %5383 = vmatpush1.bf16.msra.mxu0 %v5359
        %5384 = vmatprep.subr.bf16.mxu0 0
        %5385 = vmatpush1.bf16.msra.mxu0 0
        %5386 = vmatprep.subr.bf16.mxu0 0
        %5387 = vmatpush1.bf16.msra.mxu0 0
        %5388 = vmatprep.subr.bf16.mxu0 0
        %5389 = vmatpush1.bf16.msra.mxu0 0
        %5390 = vmatprep.subr.bf16.mxu0 0
        %5391 = vmatpush1.bf16.msra.mxu0 0
        %5392 = vmatprep.subr.bf16.mxu0 0
        %5393 = vmatpush1.bf16.msra.mxu0 0
        %5394 = vmatprep.subr.bf16.mxu0 0
        %5395 = vmatpush1.bf16.msra.mxu0 0
        %5396 = vmatprep.subr.bf16.mxu0 0
        %5397 = vmatpush1.bf16.msra.mxu0 0
        %5398 = vmatprep.subr.bf16.mxu0 0
        %5399 = vmatpush1.bf16.msra.mxu0 0
        %5400 = vmatprep.mubr.bf16.mxu0 0
        %5401 = vmatmul.mubr.bf16.gmra.mrb[0].mxu0 %v5314
        %v5402 = vpop.f32.mrb[0].mxu0
        %v5403 = vadd.f32 %v5319, %v5402
        %v5404 = vpop.f32.mrb[0].mxu0
        %v5405 = vpop.f32.mrb[0].mxu0
        %v5406 = vpop.f32.mrb[0].mxu0
        %5407 = vdwg.mxu0
        %v5408 = vxor.u32 %v5403, 2147483648
        %v5409 = vmul.f32 %v5408, 1.442695
        %v5410 = vpow.pop %v5409
        %v5411 = vadd.f32 %v5410, 1.0
        %v5412 = vrcp.pop %v5411
        %v5413 = vmul.f32 1.0, %v5412
        %v5414 = vld [vmem:[#allocation18 + $0x4c0] sm:$0xf]
        %v5415 = vld [vmem:[#allocation18 + $0x4c4] sm:$0xf]
        %v5416 = vld [vmem:[#allocation18 + $0x4c8] sm:$0xf]
        %v5417 = vld [vmem:[#allocation18 + $0x4cc] sm:$0xf]
        %v5418 = vld [vmem:[#allocation18 + $0x4d0] sm:$0xf]
        %v5419 = vld [vmem:[#allocation18 + $0x4d4] sm:$0xf]
        %v5420 = vld [vmem:[#allocation18 + $0x4d8] sm:$0xf]
        %v5421 = vld [vmem:[#allocation18 + $0x4dc] sm:$0xf]
        %v5422 = vld [vmem:[#allocation18 + $0x4e0] sm:$0xf]
        %v5423 = vld [vmem:[#allocation18 + $0x4e4] sm:$0xf]
        %v5424 = vld [vmem:[#allocation18 + $0x4e8] sm:$0xf]
        %v5425 = vld [vmem:[#allocation18 + $0x4ec] sm:$0xf]
        %v5426 = vld [vmem:[#allocation18 + $0x4f0] sm:$0xf]
        %v5427 = vld [vmem:[#allocation18 + $0x4f4] sm:$0xf]
        %v5428 = vld [vmem:[#allocation18 + $0x4f8] sm:$0xf]
        %v5429 = vld [vmem:[#allocation18 + $0x4fc] sm:$0xf]
        %v5430 = vld [vmem:[%s15 + $0x1b] sm:$0x1]
        %v5431 = vlaneseq
        %v5432 = vshrl.u32 %v5431, 7
        %v5433 = vsub.s32 0, %v5432
        %v5434 = vrot.slane %v5430, %v5433
        %v5451 = vunpack.c.l.b16 %v5414
        %v5452 = vunpack.c.l.b16 %v5415
        %v5453 = vunpack.c.l.b16 %v5416
        %v5454 = vunpack.c.l.b16 %v5417
        %v5455 = vunpack.c.l.b16 %v5418
        %v5456 = vunpack.c.l.b16 %v5419
        %v5457 = vunpack.c.l.b16 %v5420
        %v5458 = vunpack.c.l.b16 %v5421
        %v5459 = vunpack.c.l.b16 %v5422
        %v5460 = vunpack.c.l.b16 %v5423
        %v5461 = vunpack.c.l.b16 %v5424
        %v5462 = vunpack.c.l.b16 %v5425
        %v5463 = vunpack.c.l.b16 %v5426
        %v5464 = vunpack.c.l.b16 %v5427
        %v5465 = vunpack.c.l.b16 %v5428
        %v5466 = vunpack.c.l.b16 %v5429
        %v5467 = vpack.c.b16 %v5452, %v5451
        %v5468 = vpack.c.b16 %v5454, %v5453
        %v5469 = vpack.c.b16 %v5456, %v5455
        %v5470 = vpack.c.b16 %v5458, %v5457
        %v5471 = vpack.c.b16 %v5460, %v5459
        %v5472 = vpack.c.b16 %v5462, %v5461
        %v5473 = vpack.c.b16 %v5464, %v5463
        %v5474 = vpack.c.b16 %v5466, %v5465
        %5483 = vmatprep.subr.bf16.mxu0 0
        %5484 = vmatpush1.bf16.msra.mxu0 %v5467
        %5485 = vmatprep.subr.bf16.mxu0 0
        %5486 = vmatpush1.bf16.msra.mxu0 %v5468
        %5487 = vmatprep.subr.bf16.mxu0 0
        %5488 = vmatpush1.bf16.msra.mxu0 %v5469
        %5489 = vmatprep.subr.bf16.mxu0 0
        %5490 = vmatpush1.bf16.msra.mxu0 %v5470
        %5491 = vmatprep.subr.bf16.mxu0 0
        %5492 = vmatpush1.bf16.msra.mxu0 %v5471
        %5493 = vmatprep.subr.bf16.mxu0 0
        %5494 = vmatpush1.bf16.msra.mxu0 %v5472
        %5495 = vmatprep.subr.bf16.mxu0 0
        %5496 = vmatpush1.bf16.msra.mxu0 %v5473
        %5497 = vmatprep.subr.bf16.mxu0 0
        %5498 = vmatpush1.bf16.msra.mxu0 %v5474
        %5499 = vmatprep.subr.bf16.mxu0 0
        %5500 = vmatpush1.bf16.msra.mxu0 0
        %5501 = vmatprep.subr.bf16.mxu0 0
        %5502 = vmatpush1.bf16.msra.mxu0 0
        %5503 = vmatprep.subr.bf16.mxu0 0
        %5504 = vmatpush1.bf16.msra.mxu0 0
        %5505 = vmatprep.subr.bf16.mxu0 0
        %5506 = vmatpush1.bf16.msra.mxu0 0
        %5507 = vmatprep.subr.bf16.mxu0 0
        %5508 = vmatpush1.bf16.msra.mxu0 0
        %5509 = vmatprep.subr.bf16.mxu0 0
        %5510 = vmatpush1.bf16.msra.mxu0 0
        %5511 = vmatprep.subr.bf16.mxu0 0
        %5512 = vmatpush1.bf16.msra.mxu0 0
        %5513 = vmatprep.subr.bf16.mxu0 0
        %5514 = vmatpush1.bf16.msra.mxu0 0
        %5515 = vmatprep.mubr.bf16.mxu0 0
        %5516 = vmatmul.mubr.bf16.gmra.mrb[0].mxu0 %v5314
        %v5517 = vpop.f32.mrb[0].mxu0
        %v5518 = vadd.f32 %v5434, %v5517
        %v5519 = vpop.f32.mrb[0].mxu0
        %v5520 = vpop.f32.mrb[0].mxu0
        %v5521 = vpop.f32.mrb[0].mxu0
        %5522 = vdwg.mxu0
        %v5523 = vmul.f32 %v5413, %v5518
        %v5524 = vmul.f32 %v5523, %v411
        %v5525 = vrot.slane %v5524, 4
        %v5526 = vadd.f32 %v5524, %v5525
        %v5527 = vrot.slane %v5526, 2
        %v5528 = vadd.f32 %v5526, %v5527
        %v5529 = vrot.slane %v5528, 1
        %v5530 = vadd.f32 %v5528, %v5529
        %v5531 = vld [vmem:[#allocation18 + $0x500] sm:$0xf]
        %v5532 = vld [vmem:[#allocation18 + $0x504] sm:$0xf]
        %v5533 = vld [vmem:[#allocation18 + $0x508] sm:$0xf]
        %v5534 = vld [vmem:[#allocation18 + $0x50c] sm:$0xf]
        %v5535 = vld [vmem:[#allocation18 + $0x510] sm:$0xf]
        %v5536 = vld [vmem:[#allocation18 + $0x514] sm:$0xf]
        %v5537 = vld [vmem:[#allocation18 + $0x518] sm:$0xf]
        %v5538 = vld [vmem:[#allocation18 + $0x51c] sm:$0xf]
        %v5539 = vld [vmem:[#allocation18 + $0x520] sm:$0xf]
        %v5540 = vld [vmem:[#allocation18 + $0x524] sm:$0xf]
        %v5541 = vld [vmem:[#allocation18 + $0x528] sm:$0xf]
        %v5542 = vld [vmem:[#allocation18 + $0x52c] sm:$0xf]
        %v5543 = vld [vmem:[#allocation18 + $0x530] sm:$0xf]
        %v5544 = vld [vmem:[#allocation18 + $0x534] sm:$0xf]
        %v5545 = vld [vmem:[#allocation18 + $0x538] sm:$0xf]
        %v5546 = vld [vmem:[#allocation18 + $0x53c] sm:$0xf]
        %v5547 = vpack.c.bf16 %v2982, %v2982
        %v5548 = vld [vmem:[%s15 + $0x1c] sm:$0x1]
        %v5565 = vunpack.c.l.b16 %v5531
        %v5566 = vunpack.c.l.b16 %v5532
        %v5567 = vunpack.c.l.b16 %v5533
        %v5568 = vunpack.c.l.b16 %v5534
        %v5569 = vunpack.c.l.b16 %v5535
        %v5570 = vunpack.c.l.b16 %v5536
        %v5571 = vunpack.c.l.b16 %v5537
        %v5572 = vunpack.c.l.b16 %v5538
        %v5573 = vunpack.c.l.b16 %v5539
        %v5574 = vunpack.c.l.b16 %v5540
        %v5575 = vunpack.c.l.b16 %v5541
        %v5576 = vunpack.c.l.b16 %v5542
        %v5577 = vunpack.c.l.b16 %v5543
        %v5578 = vunpack.c.l.b16 %v5544
        %v5579 = vunpack.c.l.b16 %v5545
        %v5580 = vunpack.c.l.b16 %v5546
        %v5581 = vpack.c.b16 %v5566, %v5565
        %v5582 = vpack.c.b16 %v5568, %v5567
        %v5583 = vpack.c.b16 %v5570, %v5569
        %v5584 = vpack.c.b16 %v5572, %v5571
        %v5585 = vpack.c.b16 %v5574, %v5573
        %v5586 = vpack.c.b16 %v5576, %v5575
        %v5587 = vpack.c.b16 %v5578, %v5577
        %v5588 = vpack.c.b16 %v5580, %v5579
        %5597 = vmatprep.subr.bf16.mxu0 0
        %5598 = vmatpush1.bf16.msra.mxu0 %v5581
        %5599 = vmatprep.subr.bf16.mxu0 0
        %5600 = vmatpush1.bf16.msra.mxu0 %v5582
        %5601 = vmatprep.subr.bf16.mxu0 0
        %5602 = vmatpush1.bf16.msra.mxu0 %v5583
        %5603 = vmatprep.subr.bf16.mxu0 0
        %5604 = vmatpush1.bf16.msra.mxu0 %v5584
        %5605 = vmatprep.subr.bf16.mxu0 0
        %5606 = vmatpush1.bf16.msra.mxu0 %v5585
        %5607 = vmatprep.subr.bf16.mxu0 0
        %5608 = vmatpush1.bf16.msra.mxu0 %v5586
        %5609 = vmatprep.subr.bf16.mxu0 0
        %5610 = vmatpush1.bf16.msra.mxu0 %v5587
        %5611 = vmatprep.subr.bf16.mxu0 0
        %5612 = vmatpush1.bf16.msra.mxu0 %v5588
        %5613 = vmatprep.subr.bf16.mxu0 0
        %5614 = vmatpush1.bf16.msra.mxu0 0
        %5615 = vmatprep.subr.bf16.mxu0 0
        %5616 = vmatpush1.bf16.msra.mxu0 0
        %5617 = vmatprep.subr.bf16.mxu0 0
        %5618 = vmatpush1.bf16.msra.mxu0 0
        %5619 = vmatprep.subr.bf16.mxu0 0
        %5620 = vmatpush1.bf16.msra.mxu0 0
        %5621 = vmatprep.subr.bf16.mxu0 0
        %5622 = vmatpush1.bf16.msra.mxu0 0
        %5623 = vmatprep.subr.bf16.mxu0 0
        %5624 = vmatpush1.bf16.msra.mxu0 0
        %5625 = vmatprep.subr.bf16.mxu0 0
        %5626 = vmatpush1.bf16.msra.mxu0 0
        %5627 = vmatprep.subr.bf16.mxu0 0
        %5628 = vmatpush1.bf16.msra.mxu0 0
        %5629 = vmatprep.mubr.bf16.mxu0 0
        %5630 = vmatmul.mubr.bf16.gmra.mrb[0].mxu0 %v5547
        %v5631 = vpop.f32.mrb[0].mxu0
        %v5632 = vadd.f32 %v5548, %v5631
        %v5633 = vpop.f32.mrb[0].mxu0
        %v5634 = vpop.f32.mrb[0].mxu0
        %v5635 = vpop.f32.mrb[0].mxu0
        %5636 = vdwg.mxu0
        %v5637 = vlaneseq
        %v5638 = vand.u32 %v5637, 127
        %vm5639 = vcmp.lt.s32.totalorder %v5638, 115
        %v5640 = vsel %vm5639, %v5632, -1e+30
        %vm5641 = vcmask 1040384
        %v5642 = vsel %vm5641, %v5640, -inf
        %5643 = vmax.xlane.f32.xlu0 %v5642
        %v5644 = vpop.xlane.xlu0 %5643
        %v5645 = vsub.f32 %v5640, %v5644
        %v5646 = vmul.f32 %v5645, 1.442695
        %v5647 = vpow.pop %v5646
        %v5648 = vsel %vm5641, %v5647, 0.0
        %5649 = vadd.xlane.f32.xlu0 %v5648
        %v5650 = vpop.xlane.xlu0 %5649
        %v5651 = vlog2.pop %v5650
        %v5652 = vmul.f32 %v5651, 0.6931472
        %v5653 = vsub.f32 %v5645, %v5652
        %v5654 = vmul.f32 %v5653, 1.442695
        %v5655 = vpow.pop %v5654
        %v5656 = vld [vmem:[#allocation18 + $0x540] sm:$0xf]
        %v5657 = vld [vmem:[#allocation18 + $0x544] sm:$0xf]
        %v5658 = vld [vmem:[#allocation18 + $0x548] sm:$0xf]
        %v5659 = vld [vmem:[#allocation18 + $0x54c] sm:$0xf]
        %v5660 = vld [vmem:[#allocation18 + $0x550] sm:$0xf]
        %v5661 = vld [vmem:[#allocation18 + $0x554] sm:$0xf]
        %v5662 = vld [vmem:[#allocation18 + $0x558] sm:$0xf]
        %v5663 = vld [vmem:[#allocation18 + $0x55c] sm:$0xf]
        %v5664 = vld [vmem:[#allocation18 + $0x560] sm:$0xf]
        %v5665 = vld [vmem:[#allocation18 + $0x564] sm:$0xf]
        %v5666 = vld [vmem:[#allocation18 + $0x568] sm:$0xf]
        %v5667 = vld [vmem:[#allocation18 + $0x56c] sm:$0xf]
        %v5668 = vld [vmem:[#allocation18 + $0x570] sm:$0xf]
        %v5669 = vld [vmem:[#allocation18 + $0x574] sm:$0xf]
        %v5670 = vld [vmem:[#allocation18 + $0x578] sm:$0xf]
        %v5671 = vld [vmem:[#allocation18 + $0x57c] sm:$0xf]
        %v5672 = vpack.c.bf16 %v5530, %v5530
        %v5673 = vld [vmem:[#allocation18 + $0x580] sm:$0xf]
        %v5674 = vld [vmem:[#allocation18 + $0x584] sm:$0xf]
        %v5675 = vld [vmem:[#allocation18 + $0x588] sm:$0xf]
        %v5676 = vld [vmem:[#allocation18 + $0x58c] sm:$0xf]
        %v5677 = vld [vmem:[#allocation18 + $0x590] sm:$0xf]
        %v5678 = vld [vmem:[#allocation18 + $0x594] sm:$0xf]
        %v5679 = vld [vmem:[#allocation18 + $0x598] sm:$0xf]
        %v5680 = vld [vmem:[#allocation18 + $0x59c] sm:$0xf]
        %v5681 = vld [vmem:[#allocation18 + $0x5a0] sm:$0xf]
        %v5682 = vld [vmem:[#allocation18 + $0x5a4] sm:$0xf]
        %v5683 = vld [vmem:[#allocation18 + $0x5a8] sm:$0xf]
        %v5684 = vld [vmem:[#allocation18 + $0x5ac] sm:$0xf]
        %v5685 = vld [vmem:[#allocation18 + $0x5b0] sm:$0xf]
        %v5686 = vld [vmem:[#allocation18 + $0x5b4] sm:$0xf]
        %v5687 = vld [vmem:[#allocation18 + $0x5b8] sm:$0xf]
        %v5688 = vld [vmem:[#allocation18 + $0x5bc] sm:$0xf]
        %v5689 = vpack.c.bf16 %v5655, %v5655
        %v5706 = vunpack.c.l.b16 %v5673
        %v5707 = vunpack.c.l.b16 %v5674
        %v5708 = vunpack.c.l.b16 %v5675
        %v5709 = vunpack.c.l.b16 %v5676
        %v5710 = vunpack.c.l.b16 %v5677
        %v5711 = vunpack.c.l.b16 %v5678
        %v5712 = vunpack.c.l.b16 %v5679
        %v5713 = vunpack.c.l.b16 %v5680
        %v5714 = vunpack.c.l.b16 %v5681
        %v5715 = vunpack.c.l.b16 %v5682
        %v5716 = vunpack.c.l.b16 %v5683
        %v5717 = vunpack.c.l.b16 %v5684
        %v5718 = vunpack.c.l.b16 %v5685
        %v5719 = vunpack.c.l.b16 %v5686
        %v5720 = vunpack.c.l.b16 %v5687
        %v5721 = vunpack.c.l.b16 %v5688
        %v5722 = vpack.c.b16 %v5707, %v5706
        %v5723 = vpack.c.b16 %v5709, %v5708
        %v5724 = vpack.c.b16 %v5711, %v5710
        %v5725 = vpack.c.b16 %v5713, %v5712
        %v5726 = vpack.c.b16 %v5715, %v5714
        %v5727 = vpack.c.b16 %v5717, %v5716
        %v5728 = vpack.c.b16 %v5719, %v5718
        %v5729 = vpack.c.b16 %v5721, %v5720
        %5738 = vmatprep.subr.bf16.mxu0 0
        %5739 = vmatpush1.bf16.msra.mxu0 %v5722
        %5740 = vmatprep.subr.bf16.mxu0 0
        %5741 = vmatpush1.bf16.msra.mxu0 %v5723
        %5742 = vmatprep.subr.bf16.mxu0 0
        %5743 = vmatpush1.bf16.msra.mxu0 %v5724
        %5744 = vmatprep.subr.bf16.mxu0 0
        %5745 = vmatpush1.bf16.msra.mxu0 %v5725
        %5746 = vmatprep.subr.bf16.mxu0 0
        %5747 = vmatpush1.bf16.msra.mxu0 %v5726
        %5748 = vmatprep.subr.bf16.mxu0 0
        %5749 = vmatpush1.bf16.msra.mxu0 %v5727
        %5750 = vmatprep.subr.bf16.mxu0 0
        %5751 = vmatpush1.bf16.msra.mxu0 %v5728
        %5752 = vmatprep.subr.bf16.mxu0 0
        %5753 = vmatpush1.bf16.msra.mxu0 %v5729
        %5754 = vmatprep.subr.bf16.mxu0 0
        %5755 = vmatpush1.bf16.msra.mxu0 0
        %5756 = vmatprep.subr.bf16.mxu0 0
        %5757 = vmatpush1.bf16.msra.mxu0 0
        %5758 = vmatprep.subr.bf16.mxu0 0
        %5759 = vmatpush1.bf16.msra.mxu0 0
        %5760 = vmatprep.subr.bf16.mxu0 0
        %5761 = vmatpush1.bf16.msra.mxu0 0
        %5762 = vmatprep.subr.bf16.mxu0 0
        %5763 = vmatpush1.bf16.msra.mxu0 0
        %5764 = vmatprep.subr.bf16.mxu0 0
        %5765 = vmatpush1.bf16.msra.mxu0 0
        %5766 = vmatprep.subr.bf16.mxu0 0
        %5767 = vmatpush1.bf16.msra.mxu0 0
        %5768 = vmatprep.subr.bf16.mxu0 0
        %5769 = vmatpush1.bf16.msra.mxu0 0
        %5770 = vmatprep.mubr.bf16.mxu0 0
        %5771 = vmatmul.mubr.bf16.gmra.mrb[0].mxu0 %v5689
        %v5772 = vpop.f32.mrb[0].mxu0
        %v5773 = vadd.f32 0.0, %v5772
        %v5774 = vpop.f32.mrb[0].mxu0
        %v5775 = vpop.f32.mrb[0].mxu0
        %v5776 = vpop.f32.mrb[0].mxu0
        %5777 = vdwg.mxu0
        %v5794 = vunpack.c.l.b16 %v5656
        %v5795 = vunpack.c.l.b16 %v5657
        %v5796 = vunpack.c.l.b16 %v5658
        %v5797 = vunpack.c.l.b16 %v5659
        %v5798 = vunpack.c.l.b16 %v5660
        %v5799 = vunpack.c.l.b16 %v5661
        %v5800 = vunpack.c.l.b16 %v5662
        %v5801 = vunpack.c.l.b16 %v5663
        %v5802 = vunpack.c.l.b16 %v5664
        %v5803 = vunpack.c.l.b16 %v5665
        %v5804 = vunpack.c.l.b16 %v5666
        %v5805 = vunpack.c.l.b16 %v5667
        %v5806 = vunpack.c.l.b16 %v5668
        %v5807 = vunpack.c.l.b16 %v5669
        %v5808 = vunpack.c.l.b16 %v5670
        %v5809 = vunpack.c.l.b16 %v5671
        %v5810 = vpack.c.b16 %v5795, %v5794
        %v5811 = vpack.c.b16 %v5797, %v5796
        %v5812 = vpack.c.b16 %v5799, %v5798
        %v5813 = vpack.c.b16 %v5801, %v5800
        %v5814 = vpack.c.b16 %v5803, %v5802
        %v5815 = vpack.c.b16 %v5805, %v5804
        %v5816 = vpack.c.b16 %v5807, %v5806
        %v5817 = vpack.c.b16 %v5809, %v5808
        %5826 = vmatprep.subr.bf16.mxu0 0
        %5827 = vmatpush1.bf16.msra.mxu0 %v5810
        %5828 = vmatprep.subr.bf16.mxu0 0
        %5829 = vmatpush1.bf16.msra.mxu0 %v5811
        %5830 = vmatprep.subr.bf16.mxu0 0
        %5831 = vmatpush1.bf16.msra.mxu0 %v5812
        %5832 = vmatprep.subr.bf16.mxu0 0
        %5833 = vmatpush1.bf16.msra.mxu0 %v5813
        %5834 = vmatprep.subr.bf16.mxu0 0
        %5835 = vmatpush1.bf16.msra.mxu0 %v5814
        %5836 = vmatprep.subr.bf16.mxu0 0
        %5837 = vmatpush1.bf16.msra.mxu0 %v5815
        %5838 = vmatprep.subr.bf16.mxu0 0
        %5839 = vmatpush1.bf16.msra.mxu0 %v5816
        %5840 = vmatprep.subr.bf16.mxu0 0
        %5841 = vmatpush1.bf16.msra.mxu0 %v5817
        %5842 = vmatprep.subr.bf16.mxu0 0
        %5843 = vmatpush1.bf16.msra.mxu0 0
        %5844 = vmatprep.subr.bf16.mxu0 0
        %5845 = vmatpush1.bf16.msra.mxu0 0
        %5846 = vmatprep.subr.bf16.mxu0 0
        %5847 = vmatpush1.bf16.msra.mxu0 0
        %5848 = vmatprep.subr.bf16.mxu0 0
        %5849 = vmatpush1.bf16.msra.mxu0 0
        %5850 = vmatprep.subr.bf16.mxu0 0
        %5851 = vmatpush1.bf16.msra.mxu0 0
        %5852 = vmatprep.subr.bf16.mxu0 0
        %5853 = vmatpush1.bf16.msra.mxu0 0
        %5854 = vmatprep.subr.bf16.mxu0 0
        %5855 = vmatpush1.bf16.msra.mxu0 0
        %5856 = vmatprep.subr.bf16.mxu0 0
        %5857 = vmatpush1.bf16.msra.mxu0 0
        %5858 = vmatprep.mubr.bf16.mxu0 0
        %5859 = vmatmul.mubr.bf16.gmra.mrb[0].mxu0 %v5672
        %v5860 = vpop.f32.mrb[0].mxu0
        %v5861 = vadd.f32 %v5773, %v5860
        %v5862 = vpop.f32.mrb[0].mxu0
        %v5863 = vpop.f32.mrb[0].mxu0
        %v5864 = vpop.f32.mrb[0].mxu0
        %5865 = vdwg.mxu0
        %v5866 = vld [vmem:[%s15 + $0x1d] sm:$0x1]
        %v5867 = vadd.f32 %v5861, %v5866
        %v5868 = vld [vmem:[#allocation18 + $0x5c0] sm:$0xf]
        %v5869 = vld [vmem:[#allocation18 + $0x5c4] sm:$0xf]
        %v5870 = vld [vmem:[#allocation18 + $0x5c8] sm:$0xf]
        %v5871 = vld [vmem:[#allocation18 + $0x5cc] sm:$0xf]
        %v5872 = vld [vmem:[#allocation18 + $0x5d0] sm:$0xf]
        %v5873 = vld [vmem:[#allocation18 + $0x5d4] sm:$0xf]
        %v5874 = vld [vmem:[#allocation18 + $0x5d8] sm:$0xf]
        %v5875 = vld [vmem:[#allocation18 + $0x5dc] sm:$0xf]
        %v5876 = vld [vmem:[#allocation18 + $0x5e0] sm:$0xf]
        %v5877 = vld [vmem:[#allocation18 + $0x5e4] sm:$0xf]
        %v5878 = vld [vmem:[#allocation18 + $0x5e8] sm:$0xf]
        %v5879 = vld [vmem:[#allocation18 + $0x5ec] sm:$0xf]
        %v5880 = vld [vmem:[#allocation18 + $0x5f0] sm:$0xf]
        %v5881 = vld [vmem:[#allocation18 + $0x5f4] sm:$0xf]
        %v5882 = vld [vmem:[#allocation18 + $0x5f8] sm:$0xf]
        %v5883 = vld [vmem:[#allocation18 + $0x5fc] sm:$0xf]
        %v5884 = vld [vmem:[#allocation18 + $0x600] sm:$0xf]
        %v5885 = vld [vmem:[#allocation18 + $0x604] sm:$0xf]
        %v5886 = vld [vmem:[#allocation18 + $0x608] sm:$0xf]
        %v5887 = vld [vmem:[#allocation18 + $0x60c] sm:$0xf]
        %v5888 = vld [vmem:[#allocation18 + $0x610] sm:$0xf]
        %v5889 = vld [vmem:[#allocation18 + $0x614] sm:$0xf]
        %v5890 = vld [vmem:[#allocation18 + $0x618] sm:$0xf]
        %v5891 = vld [vmem:[#allocation18 + $0x61c] sm:$0xf]
        %v5892 = vld [vmem:[#allocation18 + $0x620] sm:$0xf]
        %v5893 = vld [vmem:[#allocation18 + $0x624] sm:$0xf]
        %v5894 = vld [vmem:[#allocation18 + $0x628] sm:$0xf]
        %v5895 = vld [vmem:[#allocation18 + $0x62c] sm:$0xf]
        %v5896 = vld [vmem:[#allocation18 + $0x630] sm:$0xf]
        %v5897 = vld [vmem:[#allocation18 + $0x634] sm:$0xf]
        %v5898 = vld [vmem:[#allocation18 + $0x638] sm:$0xf]
        %v5899 = vld [vmem:[#allocation18 + $0x63c] sm:$0xf]
        %v5900 = vpack.c.bf16 %v5867, %v5867
        %v5917 = vunpack.c.l.b16 %v5884
        %v5918 = vunpack.c.l.b16 %v5885
        %v5919 = vunpack.c.l.b16 %v5886
        %v5920 = vunpack.c.l.b16 %v5887
        %v5921 = vunpack.c.l.b16 %v5888
        %v5922 = vunpack.c.l.b16 %v5889
        %v5923 = vunpack.c.l.b16 %v5890
        %v5924 = vunpack.c.l.b16 %v5891
        %v5925 = vunpack.c.l.b16 %v5892
        %v5926 = vunpack.c.l.b16 %v5893
        %v5927 = vunpack.c.l.b16 %v5894
        %v5928 = vunpack.c.l.b16 %v5895
        %v5929 = vunpack.c.l.b16 %v5896
        %v5930 = vunpack.c.l.b16 %v5897
        %v5931 = vunpack.c.l.b16 %v5898
        %v5932 = vunpack.c.l.b16 %v5899
        %v5933 = vpack.c.b16 %v5918, %v5917
        %v5934 = vpack.c.b16 %v5920, %v5919
        %v5935 = vpack.c.b16 %v5922, %v5921
        %v5936 = vpack.c.b16 %v5924, %v5923
        %v5937 = vpack.c.b16 %v5926, %v5925
        %v5938 = vpack.c.b16 %v5928, %v5927
        %v5939 = vpack.c.b16 %v5930, %v5929
        %v5940 = vpack.c.b16 %v5932, %v5931
        %5949 = vmatprep.subr.bf16.mxu0 0
        %5950 = vmatpush1.bf16.msra.mxu0 %v5933
        %5951 = vmatprep.subr.bf16.mxu0 0
        %5952 = vmatpush1.bf16.msra.mxu0 %v5934
        %5953 = vmatprep.subr.bf16.mxu0 0
        %5954 = vmatpush1.bf16.msra.mxu0 %v5935
        %5955 = vmatprep.subr.bf16.mxu0 0
        %5956 = vmatpush1.bf16.msra.mxu0 %v5936
        %5957 = vmatprep.subr.bf16.mxu0 0
        %5958 = vmatpush1.bf16.msra.mxu0 %v5937
        %5959 = vmatprep.subr.bf16.mxu0 0
        %5960 = vmatpush1.bf16.msra.mxu0 %v5938
        %5961 = vmatprep.subr.bf16.mxu0 0
        %5962 = vmatpush1.bf16.msra.mxu0 %v5939
        %5963 = vmatprep.subr.bf16.mxu0 0
        %5964 = vmatpush1.bf16.msra.mxu0 %v5940
        %5965 = vmatprep.subr.bf16.mxu0 0
        %5966 = vmatpush1.bf16.msra.mxu0 0
        %5967 = vmatprep.subr.bf16.mxu0 0
        %5968 = vmatpush1.bf16.msra.mxu0 0
        %5969 = vmatprep.subr.bf16.mxu0 0
        %5970 = vmatpush1.bf16.msra.mxu0 0
        %5971 = vmatprep.subr.bf16.mxu0 0
        %5972 = vmatpush1.bf16.msra.mxu0 0
        %5973 = vmatprep.subr.bf16.mxu0 0
        %5974 = vmatpush1.bf16.msra.mxu0 0
        %5975 = vmatprep.subr.bf16.mxu0 0
        %5976 = vmatpush1.bf16.msra.mxu0 0
        %5977 = vmatprep.subr.bf16.mxu0 0
        %5978 = vmatpush1.bf16.msra.mxu0 0
        %5979 = vmatprep.subr.bf16.mxu0 0
        %5980 = vmatpush1.bf16.msra.mxu0 0
        %5981 = vmatprep.mubr.bf16.mxu0 0
        %5982 = vmatmul.mubr.bf16.gmra.mrb[0].mxu0 %v5900
        %v5983 = vpop.f32.mrb[0].mxu0
        %v5984 = vadd.f32 0.0, %v5983
        %v5985 = vpop.f32.mrb[0].mxu0
        %v5986 = vpop.f32.mrb[0].mxu0
        %v5987 = vpop.f32.mrb[0].mxu0
        %5988 = vdwg.mxu0
        %v6005 = vunpack.c.l.b16 %v5868
        %v6006 = vunpack.c.l.b16 %v5869
        %v6007 = vunpack.c.l.b16 %v5870
        %v6008 = vunpack.c.l.b16 %v5871
        %v6009 = vunpack.c.l.b16 %v5872
        %v6010 = vunpack.c.l.b16 %v5873
        %v6011 = vunpack.c.l.b16 %v5874
        %v6012 = vunpack.c.l.b16 %v5875
        %v6013 = vunpack.c.l.b16 %v5876
        %v6014 = vunpack.c.l.b16 %v5877
        %v6015 = vunpack.c.l.b16 %v5878
        %v6016 = vunpack.c.l.b16 %v5879
        %v6017 = vunpack.c.l.b16 %v5880
        %v6018 = vunpack.c.l.b16 %v5881
        %v6019 = vunpack.c.l.b16 %v5882
        %v6020 = vunpack.c.l.b16 %v5883
        %v6021 = vpack.c.b16 %v6006, %v6005
        %v6022 = vpack.c.b16 %v6008, %v6007
        %v6023 = vpack.c.b16 %v6010, %v6009
        %v6024 = vpack.c.b16 %v6012, %v6011
        %v6025 = vpack.c.b16 %v6014, %v6013
        %v6026 = vpack.c.b16 %v6016, %v6015
        %v6027 = vpack.c.b16 %v6018, %v6017
        %v6028 = vpack.c.b16 %v6020, %v6019
        %6037 = vmatprep.subr.bf16.mxu0 0
        %6038 = vmatpush1.bf16.msra.mxu0 %v6021
        %6039 = vmatprep.subr.bf16.mxu0 0
        %6040 = vmatpush1.bf16.msra.mxu0 %v6022
        %6041 = vmatprep.subr.bf16.mxu0 0
        %6042 = vmatpush1.bf16.msra.mxu0 %v6023
        %6043 = vmatprep.subr.bf16.mxu0 0
        %6044 = vmatpush1.bf16.msra.mxu0 %v6024
        %6045 = vmatprep.subr.bf16.mxu0 0
        %6046 = vmatpush1.bf16.msra.mxu0 %v6025
        %6047 = vmatprep.subr.bf16.mxu0 0
        %6048 = vmatpush1.bf16.msra.mxu0 %v6026
        %6049 = vmatprep.subr.bf16.mxu0 0
        %6050 = vmatpush1.bf16.msra.mxu0 %v6027
        %6051 = vmatprep.subr.bf16.mxu0 0
        %6052 = vmatpush1.bf16.msra.mxu0 %v6028
        %6053 = vmatprep.subr.bf16.mxu0 0
        %6054 = vmatpush1.bf16.msra.mxu0 0
        %6055 = vmatprep.subr.bf16.mxu0 0
        %6056 = vmatpush1.bf16.msra.mxu0 0
        %6057 = vmatprep.subr.bf16.mxu0 0
        %6058 = vmatpush1.bf16.msra.mxu0 0
        %6059 = vmatprep.subr.bf16.mxu0 0
        %6060 = vmatpush1.bf16.msra.mxu0 0
        %6061 = vmatprep.subr.bf16.mxu0 0
        %6062 = vmatpush1.bf16.msra.mxu0 0
        %6063 = vmatprep.subr.bf16.mxu0 0
        %6064 = vmatpush1.bf16.msra.mxu0 0
        %6065 = vmatprep.subr.bf16.mxu0 0
        %6066 = vmatpush1.bf16.msra.mxu0 0
        %6067 = vmatprep.subr.bf16.mxu0 0
        %6068 = vmatpush1.bf16.msra.mxu0 0
        %6069 = vmatprep.mubr.bf16.mxu0 0
        %6070 = vmatmul.mubr.bf16.gmra.mrb[0].mxu0 %v5547
        %v6071 = vpop.f32.mrb[0].mxu0
        %v6072 = vadd.f32 %v5984, %v6071
        %v6073 = vpop.f32.mrb[0].mxu0
        %v6074 = vpop.f32.mrb[0].mxu0
        %v6075 = vpop.f32.mrb[0].mxu0
        %6076 = vdwg.mxu0
        %v6077 = vld [vmem:[%s15 + $0x1e] sm:$0x1]
        %v6078 = vadd.f32 %v6072, %v6077
        %vm6079 = vcmp.lt.s32.totalorder %v5638, 2
        %v6080 = vsel %vm6079, %v6078, -1e+30
        %v6081 = vsel %vm5641, %v6080, -inf
        %6082 = vmax.xlane.f32.xlu0 %v6081
        %v6083 = vpop.xlane.xlu0 %6082
        %v6084 = vsub.f32 %v6080, %v6083
        %v6085 = vmul.f32 %v6084, 1.442695
        %v6086 = vpow.pop %v6085
        %v6087 = vsel %vm5641, %v6086, 0.0
        %6088 = vadd.xlane.f32.xlu0 %v6087
        %v6089 = vpop.xlane.xlu0 %6088
        %v6090 = vlog2.pop %v6089
        %v6091 = vmul.f32 %v6090, 0.6931472
        %v6092 = vsub.f32 %v6084, %v6091
        %v6093 = vld [vmem:[#allocation18 + $0x640] sm:$0xf]
        %v6094 = vld [vmem:[#allocation18 + $0x644] sm:$0xf]
        %v6095 = vld [vmem:[#allocation18 + $0x648] sm:$0xf]
        %v6096 = vld [vmem:[#allocation18 + $0x64c] sm:$0xf]
        %v6097 = vld [vmem:[#allocation18 + $0x650] sm:$0xf]
        %v6098 = vld [vmem:[#allocation18 + $0x654] sm:$0xf]
        %v6099 = vld [vmem:[#allocation18 + $0x658] sm:$0xf]
        %v6100 = vld [vmem:[#allocation18 + $0x65c] sm:$0xf]
        %v6101 = vld [vmem:[#allocation18 + $0x660] sm:$0xf]
        %v6102 = vld [vmem:[#allocation18 + $0x664] sm:$0xf]
        %v6103 = vld [vmem:[#allocation18 + $0x668] sm:$0xf]
        %v6104 = vld [vmem:[#allocation18 + $0x66c] sm:$0xf]
        %v6105 = vld [vmem:[#allocation18 + $0x670] sm:$0xf]
        %v6106 = vld [vmem:[#allocation18 + $0x674] sm:$0xf]
        %v6107 = vld [vmem:[#allocation18 + $0x678] sm:$0xf]
        %v6108 = vld [vmem:[#allocation18 + $0x67c] sm:$0xf]
        %v6109 = vld [vmem:[#allocation18 + $0x680] sm:$0xf]
        %v6110 = vld [vmem:[#allocation18 + $0x684] sm:$0xf]
        %v6111 = vld [vmem:[#allocation18 + $0x688] sm:$0xf]
        %v6112 = vld [vmem:[#allocation18 + $0x68c] sm:$0xf]
        %v6113 = vld [vmem:[#allocation18 + $0x690] sm:$0xf]
        %v6114 = vld [vmem:[#allocation18 + $0x694] sm:$0xf]
        %v6115 = vld [vmem:[#allocation18 + $0x698] sm:$0xf]
        %v6116 = vld [vmem:[#allocation18 + $0x69c] sm:$0xf]
        %v6117 = vld [vmem:[#allocation18 + $0x6a0] sm:$0xf]
        %v6118 = vld [vmem:[#allocation18 + $0x6a4] sm:$0xf]
        %v6119 = vld [vmem:[#allocation18 + $0x6a8] sm:$0xf]
        %v6120 = vld [vmem:[#allocation18 + $0x6ac] sm:$0xf]
        %v6121 = vld [vmem:[#allocation18 + $0x6b0] sm:$0xf]
        %v6122 = vld [vmem:[#allocation18 + $0x6b4] sm:$0xf]
        %v6123 = vld [vmem:[#allocation18 + $0x6b8] sm:$0xf]
        %v6124 = vld [vmem:[#allocation18 + $0x6bc] sm:$0xf]
        %v6141 = vunpack.c.l.b16 %v6109
        %v6142 = vunpack.c.l.b16 %v6110
        %v6143 = vunpack.c.l.b16 %v6111
        %v6144 = vunpack.c.l.b16 %v6112
        %v6145 = vunpack.c.l.b16 %v6113
        %v6146 = vunpack.c.l.b16 %v6114
        %v6147 = vunpack.c.l.b16 %v6115
        %v6148 = vunpack.c.l.b16 %v6116
        %v6149 = vunpack.c.l.b16 %v6117
        %v6150 = vunpack.c.l.b16 %v6118
        %v6151 = vunpack.c.l.b16 %v6119
        %v6152 = vunpack.c.l.b16 %v6120
        %v6153 = vunpack.c.l.b16 %v6121
        %v6154 = vunpack.c.l.b16 %v6122
        %v6155 = vunpack.c.l.b16 %v6123
        %v6156 = vunpack.c.l.b16 %v6124
        %v6157 = vpack.c.b16 %v6142, %v6141
        %v6158 = vpack.c.b16 %v6144, %v6143
        %v6159 = vpack.c.b16 %v6146, %v6145
        %v6160 = vpack.c.b16 %v6148, %v6147
        %v6161 = vpack.c.b16 %v6150, %v6149
        %v6162 = vpack.c.b16 %v6152, %v6151
        %v6163 = vpack.c.b16 %v6154, %v6153
        %v6164 = vpack.c.b16 %v6156, %v6155
        %6173 = vmatprep.subr.bf16.mxu0 0
        %6174 = vmatpush1.bf16.msra.mxu0 %v6157
        %6175 = vmatprep.subr.bf16.mxu0 0
        %6176 = vmatpush1.bf16.msra.mxu0 %v6158
        %6177 = vmatprep.subr.bf16.mxu0 0
        %6178 = vmatpush1.bf16.msra.mxu0 %v6159
        %6179 = vmatprep.subr.bf16.mxu0 0
        %6180 = vmatpush1.bf16.msra.mxu0 %v6160
        %6181 = vmatprep.subr.bf16.mxu0 0
        %6182 = vmatpush1.bf16.msra.mxu0 %v6161
        %6183 = vmatprep.subr.bf16.mxu0 0
        %6184 = vmatpush1.bf16.msra.mxu0 %v6162
        %6185 = vmatprep.subr.bf16.mxu0 0
        %6186 = vmatpush1.bf16.msra.mxu0 %v6163
        %6187 = vmatprep.subr.bf16.mxu0 0
        %6188 = vmatpush1.bf16.msra.mxu0 %v6164
        %6189 = vmatprep.subr.bf16.mxu0 0
        %6190 = vmatpush1.bf16.msra.mxu0 0
        %6191 = vmatprep.subr.bf16.mxu0 0
        %6192 = vmatpush1.bf16.msra.mxu0 0
        %6193 = vmatprep.subr.bf16.mxu0 0
        %6194 = vmatpush1.bf16.msra.mxu0 0
        %6195 = vmatprep.subr.bf16.mxu0 0
        %6196 = vmatpush1.bf16.msra.mxu0 0
        %6197 = vmatprep.subr.bf16.mxu0 0
        %6198 = vmatpush1.bf16.msra.mxu0 0
        %6199 = vmatprep.subr.bf16.mxu0 0
        %6200 = vmatpush1.bf16.msra.mxu0 0
        %6201 = vmatprep.subr.bf16.mxu0 0
        %6202 = vmatpush1.bf16.msra.mxu0 0
        %6203 = vmatprep.subr.bf16.mxu0 0
        %6204 = vmatpush1.bf16.msra.mxu0 0
        %6205 = vmatprep.mubr.bf16.mxu0 0
        %6206 = vmatmul.mubr.bf16.gmra.mrb[0].mxu0 %v5900
        %v6207 = vpop.f32.mrb[0].mxu0
        %v6208 = vadd.f32 0.0, %v6207
        %v6209 = vpop.f32.mrb[0].mxu0
        %v6210 = vpop.f32.mrb[0].mxu0
        %v6211 = vpop.f32.mrb[0].mxu0
        %6212 = vdwg.mxu0
        %v6213 = vlaneseq
        %v6214 = vshrl.u32 %v6213, 7
        %v6215 = vsub.s32 0, %v6214
        %v6216 = vrot.slane %v6208, %v6215
        %v6233 = vunpack.c.l.b16 %v6093
        %v6234 = vunpack.c.l.b16 %v6094
        %v6235 = vunpack.c.l.b16 %v6095
        %v6236 = vunpack.c.l.b16 %v6096
        %v6237 = vunpack.c.l.b16 %v6097
        %v6238 = vunpack.c.l.b16 %v6098
        %v6239 = vunpack.c.l.b16 %v6099
        %v6240 = vunpack.c.l.b16 %v6100
        %v6241 = vunpack.c.l.b16 %v6101
        %v6242 = vunpack.c.l.b16 %v6102
        %v6243 = vunpack.c.l.b16 %v6103
        %v6244 = vunpack.c.l.b16 %v6104
        %v6245 = vunpack.c.l.b16 %v6105
        %v6246 = vunpack.c.l.b16 %v6106
        %v6247 = vunpack.c.l.b16 %v6107
        %v6248 = vunpack.c.l.b16 %v6108
        %v6249 = vpack.c.b16 %v6234, %v6233
        %v6250 = vpack.c.b16 %v6236, %v6235
        %v6251 = vpack.c.b16 %v6238, %v6237
        %v6252 = vpack.c.b16 %v6240, %v6239
        %v6253 = vpack.c.b16 %v6242, %v6241
        %v6254 = vpack.c.b16 %v6244, %v6243
        %v6255 = vpack.c.b16 %v6246, %v6245
        %v6256 = vpack.c.b16 %v6248, %v6247
        %6265 = vmatprep.subr.bf16.mxu0 0
        %6266 = vmatpush1.bf16.msra.mxu0 %v6249
        %6267 = vmatprep.subr.bf16.mxu0 0
        %6268 = vmatpush1.bf16.msra.mxu0 %v6250
        %6269 = vmatprep.subr.bf16.mxu0 0
        %6270 = vmatpush1.bf16.msra.mxu0 %v6251
        %6271 = vmatprep.subr.bf16.mxu0 0
        %6272 = vmatpush1.bf16.msra.mxu0 %v6252
        %6273 = vmatprep.subr.bf16.mxu0 0
        %6274 = vmatpush1.bf16.msra.mxu0 %v6253
        %6275 = vmatprep.subr.bf16.mxu0 0
        %6276 = vmatpush1.bf16.msra.mxu0 %v6254
        %6277 = vmatprep.subr.bf16.mxu0 0
        %6278 = vmatpush1.bf16.msra.mxu0 %v6255
        %6279 = vmatprep.subr.bf16.mxu0 0
        %6280 = vmatpush1.bf16.msra.mxu0 %v6256
        %6281 = vmatprep.subr.bf16.mxu0 0
        %6282 = vmatpush1.bf16.msra.mxu0 0
        %6283 = vmatprep.subr.bf16.mxu0 0
        %6284 = vmatpush1.bf16.msra.mxu0 0
        %6285 = vmatprep.subr.bf16.mxu0 0
        %6286 = vmatpush1.bf16.msra.mxu0 0
        %6287 = vmatprep.subr.bf16.mxu0 0
        %6288 = vmatpush1.bf16.msra.mxu0 0
        %6289 = vmatprep.subr.bf16.mxu0 0
        %6290 = vmatpush1.bf16.msra.mxu0 0
        %6291 = vmatprep.subr.bf16.mxu0 0
        %6292 = vmatpush1.bf16.msra.mxu0 0
        %6293 = vmatprep.subr.bf16.mxu0 0
        %6294 = vmatpush1.bf16.msra.mxu0 0
        %6295 = vmatprep.subr.bf16.mxu0 0
        %6296 = vmatpush1.bf16.msra.mxu0 0
        %6297 = vmatprep.mubr.bf16.mxu0 0
        %6298 = vmatmul.mubr.bf16.gmra.mrb[0].mxu0 %v5314
        %v6299 = vpop.f32.mrb[0].mxu0
        %v6300 = vadd.f32 %v6216, %v6299
        %v6301 = vpop.f32.mrb[0].mxu0
        %v6302 = vpop.f32.mrb[0].mxu0
        %v6303 = vpop.f32.mrb[0].mxu0
        %6304 = vdwg.mxu0
        %v6305 = vld [vmem:[%s15 + $0x1f] sm:$0x1]
        %v6306 = vlaneseq
        %v6307 = vshrl.u32 %v6306, 7
        %v6308 = vsub.s32 0, %v6307
        %v6309 = vrot.slane %v6305, %v6308
        %v6310 = vadd.f32 %v6300, %v6309
        %vm6311 = vcmp.lt.s32.totalorder %v5638, 20
        %v6312 = vsel %vm6311, %v6310, -1e+30
        %6313 = vmax.xlane.f32.xlu0 %v6312
        %v6314 = vpop.xlane.xlu0 %6313
        %v6315 = vsub.f32 %v6312, %v6314
        %v6316 = vmul.f32 %v6315, 1.442695
        %v6317 = vpow.pop %v6316
        %6318 = vadd.xlane.f32.xlu0 %v6317
        %v6319 = vpop.xlane.xlu0 %6318
        %v6320 = vlog2.pop %v6319
        %v6321 = vmul.f32 %v6320, 0.6931472
        %v6322 = vsub.f32 %v6315, %v6321
        %v6323 = vstv %s399
        %vm6324 = vcmp.eq.s32.totalorder %v5638, %v6323
        %v6325 = vsel %vm6324, %v5653, 0.0
        %v6326 = vsel %vm5641, %v6325, 0.0
        %6327 = vadd.xlane.f32.xlu0 %v6326
        %v6328 = vpop.xlane.xlu0 %6327
        %v6329 = vrot.slane %v6328, 4
        %v6330 = vadd.f32 %v6328, %v6329
        %v6331 = vrot.slane %v6330, 2
        %v6332 = vadd.f32 %v6330, %v6331
        %v6333 = vrot.slane %v6332, 1
        %v6334 = vadd.f32 %v6332, %v6333
        %s6335 = vtos %v6334
        %vm6336 = vcmp.eq.s32.totalorder %v5638, 0
        %v6337 = vsel %vm6336, %v6092, 0.0
        %v6338 = vsel %vm5641, %v6337, 0.0
        %6339 = vadd.xlane.f32.xlu0 %v6338
        %v6340 = vpop.xlane.xlu0 %6339
        %v6341 = vrot.slane %v6340, 4
        %v6342 = vadd.f32 %v6340, %v6341
        %v6343 = vrot.slane %v6342, 2
        %v6344 = vadd.f32 %v6342, %v6343
        %v6345 = vrot.slane %v6344, 1
        %v6346 = vadd.f32 %v6344, %v6345
        %s6347 = vtos %v6346
        %vm6348 = vcmp.eq.s32.totalorder %v5638, 1
        %v6349 = vsel %vm6348, %v6092, 0.0
        %v6350 = vsel %vm5641, %v6349, 0.0
        %6351 = vadd.xlane.f32.xlu0 %v6350
        %v6352 = vpop.xlane.xlu0 %6351
        %v6353 = vrot.slane %v6352, 4
        %v6354 = vadd.f32 %v6352, %v6353
        %v6355 = vrot.slane %v6354, 2
        %v6356 = vadd.f32 %v6354, %v6355
        %v6357 = vrot.slane %v6356, 1
        %v6358 = vadd.f32 %v6356, %v6357
        %s6359 = vtos %v6358
        %s6360 = smul.u32 %s47, 128
        %s6361 = sld [smem:[#allocation10 + %s6360]]
        %s6362 = sld [smem:[#allocation11 + %s6360]]
        %v6363 = vstv %s6361
        %vm6364 = vcmp.eq.s32.totalorder %v403, %v6363
        %v6365 = vstv %s6362
        %vm6366 = vcmp.eq.s32.totalorder %v5638, %v6365
        %vm6367 = vmand %vm6364, %vm6366
        %v6368 = vsel %vm6367, %v6322, 0.0
        %6369 = vadd.xlane.f32.xlu0 %v6368
        %v6370 = vpop.xlane.xlu0 %6369
        %v6371 = vrot.slane %v6370, 4
        %v6372 = vadd.f32 %v6370, %v6371
        %v6373 = vrot.slane %v6372, 2
        %v6374 = vadd.f32 %v6372, %v6373
        %v6375 = vrot.slane %v6374, 1
        %v6376 = vadd.f32 %v6374, %v6375
        %s6377 = vtos %v6376
        %p6378 = scmp.gt.s32.totalorder %s401, 0
        %s6379 = sadd.f32 %s6347, %s6377
        %s6380 = scalar_select %p6378, %s6379, 0.0
        %s6381 = sadd.f32 %s6380, 0.0
        %s6382 = sadd.s32 %s6360, 1
        %s6383 = sld [smem:[#allocation10 + %s6382]]
        %s6384 = sld [smem:[#allocation11 + %s6382]]
        %v6385 = vstv %s6383
        %vm6386 = vcmp.eq.s32.totalorder %v403, %v6385
        %v6387 = vstv %s6384
        %vm6388 = vcmp.eq.s32.totalorder %v5638, %v6387
        %vm6389 = vmand %vm6386, %vm6388
        %v6390 = vsel %vm6389, %v6322, 0.0
        %6391 = vadd.xlane.f32.xlu0 %v6390
        %v6392 = vpop.xlane.xlu0 %6391
        %v6393 = vrot.slane %v6392, 4
        %v6394 = vadd.f32 %v6392, %v6393
        %v6395 = vrot.slane %v6394, 2
        %v6396 = vadd.f32 %v6394, %v6395
        %v6397 = vrot.slane %v6396, 1
        %v6398 = vadd.f32 %v6396, %v6397
        %s6399 = vtos %v6398
        %p6400 = scmp.gt.s32.totalorder %s401, 1
        %s6401 = sadd.f32 %s6347, %s6399
        %s6402 = scalar_select %p6400, %s6401, 0.0
        %s6403 = sadd.f32 %s6381, %s6402
        %s6404 = sadd.s32 %s6360, 2
        %s6405 = sld [smem:[#allocation10 + %s6404]]
        %s6406 = sld [smem:[#allocation11 + %s6404]]
        %v6407 = vstv %s6405
        %vm6408 = vcmp.eq.s32.totalorder %v403, %v6407
        %v6409 = vstv %s6406
        %vm6410 = vcmp.eq.s32.totalorder %v5638, %v6409
        %vm6411 = vmand %vm6408, %vm6410
        %v6412 = vsel %vm6411, %v6322, 0.0
        %6413 = vadd.xlane.f32.xlu0 %v6412
        %v6414 = vpop.xlane.xlu0 %6413
        %v6415 = vrot.slane %v6414, 4
        %v6416 = vadd.f32 %v6414, %v6415
        %v6417 = vrot.slane %v6416, 2
        %v6418 = vadd.f32 %v6416, %v6417
        %v6419 = vrot.slane %v6418, 1
        %v6420 = vadd.f32 %v6418, %v6419
        %s6421 = vtos %v6420
        %p6422 = scmp.gt.s32.totalorder %s401, 2
        %s6423 = sadd.f32 %s6347, %s6421
        %s6424 = scalar_select %p6422, %s6423, 0.0
        %s6425 = sadd.f32 %s6403, %s6424
        %s6426 = sadd.s32 %s6360, 3
        %s6427 = sld [smem:[#allocation10 + %s6426]]
        %s6428 = sld [smem:[#allocation11 + %s6426]]
        %v6429 = vstv %s6427
        %vm6430 = vcmp.eq.s32.totalorder %v403, %v6429
        %v6431 = vstv %s6428
        %vm6432 = vcmp.eq.s32.totalorder %v5638, %v6431
        %vm6433 = vmand %vm6430, %vm6432
        %v6434 = vsel %vm6433, %v6322, 0.0
        %6435 = vadd.xlane.f32.xlu0 %v6434
        %v6436 = vpop.xlane.xlu0 %6435
        %v6437 = vrot.slane %v6436, 4
        %v6438 = vadd.f32 %v6436, %v6437
        %v6439 = vrot.slane %v6438, 2
        %v6440 = vadd.f32 %v6438, %v6439
        %v6441 = vrot.slane %v6440, 1
        %v6442 = vadd.f32 %v6440, %v6441
        %s6443 = vtos %v6442
        %p6444 = scmp.gt.s32.totalorder %s401, 3
        %s6445 = sadd.f32 %s6347, %s6443
        %s6446 = scalar_select %p6444, %s6445, 0.0
        %s6447 = sadd.f32 %s6425, %s6446
        %s6448 = sadd.s32 %s6360, 4
        %s6449 = sld [smem:[#allocation10 + %s6448]]
        %s6450 = sld [smem:[#allocation11 + %s6448]]
        %v6451 = vstv %s6449
        %vm6452 = vcmp.eq.s32.totalorder %v403, %v6451
        %v6453 = vstv %s6450
        %vm6454 = vcmp.eq.s32.totalorder %v5638, %v6453
        %vm6455 = vmand %vm6452, %vm6454
        %v6456 = vsel %vm6455, %v6322, 0.0
        %6457 = vadd.xlane.f32.xlu0 %v6456
        %v6458 = vpop.xlane.xlu0 %6457
        %v6459 = vrot.slane %v6458, 4
        %v6460 = vadd.f32 %v6458, %v6459
        %v6461 = vrot.slane %v6460, 2
        %v6462 = vadd.f32 %v6460, %v6461
        %v6463 = vrot.slane %v6462, 1
        %v6464 = vadd.f32 %v6462, %v6463
        %s6465 = vtos %v6464
        %p6466 = scmp.gt.s32.totalorder %s401, 4
        %s6467 = sadd.f32 %s6347, %s6465
        %s6468 = scalar_select %p6466, %s6467, 0.0
        %s6469 = sadd.f32 %s6447, %s6468
        %s6470 = sadd.s32 %s6360, 5
        %s6471 = sld [smem:[#allocation10 + %s6470]]
        %s6472 = sld [smem:[#allocation11 + %s6470]]
        %v6473 = vstv %s6471
        %vm6474 = vcmp.eq.s32.totalorder %v403, %v6473
        %v6475 = vstv %s6472
        %vm6476 = vcmp.eq.s32.totalorder %v5638, %v6475
        %vm6477 = vmand %vm6474, %vm6476
        %v6478 = vsel %vm6477, %v6322, 0.0
        %6479 = vadd.xlane.f32.xlu0 %v6478
        %v6480 = vpop.xlane.xlu0 %6479
        %v6481 = vrot.slane %v6480, 4
        %v6482 = vadd.f32 %v6480, %v6481
        %v6483 = vrot.slane %v6482, 2
        %v6484 = vadd.f32 %v6482, %v6483
        %v6485 = vrot.slane %v6484, 1
        %v6486 = vadd.f32 %v6484, %v6485
        %s6487 = vtos %v6486
        %p6488 = scmp.gt.s32.totalorder %s401, 5
        %s6489 = sadd.f32 %s6347, %s6487
        %s6490 = scalar_select %p6488, %s6489, 0.0
        %s6491 = sadd.f32 %s6469, %s6490
        %s6492 = sadd.s32 %s6360, 6
        %s6493 = sld [smem:[#allocation10 + %s6492]]
        %s6494 = sld [smem:[#allocation11 + %s6492]]
        %v6495 = vstv %s6493
        %vm6496 = vcmp.eq.s32.totalorder %v403, %v6495
        %v6497 = vstv %s6494
        %vm6498 = vcmp.eq.s32.totalorder %v5638, %v6497
        %vm6499 = vmand %vm6496, %vm6498
        %v6500 = vsel %vm6499, %v6322, 0.0
        %6501 = vadd.xlane.f32.xlu0 %v6500
        %v6502 = vpop.xlane.xlu0 %6501
        %v6503 = vrot.slane %v6502, 4
        %v6504 = vadd.f32 %v6502, %v6503
        %v6505 = vrot.slane %v6504, 2
        %v6506 = vadd.f32 %v6504, %v6505
        %v6507 = vrot.slane %v6506, 1
        %v6508 = vadd.f32 %v6506, %v6507
        %s6509 = vtos %v6508
        %p6510 = scmp.gt.s32.totalorder %s401, 6
        %s6511 = sadd.f32 %s6347, %s6509
        %s6512 = scalar_select %p6510, %s6511, 0.0
        %s6513 = sadd.f32 %s6491, %s6512
        %s6514 = sadd.s32 %s6360, 7
        %s6515 = sld [smem:[#allocation10 + %s6514]]
        %s6516 = sld [smem:[#allocation11 + %s6514]]
        %v6517 = vstv %s6515
        %vm6518 = vcmp.eq.s32.totalorder %v403, %v6517
        %v6519 = vstv %s6516
        %vm6520 = vcmp.eq.s32.totalorder %v5638, %v6519
        %vm6521 = vmand %vm6518, %vm6520
        %v6522 = vsel %vm6521, %v6322, 0.0
        %6523 = vadd.xlane.f32.xlu0 %v6522
        %v6524 = vpop.xlane.xlu0 %6523
        %v6525 = vrot.slane %v6524, 4
        %v6526 = vadd.f32 %v6524, %v6525
        %v6527 = vrot.slane %v6526, 2
        %v6528 = vadd.f32 %v6526, %v6527
        %v6529 = vrot.slane %v6528, 1
        %v6530 = vadd.f32 %v6528, %v6529
        %s6531 = vtos %v6530
        %p6532 = scmp.gt.s32.totalorder %s401, 7
        %s6533 = sadd.f32 %s6347, %s6531
        %s6534 = scalar_select %p6532, %s6533, 0.0
        %s6535 = sadd.f32 %s6513, %s6534
        %p6536 = scmp.eq.s32.totalorder %s47, 2
        %s6537 = scalar_select %p6536, 0.0, %s6359
        %v6538 = vld [vmem:[#allocation3] sm:$0x1]
        %s6539 = sadd.f32 %s6335, %s6537
        %s6540 = sadd.f32 %s6539, %s6535
        %v6541 = vstv %s6540
        %v6542 = vadd.f32 %v6538, %v6541
        %6543 = vst [vmem:[#allocation3] sm:$0x1] %v6542
        %6544 = vst [vmem:[#allocation21] sm:$0x1] %v6542
        %v6545 = vstv %s400
        %vm6546 = vcmp.eq.s32.totalorder %v403, %v6545
        %v6547 = vld [vmem:[%s8] sm:$0xff]
        %v6548 = vsel %vm6546, 1, 0
        %vm6549 = vcmp.eq.s32.totalorder %v6548, 1
        %v6550 = vsel %vm6549, %v6547, 0.0
        %v6551 = vrot.slane %v6550, 4
        %v6552 = vadd.f32 %v6550, %v6551
        %v6553 = vrot.slane %v6552, 2
        %v6554 = vadd.f32 %v6552, %v6553
        %v6555 = vrot.slane %v6554, 1
        %v6556 = vadd.f32 %v6554, %v6555
        %vm6557 = vcmp.eq.s32.totalorder %v403, %v408
        %v6558 = vsel %vm6557, 1, 0
        %vm6559 = vcmp.eq.s32.totalorder %v6558, 1
        %v6560 = vsel %vm6559, %v6556, %v5297
        %6561 = vst [vmem:[#allocation2] sm:$0xff] %v6560
        // Predicated region
        $region81: #{tpu_custom_call.1} parent=55 // pred_check
          %p6562 = pneg %p249
        $region82: #{tpu_custom_call.1} parent=55 // pred_check_branch
          %6564 = sbr.rel (%p6562) target = $region84
        $region83: #{tpu_custom_call.1} parent=55 // pred_region
          %s6566 = ssub.s32 16, 16
          %6567 = vsyncadd [#allocation14], %s6566
          %s6569 = sshll.u32 [#allocation21], 4
          %s6570 = int_to_ptr.vmem [resolvable:$true] %s6569
          %6572 = dma.vmem_to_hbm [thread:$0]  %s6570, 16, %s16, [#allocation14]
        $region84: #{tpu_custom_call.1} parent=55 // pred_fallthru
          _
        // Predicated region
        $region85: #{tpu_custom_call.1} parent=55 // pred_check
          %p6573 = pneg %p249
        $region86: #{tpu_custom_call.1} parent=55 // pred_check_branch
          %6575 = sbr.rel (%p6573) target = $region88
        $region87: #{tpu_custom_call.1} parent=55 // pred_region
          %6576 = dma.done [#allocation14], 16
        $region88: #{tpu_custom_call.1} parent=55 // pred_fallthru
          _
      $region56: #{tpu_custom_call.1} parent=5 // pred_fallthru
        _
      %p6577 = scmp.le.s32.totalorder 2, %s42
      // Predicated region
      $region89: #{tpu_custom_call.1} parent=5 // pred_check
        %p6578 = pneg %p6577
      $region90: #{tpu_custom_call.1} parent=5 // pred_check_branch
        %6580 = sbr.rel (%p6578) target = $region92
      $region91: #{tpu_custom_call.1} parent=5 // pred_region
        %s6581 = ssub.s32 %s42, 2
      $region92: #{tpu_custom_call.1} parent=5 // pred_fallthru
        _
    $region6: #{tpu_custom_call.1} parent=1 // loop_footer
      %s46 = sadd.s32 1, %s42
    $region7: #{tpu_custom_call.1} parent=1 // loop_footer_branch
      %41 = sbr.rel target = $region3
    $region8: #{tpu_custom_call.1} parent=1 // loop_exit
      _
    %6582 = vsyncpa [#allocation13], 1
    %s6583 = scalar_lea.sflag [#allocation13], 1
    %6584 = vsyncpa %s6583, 1
    %6585 = vsyncpa [#allocation16], 1
    %6586 = vsyncpa [#allocation19], 1
    %6587 = vsyncpa [#allocation14], 1
    %s6588 = scalar_lea.sflag [#allocation14], 1
    %6589 = vsyncpa %s6588, 1

</llo_original>
